<compile_context>
chip_gen: v7x
topology: tpu7x:2x2x1
jax: 0.10.0
libtpu: 0.0.40
codegen_flags: <defaults>
</compile_context>

<pallas_src>
import functools

import jax
import jax.numpy as jnp
from jax.experimental import pallas as pl
from jax.experimental.pallas import tpu as pltpu

LANE = 128
_EPS = 1e-5


def _round_up(v, m):
    return (v + m - 1) // m * m


# ---------------------------------------------------------------------------
# Fused kernel: [optional BN+ReLU on input] -> 3x3 same conv -> BN statistics
# ---------------------------------------------------------------------------
def _conv_bn_stats_kernel(x_ref, mask_ref, w_ref, b_ref, scale_ref, shift_ref,
                          o_ref, sum_ref, sq_ref, col_scr,
                          *, NB, H, W, C, apply_bn_in):
    M = NB * H * W
    x = x_ref[...].reshape(M, C).astype(jnp.float32)      # (M, C) f32

    if apply_bn_in:
        # Previous layer's folded BatchNorm (scale/shift) + ReLU, fused on the
        # freshly loaded tile (f32 elementwise math).
        x = jnp.maximum(x * scale_ref[...] + shift_ref[...], 0.0)

    mask = mask_ref[...]                                   # (M, 9) {0,1} f32

    # im2col into a lane-dense bf16 VMEM scratch.  The 1-pixel zero halo is a
    # sublane roll + one precomputed-mask multiply per tap (wrap-around rows /
    # images are killed by the mask), no host padding, no unaligned stores.
    for t in range(9):
        oy, ox = t // 3 - 1, t % 3 - 1
        s = oy * W + ox                                    # flat tap offset
        shifted = pltpu.roll(x, shift=(-s) % M, axis=0) if s != 0 else x
        col_scr[:, t * C:(t + 1) * C] = (
            shifted * mask[:, t:t + 1]).astype(col_scr.dtype)

    # One MXU matmul: (M, 9C) x (9C, C), bf16 operands, f32 accumulation.
    acc = jnp.dot(col_scr[...], w_ref[...],
                  preferred_element_type=jnp.float32)      # (M, C) f32
    acc = acc + b_ref[...]                                 # conv bias

    o_ref[...] = acc.reshape(NB, H, W, C).astype(o_ref.dtype)

    # Per-grid-step BN statistics of the conv output (f32).
    sum_ref[...] = jnp.sum(acc, axis=0, keepdims=True).reshape(1, 1, C)
    sq_ref[...] = jnp.sum(acc * acc, axis=0, keepdims=True).reshape(1, 1, C)


def conv3x3_bn_stats(x, mask, w9, b, scale, shift, *, nb, apply_bn_in,
                     out_dtype):
    """x: (N,H,W,C); mask: (nb*H*W,9) f32; w9: (9C,C) bf16; b/scale/shift: (1,C)."""
    N, H, W, C = x.shape
    G = N // nb
    M = nb * H * W
    kernel = functools.partial(_conv_bn_stats_kernel, NB=nb, H=H, W=W, C=C,
                               apply_bn_in=apply_bn_in)
    flops = 2 * N * H * W * 9 * C * C
    bytes_accessed = (x.size * x.dtype.itemsize + mask.size * 4
                      + w9.size * 2 + 3 * C * 4
                      + N * H * W * C * jnp.dtype(out_dtype).itemsize
                      + 2 * G * C * 4)
    return pl.pallas_call(
        kernel,
        out_shape=(jax.ShapeDtypeStruct((N, H, W, C), out_dtype),
                   jax.ShapeDtypeStruct((G, 1, C), jnp.float32),
                   jax.ShapeDtypeStruct((G, 1, C), jnp.float32)),
        grid=(G,),
        in_specs=[
            pl.BlockSpec((nb, H, W, C), lambda g: (g, 0, 0, 0)),
            pl.BlockSpec((M, 9), lambda g: (0, 0)),
            pl.BlockSpec((9 * C, C), lambda g: (0, 0)),
            pl.BlockSpec((1, C), lambda g: (0, 0)),
            pl.BlockSpec((1, C), lambda g: (0, 0)),
            pl.BlockSpec((1, C), lambda g: (0, 0)),
        ],
        out_specs=(
            pl.BlockSpec((nb, H, W, C), lambda g: (g, 0, 0, 0)),
            pl.BlockSpec((1, 1, C), lambda g: (g, 0, 0)),
            pl.BlockSpec((1, 1, C), lambda g: (g, 0, 0)),
        ),
        scratch_shapes=[pltpu.VMEM((M, 9 * C), jnp.bfloat16)],
        compiler_params=pltpu.CompilerParams(
            dimension_semantics=("parallel",),
            vmem_limit_bytes=32 * 1024 * 1024),
        cost_estimate=pl.CostEstimate(flops=flops, transcendentals=0,
                                      bytes_accessed=bytes_accessed),
    )(x, mask, w9, b, scale, shift)


# ---------------------------------------------------------------------------
# Host-side helpers (tiny, layout / parameter plumbing only).
# ---------------------------------------------------------------------------
def _build_halo_mask(H, W, nb):
    """(nb*H*W, 9) {0,1} f32 validity mask for the 9 taps of a 3x3 same conv."""
    h = jnp.arange(H).reshape(H, 1, 1)
    w = jnp.arange(W).reshape(1, W, 1)
    t = jnp.arange(9).reshape(1, 1, 9)
    oy = t // 3 - 1
    ox = t % 3 - 1
    valid = ((h + oy >= 0) & (h + oy < H) & (w + ox >= 0) & (w + ox < W))
    mask = valid.reshape(H * W, 9).astype(jnp.float32)
    return jnp.tile(mask, (nb, 1))


def _pick_batch_block(N, H, W, C, budget=24 * 1024 * 1024):
    """Largest NB dividing N with grid >= 2 (when N >= 2) under a VMEM budget."""
    best = 1
    for nb in range(1, N + 1):
        if N % nb:
            continue
        if N >= 2 and N // nb < 2:          # keep both TensorCores busy (v7x)
            continue
        blk = nb * H * W * C
        per_step = blk * (2 * 4 + 2 * 4 + 9 * 2) + 9 * C * C * 2
        if per_step <= budget:
            best = nb
    return best


def _bn_scale_shift(sums, sumsq, count, gamma, beta, eps=_EPS):
    mean = sums / count
    # Single-pass E[x^2] - E[x]^2 in f32; clamp avoids cancellation NaNs.
    # TODO(synk): centered accumulation if used beyond small shapes.
    var = jnp.maximum(sumsq / count - mean * mean, 0.0)
    inv = gamma / jnp.sqrt(var + eps)
    return inv.reshape(1, -1), (beta - mean * inv).reshape(1, -1)


def _pad_channels(a, target, axis, value=0.0):
    pad = target - a.shape[axis]
    if pad == 0:
        return a
    cfg = [(0, 0)] * a.ndim
    cfg[axis] = (0, pad)
    return jnp.pad(a, cfg, constant_values=value)


def _pack_weight(w, C):
    """(3,3,Cin,Cout) HWIO -> zero-padded, tap-major (9*C, C) bf16."""
    w = _pad_channels(w, C, axis=2)
    w = _pad_channels(w, C, axis=3)
    return w.reshape(9 * C, C).astype(jnp.bfloat16)


def _pack_vec(v, C, value=0.0):
    return _pad_channels(v, C, axis=0, value=value).astype(jnp.float32)


# ---------------------------------------------------------------------------
# Full conv_block forward: Conv -> BN -> ReLU -> Conv -> BN -> ReLU.
# ---------------------------------------------------------------------------
def conv_block_forward(x_nchw, params):
    N, Cin, H, W = x_nchw.shape
    Cout = params["b1"].shape[0]
    C = _round_up(max(Cin, Cout, LANE), LANE)             # lane-dense channels
    count = float(N * H * W)
    nb = _pick_batch_block(N, H, W, C)

    # NCHW -> NHWC, pad channels (lane dim) to C.
    x = jnp.transpose(x_nchw, (0, 2, 3, 1))
    x = _pad_channels(x, C, axis=3)

    mask = _build_halo_mask(H, W, nb)

    w1 = _pack_weight(params["w1"], C)
    b1 = _pack_vec(params["b1"], C).reshape(1, C)
    g1 = _pack_vec(params["g1"], C)      # gamma padded with 0 -> padded lanes stay 0
    be1 = _pack_vec(params["be1"], C)
    w2 = _pack_weight(params["w2"], C)
    b2 = _pack_vec(params["b2"], C).reshape(1, C)
    g2 = _pack_vec(params["g2"], C)
    be2 = _pack_vec(params["be2"], C)

    zero = jnp.zeros((1, C), jnp.float32)

    # Layer 1: conv1 + fused BN1 statistics; inter-layer activation in bf16.
    y1, s1, q1 = conv3x3_bn_stats(x, mask, w1, b1, zero, zero,
                                  nb=nb, apply_bn_in=False,
                                  out_dtype=jnp.bfloat16)
    sc1, sh1 = _bn_scale_shift(jnp.sum(s1, axis=(0, 1)),
                               jnp.sum(q1, axis=(0, 1)), count, g1, be1)

    # Layer 2: BN1+ReLU fused into conv2's input path, + fused BN2 statistics.
    y2, s2, q2 = conv3x3_bn_stats(y1, mask, w2, b2, sc1, sh1,
                                  nb=nb, apply_bn_in=True,
                                  out_dtype=jnp.float32)
    sc2, sh2 = _bn_scale_shift(jnp.sum(s2, axis=(0, 1)),
                               jnp.sum(q2, axis=(0, 1)), count, g2, be2)

    # Epilogue: BN2-apply + ReLU + channel slice + NHWC->NCHW.  Left to XLA so
    # it fuses into a single elementwise+transpose pass over y2 (perf review:
    # removes one full-tensor HBM round trip vs. a separate Pallas kernel).
    out = jnp.maximum(y2[..., :Cout] * sc2[0, :Cout] + sh2[0, :Cout], 0.0)
    return jnp.transpose(out, (0, 3, 1, 2))


# ---------------------------------------------------------------------------
# Pure-JAX f32 reference of the same module (for a numerical sanity check).
# ---------------------------------------------------------------------------
def _reference_forward(x_nchw, params, eps=_EPS):
    def conv(x, w, b):                       # x NCHW, w HWIO
        y = jax.lax.conv_general_dilated(
            x, w, window_strides=(1, 1), padding="SAME",
            dimension_numbers=("NCHW", "HWIO", "NCHW"))
        return y + b.reshape(1, -1, 1, 1)

    def bn_relu(y, g, be):
        mean = jnp.mean(y, axis=(0, 2, 3), keepdims=True)
        var = jnp.mean((y - mean) ** 2, axis=(0, 2, 3), keepdims=True)
        yn = (y - mean) / jnp.sqrt(var + eps)
        return jnp.maximum(yn * g.reshape(1, -1, 1, 1)
                           + be.reshape(1, -1, 1, 1), 0.0)

    y = bn_relu(conv(x_nchw, params["w1"], params["b1"]),
                params["g1"], params["be1"])
    y = bn_relu(conv(y, params["w2"], params["b2"]),
                params["g2"], params["be2"])
    return y


if __name__ == "__main__":
    N, Cin, Cout, H, W = 2, 4, 8, 16, 16
    key = jax.random.PRNGKey(0)
    k = jax.random.split(key, 5)

    x = jax.random.normal(k[0], (N, Cin, H, W), jnp.float32)

    # Deterministic synthetic parameters (shapes from nn.Conv2d / nn.BatchNorm2d,
    # conv weights stored HWIO).
    params = {
        "w1": jax.random.normal(k[1], (3, 3, Cin, Cout), jnp.float32) * 0.1,
        "b1": jax.random.normal(k[2], (Cout,), jnp.float32) * 0.1,
        "g1": jnp.ones((Cout,), jnp.float32),
        "be1": jnp.zeros((Cout,), jnp.float32),
        "w2": jax.random.normal(k[3], (3, 3, Cout, Cout), jnp.float32) * 0.1,
        "b2": jax.random.normal(k[4], (Cout,), jnp.float32) * 0.1,
        "g2": jnp.ones((Cout,), jnp.float32),
        "be2": jnp.zeros((Cout,), jnp.float32),
    }

    out = jax.jit(conv_block_forward)(x, params)
    out = jax.block_until_ready(out)
    assert out.shape == (N, Cout, H, W)
    assert bool(jnp.all(out >= 0.0))                      # ReLU output >= 0

    # Numerical sanity check vs. a pure-JAX reference (bf16 intermediate ->
    # loose tolerance).
    ref = _reference_forward(x, params)
    err = float(jnp.max(jnp.abs(out - ref)))
    assert err < 5e-2, f"max abs err vs reference: {err}"

    print("KERNEL_OK")
</pallas_src>

<mosaic_0001>
module attributes {stable_mosaic.version = 11 : i64} {
  func.func @_conv_bn_stats_kernel(%arg0: i32, %arg1: memref<1x16x16x128xf32, #tpu.memory_space<vmem>>, %arg2: memref<256x9xf32, #tpu.memory_space<vmem>>, %arg3: memref<1152x128xbf16, #tpu.memory_space<vmem>>, %arg4: memref<1x128xf32, #tpu.memory_space<vmem>>, %arg5: memref<1x128xf32, #tpu.memory_space<vmem>>, %arg6: memref<1x128xf32, #tpu.memory_space<vmem>>, %arg7: memref<1x16x16x128xbf16, #tpu.memory_space<vmem>>, %arg8: memref<1x1x128xf32, #tpu.memory_space<vmem>>, %arg9: memref<1x1x128xf32, #tpu.memory_space<vmem>>, %arg10: memref<256x1152xbf16, #tpu.memory_space<vmem>>) attributes {dimension_semantics = [#tpu.dimension_semantics<parallel>], iteration_bounds = array<i64: 2>, scalar_prefetch = 0 : i64, scratch_operands = 1 : i64, tpu.core_type = #tpu.core_type<tc>, window_params = [{transform_indices = @transform_0, window_bounds = array<i64: 1, 16, 16, 128>}, {pipeline_mode = #tpu.pipeline_mode<synchronous>, transform_indices = @transform_1, window_bounds = array<i64: 256, 9>}, {pipeline_mode = #tpu.pipeline_mode<synchronous>, transform_indices = @transform_2, window_bounds = array<i64: 1152, 128>}, {pipeline_mode = #tpu.pipeline_mode<synchronous>, transform_indices = @transform_3, window_bounds = array<i64: 1, 128>}, {pipeline_mode = #tpu.pipeline_mode<synchronous>, transform_indices = @transform_4, window_bounds = array<i64: 1, 128>}, {pipeline_mode = #tpu.pipeline_mode<synchronous>, transform_indices = @transform_5, window_bounds = array<i64: 1, 128>}, {transform_indices = @transform_6, window_bounds = array<i64: 1, 16, 16, 128>}, {transform_indices = @transform_7, window_bounds = array<i64: 1, 1, 128>}, {transform_indices = @transform_8, window_bounds = array<i64: 1, 1, 128>}]} {
    %c0 = arith.constant 0 : index
    %c0_0 = arith.constant 0 : index
    %c0_1 = arith.constant 0 : index
    %c0_2 = arith.constant 0 : index
    %0 = vector.load %arg1[%c0, %c0_0, %c0_1, %c0_2] : memref<1x16x16x128xf32, #tpu.memory_space<vmem>>, vector<1x16x16x128xf32>
    %1 = vector.shape_cast %0 : vector<1x16x16x128xf32> to vector<256x128xf32>
    %c0_3 = arith.constant 0 : index
    %c0_4 = arith.constant 0 : index
    %2 = vector.load %arg2[%c0_3, %c0_4] : memref<256x9xf32, #tpu.memory_space<vmem>>, vector<256x9xf32>
    %c17_i32 = arith.constant 17 : i32
    %3 = tpu.dynamic_rotate %1 by %c17_i32 dim 0 : vector<256x128xf32>, i32 -> vector<256x128xf32>
    %4 = vector.extract_strided_slice %2 {offsets = [0, 0], sizes = [256, 1], strides = [1, 1]} : vector<256x9xf32> to vector<256x1xf32>
    %5 = vector.broadcast %4 : vector<256x1xf32> to vector<256x128xf32>
    %6 = arith.mulf %3, %5 : vector<256x128xf32>
    %7 = arith.truncf %6 : vector<256x128xf32> to vector<256x128xbf16>
    %c0_5 = arith.constant 0 : index
    %c0_6 = arith.constant 0 : index
    %8 = vector.load %arg10[%c0_5, %c0_6] : memref<256x1152xbf16, #tpu.memory_space<vmem>>, vector<256x128xbf16>
    tpu.vector_store %arg10[%c0_5, %c0_6], %7 {strides = array<i32>} : memref<256x1152xbf16, #tpu.memory_space<vmem>>, vector<256x128xbf16>,
    %c16_i32 = arith.constant 16 : i32
    %9 = tpu.dynamic_rotate %1 by %c16_i32 dim 0 : vector<256x128xf32>, i32 -> vector<256x128xf32>
    %10 = vector.extract_strided_slice %2 {offsets = [0, 1], sizes = [256, 1], strides = [1, 1]} : vector<256x9xf32> to vector<256x1xf32>
    %11 = vector.broadcast %10 : vector<256x1xf32> to vector<256x128xf32>
    %12 = arith.mulf %9, %11 : vector<256x128xf32>
    %13 = arith.truncf %12 : vector<256x128xf32> to vector<256x128xbf16>
    %c0_7 = arith.constant 0 : index
    %c128 = arith.constant 128 : index
    %14 = vector.load %arg10[%c0_7, %c128] : memref<256x1152xbf16, #tpu.memory_space<vmem>>, vector<256x128xbf16>
    tpu.vector_store %arg10[%c0_7, %c128], %13 {strides = array<i32>} : memref<256x1152xbf16, #tpu.memory_space<vmem>>, vector<256x128xbf16>,
    %c15_i32 = arith.constant 15 : i32
    %15 = tpu.dynamic_rotate %1 by %c15_i32 dim 0 : vector<256x128xf32>, i32 -> vector<256x128xf32>
    %16 = vector.extract_strided_slice %2 {offsets = [0, 2], sizes = [256, 1], strides = [1, 1]} : vector<256x9xf32> to vector<256x1xf32>
    %17 = vector.broadcast %16 : vector<256x1xf32> to vector<256x128xf32>
    %18 = arith.mulf %15, %17 : vector<256x128xf32>
    %19 = arith.truncf %18 : vector<256x128xf32> to vector<256x128xbf16>
    %c0_8 = arith.constant 0 : index
    %c256 = arith.constant 256 : index
    %20 = vector.load %arg10[%c0_8, %c256] : memref<256x1152xbf16, #tpu.memory_space<vmem>>, vector<256x128xbf16>
    tpu.vector_store %arg10[%c0_8, %c256], %19 {strides = array<i32>} : memref<256x1152xbf16, #tpu.memory_space<vmem>>, vector<256x128xbf16>,
    %c1_i32 = arith.constant 1 : i32
    %21 = tpu.dynamic_rotate %1 by %c1_i32 dim 0 : vector<256x128xf32>, i32 -> vector<256x128xf32>
    %22 = vector.extract_strided_slice %2 {offsets = [0, 3], sizes = [256, 1], strides = [1, 1]} : vector<256x9xf32> to vector<256x1xf32>
    %23 = vector.broadcast %22 : vector<256x1xf32> to vector<256x128xf32>
    %24 = arith.mulf %21, %23 : vector<256x128xf32>
    %25 = arith.truncf %24 : vector<256x128xf32> to vector<256x128xbf16>
    %c0_9 = arith.constant 0 : index
    %c384 = arith.constant 384 : index
    %26 = vector.load %arg10[%c0_9, %c384] : memref<256x1152xbf16, #tpu.memory_space<vmem>>, vector<256x128xbf16>
    tpu.vector_store %arg10[%c0_9, %c384], %25 {strides = array<i32>} : memref<256x1152xbf16, #tpu.memory_space<vmem>>, vector<256x128xbf16>,
    %27 = vector.extract_strided_slice %2 {offsets = [0, 4], sizes = [256, 1], strides = [1, 1]} : vector<256x9xf32> to vector<256x1xf32>
    %28 = vector.broadcast %27 : vector<256x1xf32> to vector<256x128xf32>
    %29 = arith.mulf %1, %28 : vector<256x128xf32>
    %30 = arith.truncf %29 : vector<256x128xf32> to vector<256x128xbf16>
    %c0_10 = arith.constant 0 : index
    %c512 = arith.constant 512 : index
    %31 = vector.load %arg10[%c0_10, %c512] : memref<256x1152xbf16, #tpu.memory_space<vmem>>, vector<256x128xbf16>
    tpu.vector_store %arg10[%c0_10, %c512], %30 {strides = array<i32>} : memref<256x1152xbf16, #tpu.memory_space<vmem>>, vector<256x128xbf16>,
    %c255_i32 = arith.constant 255 : i32
    %32 = tpu.dynamic_rotate %1 by %c255_i32 dim 0 : vector<256x128xf32>, i32 -> vector<256x128xf32>
    %33 = vector.extract_strided_slice %2 {offsets = [0, 5], sizes = [256, 1], strides = [1, 1]} : vector<256x9xf32> to vector<256x1xf32>
    %34 = vector.broadcast %33 : vector<256x1xf32> to vector<256x128xf32>
    %35 = arith.mulf %32, %34 : vector<256x128xf32>
    %36 = arith.truncf %35 : vector<256x128xf32> to vector<256x128xbf16>
    %c0_11 = arith.constant 0 : index
    %c640 = arith.constant 640 : index
    %37 = vector.load %arg10[%c0_11, %c640] : memref<256x1152xbf16, #tpu.memory_space<vmem>>, vector<256x128xbf16>
    tpu.vector_store %arg10[%c0_11, %c640], %36 {strides = array<i32>} : memref<256x1152xbf16, #tpu.memory_space<vmem>>, vector<256x128xbf16>,
    %c241_i32 = arith.constant 241 : i32
    %38 = tpu.dynamic_rotate %1 by %c241_i32 dim 0 : vector<256x128xf32>, i32 -> vector<256x128xf32>
    %39 = vector.extract_strided_slice %2 {offsets = [0, 6], sizes = [256, 1], strides = [1, 1]} : vector<256x9xf32> to vector<256x1xf32>
    %40 = vector.broadcast %39 : vector<256x1xf32> to vector<256x128xf32>
    %41 = arith.mulf %38, %40 : vector<256x128xf32>
    %42 = arith.truncf %41 : vector<256x128xf32> to vector<256x128xbf16>
    %c0_12 = arith.constant 0 : index
    %c768 = arith.constant 768 : index
    %43 = vector.load %arg10[%c0_12, %c768] : memref<256x1152xbf16, #tpu.memory_space<vmem>>, vector<256x128xbf16>
    tpu.vector_store %arg10[%c0_12, %c768], %42 {strides = array<i32>} : memref<256x1152xbf16, #tpu.memory_space<vmem>>, vector<256x128xbf16>,
    %c240_i32 = arith.constant 240 : i32
    %44 = tpu.dynamic_rotate %1 by %c240_i32 dim 0 : vector<256x128xf32>, i32 -> vector<256x128xf32>
    %45 = vector.extract_strided_slice %2 {offsets = [0, 7], sizes = [256, 1], strides = [1, 1]} : vector<256x9xf32> to vector<256x1xf32>
    %46 = vector.broadcast %45 : vector<256x1xf32> to vector<256x128xf32>
    %47 = arith.mulf %44, %46 : vector<256x128xf32>
    %48 = arith.truncf %47 : vector<256x128xf32> to vector<256x128xbf16>
    %c0_13 = arith.constant 0 : index
    %c896 = arith.constant 896 : index
    %49 = vector.load %arg10[%c0_13, %c896] : memref<256x1152xbf16, #tpu.memory_space<vmem>>, vector<256x128xbf16>
    tpu.vector_store %arg10[%c0_13, %c896], %48 {strides = array<i32>} : memref<256x1152xbf16, #tpu.memory_space<vmem>>, vector<256x128xbf16>,
    %c239_i32 = arith.constant 239 : i32
    %50 = tpu.dynamic_rotate %1 by %c239_i32 dim 0 : vector<256x128xf32>, i32 -> vector<256x128xf32>
    %51 = vector.extract_strided_slice %2 {offsets = [0, 8], sizes = [256, 1], strides = [1, 1]} : vector<256x9xf32> to vector<256x1xf32>
    %52 = vector.broadcast %51 : vector<256x1xf32> to vector<256x128xf32>
    %53 = arith.mulf %50, %52 : vector<256x128xf32>
    %54 = arith.truncf %53 : vector<256x128xf32> to vector<256x128xbf16>
    %c0_14 = arith.constant 0 : index
    %c1024 = arith.constant 1024 : index
    %55 = vector.load %arg10[%c0_14, %c1024] : memref<256x1152xbf16, #tpu.memory_space<vmem>>, vector<256x128xbf16>
    tpu.vector_store %arg10[%c0_14, %c1024], %54 {strides = array<i32>} : memref<256x1152xbf16, #tpu.memory_space<vmem>>, vector<256x128xbf16>,
    %c0_15 = arith.constant 0 : index
    %c0_16 = arith.constant 0 : index
    %56 = vector.load %arg10[%c0_15, %c0_16] : memref<256x1152xbf16, #tpu.memory_space<vmem>>, vector<256x1152xbf16>
    %c0_17 = arith.constant 0 : index
    %c0_18 = arith.constant 0 : index
    %57 = vector.load %arg3[%c0_17, %c0_18] : memref<1152x128xbf16, #tpu.memory_space<vmem>>, vector<1152x128xbf16>
    %cst = arith.constant dense<0.000000e+00> : vector<256x128xf32>
    %58 = tpu.matmul %56, %57, %cst {dimension_numbers = #tpu.dot_dimension_numbers<[1], [0], [0], [1], [0, 0, 1, 1], [], []>} : vector<256x1152xbf16>, vector<1152x128xbf16>, vector<256x128xf32> -> vector<256x128xf32>
    %c0_19 = arith.constant 0 : index
    %c0_20 = arith.constant 0 : index
    %59 = vector.load %arg4[%c0_19, %c0_20] : memref<1x128xf32, #tpu.memory_space<vmem>>, vector<1x128xf32>
    %60 = vector.broadcast %59 : vector<1x128xf32> to vector<256x128xf32>
    %61 = arith.addf %58, %60 : vector<256x128xf32>
    %62 = vector.shape_cast %61 : vector<256x128xf32> to vector<1x16x16x128xf32>
    %63 = arith.truncf %62 : vector<1x16x16x128xf32> to vector<1x16x16x128xbf16>
    %c0_21 = arith.constant 0 : index
    %c0_22 = arith.constant 0 : index
    %c0_23 = arith.constant 0 : index
    %c0_24 = arith.constant 0 : index
    %64 = vector.load %arg7[%c0_21, %c0_22, %c0_23, %c0_24] : memref<1x16x16x128xbf16, #tpu.memory_space<vmem>>, vector<1x16x16x128xbf16>
    tpu.vector_store %arg7[%c0_21, %c0_22, %c0_23, %c0_24], %63 {strides = array<i32>} : memref<1x16x16x128xbf16, #tpu.memory_space<vmem>>, vector<1x16x16x128xbf16>,
    %cst_25 = arith.constant dense<0.000000e+00> : vector<128xf32>
    %65 = vector.multi_reduction <add>, %61, %cst_25 [0] : vector<256x128xf32> to vector<128xf32>
    %66 = vector.shape_cast %65 : vector<128xf32> to vector<1x128xf32>
    %67 = vector.shape_cast %66 : vector<1x128xf32> to vector<1x1x128xf32>
    %c0_26 = arith.constant 0 : index
    %c0_27 = arith.constant 0 : index
    %c0_28 = arith.constant 0 : index
    %68 = vector.load %arg8[%c0_26, %c0_27, %c0_28] : memref<1x1x128xf32, #tpu.memory_space<vmem>>, vector<1x1x128xf32>
    tpu.vector_store %arg8[%c0_26, %c0_27, %c0_28], %67 {strides = array<i32>} : memref<1x1x128xf32, #tpu.memory_space<vmem>>, vector<1x1x128xf32>,
    %69 = arith.mulf %61, %61 : vector<256x128xf32>
    %cst_29 = arith.constant dense<0.000000e+00> : vector<128xf32>
    %70 = vector.multi_reduction <add>, %69, %cst_29 [0] : vector<256x128xf32> to vector<128xf32>
    %71 = vector.shape_cast %70 : vector<128xf32> to vector<1x128xf32>
    %72 = vector.shape_cast %71 : vector<1x128xf32> to vector<1x1x128xf32>
    %c0_30 = arith.constant 0 : index
    %c0_31 = arith.constant 0 : index
    %c0_32 = arith.constant 0 : index
    %73 = vector.load %arg9[%c0_30, %c0_31, %c0_32] : memref<1x1x128xf32, #tpu.memory_space<vmem>>, vector<1x1x128xf32>
    tpu.vector_store %arg9[%c0_30, %c0_31, %c0_32], %72 {strides = array<i32>} : memref<1x1x128xf32, #tpu.memory_space<vmem>>, vector<1x1x128xf32>,
    return
  }
  func.func @transform_0(%arg0: i32) -> (i32, i32, i32, i32) {
    %c0_i32 = arith.constant 0 : i32
    %c0_i32_0 = arith.constant 0 : i32
    %c0_i32_1 = arith.constant 0 : i32
    %c0_i32_2 = arith.constant 0 : i32
    return %arg0, %c0_i32, %c0_i32_0, %c0_i32_1 : i32, i32, i32, i32
  }
  func.func @transform_1(%arg0: i32) -> (i32, i32) {
    %c0_i32 = arith.constant 0 : i32
    %c0_i32_0 = arith.constant 0 : i32
    %c0_i32_1 = arith.constant 0 : i32
    return %c0_i32, %c0_i32_0 : i32, i32
  }
  func.func @transform_2(%arg0: i32) -> (i32, i32) {
    %c0_i32 = arith.constant 0 : i32
    %c0_i32_0 = arith.constant 0 : i32
    %c0_i32_1 = arith.constant 0 : i32
    return %c0_i32, %c0_i32_0 : i32, i32
  }
  func.func @transform_3(%arg0: i32) -> (i32, i32) {
    %c0_i32 = arith.constant 0 : i32
    %c0_i32_0 = arith.constant 0 : i32
    %c0_i32_1 = arith.constant 0 : i32
    return %c0_i32, %c0_i32_0 : i32, i32
  }
  func.func @transform_4(%arg0: i32) -> (i32, i32) {
    %c0_i32 = arith.constant 0 : i32
    %c0_i32_0 = arith.constant 0 : i32
    %c0_i32_1 = arith.constant 0 : i32
    return %c0_i32, %c0_i32_0 : i32, i32
  }
  func.func @transform_5(%arg0: i32) -> (i32, i32) {
    %c0_i32 = arith.constant 0 : i32
    %c0_i32_0 = arith.constant 0 : i32
    %c0_i32_1 = arith.constant 0 : i32
    return %c0_i32, %c0_i32_0 : i32, i32
  }
  func.func @transform_6(%arg0: i32) -> (i32, i32, i32, i32) {
    %c0_i32 = arith.constant 0 : i32
    %c0_i32_0 = arith.constant 0 : i32
    %c0_i32_1 = arith.constant 0 : i32
    %c0_i32_2 = arith.constant 0 : i32
    return %arg0, %c0_i32, %c0_i32_0, %c0_i32_1 : i32, i32, i32, i32
  }
  func.func @transform_7(%arg0: i32) -> (i32, i32, i32) {
    %c0_i32 = arith.constant 0 : i32
    %c0_i32_0 = arith.constant 0 : i32
    %c0_i32_1 = arith.constant 0 : i32
    return %arg0, %c0_i32, %c0_i32_0 : i32, i32, i32
  }
  func.func @transform_8(%arg0: i32) -> (i32, i32, i32) {
    %c0_i32 = arith.constant 0 : i32
    %c0_i32_0 = arith.constant 0 : i32
    %c0_i32_1 = arith.constant 0 : i32
    return %arg0, %c0_i32, %c0_i32_0 : i32, i32, i32
  }
}

module attributes {stable_mosaic.version = 11 : i64} {
  func.func @_conv_bn_stats_kernel(%arg0: i32, %arg1: memref<1x16x16x128xbf16, #tpu.memory_space<vmem>>, %arg2: memref<256x9xf32, #tpu.memory_space<vmem>>, %arg3: memref<1152x128xbf16, #tpu.memory_space<vmem>>, %arg4: memref<1x128xf32, #tpu.memory_space<vmem>>, %arg5: memref<1x128xf32, #tpu.memory_space<vmem>>, %arg6: memref<1x128xf32, #tpu.memory_space<vmem>>, %arg7: memref<1x16x16x128xf32, #tpu.memory_space<vmem>>, %arg8: memref<1x1x128xf32, #tpu.memory_space<vmem>>, %arg9: memref<1x1x128xf32, #tpu.memory_space<vmem>>, %arg10: memref<256x1152xbf16, #tpu.memory_space<vmem>>) attributes {dimension_semantics = [#tpu.dimension_semantics<parallel>], iteration_bounds = array<i64: 2>, scalar_prefetch = 0 : i64, scratch_operands = 1 : i64, tpu.core_type = #tpu.core_type<tc>, window_params = [{transform_indices = @transform_0, window_bounds = array<i64: 1, 16, 16, 128>}, {pipeline_mode = #tpu.pipeline_mode<synchronous>, transform_indices = @transform_1, window_bounds = array<i64: 256, 9>}, {pipeline_mode = #tpu.pipeline_mode<synchronous>, transform_indices = @transform_2, window_bounds = array<i64: 1152, 128>}, {pipeline_mode = #tpu.pipeline_mode<synchronous>, transform_indices = @transform_3, window_bounds = array<i64: 1, 128>}, {pipeline_mode = #tpu.pipeline_mode<synchronous>, transform_indices = @transform_4, window_bounds = array<i64: 1, 128>}, {pipeline_mode = #tpu.pipeline_mode<synchronous>, transform_indices = @transform_5, window_bounds = array<i64: 1, 128>}, {transform_indices = @transform_6, window_bounds = array<i64: 1, 16, 16, 128>}, {transform_indices = @transform_7, window_bounds = array<i64: 1, 1, 128>}, {transform_indices = @transform_8, window_bounds = array<i64: 1, 1, 128>}]} {
    %c0 = arith.constant 0 : index
    %c0_0 = arith.constant 0 : index
    %c0_1 = arith.constant 0 : index
    %c0_2 = arith.constant 0 : index
    %0 = vector.load %arg1[%c0, %c0_0, %c0_1, %c0_2] : memref<1x16x16x128xbf16, #tpu.memory_space<vmem>>, vector<1x16x16x128xbf16>
    %1 = vector.shape_cast %0 : vector<1x16x16x128xbf16> to vector<256x128xbf16>
    %2 = arith.extf %1 : vector<256x128xbf16> to vector<256x128xf32>
    %c0_3 = arith.constant 0 : index
    %c0_4 = arith.constant 0 : index
    %3 = vector.load %arg5[%c0_3, %c0_4] : memref<1x128xf32, #tpu.memory_space<vmem>>, vector<1x128xf32>
    %4 = vector.broadcast %3 : vector<1x128xf32> to vector<256x128xf32>
    %5 = arith.mulf %2, %4 : vector<256x128xf32>
    %c0_5 = arith.constant 0 : index
    %c0_6 = arith.constant 0 : index
    %6 = vector.load %arg6[%c0_5, %c0_6] : memref<1x128xf32, #tpu.memory_space<vmem>>, vector<1x128xf32>
    %7 = vector.broadcast %6 : vector<1x128xf32> to vector<256x128xf32>
    %8 = arith.addf %5, %7 : vector<256x128xf32>
    %cst = arith.constant 0.000000e+00 : f32
    %9 = vector.broadcast %cst : f32 to vector<256x128xf32>
    %10 = arith.maximumf %8, %9 : vector<256x128xf32>
    %c0_7 = arith.constant 0 : index
    %c0_8 = arith.constant 0 : index
    %11 = vector.load %arg2[%c0_7, %c0_8] : memref<256x9xf32, #tpu.memory_space<vmem>>, vector<256x9xf32>
    %c17_i32 = arith.constant 17 : i32
    %12 = tpu.dynamic_rotate %10 by %c17_i32 dim 0 : vector<256x128xf32>, i32 -> vector<256x128xf32>
    %13 = vector.extract_strided_slice %11 {offsets = [0, 0], sizes = [256, 1], strides = [1, 1]} : vector<256x9xf32> to vector<256x1xf32>
    %14 = vector.broadcast %13 : vector<256x1xf32> to vector<256x128xf32>
    %15 = arith.mulf %12, %14 : vector<256x128xf32>
    %16 = arith.truncf %15 : vector<256x128xf32> to vector<256x128xbf16>
    %c0_9 = arith.constant 0 : index
    %c0_10 = arith.constant 0 : index
    %17 = vector.load %arg10[%c0_9, %c0_10] : memref<256x1152xbf16, #tpu.memory_space<vmem>>, vector<256x128xbf16>
    tpu.vector_store %arg10[%c0_9, %c0_10], %16 {strides = array<i32>} : memref<256x1152xbf16, #tpu.memory_space<vmem>>, vector<256x128xbf16>,
    %c16_i32 = arith.constant 16 : i32
    %18 = tpu.dynamic_rotate %10 by %c16_i32 dim 0 : vector<256x128xf32>, i32 -> vector<256x128xf32>
    %19 = vector.extract_strided_slice %11 {offsets = [0, 1], sizes = [256, 1], strides = [1, 1]} : vector<256x9xf32> to vector<256x1xf32>
    %20 = vector.broadcast %19 : vector<256x1xf32> to vector<256x128xf32>
    %21 = arith.mulf %18, %20 : vector<256x128xf32>
    %22 = arith.truncf %21 : vector<256x128xf32> to vector<256x128xbf16>
    %c0_11 = arith.constant 0 : index
    %c128 = arith.constant 128 : index
    %23 = vector.load %arg10[%c0_11, %c128] : memref<256x1152xbf16, #tpu.memory_space<vmem>>, vector<256x128xbf16>
    tpu.vector_store %arg10[%c0_11, %c128], %22 {strides = array<i32>} : memref<256x1152xbf16, #tpu.memory_space<vmem>>, vector<256x128xbf16>,
    %c15_i32 = arith.constant 15 : i32
    %24 = tpu.dynamic_rotate %10 by %c15_i32 dim 0 : vector<256x128xf32>, i32 -> vector<256x128xf32>
    %25 = vector.extract_strided_slice %11 {offsets = [0, 2], sizes = [256, 1], strides = [1, 1]} : vector<256x9xf32> to vector<256x1xf32>
    %26 = vector.broadcast %25 : vector<256x1xf32> to vector<256x128xf32>
    %27 = arith.mulf %24, %26 : vector<256x128xf32>
    %28 = arith.truncf %27 : vector<256x128xf32> to vector<256x128xbf16>
    %c0_12 = arith.constant 0 : index
    %c256 = arith.constant 256 : index
    %29 = vector.load %arg10[%c0_12, %c256] : memref<256x1152xbf16, #tpu.memory_space<vmem>>, vector<256x128xbf16>
    tpu.vector_store %arg10[%c0_12, %c256], %28 {strides = array<i32>} : memref<256x1152xbf16, #tpu.memory_space<vmem>>, vector<256x128xbf16>,
    %c1_i32 = arith.constant 1 : i32
    %30 = tpu.dynamic_rotate %10 by %c1_i32 dim 0 : vector<256x128xf32>, i32 -> vector<256x128xf32>
    %31 = vector.extract_strided_slice %11 {offsets = [0, 3], sizes = [256, 1], strides = [1, 1]} : vector<256x9xf32> to vector<256x1xf32>
    %32 = vector.broadcast %31 : vector<256x1xf32> to vector<256x128xf32>
    %33 = arith.mulf %30, %32 : vector<256x128xf32>
    %34 = arith.truncf %33 : vector<256x128xf32> to vector<256x128xbf16>
    %c0_13 = arith.constant 0 : index
    %c384 = arith.constant 384 : index
    %35 = vector.load %arg10[%c0_13, %c384] : memref<256x1152xbf16, #tpu.memory_space<vmem>>, vector<256x128xbf16>
    tpu.vector_store %arg10[%c0_13, %c384], %34 {strides = array<i32>} : memref<256x1152xbf16, #tpu.memory_space<vmem>>, vector<256x128xbf16>,
    %36 = vector.extract_strided_slice %11 {offsets = [0, 4], sizes = [256, 1], strides = [1, 1]} : vector<256x9xf32> to vector<256x1xf32>
    %37 = vector.broadcast %36 : vector<256x1xf32> to vector<256x128xf32>
    %38 = arith.mulf %10, %37 : vector<256x128xf32>
    %39 = arith.truncf %38 : vector<256x128xf32> to vector<256x128xbf16>
    %c0_14 = arith.constant 0 : index
    %c512 = arith.constant 512 : index
    %40 = vector.load %arg10[%c0_14, %c512] : memref<256x1152xbf16, #tpu.memory_space<vmem>>, vector<256x128xbf16>
    tpu.vector_store %arg10[%c0_14, %c512], %39 {strides = array<i32>} : memref<256x1152xbf16, #tpu.memory_space<vmem>>, vector<256x128xbf16>,
    %c255_i32 = arith.constant 255 : i32
    %41 = tpu.dynamic_rotate %10 by %c255_i32 dim 0 : vector<256x128xf32>, i32 -> vector<256x128xf32>
    %42 = vector.extract_strided_slice %11 {offsets = [0, 5], sizes = [256, 1], strides = [1, 1]} : vector<256x9xf32> to vector<256x1xf32>
    %43 = vector.broadcast %42 : vector<256x1xf32> to vector<256x128xf32>
    %44 = arith.mulf %41, %43 : vector<256x128xf32>
    %45 = arith.truncf %44 : vector<256x128xf32> to vector<256x128xbf16>
    %c0_15 = arith.constant 0 : index
    %c640 = arith.constant 640 : index
    %46 = vector.load %arg10[%c0_15, %c640] : memref<256x1152xbf16, #tpu.memory_space<vmem>>, vector<256x128xbf16>
    tpu.vector_store %arg10[%c0_15, %c640], %45 {strides = array<i32>} : memref<256x1152xbf16, #tpu.memory_space<vmem>>, vector<256x128xbf16>,
    %c241_i32 = arith.constant 241 : i32
    %47 = tpu.dynamic_rotate %10 by %c241_i32 dim 0 : vector<256x128xf32>, i32 -> vector<256x128xf32>
    %48 = vector.extract_strided_slice %11 {offsets = [0, 6], sizes = [256, 1], strides = [1, 1]} : vector<256x9xf32> to vector<256x1xf32>
    %49 = vector.broadcast %48 : vector<256x1xf32> to vector<256x128xf32>
    %50 = arith.mulf %47, %49 : vector<256x128xf32>
    %51 = arith.truncf %50 : vector<256x128xf32> to vector<256x128xbf16>
    %c0_16 = arith.constant 0 : index
    %c768 = arith.constant 768 : index
    %52 = vector.load %arg10[%c0_16, %c768] : memref<256x1152xbf16, #tpu.memory_space<vmem>>, vector<256x128xbf16>
    tpu.vector_store %arg10[%c0_16, %c768], %51 {strides = array<i32>} : memref<256x1152xbf16, #tpu.memory_space<vmem>>, vector<256x128xbf16>,
    %c240_i32 = arith.constant 240 : i32
    %53 = tpu.dynamic_rotate %10 by %c240_i32 dim 0 : vector<256x128xf32>, i32 -> vector<256x128xf32>
    %54 = vector.extract_strided_slice %11 {offsets = [0, 7], sizes = [256, 1], strides = [1, 1]} : vector<256x9xf32> to vector<256x1xf32>
    %55 = vector.broadcast %54 : vector<256x1xf32> to vector<256x128xf32>
    %56 = arith.mulf %53, %55 : vector<256x128xf32>
    %57 = arith.truncf %56 : vector<256x128xf32> to vector<256x128xbf16>
    %c0_17 = arith.constant 0 : index
    %c896 = arith.constant 896 : index
    %58 = vector.load %arg10[%c0_17, %c896] : memref<256x1152xbf16, #tpu.memory_space<vmem>>, vector<256x128xbf16>
    tpu.vector_store %arg10[%c0_17, %c896], %57 {strides = array<i32>} : memref<256x1152xbf16, #tpu.memory_space<vmem>>, vector<256x128xbf16>,
    %c239_i32 = arith.constant 239 : i32
    %59 = tpu.dynamic_rotate %10 by %c239_i32 dim 0 : vector<256x128xf32>, i32 -> vector<256x128xf32>
    %60 = vector.extract_strided_slice %11 {offsets = [0, 8], sizes = [256, 1], strides = [1, 1]} : vector<256x9xf32> to vector<256x1xf32>
    %61 = vector.broadcast %60 : vector<256x1xf32> to vector<256x128xf32>
    %62 = arith.mulf %59, %61 : vector<256x128xf32>
    %63 = arith.truncf %62 : vector<256x128xf32> to vector<256x128xbf16>
    %c0_18 = arith.constant 0 : index
    %c1024 = arith.constant 1024 : index
    %64 = vector.load %arg10[%c0_18, %c1024] : memref<256x1152xbf16, #tpu.memory_space<vmem>>, vector<256x128xbf16>
    tpu.vector_store %arg10[%c0_18, %c1024], %63 {strides = array<i32>} : memref<256x1152xbf16, #tpu.memory_space<vmem>>, vector<256x128xbf16>,
    %c0_19 = arith.constant 0 : index
    %c0_20 = arith.constant 0 : index
    %65 = vector.load %arg10[%c0_19, %c0_20] : memref<256x1152xbf16, #tpu.memory_space<vmem>>, vector<256x1152xbf16>
    %c0_21 = arith.constant 0 : index
    %c0_22 = arith.constant 0 : index
    %66 = vector.load %arg3[%c0_21, %c0_22] : memref<1152x128xbf16, #tpu.memory_space<vmem>>, vector<1152x128xbf16>
    %cst_23 = arith.constant dense<0.000000e+00> : vector<256x128xf32>
    %67 = tpu.matmul %65, %66, %cst_23 {dimension_numbers = #tpu.dot_dimension_numbers<[1], [0], [0], [1], [0, 0, 1, 1], [], []>} : vector<256x1152xbf16>, vector<1152x128xbf16>, vector<256x128xf32> -> vector<256x128xf32>
    %c0_24 = arith.constant 0 : index
    %c0_25 = arith.constant 0 : index
    %68 = vector.load %arg4[%c0_24, %c0_25] : memref<1x128xf32, #tpu.memory_space<vmem>>, vector<1x128xf32>
    %69 = vector.broadcast %68 : vector<1x128xf32> to vector<256x128xf32>
    %70 = arith.addf %67, %69 : vector<256x128xf32>
    %71 = vector.shape_cast %70 : vector<256x128xf32> to vector<1x16x16x128xf32>
    %c0_26 = arith.constant 0 : index
    %c0_27 = arith.constant 0 : index
    %c0_28 = arith.constant 0 : index
    %c0_29 = arith.constant 0 : index
    %72 = vector.load %arg7[%c0_26, %c0_27, %c0_28, %c0_29] : memref<1x16x16x128xf32, #tpu.memory_space<vmem>>, vector<1x16x16x128xf32>
    tpu.vector_store %arg7[%c0_26, %c0_27, %c0_28, %c0_29], %71 {strides = array<i32>} : memref<1x16x16x128xf32, #tpu.memory_space<vmem>>, vector<1x16x16x128xf32>,
    %cst_30 = arith.constant dense<0.000000e+00> : vector<128xf32>
    %73 = vector.multi_reduction <add>, %70, %cst_30 [0] : vector<256x128xf32> to vector<128xf32>
    %74 = vector.shape_cast %73 : vector<128xf32> to vector<1x128xf32>
    %75 = vector.shape_cast %74 : vector<1x128xf32> to vector<1x1x128xf32>
    %c0_31 = arith.constant 0 : index
    %c0_32 = arith.constant 0 : index
    %c0_33 = arith.constant 0 : index
    %76 = vector.load %arg8[%c0_31, %c0_32, %c0_33] : memref<1x1x128xf32, #tpu.memory_space<vmem>>, vector<1x1x128xf32>
    tpu.vector_store %arg8[%c0_31, %c0_32, %c0_33], %75 {strides = array<i32>} : memref<1x1x128xf32, #tpu.memory_space<vmem>>, vector<1x1x128xf32>,
    %77 = arith.mulf %70, %70 : vector<256x128xf32>
    %cst_34 = arith.constant dense<0.000000e+00> : vector<128xf32>
    %78 = vector.multi_reduction <add>, %77, %cst_34 [0] : vector<256x128xf32> to vector<128xf32>
    %79 = vector.shape_cast %78 : vector<128xf32> to vector<1x128xf32>
    %80 = vector.shape_cast %79 : vector<1x128xf32> to vector<1x1x128xf32>
    %c0_35 = arith.constant 0 : index
    %c0_36 = arith.constant 0 : index
    %c0_37 = arith.constant 0 : index
    %81 = vector.load %arg9[%c0_35, %c0_36, %c0_37] : memref<1x1x128xf32, #tpu.memory_space<vmem>>, vector<1x1x128xf32>
    tpu.vector_store %arg9[%c0_35, %c0_36, %c0_37], %80 {strides = array<i32>} : memref<1x1x128xf32, #tpu.memory_space<vmem>>, vector<1x1x128xf32>,
    return
  }
  func.func @transform_0(%arg0: i32) -> (i32, i32, i32, i32) {
    %c0_i32 = arith.constant 0 : i32
    %c0_i32_0 = arith.constant 0 : i32
    %c0_i32_1 = arith.constant 0 : i32
    %c0_i32_2 = arith.constant 0 : i32
    return %arg0, %c0_i32, %c0_i32_0, %c0_i32_1 : i32, i32, i32, i32
  }
  func.func @transform_1(%arg0: i32) -> (i32, i32) {
    %c0_i32 = arith.constant 0 : i32
    %c0_i32_0 = arith.constant 0 : i32
    %c0_i32_1 = arith.constant 0 : i32
    return %c0_i32, %c0_i32_0 : i32, i32
  }
  func.func @transform_2(%arg0: i32) -> (i32, i32) {
    %c0_i32 = arith.constant 0 : i32
    %c0_i32_0 = arith.constant 0 : i32
    %c0_i32_1 = arith.constant 0 : i32
    return %c0_i32, %c0_i32_0 : i32, i32
  }
  func.func @transform_3(%arg0: i32) -> (i32, i32) {
    %c0_i32 = arith.constant 0 : i32
    %c0_i32_0 = arith.constant 0 : i32
    %c0_i32_1 = arith.constant 0 : i32
    return %c0_i32, %c0_i32_0 : i32, i32
  }
  func.func @transform_4(%arg0: i32) -> (i32, i32) {
    %c0_i32 = arith.constant 0 : i32
    %c0_i32_0 = arith.constant 0 : i32
    %c0_i32_1 = arith.constant 0 : i32
    return %c0_i32, %c0_i32_0 : i32, i32
  }
  func.func @transform_5(%arg0: i32) -> (i32, i32) {
    %c0_i32 = arith.constant 0 : i32
    %c0_i32_0 = arith.constant 0 : i32
    %c0_i32_1 = arith.constant 0 : i32
    return %c0_i32, %c0_i32_0 : i32, i32
  }
  func.func @transform_6(%arg0: i32) -> (i32, i32, i32, i32) {
    %c0_i32 = arith.constant 0 : i32
    %c0_i32_0 = arith.constant 0 : i32
    %c0_i32_1 = arith.constant 0 : i32
    %c0_i32_2 = arith.constant 0 : i32
    return %arg0, %c0_i32, %c0_i32_0, %c0_i32_1 : i32, i32, i32, i32
  }
  func.func @transform_7(%arg0: i32) -> (i32, i32, i32) {
    %c0_i32 = arith.constant 0 : i32
    %c0_i32_0 = arith.constant 0 : i32
    %c0_i32_1 = arith.constant 0 : i32
    return %arg0, %c0_i32, %c0_i32_0 : i32, i32, i32
  }
  func.func @transform_8(%arg0: i32) -> (i32, i32, i32) {
    %c0_i32 = arith.constant 0 : i32
    %c0_i32_0 = arith.constant 0 : i32
    %c0_i32_1 = arith.constant 0 : i32
    return %arg0, %c0_i32, %c0_i32_0 : i32, i32, i32
  }
}

</mosaic_0001>

<llo_original>
// kernel: conv_block_forward.2
$region0: #{conv_block_forward.2}
  #allocation0 [shape = 'u32[]', space=smem, size = 0x4, offset = 0x4, fixed_abs, tag = 'smem constant byte address 0x4 - core index']
  #allocation1 [shape = 'u32[144,128]{1,0:T(1,128)}', space=vmem, size = 0x12000, scoped, tag = 'internal scratch']
  #allocation2 [shape = 'bf16[256,1152]{1,0:T(16,128)(2,1)}', space=vmem, size = 0x90000, scoped, tag = 'scratch operand']
  %s0 = inlined_call_operand.vmem [shape: f32[2,16,16,128], index: 0, kind: input, shape index: {}]
  %s1 = inlined_call_operand.vmem [shape: f32[256,9], index: 1, kind: input, shape index: {}]
  %s2 = inlined_call_operand.vmem [shape: bf16[1152,128], index: 2, kind: input, shape index: {}]
  %s3 = inlined_call_operand.vmem [shape: f32[1,128], index: 3, kind: input, shape index: {}]
  %s4 = inlined_call_operand.vmem [shape: f32[1,128], index: 4, kind: input, shape index: {}, may-alias: {4,5}]
  %s5 = inlined_call_operand.vmem [shape: f32[1,128], index: 5, kind: input, shape index: {}, may-alias: {4,5}]
  %s6 = inlined_call_operand.vmem [shape: bf16[2,16,16,128], index: 6, kind: output, shape index: {0}]
  %s7 = inlined_call_operand.vmem [shape: f32[2,1,128], index: 7, kind: output, shape index: {1}]
  %s8 = inlined_call_operand.vmem [shape: f32[2,1,128], index: 8, kind: output, shape index: {2}]
  %9 = xla_tuple %s6, %s7, %s8
  %s10 = sld [smem:[#allocation0]]
  $region73: #{conv_block_forward.2} parent=0
    _
  %s12 = ssub.s32 1, %s10
  %s13 = scalar_select 0, %s12, %s10
  loop: start=0, step=1, limit=4
  $region2: #{conv_block_forward.2} parent=0 // loop_pre_header
    _
  $region3: #{conv_block_forward.2} parent=0 // loop_header
    %s15 = sphi 0, %s19
    %p16 = scmp.ge.s32.totalorder %s15, 4
    %s25 = sphi 0, %s27
    %s28 = sphi 0, %s25
    %s29 = sphi 0, %s28
    %s45 = sphi 0, %s29
    %s49 = sphi 0, %s49
    %s51 = sphi 0, %s49
    %s52 = sphi 0, %s51
    %s66 = sphi 0, %s52
    %s70 = sphi 0, %s70
    %s72 = sphi 0, %s70
    %s73 = sphi 0, %s72
    %s87 = sphi 0, %s73
    %s91 = sphi 0, %s91
    %s93 = sphi 0, %s91
    %s94 = sphi 0, %s93
    %s108 = sphi 0, %s94
    %s112 = sphi 0, %s112
    %s114 = sphi 0, %s112
    %s115 = sphi 0, %s114
    %s129 = sphi 0, %s115
    %s133 = sphi 0, %s133
    %s135 = sphi 0, %s133
    %s136 = sphi 0, %s135
    %s150 = sphi 0, %s136
    %s156 = sphi 0, %s158
    %s159 = sphi 0, %s156
    %s160 = sphi 0, %s159
    %s176 = sphi 0, %s160
    %s182 = sphi 0, %s184
    %s185 = sphi 0, %s182
    %s186 = sphi 0, %s185
    %s202 = sphi 0, %s186
    %s208 = sphi 0, %s210
    %s211 = sphi 0, %s208
    %s212 = sphi 0, %s211
    %s228 = sphi 0, %s212
  $region4: #{conv_block_forward.2} parent=0 // loop_header_branch
    %18 = sbr.rel (%p16) target = $region8
  $region5: #{conv_block_forward.2} parent=0 // loop_body
    %s20 = ssub.s32 %s15, 1
    %s21 = ssub.s32 %s15, 2
    %s22 = sadd.s32 %s15, 1
    %s23 = ssub.s32 %s15, %s22
    %p24 = scmp.eq.s32.totalorder %s23, 0
    %s26 = sadd.s32 %s25, 1
    %s27 = scalar_select %p24, %s25, %s26
    %p30 = pneg %p24
    %p31 = scmp.eq.s32.totalorder %s15, 1
    %p32 = por %p30, %p31
    %p33 = scmp.ne.s32.totalorder %s25, %s28
    %p34 = scmp.eq.s32.totalorder %s15, 0
    %p35 = por %p33, %p34
    %p36 = scmp.ne.s32.totalorder %s25, %s28
    %p37 = scmp.eq.s32.totalorder %s20, 1
    %p38 = por %p36, %p37
    %p39 = scmp.ne.s32.totalorder %s28, %s29
    %p40 = scmp.eq.s32.totalorder %s20, 0
    %p41 = por %p39, %p40
    %p42 = scmp.ne.s32.totalorder %s28, %s29
    %p43 = scmp.eq.s32.totalorder %s21, 1
    %p44 = por %p42, %p43
    %p46 = scmp.ne.s32.totalorder %s29, %s45
    %p47 = scmp.eq.s32.totalorder %s21, 0
    %p48 = por %p46, %p47
    %s50 = sadd.s32 %s49, 1
    %p53 = scmp.eq.s32.totalorder %s15, 1
    %p54 = scmp.ne.s32.totalorder %s49, %s51
    %p55 = scmp.eq.s32.totalorder %s15, 0
    %p56 = por %p54, %p55
    %p57 = scmp.ne.s32.totalorder %s49, %s51
    %p58 = scmp.eq.s32.totalorder %s20, 1
    %p59 = por %p57, %p58
    %p60 = scmp.ne.s32.totalorder %s51, %s52
    %p61 = scmp.eq.s32.totalorder %s20, 0
    %p62 = por %p60, %p61
    %p63 = scmp.ne.s32.totalorder %s51, %s52
    %p64 = scmp.eq.s32.totalorder %s21, 1
    %p65 = por %p63, %p64
    %p67 = scmp.ne.s32.totalorder %s52, %s66
    %p68 = scmp.eq.s32.totalorder %s21, 0
    %p69 = por %p67, %p68
    %s71 = sadd.s32 %s70, 1
    %p74 = scmp.eq.s32.totalorder %s15, 1
    %p75 = scmp.ne.s32.totalorder %s70, %s72
    %p76 = scmp.eq.s32.totalorder %s15, 0
    %p77 = por %p75, %p76
    %p78 = scmp.ne.s32.totalorder %s70, %s72
    %p79 = scmp.eq.s32.totalorder %s20, 1
    %p80 = por %p78, %p79
    %p81 = scmp.ne.s32.totalorder %s72, %s73
    %p82 = scmp.eq.s32.totalorder %s20, 0
    %p83 = por %p81, %p82
    %p84 = scmp.ne.s32.totalorder %s72, %s73
    %p85 = scmp.eq.s32.totalorder %s21, 1
    %p86 = por %p84, %p85
    %p88 = scmp.ne.s32.totalorder %s73, %s87
    %p89 = scmp.eq.s32.totalorder %s21, 0
    %p90 = por %p88, %p89
    %s92 = sadd.s32 %s91, 1
    %p95 = scmp.eq.s32.totalorder %s15, 1
    %p96 = scmp.ne.s32.totalorder %s91, %s93
    %p97 = scmp.eq.s32.totalorder %s15, 0
    %p98 = por %p96, %p97
    %p99 = scmp.ne.s32.totalorder %s91, %s93
    %p100 = scmp.eq.s32.totalorder %s20, 1
    %p101 = por %p99, %p100
    %p102 = scmp.ne.s32.totalorder %s93, %s94
    %p103 = scmp.eq.s32.totalorder %s20, 0
    %p104 = por %p102, %p103
    %p105 = scmp.ne.s32.totalorder %s93, %s94
    %p106 = scmp.eq.s32.totalorder %s21, 1
    %p107 = por %p105, %p106
    %p109 = scmp.ne.s32.totalorder %s94, %s108
    %p110 = scmp.eq.s32.totalorder %s21, 0
    %p111 = por %p109, %p110
    %s113 = sadd.s32 %s112, 1
    %p116 = scmp.eq.s32.totalorder %s15, 1
    %p117 = scmp.ne.s32.totalorder %s112, %s114
    %p118 = scmp.eq.s32.totalorder %s15, 0
    %p119 = por %p117, %p118
    %p120 = scmp.ne.s32.totalorder %s112, %s114
    %p121 = scmp.eq.s32.totalorder %s20, 1
    %p122 = por %p120, %p121
    %p123 = scmp.ne.s32.totalorder %s114, %s115
    %p124 = scmp.eq.s32.totalorder %s20, 0
    %p125 = por %p123, %p124
    %p126 = scmp.ne.s32.totalorder %s114, %s115
    %p127 = scmp.eq.s32.totalorder %s21, 1
    %p128 = por %p126, %p127
    %p130 = scmp.ne.s32.totalorder %s115, %s129
    %p131 = scmp.eq.s32.totalorder %s21, 0
    %p132 = por %p130, %p131
    %s134 = sadd.s32 %s133, 1
    %p137 = scmp.eq.s32.totalorder %s15, 1
    %p138 = scmp.ne.s32.totalorder %s133, %s135
    %p139 = scmp.eq.s32.totalorder %s15, 0
    %p140 = por %p138, %p139
    %p141 = scmp.ne.s32.totalorder %s133, %s135
    %p142 = scmp.eq.s32.totalorder %s20, 1
    %p143 = por %p141, %p142
    %p144 = scmp.ne.s32.totalorder %s135, %s136
    %p145 = scmp.eq.s32.totalorder %s20, 0
    %p146 = por %p144, %p145
    %p147 = scmp.ne.s32.totalorder %s135, %s136
    %p148 = scmp.eq.s32.totalorder %s21, 1
    %p149 = por %p147, %p148
    %p151 = scmp.ne.s32.totalorder %s136, %s150
    %p152 = scmp.eq.s32.totalorder %s21, 0
    %p153 = por %p151, %p152
    %s154 = ssub.s32 %s15, %s22
    %p155 = scmp.eq.s32.totalorder %s154, 0
    %s157 = sadd.s32 %s156, 1
    %s158 = scalar_select %p155, %s156, %s157
    %p161 = pneg %p155
    %p162 = scmp.eq.s32.totalorder %s15, 1
    %p163 = por %p161, %p162
    %p164 = scmp.ne.s32.totalorder %s156, %s159
    %p165 = scmp.eq.s32.totalorder %s15, 0
    %p166 = por %p164, %p165
    %p167 = scmp.ne.s32.totalorder %s156, %s159
    %p168 = scmp.eq.s32.totalorder %s20, 1
    %p169 = por %p167, %p168
    %p170 = scmp.ne.s32.totalorder %s159, %s160
    %p171 = scmp.eq.s32.totalorder %s20, 0
    %p172 = por %p170, %p171
    %p173 = scmp.ne.s32.totalorder %s159, %s160
    %p174 = scmp.eq.s32.totalorder %s21, 1
    %p175 = por %p173, %p174
    %p177 = scmp.ne.s32.totalorder %s160, %s176
    %p178 = scmp.eq.s32.totalorder %s21, 0
    %p179 = por %p177, %p178
    %s180 = ssub.s32 %s15, %s22
    %p181 = scmp.eq.s32.totalorder %s180, 0
    %s183 = sadd.s32 %s182, 1
    %s184 = scalar_select %p181, %s182, %s183
    %p187 = pneg %p181
    %p188 = scmp.eq.s32.totalorder %s15, 1
    %p189 = por %p187, %p188
    %p190 = scmp.ne.s32.totalorder %s182, %s185
    %p191 = scmp.eq.s32.totalorder %s15, 0
    %p192 = por %p190, %p191
    %p193 = scmp.ne.s32.totalorder %s182, %s185
    %p194 = scmp.eq.s32.totalorder %s20, 1
    %p195 = por %p193, %p194
    %p196 = scmp.ne.s32.totalorder %s185, %s186
    %p197 = scmp.eq.s32.totalorder %s20, 0
    %p198 = por %p196, %p197
    %p199 = scmp.ne.s32.totalorder %s185, %s186
    %p200 = scmp.eq.s32.totalorder %s21, 1
    %p201 = por %p199, %p200
    %p203 = scmp.ne.s32.totalorder %s186, %s202
    %p204 = scmp.eq.s32.totalorder %s21, 0
    %p205 = por %p203, %p204
    %s206 = ssub.s32 %s15, %s22
    %p207 = scmp.eq.s32.totalorder %s206, 0
    %s209 = sadd.s32 %s208, 1
    %s210 = scalar_select %p207, %s208, %s209
    %p213 = pneg %p207
    %p214 = scmp.eq.s32.totalorder %s15, 1
    %p215 = por %p213, %p214
    %p216 = scmp.ne.s32.totalorder %s208, %s211
    %p217 = scmp.eq.s32.totalorder %s15, 0
    %p218 = por %p216, %p217
    %p219 = scmp.ne.s32.totalorder %s208, %s211
    %p220 = scmp.eq.s32.totalorder %s20, 1
    %p221 = por %p219, %p220
    %p222 = scmp.ne.s32.totalorder %s211, %s212
    %p223 = scmp.eq.s32.totalorder %s20, 0
    %p224 = por %p222, %p223
    %p225 = scmp.ne.s32.totalorder %s211, %s212
    %p226 = scmp.eq.s32.totalorder %s21, 1
    %p227 = por %p225, %p226
    %p229 = scmp.ne.s32.totalorder %s212, %s228
    %p230 = scmp.eq.s32.totalorder %s21, 0
    %p231 = por %p229, %p230
    %p232 = scmp.le.s32.totalorder 1, %s15
    %p233 = scmp.lt.s32.totalorder %s15, 3
    %p234 = pnand %p232, %p233
    %p235 = pneg %p234
    // Predicated region
    $region9: #{conv_block_forward.2} parent=5 // pred_check
      _
    $region10: #{conv_block_forward.2} parent=5 // pred_check_branch
      %237 = sbr.rel (%p234) target = $region12
    $region11: #{conv_block_forward.2} parent=5 // pred_region
      %s238 = ssub.s32 %s15, 1
      // Predicated region
      $region13: #{conv_block_forward.2} parent=11 // pred_check
        %p239 = pneg %p62
      $region14: #{conv_block_forward.2} parent=11 // pred_check_branch
        %241 = sbr.rel (%p239) target = $region16
      $region15: #{conv_block_forward.2} parent=11 // pred_region
        _
      $region16: #{conv_block_forward.2} parent=11 // pred_fallthru
        _
      // Predicated region
      $region17: #{conv_block_forward.2} parent=11 // pred_check
        %p242 = pneg %p83
      $region18: #{conv_block_forward.2} parent=11 // pred_check_branch
        %244 = sbr.rel (%p242) target = $region20
      $region19: #{conv_block_forward.2} parent=11 // pred_region
        _
      $region20: #{conv_block_forward.2} parent=11 // pred_fallthru
        _
      // Predicated region
      $region21: #{conv_block_forward.2} parent=11 // pred_check
        %p245 = pneg %p104
      $region22: #{conv_block_forward.2} parent=11 // pred_check_branch
        %247 = sbr.rel (%p245) target = $region24
      $region23: #{conv_block_forward.2} parent=11 // pred_region
        _
      $region24: #{conv_block_forward.2} parent=11 // pred_fallthru
        _
      // Predicated region
      $region25: #{conv_block_forward.2} parent=11 // pred_check
        %p248 = pneg %p125
      $region26: #{conv_block_forward.2} parent=11 // pred_check_branch
        %250 = sbr.rel (%p248) target = $region28
      $region27: #{conv_block_forward.2} parent=11 // pred_region
        _
      $region28: #{conv_block_forward.2} parent=11 // pred_fallthru
        _
      // Predicated region
      $region29: #{conv_block_forward.2} parent=11 // pred_check
        %p251 = pneg %p146
      $region30: #{conv_block_forward.2} parent=11 // pred_check_branch
        %253 = sbr.rel (%p251) target = $region32
      $region31: #{conv_block_forward.2} parent=11 // pred_region
        _
      $region32: #{conv_block_forward.2} parent=11 // pred_fallthru
        _
    $region12: #{conv_block_forward.2} parent=5 // pred_fallthru
      _
    %p254 = scmp.lt.s32.totalorder %s15, 2
    // Predicated region
    $region33: #{conv_block_forward.2} parent=5 // pred_check
      %p255 = pneg %p254
    $region34: #{conv_block_forward.2} parent=5 // pred_check_branch
      %257 = sbr.rel (%p255) target = $region36
    $region35: #{conv_block_forward.2} parent=5 // pred_region
      // Predicated region
      $region37: #{conv_block_forward.2} parent=35 // pred_check
        %p258 = pneg %p35
      $region38: #{conv_block_forward.2} parent=35 // pred_check_branch
        %260 = sbr.rel (%p258) target = $region40
      $region39: #{conv_block_forward.2} parent=35 // pred_region
        %p261 = scmp.lt.s32.totalorder %s15, 1
        %s262 = scalar_select %p261, %s15, 1
        %s263 = smul.addr %s262, 32
        %s264 = smul.addr %s263, 8
        %s265 = scalar_lea.vmem %s0, %s264
      $region40: #{conv_block_forward.2} parent=35 // pred_fallthru
        _
    $region36: #{conv_block_forward.2} parent=5 // pred_fallthru
      _
    %p266 = scmp.le.s32.totalorder 1, %s15
    %p267 = scmp.lt.s32.totalorder %s15, 3
    %p268 = pnand %p266, %p267
    %p269 = pneg %p268
    // Predicated region
    $region41: #{conv_block_forward.2} parent=5 // pred_check
      _
    $region42: #{conv_block_forward.2} parent=5 // pred_check_branch
      %271 = sbr.rel (%p268) target = $region44
    $region43: #{conv_block_forward.2} parent=5 // pred_region
      %s272 = ssub.s32 %s15, 1
      %p273 = scmp.lt.s32.totalorder %s20, 1
      %s274 = scalar_select %p273, %s20, 1
      %s275 = smul.addr %s274, 32
      %s276 = smul.addr %s275, 8
      %s277 = scalar_lea.vmem %s0, %s276
      %p278 = pneg %p41
      %p279 = pneg %p38
      %p280 = pneg %p62
      %p281 = pneg %p59
      %p282 = pneg %p83
      %p283 = pneg %p80
      %p284 = pneg %p104
      %p285 = pneg %p101
      %p286 = pneg %p125
      %p287 = pneg %p122
      %p288 = pneg %p146
      %p289 = pneg %p143
      %p290 = pneg %p172
      %p291 = pneg %p169
      %p292 = scmp.lt.s32.totalorder %s20, 1
      %s293 = scalar_select %p292, %s20, 1
      %s294 = smul.addr %s293, 32
      %s295 = smul.addr %s294, 4
      %s296 = scalar_lea.vmem %s6, %s295
      %p297 = pneg %p198
      %p298 = pneg %p195
      %p299 = scmp.lt.s32.totalorder %s20, 1
      %s300 = scalar_select %p299, %s20, 1
      %s301 = scalar_lea.vmem %s7, %s300
      %p302 = pneg %p224
      %p303 = pneg %p221
      %p304 = scmp.lt.s32.totalorder %s20, 1
      %s305 = scalar_select %p304, %s20, 1
      %s306 = scalar_lea.vmem %s8, %s305
      %p307 = scmp.lt.s32.totalorder %s20, 1
      %s308 = scalar_select %p307, %s20, 1
      %s309 = smul.addr %s308, 32
      %s310 = smul.addr %s309, 8
      %s311 = scalar_lea.vmem %s0, %s310
      %p312 = scmp.lt.s32.totalorder %s20, 1
      %s313 = scalar_select %p312, %s20, 1
      %s314 = smul.addr %s313, 32
      %s315 = smul.addr %s314, 4
      %s316 = scalar_lea.vmem %s6, %s315
      %p317 = scmp.lt.s32.totalorder %s20, 1
      %s318 = scalar_select %p317, %s20, 1
      %s319 = scalar_lea.vmem %s7, %s318
      %p320 = scmp.lt.s32.totalorder %s20, 1
      %s321 = scalar_select %p320, %s20, 1
      %s322 = scalar_lea.vmem %s8, %s321
      %v324 = vld [vmem:[%s311] sm:$0xff]
      %v325 = vld [vmem:[%s311 + $0x8] sm:$0xff]
      %v326 = vld [vmem:[%s311 + $0x10] sm:$0xff]
      %v327 = vld [vmem:[%s311 + $0x18] sm:$0xff]
      %v328 = vld [vmem:[%s311 + $0x20] sm:$0xff]
      %v329 = vld [vmem:[%s311 + $0x28] sm:$0xff]
      %v330 = vld [vmem:[%s311 + $0x30] sm:$0xff]
      %v331 = vld [vmem:[%s311 + $0x38] sm:$0xff]
      %v332 = vld [vmem:[%s311 + $0x40] sm:$0xff]
      %v333 = vld [vmem:[%s311 + $0x48] sm:$0xff]
      %v334 = vld [vmem:[%s311 + $0x50] sm:$0xff]
      %v335 = vld [vmem:[%s311 + $0x58] sm:$0xff]
      %v336 = vld [vmem:[%s311 + $0x60] sm:$0xff]
      %v337 = vld [vmem:[%s311 + $0x68] sm:$0xff]
      %v338 = vld [vmem:[%s311 + $0x70] sm:$0xff]
      %v339 = vld [vmem:[%s311 + $0x78] sm:$0xff]
      %v340 = vld [vmem:[%s311 + $0x80] sm:$0xff]
      %v341 = vld [vmem:[%s311 + $0x88] sm:$0xff]
      %v342 = vld [vmem:[%s311 + $0x90] sm:$0xff]
      %v343 = vld [vmem:[%s311 + $0x98] sm:$0xff]
      %v344 = vld [vmem:[%s311 + $0xa0] sm:$0xff]
      %v345 = vld [vmem:[%s311 + $0xa8] sm:$0xff]
      %v346 = vld [vmem:[%s311 + $0xb0] sm:$0xff]
      %v347 = vld [vmem:[%s311 + $0xb8] sm:$0xff]
      %v348 = vld [vmem:[%s311 + $0xc0] sm:$0xff]
      %v349 = vld [vmem:[%s311 + $0xc8] sm:$0xff]
      %v350 = vld [vmem:[%s311 + $0xd0] sm:$0xff]
      %v351 = vld [vmem:[%s311 + $0xd8] sm:$0xff]
      %v352 = vld [vmem:[%s311 + $0xe0] sm:$0xff]
      %v353 = vld [vmem:[%s311 + $0xe8] sm:$0xff]
      %v354 = vld [vmem:[%s311 + $0xf0] sm:$0xff]
      %v355 = vld [vmem:[%s311 + $0xf8] sm:$0xff]
      %v356 = vld [vmem:[%s1] sm:$0xff]
      %v357 = vld [vmem:[%s1 + $0x8] sm:$0xff]
      %v358 = vld [vmem:[%s1 + $0x10] sm:$0xff]
      %v359 = vld [vmem:[%s1 + $0x18] sm:$0xff]
      %v360 = vld [vmem:[%s1 + $0x20] sm:$0xff]
      %v361 = vld [vmem:[%s1 + $0x28] sm:$0xff]
      %v362 = vld [vmem:[%s1 + $0x30] sm:$0xff]
      %v363 = vld [vmem:[%s1 + $0x38] sm:$0xff]
      %v364 = vld [vmem:[%s1 + $0x40] sm:$0xff]
      %v365 = vld [vmem:[%s1 + $0x48] sm:$0xff]
      %v366 = vld [vmem:[%s1 + $0x50] sm:$0xff]
      %v367 = vld [vmem:[%s1 + $0x58] sm:$0xff]
      %v368 = vld [vmem:[%s1 + $0x60] sm:$0xff]
      %v369 = vld [vmem:[%s1 + $0x68] sm:$0xff]
      %v370 = vld [vmem:[%s1 + $0x70] sm:$0xff]
      %v371 = vld [vmem:[%s1 + $0x78] sm:$0xff]
      %v372 = vld [vmem:[%s1 + $0x80] sm:$0xff]
      %v373 = vld [vmem:[%s1 + $0x88] sm:$0xff]
      %v374 = vld [vmem:[%s1 + $0x90] sm:$0xff]
      %v375 = vld [vmem:[%s1 + $0x98] sm:$0xff]
      %v376 = vld [vmem:[%s1 + $0xa0] sm:$0xff]
      %v377 = vld [vmem:[%s1 + $0xa8] sm:$0xff]
      %v378 = vld [vmem:[%s1 + $0xb0] sm:$0xff]
      %v379 = vld [vmem:[%s1 + $0xb8] sm:$0xff]
      %v380 = vld [vmem:[%s1 + $0xc0] sm:$0xff]
      %v381 = vld [vmem:[%s1 + $0xc8] sm:$0xff]
      %v382 = vld [vmem:[%s1 + $0xd0] sm:$0xff]
      %v383 = vld [vmem:[%s1 + $0xd8] sm:$0xff]
      %v384 = vld [vmem:[%s1 + $0xe0] sm:$0xff]
      %v385 = vld [vmem:[%s1 + $0xe8] sm:$0xff]
      %v386 = vld [vmem:[%s1 + $0xf0] sm:$0xff]
      %v387 = vld [vmem:[%s1 + $0xf8] sm:$0xff]
      %v388 = vrot.slane %v324, 7
      %v389 = vrot.slane %v325, 7
      %v390 = vrot.slane %v326, 7
      %v391 = vrot.slane %v327, 7
      %v392 = vrot.slane %v328, 7
      %v393 = vrot.slane %v329, 7
      %v394 = vrot.slane %v330, 7
      %v395 = vrot.slane %v331, 7
      %v396 = vrot.slane %v332, 7
      %v397 = vrot.slane %v333, 7
      %v398 = vrot.slane %v334, 7
      %v399 = vrot.slane %v335, 7
      %v400 = vrot.slane %v336, 7
      %v401 = vrot.slane %v337, 7
      %v402 = vrot.slane %v338, 7
      %v403 = vrot.slane %v339, 7
      %v404 = vrot.slane %v340, 7
      %v405 = vrot.slane %v341, 7
      %v406 = vrot.slane %v342, 7
      %v407 = vrot.slane %v343, 7
      %v408 = vrot.slane %v344, 7
      %v409 = vrot.slane %v345, 7
      %v410 = vrot.slane %v346, 7
      %v411 = vrot.slane %v347, 7
      %v412 = vrot.slane %v348, 7
      %v413 = vrot.slane %v349, 7
      %v414 = vrot.slane %v350, 7
      %v415 = vrot.slane %v351, 7
      %v416 = vrot.slane %v352, 7
      %v417 = vrot.slane %v353, 7
      %v418 = vrot.slane %v354, 7
      %v419 = vrot.slane %v355, 7
      %v420 = vlaneseq
      %v421 = vshrl.u32 %v420, 7
      %vm422 = vcmp.lt.s32.totalorder %v421, 1
      %v423 = vsel %vm422, %v418, %v419
      %v424 = vsel %vm422, %v417, %v418
      %v425 = vsel %vm422, %v416, %v417
      %v426 = vsel %vm422, %v415, %v416
      %v427 = vsel %vm422, %v414, %v415
      %v428 = vsel %vm422, %v413, %v414
      %v429 = vsel %vm422, %v412, %v413
      %v430 = vsel %vm422, %v411, %v412
      %v431 = vsel %vm422, %v410, %v411
      %v432 = vsel %vm422, %v409, %v410
      %v433 = vsel %vm422, %v408, %v409
      %v434 = vsel %vm422, %v407, %v408
      %v435 = vsel %vm422, %v406, %v407
      %v436 = vsel %vm422, %v405, %v406
      %v437 = vsel %vm422, %v404, %v405
      %v438 = vsel %vm422, %v403, %v404
      %v439 = vsel %vm422, %v402, %v403
      %v440 = vsel %vm422, %v401, %v402
      %v441 = vsel %vm422, %v400, %v401
      %v442 = vsel %vm422, %v399, %v400
      %v443 = vsel %vm422, %v398, %v399
      %v444 = vsel %vm422, %v397, %v398
      %v445 = vsel %vm422, %v396, %v397
      %v446 = vsel %vm422, %v395, %v396
      %v447 = vsel %vm422, %v394, %v395
      %v448 = vsel %vm422, %v393, %v394
      %v449 = vsel %vm422, %v392, %v393
      %v450 = vsel %vm422, %v391, %v392
      %v451 = vsel %vm422, %v390, %v391
      %v452 = vsel %vm422, %v389, %v390
      %v453 = vsel %vm422, %v388, %v389
      %v454 = vsel %vm422, %v419, %v388
      %456 = vset.pattern.permute.xlu0 0
      %457 = vperm.xlu0 %456, %v356
      %v458 = vpop.permute.xlu0 %457
      %461 = vset.pattern.permute.xlu0 0
      %462 = vperm.xlu0 %461, %v357
      %v463 = vpop.permute.xlu0 %462
      %466 = vset.pattern.permute.xlu0 0
      %467 = vperm.xlu0 %466, %v358
      %v468 = vpop.permute.xlu0 %467
      %471 = vset.pattern.permute.xlu0 0
      %472 = vperm.xlu0 %471, %v359
      %v473 = vpop.permute.xlu0 %472
      %476 = vset.pattern.permute.xlu0 0
      %477 = vperm.xlu0 %476, %v360
      %v478 = vpop.permute.xlu0 %477
      %481 = vset.pattern.permute.xlu0 0
      %482 = vperm.xlu0 %481, %v361
      %v483 = vpop.permute.xlu0 %482
      %486 = vset.pattern.permute.xlu0 0
      %487 = vperm.xlu0 %486, %v362
      %v488 = vpop.permute.xlu0 %487
      %491 = vset.pattern.permute.xlu0 0
      %492 = vperm.xlu0 %491, %v363
      %v493 = vpop.permute.xlu0 %492
      %496 = vset.pattern.permute.xlu0 0
      %497 = vperm.xlu0 %496, %v364
      %v498 = vpop.permute.xlu0 %497
      %501 = vset.pattern.permute.xlu0 0
      %502 = vperm.xlu0 %501, %v365
      %v503 = vpop.permute.xlu0 %502
      %506 = vset.pattern.permute.xlu0 0
      %507 = vperm.xlu0 %506, %v366
      %v508 = vpop.permute.xlu0 %507
      %511 = vset.pattern.permute.xlu0 0
      %512 = vperm.xlu0 %511, %v367
      %v513 = vpop.permute.xlu0 %512
      %516 = vset.pattern.permute.xlu0 0
      %517 = vperm.xlu0 %516, %v368
      %v518 = vpop.permute.xlu0 %517
      %521 = vset.pattern.permute.xlu0 0
      %522 = vperm.xlu0 %521, %v369
      %v523 = vpop.permute.xlu0 %522
      %526 = vset.pattern.permute.xlu0 0
      %527 = vperm.xlu0 %526, %v370
      %v528 = vpop.permute.xlu0 %527
      %531 = vset.pattern.permute.xlu0 0
      %532 = vperm.xlu0 %531, %v371
      %v533 = vpop.permute.xlu0 %532
      %536 = vset.pattern.permute.xlu0 0
      %537 = vperm.xlu0 %536, %v372
      %v538 = vpop.permute.xlu0 %537
      %541 = vset.pattern.permute.xlu0 0
      %542 = vperm.xlu0 %541, %v373
      %v543 = vpop.permute.xlu0 %542
      %546 = vset.pattern.permute.xlu0 0
      %547 = vperm.xlu0 %546, %v374
      %v548 = vpop.permute.xlu0 %547
      %551 = vset.pattern.permute.xlu0 0
      %552 = vperm.xlu0 %551, %v375
      %v553 = vpop.permute.xlu0 %552
      %556 = vset.pattern.permute.xlu0 0
      %557 = vperm.xlu0 %556, %v376
      %v558 = vpop.permute.xlu0 %557
      %561 = vset.pattern.permute.xlu0 0
      %562 = vperm.xlu0 %561, %v377
      %v563 = vpop.permute.xlu0 %562
      %566 = vset.pattern.permute.xlu0 0
      %567 = vperm.xlu0 %566, %v378
      %v568 = vpop.permute.xlu0 %567
      %571 = vset.pattern.permute.xlu0 0
      %572 = vperm.xlu0 %571, %v379
      %v573 = vpop.permute.xlu0 %572
      %576 = vset.pattern.permute.xlu0 0
      %577 = vperm.xlu0 %576, %v380
      %v578 = vpop.permute.xlu0 %577
      %581 = vset.pattern.permute.xlu0 0
      %582 = vperm.xlu0 %581, %v381
      %v583 = vpop.permute.xlu0 %582
      %586 = vset.pattern.permute.xlu0 0
      %587 = vperm.xlu0 %586, %v382
      %v588 = vpop.permute.xlu0 %587
      %591 = vset.pattern.permute.xlu0 0
      %592 = vperm.xlu0 %591, %v383
      %v593 = vpop.permute.xlu0 %592
      %596 = vset.pattern.permute.xlu0 0
      %597 = vperm.xlu0 %596, %v384
      %v598 = vpop.permute.xlu0 %597
      %601 = vset.pattern.permute.xlu0 0
      %602 = vperm.xlu0 %601, %v385
      %v603 = vpop.permute.xlu0 %602
      %606 = vset.pattern.permute.xlu0 0
      %607 = vperm.xlu0 %606, %v386
      %v608 = vpop.permute.xlu0 %607
      %611 = vset.pattern.permute.xlu0 0
      %612 = vperm.xlu0 %611, %v387
      %v613 = vpop.permute.xlu0 %612
      %v615 = vmul.f32 %v424, %v458
      %v616 = vmul.f32 %v423, %v463
      %v617 = vmul.f32 %v454, %v468
      %v618 = vmul.f32 %v453, %v473
      %v619 = vmul.f32 %v452, %v478
      %v620 = vmul.f32 %v451, %v483
      %v621 = vmul.f32 %v450, %v488
      %v622 = vmul.f32 %v449, %v493
      %v623 = vmul.f32 %v448, %v498
      %v624 = vmul.f32 %v447, %v503
      %v625 = vmul.f32 %v446, %v508
      %v626 = vmul.f32 %v445, %v513
      %v627 = vmul.f32 %v444, %v518
      %v628 = vmul.f32 %v443, %v523
      %v629 = vmul.f32 %v442, %v528
      %v630 = vmul.f32 %v441, %v533
      %v631 = vmul.f32 %v440, %v538
      %v632 = vmul.f32 %v439, %v543
      %v633 = vmul.f32 %v438, %v548
      %v634 = vmul.f32 %v437, %v553
      %v635 = vmul.f32 %v436, %v558
      %v636 = vmul.f32 %v435, %v563
      %v637 = vmul.f32 %v434, %v568
      %v638 = vmul.f32 %v433, %v573
      %v639 = vmul.f32 %v432, %v578
      %v640 = vmul.f32 %v431, %v583
      %v641 = vmul.f32 %v430, %v588
      %v642 = vmul.f32 %v429, %v593
      %v643 = vmul.f32 %v428, %v598
      %v644 = vmul.f32 %v427, %v603
      %v645 = vmul.f32 %v426, %v608
      %v646 = vmul.f32 %v425, %v613
      %v647 = vpack.c.bf16 %v616, %v615
      %v648 = vpack.c.bf16 %v618, %v617
      %v649 = vpack.c.bf16 %v620, %v619
      %v650 = vpack.c.bf16 %v622, %v621
      %v651 = vpack.c.bf16 %v624, %v623
      %v652 = vpack.c.bf16 %v626, %v625
      %v653 = vpack.c.bf16 %v628, %v627
      %v654 = vpack.c.bf16 %v630, %v629
      %v655 = vpack.c.bf16 %v632, %v631
      %v656 = vpack.c.bf16 %v634, %v633
      %v657 = vpack.c.bf16 %v636, %v635
      %v658 = vpack.c.bf16 %v638, %v637
      %v659 = vpack.c.bf16 %v640, %v639
      %v660 = vpack.c.bf16 %v642, %v641
      %v661 = vpack.c.bf16 %v644, %v643
      %v662 = vpack.c.bf16 %v646, %v645
      %663 = vst [vmem:[#allocation2] sm:$0xff] %v647
      %664 = vst [vmem:[#allocation2 + $0x48] sm:$0xff] %v648
      %665 = vst [vmem:[#allocation2 + $0x90] sm:$0xff] %v649
      %666 = vst [vmem:[#allocation2 + $0xd8] sm:$0xff] %v650
      %667 = vst [vmem:[#allocation2 + $0x120] sm:$0xff] %v651
      %668 = vst [vmem:[#allocation2 + $0x168] sm:$0xff] %v652
      %669 = vst [vmem:[#allocation2 + $0x1b0] sm:$0xff] %v653
      %670 = vst [vmem:[#allocation2 + $0x1f8] sm:$0xff] %v654
      %671 = vst [vmem:[#allocation2 + $0x240] sm:$0xff] %v655
      %672 = vst [vmem:[#allocation2 + $0x288] sm:$0xff] %v656
      %673 = vst [vmem:[#allocation2 + $0x2d0] sm:$0xff] %v657
      %674 = vst [vmem:[#allocation2 + $0x318] sm:$0xff] %v658
      %675 = vst [vmem:[#allocation2 + $0x360] sm:$0xff] %v659
      %676 = vst [vmem:[#allocation2 + $0x3a8] sm:$0xff] %v660
      %677 = vst [vmem:[#allocation2 + $0x3f0] sm:$0xff] %v661
      %678 = vst [vmem:[#allocation2 + $0x438] sm:$0xff] %v662
      %679 = vset.pattern.permute.xlu0 1
      %680 = vperm.xlu0 %679, %v356
      %v681 = vpop.permute.xlu0 %680
      %683 = vset.pattern.permute.xlu0 1
      %684 = vperm.xlu0 %683, %v357
      %v685 = vpop.permute.xlu0 %684
      %687 = vset.pattern.permute.xlu0 1
      %688 = vperm.xlu0 %687, %v358
      %v689 = vpop.permute.xlu0 %688
      %691 = vset.pattern.permute.xlu0 1
      %692 = vperm.xlu0 %691, %v359
      %v693 = vpop.permute.xlu0 %692
      %695 = vset.pattern.permute.xlu0 1
      %696 = vperm.xlu0 %695, %v360
      %v697 = vpop.permute.xlu0 %696
      %699 = vset.pattern.permute.xlu0 1
      %700 = vperm.xlu0 %699, %v361
      %v701 = vpop.permute.xlu0 %700
      %703 = vset.pattern.permute.xlu0 1
      %704 = vperm.xlu0 %703, %v362
      %v705 = vpop.permute.xlu0 %704
      %707 = vset.pattern.permute.xlu0 1
      %708 = vperm.xlu0 %707, %v363
      %v709 = vpop.permute.xlu0 %708
      %711 = vset.pattern.permute.xlu0 1
      %712 = vperm.xlu0 %711, %v364
      %v713 = vpop.permute.xlu0 %712
      %715 = vset.pattern.permute.xlu0 1
      %716 = vperm.xlu0 %715, %v365
      %v717 = vpop.permute.xlu0 %716
      %719 = vset.pattern.permute.xlu0 1
      %720 = vperm.xlu0 %719, %v366
      %v721 = vpop.permute.xlu0 %720
      %723 = vset.pattern.permute.xlu0 1
      %724 = vperm.xlu0 %723, %v367
      %v725 = vpop.permute.xlu0 %724
      %727 = vset.pattern.permute.xlu0 1
      %728 = vperm.xlu0 %727, %v368
      %v729 = vpop.permute.xlu0 %728
      %731 = vset.pattern.permute.xlu0 1
      %732 = vperm.xlu0 %731, %v369
      %v733 = vpop.permute.xlu0 %732
      %735 = vset.pattern.permute.xlu0 1
      %736 = vperm.xlu0 %735, %v370
      %v737 = vpop.permute.xlu0 %736
      %739 = vset.pattern.permute.xlu0 1
      %740 = vperm.xlu0 %739, %v371
      %v741 = vpop.permute.xlu0 %740
      %743 = vset.pattern.permute.xlu0 1
      %744 = vperm.xlu0 %743, %v372
      %v745 = vpop.permute.xlu0 %744
      %747 = vset.pattern.permute.xlu0 1
      %748 = vperm.xlu0 %747, %v373
      %v749 = vpop.permute.xlu0 %748
      %751 = vset.pattern.permute.xlu0 1
      %752 = vperm.xlu0 %751, %v374
      %v753 = vpop.permute.xlu0 %752
      %755 = vset.pattern.permute.xlu0 1
      %756 = vperm.xlu0 %755, %v375
      %v757 = vpop.permute.xlu0 %756
      %759 = vset.pattern.permute.xlu0 1
      %760 = vperm.xlu0 %759, %v376
      %v761 = vpop.permute.xlu0 %760
      %763 = vset.pattern.permute.xlu0 1
      %764 = vperm.xlu0 %763, %v377
      %v765 = vpop.permute.xlu0 %764
      %767 = vset.pattern.permute.xlu0 1
      %768 = vperm.xlu0 %767, %v378
      %v769 = vpop.permute.xlu0 %768
      %771 = vset.pattern.permute.xlu0 1
      %772 = vperm.xlu0 %771, %v379
      %v773 = vpop.permute.xlu0 %772
      %775 = vset.pattern.permute.xlu0 1
      %776 = vperm.xlu0 %775, %v380
      %v777 = vpop.permute.xlu0 %776
      %779 = vset.pattern.permute.xlu0 1
      %780 = vperm.xlu0 %779, %v381
      %v781 = vpop.permute.xlu0 %780
      %783 = vset.pattern.permute.xlu0 1
      %784 = vperm.xlu0 %783, %v382
      %v785 = vpop.permute.xlu0 %784
      %787 = vset.pattern.permute.xlu0 1
      %788 = vperm.xlu0 %787, %v383
      %v789 = vpop.permute.xlu0 %788
      %791 = vset.pattern.permute.xlu0 1
      %792 = vperm.xlu0 %791, %v384
      %v793 = vpop.permute.xlu0 %792
      %795 = vset.pattern.permute.xlu0 1
      %796 = vperm.xlu0 %795, %v385
      %v797 = vpop.permute.xlu0 %796
      %799 = vset.pattern.permute.xlu0 1
      %800 = vperm.xlu0 %799, %v386
      %v801 = vpop.permute.xlu0 %800
      %803 = vset.pattern.permute.xlu0 1
      %804 = vperm.xlu0 %803, %v387
      %v805 = vpop.permute.xlu0 %804
      %v807 = vmul.f32 %v354, %v681
      %v808 = vmul.f32 %v355, %v685
      %v809 = vmul.f32 %v324, %v689
      %v810 = vmul.f32 %v325, %v693
      %v811 = vmul.f32 %v326, %v697
      %v812 = vmul.f32 %v327, %v701
      %v813 = vmul.f32 %v328, %v705
      %v814 = vmul.f32 %v329, %v709
      %v815 = vmul.f32 %v330, %v713
      %v816 = vmul.f32 %v331, %v717
      %v817 = vmul.f32 %v332, %v721
      %v818 = vmul.f32 %v333, %v725
      %v819 = vmul.f32 %v334, %v729
      %v820 = vmul.f32 %v335, %v733
      %v821 = vmul.f32 %v336, %v737
      %v822 = vmul.f32 %v337, %v741
      %v823 = vmul.f32 %v338, %v745
      %v824 = vmul.f32 %v339, %v749
      %v825 = vmul.f32 %v340, %v753
      %v826 = vmul.f32 %v341, %v757
      %v827 = vmul.f32 %v342, %v761
      %v828 = vmul.f32 %v343, %v765
      %v829 = vmul.f32 %v344, %v769
      %v830 = vmul.f32 %v345, %v773
      %v831 = vmul.f32 %v346, %v777
      %v832 = vmul.f32 %v347, %v781
      %v833 = vmul.f32 %v348, %v785
      %v834 = vmul.f32 %v349, %v789
      %v835 = vmul.f32 %v350, %v793
      %v836 = vmul.f32 %v351, %v797
      %v837 = vmul.f32 %v352, %v801
      %v838 = vmul.f32 %v353, %v805
      %v839 = vpack.c.bf16 %v808, %v807
      %v840 = vpack.c.bf16 %v810, %v809
      %v841 = vpack.c.bf16 %v812, %v811
      %v842 = vpack.c.bf16 %v814, %v813
      %v843 = vpack.c.bf16 %v816, %v815
      %v844 = vpack.c.bf16 %v818, %v817
      %v845 = vpack.c.bf16 %v820, %v819
      %v846 = vpack.c.bf16 %v822, %v821
      %v847 = vpack.c.bf16 %v824, %v823
      %v848 = vpack.c.bf16 %v826, %v825
      %v849 = vpack.c.bf16 %v828, %v827
      %v850 = vpack.c.bf16 %v830, %v829
      %v851 = vpack.c.bf16 %v832, %v831
      %v852 = vpack.c.bf16 %v834, %v833
      %v853 = vpack.c.bf16 %v836, %v835
      %v854 = vpack.c.bf16 %v838, %v837
      %855 = vst [vmem:[#allocation2 + $0x8] sm:$0xff] %v839
      %856 = vst [vmem:[#allocation2 + $0x50] sm:$0xff] %v840
      %857 = vst [vmem:[#allocation2 + $0x98] sm:$0xff] %v841
      %858 = vst [vmem:[#allocation2 + $0xe0] sm:$0xff] %v842
      %859 = vst [vmem:[#allocation2 + $0x128] sm:$0xff] %v843
      %860 = vst [vmem:[#allocation2 + $0x170] sm:$0xff] %v844
      %861 = vst [vmem:[#allocation2 + $0x1b8] sm:$0xff] %v845
      %862 = vst [vmem:[#allocation2 + $0x200] sm:$0xff] %v846
      %863 = vst [vmem:[#allocation2 + $0x248] sm:$0xff] %v847
      %864 = vst [vmem:[#allocation2 + $0x290] sm:$0xff] %v848
      %865 = vst [vmem:[#allocation2 + $0x2d8] sm:$0xff] %v849
      %866 = vst [vmem:[#allocation2 + $0x320] sm:$0xff] %v850
      %867 = vst [vmem:[#allocation2 + $0x368] sm:$0xff] %v851
      %868 = vst [vmem:[#allocation2 + $0x3b0] sm:$0xff] %v852
      %869 = vst [vmem:[#allocation2 + $0x3f8] sm:$0xff] %v853
      %870 = vst [vmem:[#allocation2 + $0x440] sm:$0xff] %v854
      %v871 = vrot.slane %v324, 1
      %v872 = vrot.slane %v325, 1
      %v873 = vrot.slane %v326, 1
      %v874 = vrot.slane %v327, 1
      %v875 = vrot.slane %v328, 1
      %v876 = vrot.slane %v329, 1
      %v877 = vrot.slane %v330, 1
      %v878 = vrot.slane %v331, 1
      %v879 = vrot.slane %v332, 1
      %v880 = vrot.slane %v333, 1
      %v881 = vrot.slane %v334, 1
      %v882 = vrot.slane %v335, 1
      %v883 = vrot.slane %v336, 1
      %v884 = vrot.slane %v337, 1
      %v885 = vrot.slane %v338, 1
      %v886 = vrot.slane %v339, 1
      %v887 = vrot.slane %v340, 1
      %v888 = vrot.slane %v341, 1
      %v889 = vrot.slane %v342, 1
      %v890 = vrot.slane %v343, 1
      %v891 = vrot.slane %v344, 1
      %v892 = vrot.slane %v345, 1
      %v893 = vrot.slane %v346, 1
      %v894 = vrot.slane %v347, 1
      %v895 = vrot.slane %v348, 1
      %v896 = vrot.slane %v349, 1
      %v897 = vrot.slane %v350, 1
      %v898 = vrot.slane %v351, 1
      %v899 = vrot.slane %v352, 1
      %v900 = vrot.slane %v353, 1
      %v901 = vrot.slane %v354, 1
      %v902 = vrot.slane %v355, 1
      %vm903 = vcmp.lt.s32.totalorder %v421, 7
      %v904 = vsel %vm903, %v901, %v902
      %v905 = vsel %vm903, %v900, %v901
      %v906 = vsel %vm903, %v899, %v900
      %v907 = vsel %vm903, %v898, %v899
      %v908 = vsel %vm903, %v897, %v898
      %v909 = vsel %vm903, %v896, %v897
      %v910 = vsel %vm903, %v895, %v896
      %v911 = vsel %vm903, %v894, %v895
      %v912 = vsel %vm903, %v893, %v894
      %v913 = vsel %vm903, %v892, %v893
      %v914 = vsel %vm903, %v891, %v892
      %v915 = vsel %vm903, %v890, %v891
      %v916 = vsel %vm903, %v889, %v890
      %v917 = vsel %vm903, %v888, %v889
      %v918 = vsel %vm903, %v887, %v888
      %v919 = vsel %vm903, %v886, %v887
      %v920 = vsel %vm903, %v885, %v886
      %v921 = vsel %vm903, %v884, %v885
      %v922 = vsel %vm903, %v883, %v884
      %v923 = vsel %vm903, %v882, %v883
      %v924 = vsel %vm903, %v881, %v882
      %v925 = vsel %vm903, %v880, %v881
      %v926 = vsel %vm903, %v879, %v880
      %v927 = vsel %vm903, %v878, %v879
      %v928 = vsel %vm903, %v877, %v878
      %v929 = vsel %vm903, %v876, %v877
      %v930 = vsel %vm903, %v875, %v876
      %v931 = vsel %vm903, %v874, %v875
      %v932 = vsel %vm903, %v873, %v874
      %v933 = vsel %vm903, %v872, %v873
      %v934 = vsel %vm903, %v871, %v872
      %v935 = vsel %vm903, %v902, %v871
      %936 = vset.pattern.permute.xlu0 2
      %937 = vperm.xlu0 %936, %v356
      %v938 = vpop.permute.xlu0 %937
      %940 = vset.pattern.permute.xlu0 2
      %941 = vperm.xlu0 %940, %v357
      %v942 = vpop.permute.xlu0 %941
      %944 = vset.pattern.permute.xlu0 2
      %945 = vperm.xlu0 %944, %v358
      %v946 = vpop.permute.xlu0 %945
      %948 = vset.pattern.permute.xlu0 2
      %949 = vperm.xlu0 %948, %v359
      %v950 = vpop.permute.xlu0 %949
      %952 = vset.pattern.permute.xlu0 2
      %953 = vperm.xlu0 %952, %v360
      %v954 = vpop.permute.xlu0 %953
      %956 = vset.pattern.permute.xlu0 2
      %957 = vperm.xlu0 %956, %v361
      %v958 = vpop.permute.xlu0 %957
      %960 = vset.pattern.permute.xlu0 2
      %961 = vperm.xlu0 %960, %v362
      %v962 = vpop.permute.xlu0 %961
      %964 = vset.pattern.permute.xlu0 2
      %965 = vperm.xlu0 %964, %v363
      %v966 = vpop.permute.xlu0 %965
      %968 = vset.pattern.permute.xlu0 2
      %969 = vperm.xlu0 %968, %v364
      %v970 = vpop.permute.xlu0 %969
      %972 = vset.pattern.permute.xlu0 2
      %973 = vperm.xlu0 %972, %v365
      %v974 = vpop.permute.xlu0 %973
      %976 = vset.pattern.permute.xlu0 2
      %977 = vperm.xlu0 %976, %v366
      %v978 = vpop.permute.xlu0 %977
      %980 = vset.pattern.permute.xlu0 2
      %981 = vperm.xlu0 %980, %v367
      %v982 = vpop.permute.xlu0 %981
      %984 = vset.pattern.permute.xlu0 2
      %985 = vperm.xlu0 %984, %v368
      %v986 = vpop.permute.xlu0 %985
      %988 = vset.pattern.permute.xlu0 2
      %989 = vperm.xlu0 %988, %v369
      %v990 = vpop.permute.xlu0 %989
      %992 = vset.pattern.permute.xlu0 2
      %993 = vperm.xlu0 %992, %v370
      %v994 = vpop.permute.xlu0 %993
      %996 = vset.pattern.permute.xlu0 2
      %997 = vperm.xlu0 %996, %v371
      %v998 = vpop.permute.xlu0 %997
      %1000 = vset.pattern.permute.xlu0 2
      %1001 = vperm.xlu0 %1000, %v372
      %v1002 = vpop.permute.xlu0 %1001
      %1004 = vset.pattern.permute.xlu0 2
      %1005 = vperm.xlu0 %1004, %v373
      %v1006 = vpop.permute.xlu0 %1005
      %1008 = vset.pattern.permute.xlu0 2
      %1009 = vperm.xlu0 %1008, %v374
      %v1010 = vpop.permute.xlu0 %1009
      %1012 = vset.pattern.permute.xlu0 2
      %1013 = vperm.xlu0 %1012, %v375
      %v1014 = vpop.permute.xlu0 %1013
      %1016 = vset.pattern.permute.xlu0 2
      %1017 = vperm.xlu0 %1016, %v376
      %v1018 = vpop.permute.xlu0 %1017
      %1020 = vset.pattern.permute.xlu0 2
      %1021 = vperm.xlu0 %1020, %v377
      %v1022 = vpop.permute.xlu0 %1021
      %1024 = vset.pattern.permute.xlu0 2
      %1025 = vperm.xlu0 %1024, %v378
      %v1026 = vpop.permute.xlu0 %1025
      %1028 = vset.pattern.permute.xlu0 2
      %1029 = vperm.xlu0 %1028, %v379
      %v1030 = vpop.permute.xlu0 %1029
      %1032 = vset.pattern.permute.xlu0 2
      %1033 = vperm.xlu0 %1032, %v380
      %v1034 = vpop.permute.xlu0 %1033
      %1036 = vset.pattern.permute.xlu0 2
      %1037 = vperm.xlu0 %1036, %v381
      %v1038 = vpop.permute.xlu0 %1037
      %1040 = vset.pattern.permute.xlu0 2
      %1041 = vperm.xlu0 %1040, %v382
      %v1042 = vpop.permute.xlu0 %1041
      %1044 = vset.pattern.permute.xlu0 2
      %1045 = vperm.xlu0 %1044, %v383
      %v1046 = vpop.permute.xlu0 %1045
      %1048 = vset.pattern.permute.xlu0 2
      %1049 = vperm.xlu0 %1048, %v384
      %v1050 = vpop.permute.xlu0 %1049
      %1052 = vset.pattern.permute.xlu0 2
      %1053 = vperm.xlu0 %1052, %v385
      %v1054 = vpop.permute.xlu0 %1053
      %1056 = vset.pattern.permute.xlu0 2
      %1057 = vperm.xlu0 %1056, %v386
      %v1058 = vpop.permute.xlu0 %1057
      %1060 = vset.pattern.permute.xlu0 2
      %1061 = vperm.xlu0 %1060, %v387
      %v1062 = vpop.permute.xlu0 %1061
      %v1064 = vmul.f32 %v904, %v938
      %v1065 = vmul.f32 %v935, %v942
      %v1066 = vmul.f32 %v934, %v946
      %v1067 = vmul.f32 %v933, %v950
      %v1068 = vmul.f32 %v932, %v954
      %v1069 = vmul.f32 %v931, %v958
      %v1070 = vmul.f32 %v930, %v962
      %v1071 = vmul.f32 %v929, %v966
      %v1072 = vmul.f32 %v928, %v970
      %v1073 = vmul.f32 %v927, %v974
      %v1074 = vmul.f32 %v926, %v978
      %v1075 = vmul.f32 %v925, %v982
      %v1076 = vmul.f32 %v924, %v986
      %v1077 = vmul.f32 %v923, %v990
      %v1078 = vmul.f32 %v922, %v994
      %v1079 = vmul.f32 %v921, %v998
      %v1080 = vmul.f32 %v920, %v1002
      %v1081 = vmul.f32 %v919, %v1006
      %v1082 = vmul.f32 %v918, %v1010
      %v1083 = vmul.f32 %v917, %v1014
      %v1084 = vmul.f32 %v916, %v1018
      %v1085 = vmul.f32 %v915, %v1022
      %v1086 = vmul.f32 %v914, %v1026
      %v1087 = vmul.f32 %v913, %v1030
      %v1088 = vmul.f32 %v912, %v1034
      %v1089 = vmul.f32 %v911, %v1038
      %v1090 = vmul.f32 %v910, %v1042
      %v1091 = vmul.f32 %v909, %v1046
      %v1092 = vmul.f32 %v908, %v1050
      %v1093 = vmul.f32 %v907, %v1054
      %v1094 = vmul.f32 %v906, %v1058
      %v1095 = vmul.f32 %v905, %v1062
      %v1096 = vpack.c.bf16 %v1065, %v1064
      %v1097 = vpack.c.bf16 %v1067, %v1066
      %v1098 = vpack.c.bf16 %v1069, %v1068
      %v1099 = vpack.c.bf16 %v1071, %v1070
      %v1100 = vpack.c.bf16 %v1073, %v1072
      %v1101 = vpack.c.bf16 %v1075, %v1074
      %v1102 = vpack.c.bf16 %v1077, %v1076
      %v1103 = vpack.c.bf16 %v1079, %v1078
      %v1104 = vpack.c.bf16 %v1081, %v1080
      %v1105 = vpack.c.bf16 %v1083, %v1082
      %v1106 = vpack.c.bf16 %v1085, %v1084
      %v1107 = vpack.c.bf16 %v1087, %v1086
      %v1108 = vpack.c.bf16 %v1089, %v1088
      %v1109 = vpack.c.bf16 %v1091, %v1090
      %v1110 = vpack.c.bf16 %v1093, %v1092
      %v1111 = vpack.c.bf16 %v1095, %v1094
      %1112 = vst [vmem:[#allocation2 + $0x10] sm:$0xff] %v1096
      %1113 = vst [vmem:[#allocation2 + $0x58] sm:$0xff] %v1097
      %1114 = vst [vmem:[#allocation2 + $0xa0] sm:$0xff] %v1098
      %1115 = vst [vmem:[#allocation2 + $0xe8] sm:$0xff] %v1099
      %1116 = vst [vmem:[#allocation2 + $0x130] sm:$0xff] %v1100
      %1117 = vst [vmem:[#allocation2 + $0x178] sm:$0xff] %v1101
      %1118 = vst [vmem:[#allocation2 + $0x1c0] sm:$0xff] %v1102
      %1119 = vst [vmem:[#allocation2 + $0x208] sm:$0xff] %v1103
      %1120 = vst [vmem:[#allocation2 + $0x250] sm:$0xff] %v1104
      %1121 = vst [vmem:[#allocation2 + $0x298] sm:$0xff] %v1105
      %1122 = vst [vmem:[#allocation2 + $0x2e0] sm:$0xff] %v1106
      %1123 = vst [vmem:[#allocation2 + $0x328] sm:$0xff] %v1107
      %1124 = vst [vmem:[#allocation2 + $0x370] sm:$0xff] %v1108
      %1125 = vst [vmem:[#allocation2 + $0x3b8] sm:$0xff] %v1109
      %1126 = vst [vmem:[#allocation2 + $0x400] sm:$0xff] %v1110
      %1127 = vst [vmem:[#allocation2 + $0x448] sm:$0xff] %v1111
      %1128 = vset.pattern.permute.xlu0 3
      %1129 = vperm.xlu0 %1128, %v356
      %v1130 = vpop.permute.xlu0 %1129
      %1132 = vset.pattern.permute.xlu0 3
      %1133 = vperm.xlu0 %1132, %v357
      %v1134 = vpop.permute.xlu0 %1133
      %1136 = vset.pattern.permute.xlu0 3
      %1137 = vperm.xlu0 %1136, %v358
      %v1138 = vpop.permute.xlu0 %1137
      %1140 = vset.pattern.permute.xlu0 3
      %1141 = vperm.xlu0 %1140, %v359
      %v1142 = vpop.permute.xlu0 %1141
      %1144 = vset.pattern.permute.xlu0 3
      %1145 = vperm.xlu0 %1144, %v360
      %v1146 = vpop.permute.xlu0 %1145
      %1148 = vset.pattern.permute.xlu0 3
      %1149 = vperm.xlu0 %1148, %v361
      %v1150 = vpop.permute.xlu0 %1149
      %1152 = vset.pattern.permute.xlu0 3
      %1153 = vperm.xlu0 %1152, %v362
      %v1154 = vpop.permute.xlu0 %1153
      %1156 = vset.pattern.permute.xlu0 3
      %1157 = vperm.xlu0 %1156, %v363
      %v1158 = vpop.permute.xlu0 %1157
      %1160 = vset.pattern.permute.xlu0 3
      %1161 = vperm.xlu0 %1160, %v364
      %v1162 = vpop.permute.xlu0 %1161
      %1164 = vset.pattern.permute.xlu0 3
      %1165 = vperm.xlu0 %1164, %v365
      %v1166 = vpop.permute.xlu0 %1165
      %1168 = vset.pattern.permute.xlu0 3
      %1169 = vperm.xlu0 %1168, %v366
      %v1170 = vpop.permute.xlu0 %1169
      %1172 = vset.pattern.permute.xlu0 3
      %1173 = vperm.xlu0 %1172, %v367
      %v1174 = vpop.permute.xlu0 %1173
      %1176 = vset.pattern.permute.xlu0 3
      %1177 = vperm.xlu0 %1176, %v368
      %v1178 = vpop.permute.xlu0 %1177
      %1180 = vset.pattern.permute.xlu0 3
      %1181 = vperm.xlu0 %1180, %v369
      %v1182 = vpop.permute.xlu0 %1181
      %1184 = vset.pattern.permute.xlu0 3
      %1185 = vperm.xlu0 %1184, %v370
      %v1186 = vpop.permute.xlu0 %1185
      %1188 = vset.pattern.permute.xlu0 3
      %1189 = vperm.xlu0 %1188, %v371
      %v1190 = vpop.permute.xlu0 %1189
      %1192 = vset.pattern.permute.xlu0 3
      %1193 = vperm.xlu0 %1192, %v372
      %v1194 = vpop.permute.xlu0 %1193
      %1196 = vset.pattern.permute.xlu0 3
      %1197 = vperm.xlu0 %1196, %v373
      %v1198 = vpop.permute.xlu0 %1197
      %1200 = vset.pattern.permute.xlu0 3
      %1201 = vperm.xlu0 %1200, %v374
      %v1202 = vpop.permute.xlu0 %1201
      %1204 = vset.pattern.permute.xlu0 3
      %1205 = vperm.xlu0 %1204, %v375
      %v1206 = vpop.permute.xlu0 %1205
      %1208 = vset.pattern.permute.xlu0 3
      %1209 = vperm.xlu0 %1208, %v376
      %v1210 = vpop.permute.xlu0 %1209
      %1212 = vset.pattern.permute.xlu0 3
      %1213 = vperm.xlu0 %1212, %v377
      %v1214 = vpop.permute.xlu0 %1213
      %1216 = vset.pattern.permute.xlu0 3
      %1217 = vperm.xlu0 %1216, %v378
      %v1218 = vpop.permute.xlu0 %1217
      %1220 = vset.pattern.permute.xlu0 3
      %1221 = vperm.xlu0 %1220, %v379
      %v1222 = vpop.permute.xlu0 %1221
      %1224 = vset.pattern.permute.xlu0 3
      %1225 = vperm.xlu0 %1224, %v380
      %v1226 = vpop.permute.xlu0 %1225
      %1228 = vset.pattern.permute.xlu0 3
      %1229 = vperm.xlu0 %1228, %v381
      %v1230 = vpop.permute.xlu0 %1229
      %1232 = vset.pattern.permute.xlu0 3
      %1233 = vperm.xlu0 %1232, %v382
      %v1234 = vpop.permute.xlu0 %1233
      %1236 = vset.pattern.permute.xlu0 3
      %1237 = vperm.xlu0 %1236, %v383
      %v1238 = vpop.permute.xlu0 %1237
      %1240 = vset.pattern.permute.xlu0 3
      %1241 = vperm.xlu0 %1240, %v384
      %v1242 = vpop.permute.xlu0 %1241
      %1244 = vset.pattern.permute.xlu0 3
      %1245 = vperm.xlu0 %1244, %v385
      %v1246 = vpop.permute.xlu0 %1245
      %1248 = vset.pattern.permute.xlu0 3
      %1249 = vperm.xlu0 %1248, %v386
      %v1250 = vpop.permute.xlu0 %1249
      %1252 = vset.pattern.permute.xlu0 3
      %1253 = vperm.xlu0 %1252, %v387
      %v1254 = vpop.permute.xlu0 %1253
      %v1256 = vmul.f32 %v454, %v1130
      %v1257 = vmul.f32 %v453, %v1134
      %v1258 = vmul.f32 %v452, %v1138
      %v1259 = vmul.f32 %v451, %v1142
      %v1260 = vmul.f32 %v450, %v1146
      %v1261 = vmul.f32 %v449, %v1150
      %v1262 = vmul.f32 %v448, %v1154
      %v1263 = vmul.f32 %v447, %v1158
      %v1264 = vmul.f32 %v446, %v1162
      %v1265 = vmul.f32 %v445, %v1166
      %v1266 = vmul.f32 %v444, %v1170
      %v1267 = vmul.f32 %v443, %v1174
      %v1268 = vmul.f32 %v442, %v1178
      %v1269 = vmul.f32 %v441, %v1182
      %v1270 = vmul.f32 %v440, %v1186
      %v1271 = vmul.f32 %v439, %v1190
      %v1272 = vmul.f32 %v438, %v1194
      %v1273 = vmul.f32 %v437, %v1198
      %v1274 = vmul.f32 %v436, %v1202
      %v1275 = vmul.f32 %v435, %v1206
      %v1276 = vmul.f32 %v434, %v1210
      %v1277 = vmul.f32 %v433, %v1214
      %v1278 = vmul.f32 %v432, %v1218
      %v1279 = vmul.f32 %v431, %v1222
      %v1280 = vmul.f32 %v430, %v1226
      %v1281 = vmul.f32 %v429, %v1230
      %v1282 = vmul.f32 %v428, %v1234
      %v1283 = vmul.f32 %v427, %v1238
      %v1284 = vmul.f32 %v426, %v1242
      %v1285 = vmul.f32 %v425, %v1246
      %v1286 = vmul.f32 %v424, %v1250
      %v1287 = vmul.f32 %v423, %v1254
      %v1288 = vpack.c.bf16 %v1257, %v1256
      %v1289 = vpack.c.bf16 %v1259, %v1258
      %v1290 = vpack.c.bf16 %v1261, %v1260
      %v1291 = vpack.c.bf16 %v1263, %v1262
      %v1292 = vpack.c.bf16 %v1265, %v1264
      %v1293 = vpack.c.bf16 %v1267, %v1266
      %v1294 = vpack.c.bf16 %v1269, %v1268
      %v1295 = vpack.c.bf16 %v1271, %v1270
      %v1296 = vpack.c.bf16 %v1273, %v1272
      %v1297 = vpack.c.bf16 %v1275, %v1274
      %v1298 = vpack.c.bf16 %v1277, %v1276
      %v1299 = vpack.c.bf16 %v1279, %v1278
      %v1300 = vpack.c.bf16 %v1281, %v1280
      %v1301 = vpack.c.bf16 %v1283, %v1282
      %v1302 = vpack.c.bf16 %v1285, %v1284
      %v1303 = vpack.c.bf16 %v1287, %v1286
      %1304 = vst [vmem:[#allocation2 + $0x18] sm:$0xff] %v1288
      %1305 = vst [vmem:[#allocation2 + $0x60] sm:$0xff] %v1289
      %1306 = vst [vmem:[#allocation2 + $0xa8] sm:$0xff] %v1290
      %1307 = vst [vmem:[#allocation2 + $0xf0] sm:$0xff] %v1291
      %1308 = vst [vmem:[#allocation2 + $0x138] sm:$0xff] %v1292
      %1309 = vst [vmem:[#allocation2 + $0x180] sm:$0xff] %v1293
      %1310 = vst [vmem:[#allocation2 + $0x1c8] sm:$0xff] %v1294
      %1311 = vst [vmem:[#allocation2 + $0x210] sm:$0xff] %v1295
      %1312 = vst [vmem:[#allocation2 + $0x258] sm:$0xff] %v1296
      %1313 = vst [vmem:[#allocation2 + $0x2a0] sm:$0xff] %v1297
      %1314 = vst [vmem:[#allocation2 + $0x2e8] sm:$0xff] %v1298
      %1315 = vst [vmem:[#allocation2 + $0x330] sm:$0xff] %v1299
      %1316 = vst [vmem:[#allocation2 + $0x378] sm:$0xff] %v1300
      %1317 = vst [vmem:[#allocation2 + $0x3c0] sm:$0xff] %v1301
      %1318 = vst [vmem:[#allocation2 + $0x408] sm:$0xff] %v1302
      %1319 = vst [vmem:[#allocation2 + $0x450] sm:$0xff] %v1303
      %1320 = vset.pattern.permute.xlu0 4
      %1321 = vperm.xlu0 %1320, %v356
      %v1322 = vpop.permute.xlu0 %1321
      %1324 = vset.pattern.permute.xlu0 4
      %1325 = vperm.xlu0 %1324, %v357
      %v1326 = vpop.permute.xlu0 %1325
      %1328 = vset.pattern.permute.xlu0 4
      %1329 = vperm.xlu0 %1328, %v358
      %v1330 = vpop.permute.xlu0 %1329
      %1332 = vset.pattern.permute.xlu0 4
      %1333 = vperm.xlu0 %1332, %v359
      %v1334 = vpop.permute.xlu0 %1333
      %1336 = vset.pattern.permute.xlu0 4
      %1337 = vperm.xlu0 %1336, %v360
      %v1338 = vpop.permute.xlu0 %1337
      %1340 = vset.pattern.permute.xlu0 4
      %1341 = vperm.xlu0 %1340, %v361
      %v1342 = vpop.permute.xlu0 %1341
      %1344 = vset.pattern.permute.xlu0 4
      %1345 = vperm.xlu0 %1344, %v362
      %v1346 = vpop.permute.xlu0 %1345
      %1348 = vset.pattern.permute.xlu0 4
      %1349 = vperm.xlu0 %1348, %v363
      %v1350 = vpop.permute.xlu0 %1349
      %1352 = vset.pattern.permute.xlu0 4
      %1353 = vperm.xlu0 %1352, %v364
      %v1354 = vpop.permute.xlu0 %1353
      %1356 = vset.pattern.permute.xlu0 4
      %1357 = vperm.xlu0 %1356, %v365
      %v1358 = vpop.permute.xlu0 %1357
      %1360 = vset.pattern.permute.xlu0 4
      %1361 = vperm.xlu0 %1360, %v366
      %v1362 = vpop.permute.xlu0 %1361
      %1364 = vset.pattern.permute.xlu0 4
      %1365 = vperm.xlu0 %1364, %v367
      %v1366 = vpop.permute.xlu0 %1365
      %1368 = vset.pattern.permute.xlu0 4
      %1369 = vperm.xlu0 %1368, %v368
      %v1370 = vpop.permute.xlu0 %1369
      %1372 = vset.pattern.permute.xlu0 4
      %1373 = vperm.xlu0 %1372, %v369
      %v1374 = vpop.permute.xlu0 %1373
      %1376 = vset.pattern.permute.xlu0 4
      %1377 = vperm.xlu0 %1376, %v370
      %v1378 = vpop.permute.xlu0 %1377
      %1380 = vset.pattern.permute.xlu0 4
      %1381 = vperm.xlu0 %1380, %v371
      %v1382 = vpop.permute.xlu0 %1381
      %1384 = vset.pattern.permute.xlu0 4
      %1385 = vperm.xlu0 %1384, %v372
      %v1386 = vpop.permute.xlu0 %1385
      %1388 = vset.pattern.permute.xlu0 4
      %1389 = vperm.xlu0 %1388, %v373
      %v1390 = vpop.permute.xlu0 %1389
      %1392 = vset.pattern.permute.xlu0 4
      %1393 = vperm.xlu0 %1392, %v374
      %v1394 = vpop.permute.xlu0 %1393
      %1396 = vset.pattern.permute.xlu0 4
      %1397 = vperm.xlu0 %1396, %v375
      %v1398 = vpop.permute.xlu0 %1397
      %1400 = vset.pattern.permute.xlu0 4
      %1401 = vperm.xlu0 %1400, %v376
      %v1402 = vpop.permute.xlu0 %1401
      %1404 = vset.pattern.permute.xlu0 4
      %1405 = vperm.xlu0 %1404, %v377
      %v1406 = vpop.permute.xlu0 %1405
      %1408 = vset.pattern.permute.xlu0 4
      %1409 = vperm.xlu0 %1408, %v378
      %v1410 = vpop.permute.xlu0 %1409
      %1412 = vset.pattern.permute.xlu0 4
      %1413 = vperm.xlu0 %1412, %v379
      %v1414 = vpop.permute.xlu0 %1413
      %1416 = vset.pattern.permute.xlu0 4
      %1417 = vperm.xlu0 %1416, %v380
      %v1418 = vpop.permute.xlu0 %1417
      %1420 = vset.pattern.permute.xlu0 4
      %1421 = vperm.xlu0 %1420, %v381
      %v1422 = vpop.permute.xlu0 %1421
      %1424 = vset.pattern.permute.xlu0 4
      %1425 = vperm.xlu0 %1424, %v382
      %v1426 = vpop.permute.xlu0 %1425
      %1428 = vset.pattern.permute.xlu0 4
      %1429 = vperm.xlu0 %1428, %v383
      %v1430 = vpop.permute.xlu0 %1429
      %1432 = vset.pattern.permute.xlu0 4
      %1433 = vperm.xlu0 %1432, %v384
      %v1434 = vpop.permute.xlu0 %1433
      %1436 = vset.pattern.permute.xlu0 4
      %1437 = vperm.xlu0 %1436, %v385
      %v1438 = vpop.permute.xlu0 %1437
      %1440 = vset.pattern.permute.xlu0 4
      %1441 = vperm.xlu0 %1440, %v386
      %v1442 = vpop.permute.xlu0 %1441
      %1444 = vset.pattern.permute.xlu0 4
      %1445 = vperm.xlu0 %1444, %v387
      %v1446 = vpop.permute.xlu0 %1445
      %v1448 = vmul.f32 %v324, %v1322
      %v1449 = vmul.f32 %v325, %v1326
      %v1450 = vmul.f32 %v326, %v1330
      %v1451 = vmul.f32 %v327, %v1334
      %v1452 = vmul.f32 %v328, %v1338
      %v1453 = vmul.f32 %v329, %v1342
      %v1454 = vmul.f32 %v330, %v1346
      %v1455 = vmul.f32 %v331, %v1350
      %v1456 = vmul.f32 %v332, %v1354
      %v1457 = vmul.f32 %v333, %v1358
      %v1458 = vmul.f32 %v334, %v1362
      %v1459 = vmul.f32 %v335, %v1366
      %v1460 = vmul.f32 %v336, %v1370
      %v1461 = vmul.f32 %v337, %v1374
      %v1462 = vmul.f32 %v338, %v1378
      %v1463 = vmul.f32 %v339, %v1382
      %v1464 = vmul.f32 %v340, %v1386
      %v1465 = vmul.f32 %v341, %v1390
      %v1466 = vmul.f32 %v342, %v1394
      %v1467 = vmul.f32 %v343, %v1398
      %v1468 = vmul.f32 %v344, %v1402
      %v1469 = vmul.f32 %v345, %v1406
      %v1470 = vmul.f32 %v346, %v1410
      %v1471 = vmul.f32 %v347, %v1414
      %v1472 = vmul.f32 %v348, %v1418
      %v1473 = vmul.f32 %v349, %v1422
      %v1474 = vmul.f32 %v350, %v1426
      %v1475 = vmul.f32 %v351, %v1430
      %v1476 = vmul.f32 %v352, %v1434
      %v1477 = vmul.f32 %v353, %v1438
      %v1478 = vmul.f32 %v354, %v1442
      %v1479 = vmul.f32 %v355, %v1446
      %v1480 = vpack.c.bf16 %v1449, %v1448
      %v1481 = vpack.c.bf16 %v1451, %v1450
      %v1482 = vpack.c.bf16 %v1453, %v1452
      %v1483 = vpack.c.bf16 %v1455, %v1454
      %v1484 = vpack.c.bf16 %v1457, %v1456
      %v1485 = vpack.c.bf16 %v1459, %v1458
      %v1486 = vpack.c.bf16 %v1461, %v1460
      %v1487 = vpack.c.bf16 %v1463, %v1462
      %v1488 = vpack.c.bf16 %v1465, %v1464
      %v1489 = vpack.c.bf16 %v1467, %v1466
      %v1490 = vpack.c.bf16 %v1469, %v1468
      %v1491 = vpack.c.bf16 %v1471, %v1470
      %v1492 = vpack.c.bf16 %v1473, %v1472
      %v1493 = vpack.c.bf16 %v1475, %v1474
      %v1494 = vpack.c.bf16 %v1477, %v1476
      %v1495 = vpack.c.bf16 %v1479, %v1478
      %1496 = vst [vmem:[#allocation2 + $0x20] sm:$0xff] %v1480
      %1497 = vst [vmem:[#allocation2 + $0x68] sm:$0xff] %v1481
      %1498 = vst [vmem:[#allocation2 + $0xb0] sm:$0xff] %v1482
      %1499 = vst [vmem:[#allocation2 + $0xf8] sm:$0xff] %v1483
      %1500 = vst [vmem:[#allocation2 + $0x140] sm:$0xff] %v1484
      %1501 = vst [vmem:[#allocation2 + $0x188] sm:$0xff] %v1485
      %1502 = vst [vmem:[#allocation2 + $0x1d0] sm:$0xff] %v1486
      %1503 = vst [vmem:[#allocation2 + $0x218] sm:$0xff] %v1487
      %1504 = vst [vmem:[#allocation2 + $0x260] sm:$0xff] %v1488
      %1505 = vst [vmem:[#allocation2 + $0x2a8] sm:$0xff] %v1489
      %1506 = vst [vmem:[#allocation2 + $0x2f0] sm:$0xff] %v1490
      %1507 = vst [vmem:[#allocation2 + $0x338] sm:$0xff] %v1491
      %1508 = vst [vmem:[#allocation2 + $0x380] sm:$0xff] %v1492
      %1509 = vst [vmem:[#allocation2 + $0x3c8] sm:$0xff] %v1493
      %1510 = vst [vmem:[#allocation2 + $0x410] sm:$0xff] %v1494
      %1511 = vst [vmem:[#allocation2 + $0x458] sm:$0xff] %v1495
      %1512 = vset.pattern.permute.xlu0 5
      %1513 = vperm.xlu0 %1512, %v356
      %v1514 = vpop.permute.xlu0 %1513
      %1516 = vset.pattern.permute.xlu0 5
      %1517 = vperm.xlu0 %1516, %v357
      %v1518 = vpop.permute.xlu0 %1517
      %1520 = vset.pattern.permute.xlu0 5
      %1521 = vperm.xlu0 %1520, %v358
      %v1522 = vpop.permute.xlu0 %1521
      %1524 = vset.pattern.permute.xlu0 5
      %1525 = vperm.xlu0 %1524, %v359
      %v1526 = vpop.permute.xlu0 %1525
      %1528 = vset.pattern.permute.xlu0 5
      %1529 = vperm.xlu0 %1528, %v360
      %v1530 = vpop.permute.xlu0 %1529
      %1532 = vset.pattern.permute.xlu0 5
      %1533 = vperm.xlu0 %1532, %v361
      %v1534 = vpop.permute.xlu0 %1533
      %1536 = vset.pattern.permute.xlu0 5
      %1537 = vperm.xlu0 %1536, %v362
      %v1538 = vpop.permute.xlu0 %1537
      %1540 = vset.pattern.permute.xlu0 5
      %1541 = vperm.xlu0 %1540, %v363
      %v1542 = vpop.permute.xlu0 %1541
      %1544 = vset.pattern.permute.xlu0 5
      %1545 = vperm.xlu0 %1544, %v364
      %v1546 = vpop.permute.xlu0 %1545
      %1548 = vset.pattern.permute.xlu0 5
      %1549 = vperm.xlu0 %1548, %v365
      %v1550 = vpop.permute.xlu0 %1549
      %1552 = vset.pattern.permute.xlu0 5
      %1553 = vperm.xlu0 %1552, %v366
      %v1554 = vpop.permute.xlu0 %1553
      %1556 = vset.pattern.permute.xlu0 5
      %1557 = vperm.xlu0 %1556, %v367
      %v1558 = vpop.permute.xlu0 %1557
      %1560 = vset.pattern.permute.xlu0 5
      %1561 = vperm.xlu0 %1560, %v368
      %v1562 = vpop.permute.xlu0 %1561
      %1564 = vset.pattern.permute.xlu0 5
      %1565 = vperm.xlu0 %1564, %v369
      %v1566 = vpop.permute.xlu0 %1565
      %1568 = vset.pattern.permute.xlu0 5
      %1569 = vperm.xlu0 %1568, %v370
      %v1570 = vpop.permute.xlu0 %1569
      %1572 = vset.pattern.permute.xlu0 5
      %1573 = vperm.xlu0 %1572, %v371
      %v1574 = vpop.permute.xlu0 %1573
      %1576 = vset.pattern.permute.xlu0 5
      %1577 = vperm.xlu0 %1576, %v372
      %v1578 = vpop.permute.xlu0 %1577
      %1580 = vset.pattern.permute.xlu0 5
      %1581 = vperm.xlu0 %1580, %v373
      %v1582 = vpop.permute.xlu0 %1581
      %1584 = vset.pattern.permute.xlu0 5
      %1585 = vperm.xlu0 %1584, %v374
      %v1586 = vpop.permute.xlu0 %1585
      %1588 = vset.pattern.permute.xlu0 5
      %1589 = vperm.xlu0 %1588, %v375
      %v1590 = vpop.permute.xlu0 %1589
      %1592 = vset.pattern.permute.xlu0 5
      %1593 = vperm.xlu0 %1592, %v376
      %v1594 = vpop.permute.xlu0 %1593
      %1596 = vset.pattern.permute.xlu0 5
      %1597 = vperm.xlu0 %1596, %v377
      %v1598 = vpop.permute.xlu0 %1597
      %1600 = vset.pattern.permute.xlu0 5
      %1601 = vperm.xlu0 %1600, %v378
      %v1602 = vpop.permute.xlu0 %1601
      %1604 = vset.pattern.permute.xlu0 5
      %1605 = vperm.xlu0 %1604, %v379
      %v1606 = vpop.permute.xlu0 %1605
      %1608 = vset.pattern.permute.xlu0 5
      %1609 = vperm.xlu0 %1608, %v380
      %v1610 = vpop.permute.xlu0 %1609
      %1612 = vset.pattern.permute.xlu0 5
      %1613 = vperm.xlu0 %1612, %v381
      %v1614 = vpop.permute.xlu0 %1613
      %1616 = vset.pattern.permute.xlu0 5
      %1617 = vperm.xlu0 %1616, %v382
      %v1618 = vpop.permute.xlu0 %1617
      %1620 = vset.pattern.permute.xlu0 5
      %1621 = vperm.xlu0 %1620, %v383
      %v1622 = vpop.permute.xlu0 %1621
      %1624 = vset.pattern.permute.xlu0 5
      %1625 = vperm.xlu0 %1624, %v384
      %v1626 = vpop.permute.xlu0 %1625
      %1628 = vset.pattern.permute.xlu0 5
      %1629 = vperm.xlu0 %1628, %v385
      %v1630 = vpop.permute.xlu0 %1629
      %1632 = vset.pattern.permute.xlu0 5
      %1633 = vperm.xlu0 %1632, %v386
      %v1634 = vpop.permute.xlu0 %1633
      %1636 = vset.pattern.permute.xlu0 5
      %1637 = vperm.xlu0 %1636, %v387
      %v1638 = vpop.permute.xlu0 %1637
      %v1640 = vmul.f32 %v934, %v1514
      %v1641 = vmul.f32 %v933, %v1518
      %v1642 = vmul.f32 %v932, %v1522
      %v1643 = vmul.f32 %v931, %v1526
      %v1644 = vmul.f32 %v930, %v1530
      %v1645 = vmul.f32 %v929, %v1534
      %v1646 = vmul.f32 %v928, %v1538
      %v1647 = vmul.f32 %v927, %v1542
      %v1648 = vmul.f32 %v926, %v1546
      %v1649 = vmul.f32 %v925, %v1550
      %v1650 = vmul.f32 %v924, %v1554
      %v1651 = vmul.f32 %v923, %v1558
      %v1652 = vmul.f32 %v922, %v1562
      %v1653 = vmul.f32 %v921, %v1566
      %v1654 = vmul.f32 %v920, %v1570
      %v1655 = vmul.f32 %v919, %v1574
      %v1656 = vmul.f32 %v918, %v1578
      %v1657 = vmul.f32 %v917, %v1582
      %v1658 = vmul.f32 %v916, %v1586
      %v1659 = vmul.f32 %v915, %v1590
      %v1660 = vmul.f32 %v914, %v1594
      %v1661 = vmul.f32 %v913, %v1598
      %v1662 = vmul.f32 %v912, %v1602
      %v1663 = vmul.f32 %v911, %v1606
      %v1664 = vmul.f32 %v910, %v1610
      %v1665 = vmul.f32 %v909, %v1614
      %v1666 = vmul.f32 %v908, %v1618
      %v1667 = vmul.f32 %v907, %v1622
      %v1668 = vmul.f32 %v906, %v1626
      %v1669 = vmul.f32 %v905, %v1630
      %v1670 = vmul.f32 %v904, %v1634
      %v1671 = vmul.f32 %v935, %v1638
      %v1672 = vpack.c.bf16 %v1641, %v1640
      %v1673 = vpack.c.bf16 %v1643, %v1642
      %v1674 = vpack.c.bf16 %v1645, %v1644
      %v1675 = vpack.c.bf16 %v1647, %v1646
      %v1676 = vpack.c.bf16 %v1649, %v1648
      %v1677 = vpack.c.bf16 %v1651, %v1650
      %v1678 = vpack.c.bf16 %v1653, %v1652
      %v1679 = vpack.c.bf16 %v1655, %v1654
      %v1680 = vpack.c.bf16 %v1657, %v1656
      %v1681 = vpack.c.bf16 %v1659, %v1658
      %v1682 = vpack.c.bf16 %v1661, %v1660
      %v1683 = vpack.c.bf16 %v1663, %v1662
      %v1684 = vpack.c.bf16 %v1665, %v1664
      %v1685 = vpack.c.bf16 %v1667, %v1666
      %v1686 = vpack.c.bf16 %v1669, %v1668
      %v1687 = vpack.c.bf16 %v1671, %v1670
      %1688 = vst [vmem:[#allocation2 + $0x28] sm:$0xff] %v1672
      %1689 = vst [vmem:[#allocation2 + $0x70] sm:$0xff] %v1673
      %1690 = vst [vmem:[#allocation2 + $0xb8] sm:$0xff] %v1674
      %1691 = vst [vmem:[#allocation2 + $0x100] sm:$0xff] %v1675
      %1692 = vst [vmem:[#allocation2 + $0x148] sm:$0xff] %v1676
      %1693 = vst [vmem:[#allocation2 + $0x190] sm:$0xff] %v1677
      %1694 = vst [vmem:[#allocation2 + $0x1d8] sm:$0xff] %v1678
      %1695 = vst [vmem:[#allocation2 + $0x220] sm:$0xff] %v1679
      %1696 = vst [vmem:[#allocation2 + $0x268] sm:$0xff] %v1680
      %1697 = vst [vmem:[#allocation2 + $0x2b0] sm:$0xff] %v1681
      %1698 = vst [vmem:[#allocation2 + $0x2f8] sm:$0xff] %v1682
      %1699 = vst [vmem:[#allocation2 + $0x340] sm:$0xff] %v1683
      %1700 = vst [vmem:[#allocation2 + $0x388] sm:$0xff] %v1684
      %1701 = vst [vmem:[#allocation2 + $0x3d0] sm:$0xff] %v1685
      %1702 = vst [vmem:[#allocation2 + $0x418] sm:$0xff] %v1686
      %1703 = vst [vmem:[#allocation2 + $0x460] sm:$0xff] %v1687
      %1704 = vset.pattern.permute.xlu0 6
      %1705 = vperm.xlu0 %1704, %v356
      %v1706 = vpop.permute.xlu0 %1705
      %1708 = vset.pattern.permute.xlu0 6
      %1709 = vperm.xlu0 %1708, %v357
      %v1710 = vpop.permute.xlu0 %1709
      %1712 = vset.pattern.permute.xlu0 6
      %1713 = vperm.xlu0 %1712, %v358
      %v1714 = vpop.permute.xlu0 %1713
      %1716 = vset.pattern.permute.xlu0 6
      %1717 = vperm.xlu0 %1716, %v359
      %v1718 = vpop.permute.xlu0 %1717
      %1720 = vset.pattern.permute.xlu0 6
      %1721 = vperm.xlu0 %1720, %v360
      %v1722 = vpop.permute.xlu0 %1721
      %1724 = vset.pattern.permute.xlu0 6
      %1725 = vperm.xlu0 %1724, %v361
      %v1726 = vpop.permute.xlu0 %1725
      %1728 = vset.pattern.permute.xlu0 6
      %1729 = vperm.xlu0 %1728, %v362
      %v1730 = vpop.permute.xlu0 %1729
      %1732 = vset.pattern.permute.xlu0 6
      %1733 = vperm.xlu0 %1732, %v363
      %v1734 = vpop.permute.xlu0 %1733
      %1736 = vset.pattern.permute.xlu0 6
      %1737 = vperm.xlu0 %1736, %v364
      %v1738 = vpop.permute.xlu0 %1737
      %1740 = vset.pattern.permute.xlu0 6
      %1741 = vperm.xlu0 %1740, %v365
      %v1742 = vpop.permute.xlu0 %1741
      %1744 = vset.pattern.permute.xlu0 6
      %1745 = vperm.xlu0 %1744, %v366
      %v1746 = vpop.permute.xlu0 %1745
      %1748 = vset.pattern.permute.xlu0 6
      %1749 = vperm.xlu0 %1748, %v367
      %v1750 = vpop.permute.xlu0 %1749
      %1752 = vset.pattern.permute.xlu0 6
      %1753 = vperm.xlu0 %1752, %v368
      %v1754 = vpop.permute.xlu0 %1753
      %1756 = vset.pattern.permute.xlu0 6
      %1757 = vperm.xlu0 %1756, %v369
      %v1758 = vpop.permute.xlu0 %1757
      %1760 = vset.pattern.permute.xlu0 6
      %1761 = vperm.xlu0 %1760, %v370
      %v1762 = vpop.permute.xlu0 %1761
      %1764 = vset.pattern.permute.xlu0 6
      %1765 = vperm.xlu0 %1764, %v371
      %v1766 = vpop.permute.xlu0 %1765
      %1768 = vset.pattern.permute.xlu0 6
      %1769 = vperm.xlu0 %1768, %v372
      %v1770 = vpop.permute.xlu0 %1769
      %1772 = vset.pattern.permute.xlu0 6
      %1773 = vperm.xlu0 %1772, %v373
      %v1774 = vpop.permute.xlu0 %1773
      %1776 = vset.pattern.permute.xlu0 6
      %1777 = vperm.xlu0 %1776, %v374
      %v1778 = vpop.permute.xlu0 %1777
      %1780 = vset.pattern.permute.xlu0 6
      %1781 = vperm.xlu0 %1780, %v375
      %v1782 = vpop.permute.xlu0 %1781
      %1784 = vset.pattern.permute.xlu0 6
      %1785 = vperm.xlu0 %1784, %v376
      %v1786 = vpop.permute.xlu0 %1785
      %1788 = vset.pattern.permute.xlu0 6
      %1789 = vperm.xlu0 %1788, %v377
      %v1790 = vpop.permute.xlu0 %1789
      %1792 = vset.pattern.permute.xlu0 6
      %1793 = vperm.xlu0 %1792, %v378
      %v1794 = vpop.permute.xlu0 %1793
      %1796 = vset.pattern.permute.xlu0 6
      %1797 = vperm.xlu0 %1796, %v379
      %v1798 = vpop.permute.xlu0 %1797
      %1800 = vset.pattern.permute.xlu0 6
      %1801 = vperm.xlu0 %1800, %v380
      %v1802 = vpop.permute.xlu0 %1801
      %1804 = vset.pattern.permute.xlu0 6
      %1805 = vperm.xlu0 %1804, %v381
      %v1806 = vpop.permute.xlu0 %1805
      %1808 = vset.pattern.permute.xlu0 6
      %1809 = vperm.xlu0 %1808, %v382
      %v1810 = vpop.permute.xlu0 %1809
      %1812 = vset.pattern.permute.xlu0 6
      %1813 = vperm.xlu0 %1812, %v383
      %v1814 = vpop.permute.xlu0 %1813
      %1816 = vset.pattern.permute.xlu0 6
      %1817 = vperm.xlu0 %1816, %v384
      %v1818 = vpop.permute.xlu0 %1817
      %1820 = vset.pattern.permute.xlu0 6
      %1821 = vperm.xlu0 %1820, %v385
      %v1822 = vpop.permute.xlu0 %1821
      %1824 = vset.pattern.permute.xlu0 6
      %1825 = vperm.xlu0 %1824, %v386
      %v1826 = vpop.permute.xlu0 %1825
      %1828 = vset.pattern.permute.xlu0 6
      %1829 = vperm.xlu0 %1828, %v387
      %v1830 = vpop.permute.xlu0 %1829
      %v1832 = vmul.f32 %v452, %v1706
      %v1833 = vmul.f32 %v451, %v1710
      %v1834 = vmul.f32 %v450, %v1714
      %v1835 = vmul.f32 %v449, %v1718
      %v1836 = vmul.f32 %v448, %v1722
      %v1837 = vmul.f32 %v447, %v1726
      %v1838 = vmul.f32 %v446, %v1730
      %v1839 = vmul.f32 %v445, %v1734
      %v1840 = vmul.f32 %v444, %v1738
      %v1841 = vmul.f32 %v443, %v1742
      %v1842 = vmul.f32 %v442, %v1746
      %v1843 = vmul.f32 %v441, %v1750
      %v1844 = vmul.f32 %v440, %v1754
      %v1845 = vmul.f32 %v439, %v1758
      %v1846 = vmul.f32 %v438, %v1762
      %v1847 = vmul.f32 %v437, %v1766
      %v1848 = vmul.f32 %v436, %v1770
      %v1849 = vmul.f32 %v435, %v1774
      %v1850 = vmul.f32 %v434, %v1778
      %v1851 = vmul.f32 %v433, %v1782
      %v1852 = vmul.f32 %v432, %v1786
      %v1853 = vmul.f32 %v431, %v1790
      %v1854 = vmul.f32 %v430, %v1794
      %v1855 = vmul.f32 %v429, %v1798
      %v1856 = vmul.f32 %v428, %v1802
      %v1857 = vmul.f32 %v427, %v1806
      %v1858 = vmul.f32 %v426, %v1810
      %v1859 = vmul.f32 %v425, %v1814
      %v1860 = vmul.f32 %v424, %v1818
      %v1861 = vmul.f32 %v423, %v1822
      %v1862 = vmul.f32 %v454, %v1826
      %v1863 = vmul.f32 %v453, %v1830
      %v1864 = vpack.c.bf16 %v1833, %v1832
      %v1865 = vpack.c.bf16 %v1835, %v1834
      %v1866 = vpack.c.bf16 %v1837, %v1836
      %v1867 = vpack.c.bf16 %v1839, %v1838
      %v1868 = vpack.c.bf16 %v1841, %v1840
      %v1869 = vpack.c.bf16 %v1843, %v1842
      %v1870 = vpack.c.bf16 %v1845, %v1844
      %v1871 = vpack.c.bf16 %v1847, %v1846
      %v1872 = vpack.c.bf16 %v1849, %v1848
      %v1873 = vpack.c.bf16 %v1851, %v1850
      %v1874 = vpack.c.bf16 %v1853, %v1852
      %v1875 = vpack.c.bf16 %v1855, %v1854
      %v1876 = vpack.c.bf16 %v1857, %v1856
      %v1877 = vpack.c.bf16 %v1859, %v1858
      %v1878 = vpack.c.bf16 %v1861, %v1860
      %v1879 = vpack.c.bf16 %v1863, %v1862
      %1880 = vst [vmem:[#allocation2 + $0x30] sm:$0xff] %v1864
      %1881 = vst [vmem:[#allocation2 + $0x78] sm:$0xff] %v1865
      %1882 = vst [vmem:[#allocation2 + $0xc0] sm:$0xff] %v1866
      %1883 = vst [vmem:[#allocation2 + $0x108] sm:$0xff] %v1867
      %1884 = vst [vmem:[#allocation2 + $0x150] sm:$0xff] %v1868
      %1885 = vst [vmem:[#allocation2 + $0x198] sm:$0xff] %v1869
      %1886 = vst [vmem:[#allocation2 + $0x1e0] sm:$0xff] %v1870
      %1887 = vst [vmem:[#allocation2 + $0x228] sm:$0xff] %v1871
      %1888 = vst [vmem:[#allocation2 + $0x270] sm:$0xff] %v1872
      %1889 = vst [vmem:[#allocation2 + $0x2b8] sm:$0xff] %v1873
      %1890 = vst [vmem:[#allocation2 + $0x300] sm:$0xff] %v1874
      %1891 = vst [vmem:[#allocation2 + $0x348] sm:$0xff] %v1875
      %1892 = vst [vmem:[#allocation2 + $0x390] sm:$0xff] %v1876
      %1893 = vst [vmem:[#allocation2 + $0x3d8] sm:$0xff] %v1877
      %1894 = vst [vmem:[#allocation2 + $0x420] sm:$0xff] %v1878
      %1895 = vst [vmem:[#allocation2 + $0x468] sm:$0xff] %v1879
      %1896 = vset.pattern.permute.xlu0 7
      %1897 = vperm.xlu0 %1896, %v356
      %v1898 = vpop.permute.xlu0 %1897
      %1900 = vset.pattern.permute.xlu0 7
      %1901 = vperm.xlu0 %1900, %v357
      %v1902 = vpop.permute.xlu0 %1901
      %1904 = vset.pattern.permute.xlu0 7
      %1905 = vperm.xlu0 %1904, %v358
      %v1906 = vpop.permute.xlu0 %1905
      %1908 = vset.pattern.permute.xlu0 7
      %1909 = vperm.xlu0 %1908, %v359
      %v1910 = vpop.permute.xlu0 %1909
      %1912 = vset.pattern.permute.xlu0 7
      %1913 = vperm.xlu0 %1912, %v360
      %v1914 = vpop.permute.xlu0 %1913
      %1916 = vset.pattern.permute.xlu0 7
      %1917 = vperm.xlu0 %1916, %v361
      %v1918 = vpop.permute.xlu0 %1917
      %1920 = vset.pattern.permute.xlu0 7
      %1921 = vperm.xlu0 %1920, %v362
      %v1922 = vpop.permute.xlu0 %1921
      %1924 = vset.pattern.permute.xlu0 7
      %1925 = vperm.xlu0 %1924, %v363
      %v1926 = vpop.permute.xlu0 %1925
      %1928 = vset.pattern.permute.xlu0 7
      %1929 = vperm.xlu0 %1928, %v364
      %v1930 = vpop.permute.xlu0 %1929
      %1932 = vset.pattern.permute.xlu0 7
      %1933 = vperm.xlu0 %1932, %v365
      %v1934 = vpop.permute.xlu0 %1933
      %1936 = vset.pattern.permute.xlu0 7
      %1937 = vperm.xlu0 %1936, %v366
      %v1938 = vpop.permute.xlu0 %1937
      %1940 = vset.pattern.permute.xlu0 7
      %1941 = vperm.xlu0 %1940, %v367
      %v1942 = vpop.permute.xlu0 %1941
      %1944 = vset.pattern.permute.xlu0 7
      %1945 = vperm.xlu0 %1944, %v368
      %v1946 = vpop.permute.xlu0 %1945
      %1948 = vset.pattern.permute.xlu0 7
      %1949 = vperm.xlu0 %1948, %v369
      %v1950 = vpop.permute.xlu0 %1949
      %1952 = vset.pattern.permute.xlu0 7
      %1953 = vperm.xlu0 %1952, %v370
      %v1954 = vpop.permute.xlu0 %1953
      %1956 = vset.pattern.permute.xlu0 7
      %1957 = vperm.xlu0 %1956, %v371
      %v1958 = vpop.permute.xlu0 %1957
      %1960 = vset.pattern.permute.xlu0 7
      %1961 = vperm.xlu0 %1960, %v372
      %v1962 = vpop.permute.xlu0 %1961
      %1964 = vset.pattern.permute.xlu0 7
      %1965 = vperm.xlu0 %1964, %v373
      %v1966 = vpop.permute.xlu0 %1965
      %1968 = vset.pattern.permute.xlu0 7
      %1969 = vperm.xlu0 %1968, %v374
      %v1970 = vpop.permute.xlu0 %1969
      %1972 = vset.pattern.permute.xlu0 7
      %1973 = vperm.xlu0 %1972, %v375
      %v1974 = vpop.permute.xlu0 %1973
      %1976 = vset.pattern.permute.xlu0 7
      %1977 = vperm.xlu0 %1976, %v376
      %v1978 = vpop.permute.xlu0 %1977
      %1980 = vset.pattern.permute.xlu0 7
      %1981 = vperm.xlu0 %1980, %v377
      %v1982 = vpop.permute.xlu0 %1981
      %1984 = vset.pattern.permute.xlu0 7
      %1985 = vperm.xlu0 %1984, %v378
      %v1986 = vpop.permute.xlu0 %1985
      %1988 = vset.pattern.permute.xlu0 7
      %1989 = vperm.xlu0 %1988, %v379
      %v1990 = vpop.permute.xlu0 %1989
      %1992 = vset.pattern.permute.xlu0 7
      %1993 = vperm.xlu0 %1992, %v380
      %v1994 = vpop.permute.xlu0 %1993
      %1996 = vset.pattern.permute.xlu0 7
      %1997 = vperm.xlu0 %1996, %v381
      %v1998 = vpop.permute.xlu0 %1997
      %2000 = vset.pattern.permute.xlu0 7
      %2001 = vperm.xlu0 %2000, %v382
      %v2002 = vpop.permute.xlu0 %2001
      %2004 = vset.pattern.permute.xlu0 7
      %2005 = vperm.xlu0 %2004, %v383
      %v2006 = vpop.permute.xlu0 %2005
      %2008 = vset.pattern.permute.xlu0 7
      %2009 = vperm.xlu0 %2008, %v384
      %v2010 = vpop.permute.xlu0 %2009
      %2012 = vset.pattern.permute.xlu0 7
      %2013 = vperm.xlu0 %2012, %v385
      %v2014 = vpop.permute.xlu0 %2013
      %2016 = vset.pattern.permute.xlu0 7
      %2017 = vperm.xlu0 %2016, %v386
      %v2018 = vpop.permute.xlu0 %2017
      %2020 = vset.pattern.permute.xlu0 7
      %2021 = vperm.xlu0 %2020, %v387
      %v2022 = vpop.permute.xlu0 %2021
      %v2024 = vmul.f32 %v326, %v1898
      %v2025 = vmul.f32 %v327, %v1902
      %v2026 = vmul.f32 %v328, %v1906
      %v2027 = vmul.f32 %v329, %v1910
      %v2028 = vmul.f32 %v330, %v1914
      %v2029 = vmul.f32 %v331, %v1918
      %v2030 = vmul.f32 %v332, %v1922
      %v2031 = vmul.f32 %v333, %v1926
      %v2032 = vmul.f32 %v334, %v1930
      %v2033 = vmul.f32 %v335, %v1934
      %v2034 = vmul.f32 %v336, %v1938
      %v2035 = vmul.f32 %v337, %v1942
      %v2036 = vmul.f32 %v338, %v1946
      %v2037 = vmul.f32 %v339, %v1950
      %v2038 = vmul.f32 %v340, %v1954
      %v2039 = vmul.f32 %v341, %v1958
      %v2040 = vmul.f32 %v342, %v1962
      %v2041 = vmul.f32 %v343, %v1966
      %v2042 = vmul.f32 %v344, %v1970
      %v2043 = vmul.f32 %v345, %v1974
      %v2044 = vmul.f32 %v346, %v1978
      %v2045 = vmul.f32 %v347, %v1982
      %v2046 = vmul.f32 %v348, %v1986
      %v2047 = vmul.f32 %v349, %v1990
      %v2048 = vmul.f32 %v350, %v1994
      %v2049 = vmul.f32 %v351, %v1998
      %v2050 = vmul.f32 %v352, %v2002
      %v2051 = vmul.f32 %v353, %v2006
      %v2052 = vmul.f32 %v354, %v2010
      %v2053 = vmul.f32 %v355, %v2014
      %v2054 = vmul.f32 %v324, %v2018
      %v2055 = vmul.f32 %v325, %v2022
      %v2056 = vpack.c.bf16 %v2025, %v2024
      %v2057 = vpack.c.bf16 %v2027, %v2026
      %v2058 = vpack.c.bf16 %v2029, %v2028
      %v2059 = vpack.c.bf16 %v2031, %v2030
      %v2060 = vpack.c.bf16 %v2033, %v2032
      %v2061 = vpack.c.bf16 %v2035, %v2034
      %v2062 = vpack.c.bf16 %v2037, %v2036
      %v2063 = vpack.c.bf16 %v2039, %v2038
      %v2064 = vpack.c.bf16 %v2041, %v2040
      %v2065 = vpack.c.bf16 %v2043, %v2042
      %v2066 = vpack.c.bf16 %v2045, %v2044
      %v2067 = vpack.c.bf16 %v2047, %v2046
      %v2068 = vpack.c.bf16 %v2049, %v2048
      %v2069 = vpack.c.bf16 %v2051, %v2050
      %v2070 = vpack.c.bf16 %v2053, %v2052
      %v2071 = vpack.c.bf16 %v2055, %v2054
      %2072 = vst [vmem:[#allocation2 + $0x38] sm:$0xff] %v2056
      %2073 = vst [vmem:[#allocation2 + $0x80] sm:$0xff] %v2057
      %2074 = vst [vmem:[#allocation2 + $0xc8] sm:$0xff] %v2058
      %2075 = vst [vmem:[#allocation2 + $0x110] sm:$0xff] %v2059
      %2076 = vst [vmem:[#allocation2 + $0x158] sm:$0xff] %v2060
      %2077 = vst [vmem:[#allocation2 + $0x1a0] sm:$0xff] %v2061
      %2078 = vst [vmem:[#allocation2 + $0x1e8] sm:$0xff] %v2062
      %2079 = vst [vmem:[#allocation2 + $0x230] sm:$0xff] %v2063
      %2080 = vst [vmem:[#allocation2 + $0x278] sm:$0xff] %v2064
      %2081 = vst [vmem:[#allocation2 + $0x2c0] sm:$0xff] %v2065
      %2082 = vst [vmem:[#allocation2 + $0x308] sm:$0xff] %v2066
      %2083 = vst [vmem:[#allocation2 + $0x350] sm:$0xff] %v2067
      %2084 = vst [vmem:[#allocation2 + $0x398] sm:$0xff] %v2068
      %2085 = vst [vmem:[#allocation2 + $0x3e0] sm:$0xff] %v2069
      %2086 = vst [vmem:[#allocation2 + $0x428] sm:$0xff] %v2070
      %2087 = vst [vmem:[#allocation2 + $0x470] sm:$0xff] %v2071
      %2088 = vset.pattern.permute.xlu0 8
      %2089 = vperm.xlu0 %2088, %v356
      %v2090 = vpop.permute.xlu0 %2089
      %2092 = vset.pattern.permute.xlu0 8
      %2093 = vperm.xlu0 %2092, %v357
      %v2094 = vpop.permute.xlu0 %2093
      %2096 = vset.pattern.permute.xlu0 8
      %2097 = vperm.xlu0 %2096, %v358
      %v2098 = vpop.permute.xlu0 %2097
      %2100 = vset.pattern.permute.xlu0 8
      %2101 = vperm.xlu0 %2100, %v359
      %v2102 = vpop.permute.xlu0 %2101
      %2104 = vset.pattern.permute.xlu0 8
      %2105 = vperm.xlu0 %2104, %v360
      %v2106 = vpop.permute.xlu0 %2105
      %2108 = vset.pattern.permute.xlu0 8
      %2109 = vperm.xlu0 %2108, %v361
      %v2110 = vpop.permute.xlu0 %2109
      %2112 = vset.pattern.permute.xlu0 8
      %2113 = vperm.xlu0 %2112, %v362
      %v2114 = vpop.permute.xlu0 %2113
      %2116 = vset.pattern.permute.xlu0 8
      %2117 = vperm.xlu0 %2116, %v363
      %v2118 = vpop.permute.xlu0 %2117
      %2120 = vset.pattern.permute.xlu0 8
      %2121 = vperm.xlu0 %2120, %v364
      %v2122 = vpop.permute.xlu0 %2121
      %2124 = vset.pattern.permute.xlu0 8
      %2125 = vperm.xlu0 %2124, %v365
      %v2126 = vpop.permute.xlu0 %2125
      %2128 = vset.pattern.permute.xlu0 8
      %2129 = vperm.xlu0 %2128, %v366
      %v2130 = vpop.permute.xlu0 %2129
      %2132 = vset.pattern.permute.xlu0 8
      %2133 = vperm.xlu0 %2132, %v367
      %v2134 = vpop.permute.xlu0 %2133
      %2136 = vset.pattern.permute.xlu0 8
      %2137 = vperm.xlu0 %2136, %v368
      %v2138 = vpop.permute.xlu0 %2137
      %2140 = vset.pattern.permute.xlu0 8
      %2141 = vperm.xlu0 %2140, %v369
      %v2142 = vpop.permute.xlu0 %2141
      %2144 = vset.pattern.permute.xlu0 8
      %2145 = vperm.xlu0 %2144, %v370
      %v2146 = vpop.permute.xlu0 %2145
      %2148 = vset.pattern.permute.xlu0 8
      %2149 = vperm.xlu0 %2148, %v371
      %v2150 = vpop.permute.xlu0 %2149
      %2152 = vset.pattern.permute.xlu0 8
      %2153 = vperm.xlu0 %2152, %v372
      %v2154 = vpop.permute.xlu0 %2153
      %2156 = vset.pattern.permute.xlu0 8
      %2157 = vperm.xlu0 %2156, %v373
      %v2158 = vpop.permute.xlu0 %2157
      %2160 = vset.pattern.permute.xlu0 8
      %2161 = vperm.xlu0 %2160, %v374
      %v2162 = vpop.permute.xlu0 %2161
      %2164 = vset.pattern.permute.xlu0 8
      %2165 = vperm.xlu0 %2164, %v375
      %v2166 = vpop.permute.xlu0 %2165
      %2168 = vset.pattern.permute.xlu0 8
      %2169 = vperm.xlu0 %2168, %v376
      %v2170 = vpop.permute.xlu0 %2169
      %2172 = vset.pattern.permute.xlu0 8
      %2173 = vperm.xlu0 %2172, %v377
      %v2174 = vpop.permute.xlu0 %2173
      %2176 = vset.pattern.permute.xlu0 8
      %2177 = vperm.xlu0 %2176, %v378
      %v2178 = vpop.permute.xlu0 %2177
      %2180 = vset.pattern.permute.xlu0 8
      %2181 = vperm.xlu0 %2180, %v379
      %v2182 = vpop.permute.xlu0 %2181
      %2184 = vset.pattern.permute.xlu0 8
      %2185 = vperm.xlu0 %2184, %v380
      %v2186 = vpop.permute.xlu0 %2185
      %2188 = vset.pattern.permute.xlu0 8
      %2189 = vperm.xlu0 %2188, %v381
      %v2190 = vpop.permute.xlu0 %2189
      %2192 = vset.pattern.permute.xlu0 8
      %2193 = vperm.xlu0 %2192, %v382
      %v2194 = vpop.permute.xlu0 %2193
      %2196 = vset.pattern.permute.xlu0 8
      %2197 = vperm.xlu0 %2196, %v383
      %v2198 = vpop.permute.xlu0 %2197
      %2200 = vset.pattern.permute.xlu0 8
      %2201 = vperm.xlu0 %2200, %v384
      %v2202 = vpop.permute.xlu0 %2201
      %2204 = vset.pattern.permute.xlu0 8
      %2205 = vperm.xlu0 %2204, %v385
      %v2206 = vpop.permute.xlu0 %2205
      %2208 = vset.pattern.permute.xlu0 8
      %2209 = vperm.xlu0 %2208, %v386
      %v2210 = vpop.permute.xlu0 %2209
      %2212 = vset.pattern.permute.xlu0 8
      %2213 = vperm.xlu0 %2212, %v387
      %v2214 = vpop.permute.xlu0 %2213
      %v2216 = vmul.f32 %v932, %v2090
      %v2217 = vmul.f32 %v931, %v2094
      %v2218 = vmul.f32 %v930, %v2098
      %v2219 = vmul.f32 %v929, %v2102
      %v2220 = vmul.f32 %v928, %v2106
      %v2221 = vmul.f32 %v927, %v2110
      %v2222 = vmul.f32 %v926, %v2114
      %v2223 = vmul.f32 %v925, %v2118
      %v2224 = vmul.f32 %v924, %v2122
      %v2225 = vmul.f32 %v923, %v2126
      %v2226 = vmul.f32 %v922, %v2130
      %v2227 = vmul.f32 %v921, %v2134
      %v2228 = vmul.f32 %v920, %v2138
      %v2229 = vmul.f32 %v919, %v2142
      %v2230 = vmul.f32 %v918, %v2146
      %v2231 = vmul.f32 %v917, %v2150
      %v2232 = vmul.f32 %v916, %v2154
      %v2233 = vmul.f32 %v915, %v2158
      %v2234 = vmul.f32 %v914, %v2162
      %v2235 = vmul.f32 %v913, %v2166
      %v2236 = vmul.f32 %v912, %v2170
      %v2237 = vmul.f32 %v911, %v2174
      %v2238 = vmul.f32 %v910, %v2178
      %v2239 = vmul.f32 %v909, %v2182
      %v2240 = vmul.f32 %v908, %v2186
      %v2241 = vmul.f32 %v907, %v2190
      %v2242 = vmul.f32 %v906, %v2194
      %v2243 = vmul.f32 %v905, %v2198
      %v2244 = vmul.f32 %v904, %v2202
      %v2245 = vmul.f32 %v935, %v2206
      %v2246 = vmul.f32 %v934, %v2210
      %v2247 = vmul.f32 %v933, %v2214
      %v2248 = vpack.c.bf16 %v2217, %v2216
      %v2249 = vpack.c.bf16 %v2219, %v2218
      %v2250 = vpack.c.bf16 %v2221, %v2220
      %v2251 = vpack.c.bf16 %v2223, %v2222
      %v2252 = vpack.c.bf16 %v2225, %v2224
      %v2253 = vpack.c.bf16 %v2227, %v2226
      %v2254 = vpack.c.bf16 %v2229, %v2228
      %v2255 = vpack.c.bf16 %v2231, %v2230
      %v2256 = vpack.c.bf16 %v2233, %v2232
      %v2257 = vpack.c.bf16 %v2235, %v2234
      %v2258 = vpack.c.bf16 %v2237, %v2236
      %v2259 = vpack.c.bf16 %v2239, %v2238
      %v2260 = vpack.c.bf16 %v2241, %v2240
      %v2261 = vpack.c.bf16 %v2243, %v2242
      %v2262 = vpack.c.bf16 %v2245, %v2244
      %v2263 = vpack.c.bf16 %v2247, %v2246
      %2264 = vst [vmem:[#allocation2 + $0x40] sm:$0xff] %v2248
      %2265 = vst [vmem:[#allocation2 + $0x88] sm:$0xff] %v2249
      %2266 = vst [vmem:[#allocation2 + $0xd0] sm:$0xff] %v2250
      %2267 = vst [vmem:[#allocation2 + $0x118] sm:$0xff] %v2251
      %2268 = vst [vmem:[#allocation2 + $0x160] sm:$0xff] %v2252
      %2269 = vst [vmem:[#allocation2 + $0x1a8] sm:$0xff] %v2253
      %2270 = vst [vmem:[#allocation2 + $0x1f0] sm:$0xff] %v2254
      %2271 = vst [vmem:[#allocation2 + $0x238] sm:$0xff] %v2255
      %2272 = vst [vmem:[#allocation2 + $0x280] sm:$0xff] %v2256
      %2273 = vst [vmem:[#allocation2 + $0x2c8] sm:$0xff] %v2257
      %2274 = vst [vmem:[#allocation2 + $0x310] sm:$0xff] %v2258
      %2275 = vst [vmem:[#allocation2 + $0x358] sm:$0xff] %v2259
      %2276 = vst [vmem:[#allocation2 + $0x3a0] sm:$0xff] %v2260
      %2277 = vst [vmem:[#allocation2 + $0x3e8] sm:$0xff] %v2261
      %2278 = vst [vmem:[#allocation2 + $0x430] sm:$0xff] %v2262
      %2279 = vst [vmem:[#allocation2 + $0x478] sm:$0xff] %v2263
      %v2280 = vld [vmem:[#allocation2] sm:$0xff]
      %v2281 = vld [vmem:[#allocation2 + $0x8] sm:$0xff]
      %v2282 = vld [vmem:[#allocation2 + $0x10] sm:$0xff]
      %v2283 = vld [vmem:[#allocation2 + $0x18] sm:$0xff]
      %v2284 = vld [vmem:[#allocation2 + $0x20] sm:$0xff]
      %v2285 = vld [vmem:[#allocation2 + $0x28] sm:$0xff]
      %v2286 = vld [vmem:[#allocation2 + $0x30] sm:$0xff]
      %v2287 = vld [vmem:[#allocation2 + $0x38] sm:$0xff]
      %v2288 = vld [vmem:[#allocation2 + $0x40] sm:$0xff]
      %v2289 = vld [vmem:[#allocation2 + $0x48] sm:$0xff]
      %v2290 = vld [vmem:[#allocation2 + $0x50] sm:$0xff]
      %v2291 = vld [vmem:[#allocation2 + $0x58] sm:$0xff]
      %v2292 = vld [vmem:[#allocation2 + $0x60] sm:$0xff]
      %v2293 = vld [vmem:[#allocation2 + $0x68] sm:$0xff]
      %v2294 = vld [vmem:[#allocation2 + $0x70] sm:$0xff]
      %v2295 = vld [vmem:[#allocation2 + $0x78] sm:$0xff]
      %v2296 = vld [vmem:[#allocation2 + $0x80] sm:$0xff]
      %v2297 = vld [vmem:[#allocation2 + $0x88] sm:$0xff]
      %v2298 = vld [vmem:[#allocation2 + $0x90] sm:$0xff]
      %v2299 = vld [vmem:[#allocation2 + $0x98] sm:$0xff]
      %v2300 = vld [vmem:[#allocation2 + $0xa0] sm:$0xff]
      %v2301 = vld [vmem:[#allocation2 + $0xa8] sm:$0xff]
      %v2302 = vld [vmem:[#allocation2 + $0xb0] sm:$0xff]
      %v2303 = vld [vmem:[#allocation2 + $0xb8] sm:$0xff]
      %v2304 = vld [vmem:[#allocation2 + $0xc0] sm:$0xff]
      %v2305 = vld [vmem:[#allocation2 + $0xc8] sm:$0xff]
      %v2306 = vld [vmem:[#allocation2 + $0xd0] sm:$0xff]
      %v2307 = vld [vmem:[#allocation2 + $0xd8] sm:$0xff]
      %v2308 = vld [vmem:[#allocation2 + $0xe0] sm:$0xff]
      %v2309 = vld [vmem:[#allocation2 + $0xe8] sm:$0xff]
      %v2310 = vld [vmem:[#allocation2 + $0xf0] sm:$0xff]
      %v2311 = vld [vmem:[#allocation2 + $0xf8] sm:$0xff]
      %v2312 = vld [vmem:[#allocation2 + $0x100] sm:$0xff]
      %v2313 = vld [vmem:[#allocation2 + $0x108] sm:$0xff]
      %v2314 = vld [vmem:[#allocation2 + $0x110] sm:$0xff]
      %v2315 = vld [vmem:[#allocation2 + $0x118] sm:$0xff]
      %v2316 = vld [vmem:[#allocation2 + $0x120] sm:$0xff]
      %v2317 = vld [vmem:[#allocation2 + $0x128] sm:$0xff]
      %v2318 = vld [vmem:[#allocation2 + $0x130] sm:$0xff]
      %v2319 = vld [vmem:[#allocation2 + $0x138] sm:$0xff]
      %v2320 = vld [vmem:[#allocation2 + $0x140] sm:$0xff]
      %v2321 = vld [vmem:[#allocation2 + $0x148] sm:$0xff]
      %v2322 = vld [vmem:[#allocation2 + $0x150] sm:$0xff]
      %v2323 = vld [vmem:[#allocation2 + $0x158] sm:$0xff]
      %v2324 = vld [vmem:[#allocation2 + $0x160] sm:$0xff]
      %v2325 = vld [vmem:[#allocation2 + $0x168] sm:$0xff]
      %v2326 = vld [vmem:[#allocation2 + $0x170] sm:$0xff]
      %v2327 = vld [vmem:[#allocation2 + $0x178] sm:$0xff]
      %v2328 = vld [vmem:[#allocation2 + $0x180] sm:$0xff]
      %v2329 = vld [vmem:[#allocation2 + $0x188] sm:$0xff]
      %v2330 = vld [vmem:[#allocation2 + $0x190] sm:$0xff]
      %v2331 = vld [vmem:[#allocation2 + $0x198] sm:$0xff]
      %v2332 = vld [vmem:[#allocation2 + $0x1a0] sm:$0xff]
      %v2333 = vld [vmem:[#allocation2 + $0x1a8] sm:$0xff]
      %v2334 = vld [vmem:[#allocation2 + $0x1b0] sm:$0xff]
      %v2335 = vld [vmem:[#allocation2 + $0x1b8] sm:$0xff]
      %v2336 = vld [vmem:[#allocation2 + $0x1c0] sm:$0xff]
      %v2337 = vld [vmem:[#allocation2 + $0x1c8] sm:$0xff]
      %v2338 = vld [vmem:[#allocation2 + $0x1d0] sm:$0xff]
      %v2339 = vld [vmem:[#allocation2 + $0x1d8] sm:$0xff]
      %v2340 = vld [vmem:[#allocation2 + $0x1e0] sm:$0xff]
      %v2341 = vld [vmem:[#allocation2 + $0x1e8] sm:$0xff]
      %v2342 = vld [vmem:[#allocation2 + $0x1f0] sm:$0xff]
      %v2343 = vld [vmem:[#allocation2 + $0x1f8] sm:$0xff]
      %v2344 = vld [vmem:[#allocation2 + $0x200] sm:$0xff]
      %v2345 = vld [vmem:[#allocation2 + $0x208] sm:$0xff]
      %v2346 = vld [vmem:[#allocation2 + $0x210] sm:$0xff]
      %v2347 = vld [vmem:[#allocation2 + $0x218] sm:$0xff]
      %v2348 = vld [vmem:[#allocation2 + $0x220] sm:$0xff]
      %v2349 = vld [vmem:[#allocation2 + $0x228] sm:$0xff]
      %v2350 = vld [vmem:[#allocation2 + $0x230] sm:$0xff]
      %v2351 = vld [vmem:[#allocation2 + $0x238] sm:$0xff]
      %v2352 = vld [vmem:[#allocation2 + $0x240] sm:$0xff]
      %v2353 = vld [vmem:[#allocation2 + $0x248] sm:$0xff]
      %v2354 = vld [vmem:[#allocation2 + $0x250] sm:$0xff]
      %v2355 = vld [vmem:[#allocation2 + $0x258] sm:$0xff]
      %v2356 = vld [vmem:[#allocation2 + $0x260] sm:$0xff]
      %v2357 = vld [vmem:[#allocation2 + $0x268] sm:$0xff]
      %v2358 = vld [vmem:[#allocation2 + $0x270] sm:$0xff]
      %v2359 = vld [vmem:[#allocation2 + $0x278] sm:$0xff]
      %v2360 = vld [vmem:[#allocation2 + $0x280] sm:$0xff]
      %v2361 = vld [vmem:[#allocation2 + $0x288] sm:$0xff]
      %v2362 = vld [vmem:[#allocation2 + $0x290] sm:$0xff]
      %v2363 = vld [vmem:[#allocation2 + $0x298] sm:$0xff]
      %v2364 = vld [vmem:[#allocation2 + $0x2a0] sm:$0xff]
      %v2365 = vld [vmem:[#allocation2 + $0x2a8] sm:$0xff]
      %v2366 = vld [vmem:[#allocation2 + $0x2b0] sm:$0xff]
      %v2367 = vld [vmem:[#allocation2 + $0x2b8] sm:$0xff]
      %v2368 = vld [vmem:[#allocation2 + $0x2c0] sm:$0xff]
      %v2369 = vld [vmem:[#allocation2 + $0x2c8] sm:$0xff]
      %v2370 = vld [vmem:[#allocation2 + $0x2d0] sm:$0xff]
      %v2371 = vld [vmem:[#allocation2 + $0x2d8] sm:$0xff]
      %v2372 = vld [vmem:[#allocation2 + $0x2e0] sm:$0xff]
      %v2373 = vld [vmem:[#allocation2 + $0x2e8] sm:$0xff]
      %v2374 = vld [vmem:[#allocation2 + $0x2f0] sm:$0xff]
      %v2375 = vld [vmem:[#allocation2 + $0x2f8] sm:$0xff]
      %v2376 = vld [vmem:[#allocation2 + $0x300] sm:$0xff]
      %v2377 = vld [vmem:[#allocation2 + $0x308] sm:$0xff]
      %v2378 = vld [vmem:[#allocation2 + $0x310] sm:$0xff]
      %v2379 = vld [vmem:[#allocation2 + $0x318] sm:$0xff]
      %v2380 = vld [vmem:[#allocation2 + $0x320] sm:$0xff]
      %v2381 = vld [vmem:[#allocation2 + $0x328] sm:$0xff]
      %v2382 = vld [vmem:[#allocation2 + $0x330] sm:$0xff]
      %v2383 = vld [vmem:[#allocation2 + $0x338] sm:$0xff]
      %v2384 = vld [vmem:[#allocation2 + $0x340] sm:$0xff]
      %v2385 = vld [vmem:[#allocation2 + $0x348] sm:$0xff]
      %v2386 = vld [vmem:[#allocation2 + $0x350] sm:$0xff]
      %v2387 = vld [vmem:[#allocation2 + $0x358] sm:$0xff]
      %v2388 = vld [vmem:[#allocation2 + $0x360] sm:$0xff]
      %v2389 = vld [vmem:[#allocation2 + $0x368] sm:$0xff]
      %v2390 = vld [vmem:[#allocation2 + $0x370] sm:$0xff]
      %v2391 = vld [vmem:[#allocation2 + $0x378] sm:$0xff]
      %v2392 = vld [vmem:[#allocation2 + $0x380] sm:$0xff]
      %v2393 = vld [vmem:[#allocation2 + $0x388] sm:$0xff]
      %v2394 = vld [vmem:[#allocation2 + $0x390] sm:$0xff]
      %v2395 = vld [vmem:[#allocation2 + $0x398] sm:$0xff]
      %v2396 = vld [vmem:[#allocation2 + $0x3a0] sm:$0xff]
      %v2397 = vld [vmem:[#allocation2 + $0x3a8] sm:$0xff]
      %v2398 = vld [vmem:[#allocation2 + $0x3b0] sm:$0xff]
      %v2399 = vld [vmem:[#allocation2 + $0x3b8] sm:$0xff]
      %v2400 = vld [vmem:[#allocation2 + $0x3c0] sm:$0xff]
      %v2401 = vld [vmem:[#allocation2 + $0x3c8] sm:$0xff]
      %v2402 = vld [vmem:[#allocation2 + $0x3d0] sm:$0xff]
      %v2403 = vld [vmem:[#allocation2 + $0x3d8] sm:$0xff]
      %v2404 = vld [vmem:[#allocation2 + $0x3e0] sm:$0xff]
      %v2405 = vld [vmem:[#allocation2 + $0x3e8] sm:$0xff]
      %v2406 = vld [vmem:[#allocation2 + $0x3f0] sm:$0xff]
      %v2407 = vld [vmem:[#allocation2 + $0x3f8] sm:$0xff]
      %v2408 = vld [vmem:[#allocation2 + $0x400] sm:$0xff]
      %v2409 = vld [vmem:[#allocation2 + $0x408] sm:$0xff]
      %v2410 = vld [vmem:[#allocation2 + $0x410] sm:$0xff]
      %v2411 = vld [vmem:[#allocation2 + $0x418] sm:$0xff]
      %v2412 = vld [vmem:[#allocation2 + $0x420] sm:$0xff]
      %v2413 = vld [vmem:[#allocation2 + $0x428] sm:$0xff]
      %v2414 = vld [vmem:[#allocation2 + $0x430] sm:$0xff]
      %v2415 = vld [vmem:[#allocation2 + $0x438] sm:$0xff]
      %v2416 = vld [vmem:[#allocation2 + $0x440] sm:$0xff]
      %v2417 = vld [vmem:[#allocation2 + $0x448] sm:$0xff]
      %v2418 = vld [vmem:[#allocation2 + $0x450] sm:$0xff]
      %v2419 = vld [vmem:[#allocation2 + $0x458] sm:$0xff]
      %v2420 = vld [vmem:[#allocation2 + $0x460] sm:$0xff]
      %v2421 = vld [vmem:[#allocation2 + $0x468] sm:$0xff]
      %v2422 = vld [vmem:[#allocation2 + $0x470] sm:$0xff]
      %v2423 = vld [vmem:[#allocation2 + $0x478] sm:$0xff]
      %v2424 = vld [vmem:[%s2] sm:$0xf]
      %v2425 = vld [vmem:[%s2 + $0x4] sm:$0xf]
      %v2426 = vld [vmem:[%s2 + $0x8] sm:$0xf]
      %v2427 = vld [vmem:[%s2 + $0xc] sm:$0xf]
      %v2428 = vld [vmem:[%s2 + $0x10] sm:$0xf]
      %v2429 = vld [vmem:[%s2 + $0x14] sm:$0xf]
      %v2430 = vld [vmem:[%s2 + $0x18] sm:$0xf]
      %v2431 = vld [vmem:[%s2 + $0x1c] sm:$0xf]
      %v2432 = vld [vmem:[%s2 + $0x20] sm:$0xf]
      %v2433 = vld [vmem:[%s2 + $0x24] sm:$0xf]
      %v2434 = vld [vmem:[%s2 + $0x28] sm:$0xf]
      %v2435 = vld [vmem:[%s2 + $0x2c] sm:$0xf]
      %v2436 = vld [vmem:[%s2 + $0x30] sm:$0xf]
      %v2437 = vld [vmem:[%s2 + $0x34] sm:$0xf]
      %v2438 = vld [vmem:[%s2 + $0x38] sm:$0xf]
      %v2439 = vld [vmem:[%s2 + $0x3c] sm:$0xf]
      %v2440 = vld [vmem:[%s2 + $0x40] sm:$0xf]
      %v2441 = vld [vmem:[%s2 + $0x44] sm:$0xf]
      %v2442 = vld [vmem:[%s2 + $0x48] sm:$0xf]
      %v2443 = vld [vmem:[%s2 + $0x4c] sm:$0xf]
      %v2444 = vld [vmem:[%s2 + $0x50] sm:$0xf]
      %v2445 = vld [vmem:[%s2 + $0x54] sm:$0xf]
      %v2446 = vld [vmem:[%s2 + $0x58] sm:$0xf]
      %v2447 = vld [vmem:[%s2 + $0x5c] sm:$0xf]
      %v2448 = vld [vmem:[%s2 + $0x60] sm:$0xf]
      %v2449 = vld [vmem:[%s2 + $0x64] sm:$0xf]
      %v2450 = vld [vmem:[%s2 + $0x68] sm:$0xf]
      %v2451 = vld [vmem:[%s2 + $0x6c] sm:$0xf]
      %v2452 = vld [vmem:[%s2 + $0x70] sm:$0xf]
      %v2453 = vld [vmem:[%s2 + $0x74] sm:$0xf]
      %v2454 = vld [vmem:[%s2 + $0x78] sm:$0xf]
      %v2455 = vld [vmem:[%s2 + $0x7c] sm:$0xf]
      %v2456 = vld [vmem:[%s2 + $0x80] sm:$0xf]
      %v2457 = vld [vmem:[%s2 + $0x84] sm:$0xf]
      %v2458 = vld [vmem:[%s2 + $0x88] sm:$0xf]
      %v2459 = vld [vmem:[%s2 + $0x8c] sm:$0xf]
      %v2460 = vld [vmem:[%s2 + $0x90] sm:$0xf]
      %v2461 = vld [vmem:[%s2 + $0x94] sm:$0xf]
      %v2462 = vld [vmem:[%s2 + $0x98] sm:$0xf]
      %v2463 = vld [vmem:[%s2 + $0x9c] sm:$0xf]
      %v2464 = vld [vmem:[%s2 + $0xa0] sm:$0xf]
      %v2465 = vld [vmem:[%s2 + $0xa4] sm:$0xf]
      %v2466 = vld [vmem:[%s2 + $0xa8] sm:$0xf]
      %v2467 = vld [vmem:[%s2 + $0xac] sm:$0xf]
      %v2468 = vld [vmem:[%s2 + $0xb0] sm:$0xf]
      %v2469 = vld [vmem:[%s2 + $0xb4] sm:$0xf]
      %v2470 = vld [vmem:[%s2 + $0xb8] sm:$0xf]
      %v2471 = vld [vmem:[%s2 + $0xbc] sm:$0xf]
      %v2472 = vld [vmem:[%s2 + $0xc0] sm:$0xf]
      %v2473 = vld [vmem:[%s2 + $0xc4] sm:$0xf]
      %v2474 = vld [vmem:[%s2 + $0xc8] sm:$0xf]
      %v2475 = vld [vmem:[%s2 + $0xcc] sm:$0xf]
      %v2476 = vld [vmem:[%s2 + $0xd0] sm:$0xf]
      %v2477 = vld [vmem:[%s2 + $0xd4] sm:$0xf]
      %v2478 = vld [vmem:[%s2 + $0xd8] sm:$0xf]
      %v2479 = vld [vmem:[%s2 + $0xdc] sm:$0xf]
      %v2480 = vld [vmem:[%s2 + $0xe0] sm:$0xf]
      %v2481 = vld [vmem:[%s2 + $0xe4] sm:$0xf]
      %v2482 = vld [vmem:[%s2 + $0xe8] sm:$0xf]
      %v2483 = vld [vmem:[%s2 + $0xec] sm:$0xf]
      %v2484 = vld [vmem:[%s2 + $0xf0] sm:$0xf]
      %v2485 = vld [vmem:[%s2 + $0xf4] sm:$0xf]
      %v2486 = vld [vmem:[%s2 + $0xf8] sm:$0xf]
      %v2487 = vld [vmem:[%s2 + $0xfc] sm:$0xf]
      %v2488 = vld [vmem:[%s2 + $0x100] sm:$0xf]
      %v2489 = vld [vmem:[%s2 + $0x104] sm:$0xf]
      %v2490 = vld [vmem:[%s2 + $0x108] sm:$0xf]
      %v2491 = vld [vmem:[%s2 + $0x10c] sm:$0xf]
      %v2492 = vld [vmem:[%s2 + $0x110] sm:$0xf]
      %v2493 = vld [vmem:[%s2 + $0x114] sm:$0xf]
      %v2494 = vld [vmem:[%s2 + $0x118] sm:$0xf]
      %v2495 = vld [vmem:[%s2 + $0x11c] sm:$0xf]
      %v2496 = vld [vmem:[%s2 + $0x120] sm:$0xf]
      %v2497 = vld [vmem:[%s2 + $0x124] sm:$0xf]
      %v2498 = vld [vmem:[%s2 + $0x128] sm:$0xf]
      %v2499 = vld [vmem:[%s2 + $0x12c] sm:$0xf]
      %v2500 = vld [vmem:[%s2 + $0x130] sm:$0xf]
      %v2501 = vld [vmem:[%s2 + $0x134] sm:$0xf]
      %v2502 = vld [vmem:[%s2 + $0x138] sm:$0xf]
      %v2503 = vld [vmem:[%s2 + $0x13c] sm:$0xf]
      %v2504 = vld [vmem:[%s2 + $0x140] sm:$0xf]
      %v2505 = vld [vmem:[%s2 + $0x144] sm:$0xf]
      %v2506 = vld [vmem:[%s2 + $0x148] sm:$0xf]
      %v2507 = vld [vmem:[%s2 + $0x14c] sm:$0xf]
      %v2508 = vld [vmem:[%s2 + $0x150] sm:$0xf]
      %v2509 = vld [vmem:[%s2 + $0x154] sm:$0xf]
      %v2510 = vld [vmem:[%s2 + $0x158] sm:$0xf]
      %v2511 = vld [vmem:[%s2 + $0x15c] sm:$0xf]
      %v2512 = vld [vmem:[%s2 + $0x160] sm:$0xf]
      %v2513 = vld [vmem:[%s2 + $0x164] sm:$0xf]
      %v2514 = vld [vmem:[%s2 + $0x168] sm:$0xf]
      %v2515 = vld [vmem:[%s2 + $0x16c] sm:$0xf]
      %v2516 = vld [vmem:[%s2 + $0x170] sm:$0xf]
      %v2517 = vld [vmem:[%s2 + $0x174] sm:$0xf]
      %v2518 = vld [vmem:[%s2 + $0x178] sm:$0xf]
      %v2519 = vld [vmem:[%s2 + $0x17c] sm:$0xf]
      %v2520 = vld [vmem:[%s2 + $0x180] sm:$0xf]
      %v2521 = vld [vmem:[%s2 + $0x184] sm:$0xf]
      %v2522 = vld [vmem:[%s2 + $0x188] sm:$0xf]
      %v2523 = vld [vmem:[%s2 + $0x18c] sm:$0xf]
      %v2524 = vld [vmem:[%s2 + $0x190] sm:$0xf]
      %v2525 = vld [vmem:[%s2 + $0x194] sm:$0xf]
      %v2526 = vld [vmem:[%s2 + $0x198] sm:$0xf]
      %v2527 = vld [vmem:[%s2 + $0x19c] sm:$0xf]
      %v2528 = vld [vmem:[%s2 + $0x1a0] sm:$0xf]
      %v2529 = vld [vmem:[%s2 + $0x1a4] sm:$0xf]
      %v2530 = vld [vmem:[%s2 + $0x1a8] sm:$0xf]
      %v2531 = vld [vmem:[%s2 + $0x1ac] sm:$0xf]
      %v2532 = vld [vmem:[%s2 + $0x1b0] sm:$0xf]
      %v2533 = vld [vmem:[%s2 + $0x1b4] sm:$0xf]
      %v2534 = vld [vmem:[%s2 + $0x1b8] sm:$0xf]
      %v2535 = vld [vmem:[%s2 + $0x1bc] sm:$0xf]
      %v2536 = vld [vmem:[%s2 + $0x1c0] sm:$0xf]
      %v2537 = vld [vmem:[%s2 + $0x1c4] sm:$0xf]
      %v2538 = vld [vmem:[%s2 + $0x1c8] sm:$0xf]
      %v2539 = vld [vmem:[%s2 + $0x1cc] sm:$0xf]
      %v2540 = vld [vmem:[%s2 + $0x1d0] sm:$0xf]
      %v2541 = vld [vmem:[%s2 + $0x1d4] sm:$0xf]
      %v2542 = vld [vmem:[%s2 + $0x1d8] sm:$0xf]
      %v2543 = vld [vmem:[%s2 + $0x1dc] sm:$0xf]
      %v2544 = vld [vmem:[%s2 + $0x1e0] sm:$0xf]
      %v2545 = vld [vmem:[%s2 + $0x1e4] sm:$0xf]
      %v2546 = vld [vmem:[%s2 + $0x1e8] sm:$0xf]
      %v2547 = vld [vmem:[%s2 + $0x1ec] sm:$0xf]
      %v2548 = vld [vmem:[%s2 + $0x1f0] sm:$0xf]
      %v2549 = vld [vmem:[%s2 + $0x1f4] sm:$0xf]
      %v2550 = vld [vmem:[%s2 + $0x1f8] sm:$0xf]
      %v2551 = vld [vmem:[%s2 + $0x1fc] sm:$0xf]
      %v2552 = vld [vmem:[%s2 + $0x200] sm:$0xf]
      %v2553 = vld [vmem:[%s2 + $0x204] sm:$0xf]
      %v2554 = vld [vmem:[%s2 + $0x208] sm:$0xf]
      %v2555 = vld [vmem:[%s2 + $0x20c] sm:$0xf]
      %v2556 = vld [vmem:[%s2 + $0x210] sm:$0xf]
      %v2557 = vld [vmem:[%s2 + $0x214] sm:$0xf]
      %v2558 = vld [vmem:[%s2 + $0x218] sm:$0xf]
      %v2559 = vld [vmem:[%s2 + $0x21c] sm:$0xf]
      %v2560 = vld [vmem:[%s2 + $0x220] sm:$0xf]
      %v2561 = vld [vmem:[%s2 + $0x224] sm:$0xf]
      %v2562 = vld [vmem:[%s2 + $0x228] sm:$0xf]
      %v2563 = vld [vmem:[%s2 + $0x22c] sm:$0xf]
      %v2564 = vld [vmem:[%s2 + $0x230] sm:$0xf]
      %v2565 = vld [vmem:[%s2 + $0x234] sm:$0xf]
      %v2566 = vld [vmem:[%s2 + $0x238] sm:$0xf]
      %v2567 = vld [vmem:[%s2 + $0x23c] sm:$0xf]
      %v2568 = vld [vmem:[%s3] sm:$0x1]
      %v2570 = vlaneseq
      %v2571 = vshrl.u32 %v2570, 7
      %v2572 = vsub.s32 0, %v2571
      %v2573 = vrot.slane %v2568, %v2572
      %v2719 = vunpack.c.l.b16 %v2424
      %v2720 = vunpack.c.l.b16 %v2425
      %v2721 = vunpack.c.l.b16 %v2426
      %v2722 = vunpack.c.l.b16 %v2427
      %v2723 = vunpack.c.l.b16 %v2428
      %v2724 = vunpack.c.l.b16 %v2429
      %v2725 = vunpack.c.l.b16 %v2430
      %v2726 = vunpack.c.l.b16 %v2431
      %v2727 = vunpack.c.l.b16 %v2432
      %v2728 = vunpack.c.l.b16 %v2433
      %v2729 = vunpack.c.l.b16 %v2434
      %v2730 = vunpack.c.l.b16 %v2435
      %v2731 = vunpack.c.l.b16 %v2436
      %v2732 = vunpack.c.l.b16 %v2437
      %v2733 = vunpack.c.l.b16 %v2438
      %v2734 = vunpack.c.l.b16 %v2439
      %v2735 = vunpack.c.l.b16 %v2440
      %v2736 = vunpack.c.l.b16 %v2441
      %v2737 = vunpack.c.l.b16 %v2442
      %v2738 = vunpack.c.l.b16 %v2443
      %v2739 = vunpack.c.l.b16 %v2444
      %v2740 = vunpack.c.l.b16 %v2445
      %v2741 = vunpack.c.l.b16 %v2446
      %v2742 = vunpack.c.l.b16 %v2447
      %v2743 = vunpack.c.l.b16 %v2448
      %v2744 = vunpack.c.l.b16 %v2449
      %v2745 = vunpack.c.l.b16 %v2450
      %v2746 = vunpack.c.l.b16 %v2451
      %v2747 = vunpack.c.l.b16 %v2452
      %v2748 = vunpack.c.l.b16 %v2453
      %v2749 = vunpack.c.l.b16 %v2454
      %v2750 = vunpack.c.l.b16 %v2455
      %v2751 = vunpack.c.l.b16 %v2456
      %v2752 = vunpack.c.l.b16 %v2457
      %v2753 = vunpack.c.l.b16 %v2458
      %v2754 = vunpack.c.l.b16 %v2459
      %v2755 = vunpack.c.l.b16 %v2460
      %v2756 = vunpack.c.l.b16 %v2461
      %v2757 = vunpack.c.l.b16 %v2462
      %v2758 = vunpack.c.l.b16 %v2463
      %v2759 = vunpack.c.l.b16 %v2464
      %v2760 = vunpack.c.l.b16 %v2465
      %v2761 = vunpack.c.l.b16 %v2466
      %v2762 = vunpack.c.l.b16 %v2467
      %v2763 = vunpack.c.l.b16 %v2468
      %v2764 = vunpack.c.l.b16 %v2469
      %v2765 = vunpack.c.l.b16 %v2470
      %v2766 = vunpack.c.l.b16 %v2471
      %v2767 = vunpack.c.l.b16 %v2472
      %v2768 = vunpack.c.l.b16 %v2473
      %v2769 = vunpack.c.l.b16 %v2474
      %v2770 = vunpack.c.l.b16 %v2475
      %v2771 = vunpack.c.l.b16 %v2476
      %v2772 = vunpack.c.l.b16 %v2477
      %v2773 = vunpack.c.l.b16 %v2478
      %v2774 = vunpack.c.l.b16 %v2479
      %v2775 = vunpack.c.l.b16 %v2480
      %v2776 = vunpack.c.l.b16 %v2481
      %v2777 = vunpack.c.l.b16 %v2482
      %v2778 = vunpack.c.l.b16 %v2483
      %v2779 = vunpack.c.l.b16 %v2484
      %v2780 = vunpack.c.l.b16 %v2485
      %v2781 = vunpack.c.l.b16 %v2486
      %v2782 = vunpack.c.l.b16 %v2487
      %v2783 = vunpack.c.l.b16 %v2488
      %v2784 = vunpack.c.l.b16 %v2489
      %v2785 = vunpack.c.l.b16 %v2490
      %v2786 = vunpack.c.l.b16 %v2491
      %v2787 = vunpack.c.l.b16 %v2492
      %v2788 = vunpack.c.l.b16 %v2493
      %v2789 = vunpack.c.l.b16 %v2494
      %v2790 = vunpack.c.l.b16 %v2495
      %v2791 = vunpack.c.l.b16 %v2496
      %v2792 = vunpack.c.l.b16 %v2497
      %v2793 = vunpack.c.l.b16 %v2498
      %v2794 = vunpack.c.l.b16 %v2499
      %v2795 = vunpack.c.l.b16 %v2500
      %v2796 = vunpack.c.l.b16 %v2501
      %v2797 = vunpack.c.l.b16 %v2502
      %v2798 = vunpack.c.l.b16 %v2503
      %v2799 = vunpack.c.l.b16 %v2504
      %v2800 = vunpack.c.l.b16 %v2505
      %v2801 = vunpack.c.l.b16 %v2506
      %v2802 = vunpack.c.l.b16 %v2507
      %v2803 = vunpack.c.l.b16 %v2508
      %v2804 = vunpack.c.l.b16 %v2509
      %v2805 = vunpack.c.l.b16 %v2510
      %v2806 = vunpack.c.l.b16 %v2511
      %v2807 = vunpack.c.l.b16 %v2512
      %v2808 = vunpack.c.l.b16 %v2513
      %v2809 = vunpack.c.l.b16 %v2514
      %v2810 = vunpack.c.l.b16 %v2515
      %v2811 = vunpack.c.l.b16 %v2516
      %v2812 = vunpack.c.l.b16 %v2517
      %v2813 = vunpack.c.l.b16 %v2518
      %v2814 = vunpack.c.l.b16 %v2519
      %v2815 = vunpack.c.l.b16 %v2520
      %v2816 = vunpack.c.l.b16 %v2521
      %v2817 = vunpack.c.l.b16 %v2522
      %v2818 = vunpack.c.l.b16 %v2523
      %v2819 = vunpack.c.l.b16 %v2524
      %v2820 = vunpack.c.l.b16 %v2525
      %v2821 = vunpack.c.l.b16 %v2526
      %v2822 = vunpack.c.l.b16 %v2527
      %v2823 = vunpack.c.l.b16 %v2528
      %v2824 = vunpack.c.l.b16 %v2529
      %v2825 = vunpack.c.l.b16 %v2530
      %v2826 = vunpack.c.l.b16 %v2531
      %v2827 = vunpack.c.l.b16 %v2532
      %v2828 = vunpack.c.l.b16 %v2533
      %v2829 = vunpack.c.l.b16 %v2534
      %v2830 = vunpack.c.l.b16 %v2535
      %v2831 = vunpack.c.l.b16 %v2536
      %v2832 = vunpack.c.l.b16 %v2537
      %v2833 = vunpack.c.l.b16 %v2538
      %v2834 = vunpack.c.l.b16 %v2539
      %v2835 = vunpack.c.l.b16 %v2540
      %v2836 = vunpack.c.l.b16 %v2541
      %v2837 = vunpack.c.l.b16 %v2542
      %v2838 = vunpack.c.l.b16 %v2543
      %v2839 = vunpack.c.l.b16 %v2544
      %v2840 = vunpack.c.l.b16 %v2545
      %v2841 = vunpack.c.l.b16 %v2546
      %v2842 = vunpack.c.l.b16 %v2547
      %v2843 = vunpack.c.l.b16 %v2548
      %v2844 = vunpack.c.l.b16 %v2549
      %v2845 = vunpack.c.l.b16 %v2550
      %v2846 = vunpack.c.l.b16 %v2551
      %v2847 = vunpack.c.l.b16 %v2552
      %v2848 = vunpack.c.l.b16 %v2553
      %v2849 = vunpack.c.l.b16 %v2554
      %v2850 = vunpack.c.l.b16 %v2555
      %v2851 = vunpack.c.l.b16 %v2556
      %v2852 = vunpack.c.l.b16 %v2557
      %v2853 = vunpack.c.l.b16 %v2558
      %v2854 = vunpack.c.l.b16 %v2559
      %v2855 = vunpack.c.l.b16 %v2560
      %v2856 = vunpack.c.l.b16 %v2561
      %v2857 = vunpack.c.l.b16 %v2562
      %v2858 = vunpack.c.l.b16 %v2563
      %v2859 = vunpack.c.l.b16 %v2564
      %v2860 = vunpack.c.l.b16 %v2565
      %v2861 = vunpack.c.l.b16 %v2566
      %v2862 = vunpack.c.l.b16 %v2567
      %v2863 = vpack.c.b16 %v2720, %v2719
      %v2864 = vpack.c.b16 %v2722, %v2721
      %v2865 = vpack.c.b16 %v2724, %v2723
      %v2866 = vpack.c.b16 %v2726, %v2725
      %v2867 = vpack.c.b16 %v2728, %v2727
      %v2868 = vpack.c.b16 %v2730, %v2729
      %v2869 = vpack.c.b16 %v2732, %v2731
      %v2870 = vpack.c.b16 %v2734, %v2733
      %v2871 = vpack.c.b16 %v2736, %v2735
      %v2872 = vpack.c.b16 %v2738, %v2737
      %v2873 = vpack.c.b16 %v2740, %v2739
      %v2874 = vpack.c.b16 %v2742, %v2741
      %v2875 = vpack.c.b16 %v2744, %v2743
      %v2876 = vpack.c.b16 %v2746, %v2745
      %v2877 = vpack.c.b16 %v2748, %v2747
      %v2878 = vpack.c.b16 %v2750, %v2749
      %v2879 = vpack.c.b16 %v2752, %v2751
      %v2880 = vpack.c.b16 %v2754, %v2753
      %v2881 = vpack.c.b16 %v2756, %v2755
      %v2882 = vpack.c.b16 %v2758, %v2757
      %v2883 = vpack.c.b16 %v2760, %v2759
      %v2884 = vpack.c.b16 %v2762, %v2761
      %v2885 = vpack.c.b16 %v2764, %v2763
      %v2886 = vpack.c.b16 %v2766, %v2765
      %v2887 = vpack.c.b16 %v2768, %v2767
      %v2888 = vpack.c.b16 %v2770, %v2769
      %v2889 = vpack.c.b16 %v2772, %v2771
      %v2890 = vpack.c.b16 %v2774, %v2773
      %v2891 = vpack.c.b16 %v2776, %v2775
      %v2892 = vpack.c.b16 %v2778, %v2777
      %v2893 = vpack.c.b16 %v2780, %v2779
      %v2894 = vpack.c.b16 %v2782, %v2781
      %v2895 = vpack.c.b16 %v2784, %v2783
      %v2896 = vpack.c.b16 %v2786, %v2785
      %v2897 = vpack.c.b16 %v2788, %v2787
      %v2898 = vpack.c.b16 %v2790, %v2789
      %v2899 = vpack.c.b16 %v2792, %v2791
      %v2900 = vpack.c.b16 %v2794, %v2793
      %v2901 = vpack.c.b16 %v2796, %v2795
      %v2902 = vpack.c.b16 %v2798, %v2797
      %v2903 = vpack.c.b16 %v2800, %v2799
      %v2904 = vpack.c.b16 %v2802, %v2801
      %v2905 = vpack.c.b16 %v2804, %v2803
      %v2906 = vpack.c.b16 %v2806, %v2805
      %v2907 = vpack.c.b16 %v2808, %v2807
      %v2908 = vpack.c.b16 %v2810, %v2809
      %v2909 = vpack.c.b16 %v2812, %v2811
      %v2910 = vpack.c.b16 %v2814, %v2813
      %v2911 = vpack.c.b16 %v2816, %v2815
      %v2912 = vpack.c.b16 %v2818, %v2817
      %v2913 = vpack.c.b16 %v2820, %v2819
      %v2914 = vpack.c.b16 %v2822, %v2821
      %v2915 = vpack.c.b16 %v2824, %v2823
      %v2916 = vpack.c.b16 %v2826, %v2825
      %v2917 = vpack.c.b16 %v2828, %v2827
      %v2918 = vpack.c.b16 %v2830, %v2829
      %v2919 = vpack.c.b16 %v2832, %v2831
      %v2920 = vpack.c.b16 %v2834, %v2833
      %v2921 = vpack.c.b16 %v2836, %v2835
      %v2922 = vpack.c.b16 %v2838, %v2837
      %v2923 = vpack.c.b16 %v2840, %v2839
      %v2924 = vpack.c.b16 %v2842, %v2841
      %v2925 = vpack.c.b16 %v2844, %v2843
      %v2926 = vpack.c.b16 %v2846, %v2845
      %v2927 = vpack.c.b16 %v2848, %v2847
      %v2928 = vpack.c.b16 %v2850, %v2849
      %v2929 = vpack.c.b16 %v2852, %v2851
      %v2930 = vpack.c.b16 %v2854, %v2853
      %v2931 = vpack.c.b16 %v2856, %v2855
      %v2932 = vpack.c.b16 %v2858, %v2857
      %v2933 = vpack.c.b16 %v2860, %v2859
      %v2934 = vpack.c.b16 %v2862, %v2861
      %3007 = vmatprep.subr.bf16.mxu0 0
      %3008 = vmatpush1.bf16.msra.mxu0 %v2863
      %3009 = vmatprep.subr.bf16.mxu0 0
      %3010 = vmatpush1.bf16.msra.mxu0 %v2864
      %3011 = vmatprep.subr.bf16.mxu0 0
      %3012 = vmatpush1.bf16.msra.mxu0 %v2865
      %3013 = vmatprep.subr.bf16.mxu0 0
      %3014 = vmatpush1.bf16.msra.mxu0 %v2866
      %3015 = vmatprep.subr.bf16.mxu0 0
      %3016 = vmatpush1.bf16.msra.mxu0 %v2867
      %3017 = vmatprep.subr.bf16.mxu0 0
      %3018 = vmatpush1.bf16.msra.mxu0 %v2868
      %3019 = vmatprep.subr.bf16.mxu0 0
      %3020 = vmatpush1.bf16.msra.mxu0 %v2869
      %3021 = vmatprep.subr.bf16.mxu0 0
      %3022 = vmatpush1.bf16.msra.mxu0 %v2870
      %3023 = vmatprep.subr.bf16.mxu0 0
      %3024 = vmatpush1.bf16.msra.mxu0 %v2871
      %3025 = vmatprep.subr.bf16.mxu0 0
      %3026 = vmatpush1.bf16.msra.mxu0 %v2872
      %3027 = vmatprep.subr.bf16.mxu0 0
      %3028 = vmatpush1.bf16.msra.mxu0 %v2873
      %3029 = vmatprep.subr.bf16.mxu0 0
      %3030 = vmatpush1.bf16.msra.mxu0 %v2874
      %3031 = vmatprep.subr.bf16.mxu0 0
      %3032 = vmatpush1.bf16.msra.mxu0 %v2875
      %3033 = vmatprep.subr.bf16.mxu0 0
      %3034 = vmatpush1.bf16.msra.mxu0 %v2876
      %3035 = vmatprep.subr.bf16.mxu0 0
      %3036 = vmatpush1.bf16.msra.mxu0 %v2877
      %3037 = vmatprep.subr.bf16.mxu0 0
      %3038 = vmatpush1.bf16.msra.mxu0 %v2878
      %3039 = vmatprep.mubr.bf16.mxu0 %v2281
      %3040 = vmatmul.mubr.bf16.gmra.mrb[0].mxu0 %v2280
      %v3041 = vpop.f32.mrb[0].mxu0
      %v3042 = vadd.f32 %v2573, %v3041
      %v3043 = vpop.f32.mrb[0].mxu0
      %v3044 = vpop.f32.mrb[0].mxu0
      %v3045 = vadd.f32 %v2573, %v3044
      %v3046 = vpop.f32.mrb[0].mxu0
      %3047 = vmatprep.mubr.bf16.mxu0 %v2290
      %3048 = vmatmul.mubr.bf16.gmra.mrb[0].mxu0 %v2289
      %v3049 = vpop.f32.mrb[0].mxu0
      %v3050 = vadd.f32 %v2573, %v3049
      %v3051 = vpop.f32.mrb[0].mxu0
      %v3052 = vpop.f32.mrb[0].mxu0
      %v3053 = vadd.f32 %v2573, %v3052
      %v3054 = vpop.f32.mrb[0].mxu0
      %3055 = vmatprep.mubr.bf16.mxu0 %v2299
      %3056 = vmatmul.mubr.bf16.gmra.mrb[0].mxu0 %v2298
      %v3057 = vpop.f32.mrb[0].mxu0
      %v3058 = vadd.f32 %v2573, %v3057
      %v3059 = vpop.f32.mrb[0].mxu0
      %v3060 = vpop.f32.mrb[0].mxu0
      %v3061 = vadd.f32 %v2573, %v3060
      %v3062 = vpop.f32.mrb[0].mxu0
      %3063 = vmatprep.mubr.bf16.mxu0 %v2308
      %3064 = vmatmul.mubr.bf16.gmra.mrb[0].mxu0 %v2307
      %v3065 = vpop.f32.mrb[0].mxu0
      %v3066 = vadd.f32 %v2573, %v3065
      %v3067 = vpop.f32.mrb[0].mxu0
      %v3068 = vpop.f32.mrb[0].mxu0
      %v3069 = vadd.f32 %v2573, %v3068
      %v3070 = vpop.f32.mrb[0].mxu0
      %3071 = vmatprep.mubr.bf16.mxu0 %v2317
      %3072 = vmatmul.mubr.bf16.gmra.mrb[0].mxu0 %v2316
      %v3073 = vpop.f32.mrb[0].mxu0
      %v3074 = vadd.f32 %v2573, %v3073
      %v3075 = vpop.f32.mrb[0].mxu0
      %v3076 = vpop.f32.mrb[0].mxu0
      %v3077 = vadd.f32 %v2573, %v3076
      %v3078 = vpop.f32.mrb[0].mxu0
      %3079 = vmatprep.mubr.bf16.mxu0 %v2326
      %3080 = vmatmul.mubr.bf16.gmra.mrb[0].mxu0 %v2325
      %v3081 = vpop.f32.mrb[0].mxu0
      %v3082 = vadd.f32 %v2573, %v3081
      %v3083 = vpop.f32.mrb[0].mxu0
      %v3084 = vpop.f32.mrb[0].mxu0
      %v3085 = vadd.f32 %v2573, %v3084
      %v3086 = vpop.f32.mrb[0].mxu0
      %3087 = vmatprep.mubr.bf16.mxu0 %v2335
      %3088 = vmatmul.mubr.bf16.gmra.mrb[0].mxu0 %v2334
      %v3089 = vpop.f32.mrb[0].mxu0
      %v3090 = vadd.f32 %v2573, %v3089
      %v3091 = vpop.f32.mrb[0].mxu0
      %v3092 = vpop.f32.mrb[0].mxu0
      %v3093 = vadd.f32 %v2573, %v3092
      %v3094 = vpop.f32.mrb[0].mxu0
      %3095 = vmatprep.mubr.bf16.mxu0 %v2344
      %3096 = vmatmul.mubr.bf16.gmra.mrb[0].mxu0 %v2343
      %v3097 = vpop.f32.mrb[0].mxu0
      %v3098 = vadd.f32 %v2573, %v3097
      %v3099 = vpop.f32.mrb[0].mxu0
      %v3100 = vpop.f32.mrb[0].mxu0
      %v3101 = vadd.f32 %v2573, %v3100
      %v3102 = vpop.f32.mrb[0].mxu0
      %3103 = vmatprep.mubr.bf16.mxu0 %v2353
      %3104 = vmatmul.mubr.bf16.gmra.mrb[0].mxu0 %v2352
      %v3105 = vpop.f32.mrb[0].mxu0
      %v3106 = vadd.f32 %v2573, %v3105
      %v3107 = vpop.f32.mrb[0].mxu0
      %v3108 = vpop.f32.mrb[0].mxu0
      %v3109 = vadd.f32 %v2573, %v3108
      %v3110 = vpop.f32.mrb[0].mxu0
      %3111 = vmatprep.mubr.bf16.mxu0 %v2362
      %3112 = vmatmul.mubr.bf16.gmra.mrb[0].mxu0 %v2361
      %v3113 = vpop.f32.mrb[0].mxu0
      %v3114 = vadd.f32 %v2573, %v3113
      %v3115 = vpop.f32.mrb[0].mxu0
      %v3116 = vpop.f32.mrb[0].mxu0
      %v3117 = vadd.f32 %v2573, %v3116
      %v3118 = vpop.f32.mrb[0].mxu0
      %3119 = vmatprep.mubr.bf16.mxu0 %v2371
      %3120 = vmatmul.mubr.bf16.gmra.mrb[0].mxu0 %v2370
      %v3121 = vpop.f32.mrb[0].mxu0
      %v3122 = vadd.f32 %v2573, %v3121
      %v3123 = vpop.f32.mrb[0].mxu0
      %v3124 = vpop.f32.mrb[0].mxu0
      %v3125 = vadd.f32 %v2573, %v3124
      %v3126 = vpop.f32.mrb[0].mxu0
      %3127 = vmatprep.mubr.bf16.mxu0 %v2380
      %3128 = vmatmul.mubr.bf16.gmra.mrb[0].mxu0 %v2379
      %v3129 = vpop.f32.mrb[0].mxu0
      %v3130 = vadd.f32 %v2573, %v3129
      %v3131 = vpop.f32.mrb[0].mxu0
      %v3132 = vpop.f32.mrb[0].mxu0
      %v3133 = vadd.f32 %v2573, %v3132
      %v3134 = vpop.f32.mrb[0].mxu0
      %3135 = vmatprep.mubr.bf16.mxu0 %v2389
      %3136 = vmatmul.mubr.bf16.gmra.mrb[0].mxu0 %v2388
      %v3137 = vpop.f32.mrb[0].mxu0
      %v3138 = vadd.f32 %v2573, %v3137
      %v3139 = vpop.f32.mrb[0].mxu0
      %v3140 = vpop.f32.mrb[0].mxu0
      %v3141 = vadd.f32 %v2573, %v3140
      %v3142 = vpop.f32.mrb[0].mxu0
      %3143 = vmatprep.mubr.bf16.mxu0 %v2398
      %3144 = vmatmul.mubr.bf16.gmra.mrb[0].mxu0 %v2397
      %v3145 = vpop.f32.mrb[0].mxu0
      %v3146 = vadd.f32 %v2573, %v3145
      %v3147 = vpop.f32.mrb[0].mxu0
      %v3148 = vpop.f32.mrb[0].mxu0
      %v3149 = vadd.f32 %v2573, %v3148
      %v3150 = vpop.f32.mrb[0].mxu0
      %3151 = vmatprep.mubr.bf16.mxu0 %v2407
      %3152 = vmatmul.mubr.bf16.gmra.mrb[0].mxu0 %v2406
      %v3153 = vpop.f32.mrb[0].mxu0
      %v3154 = vadd.f32 %v2573, %v3153
      %v3155 = vpop.f32.mrb[0].mxu0
      %v3156 = vpop.f32.mrb[0].mxu0
      %v3157 = vadd.f32 %v2573, %v3156
      %v3158 = vpop.f32.mrb[0].mxu0
      %3159 = vmatprep.mubr.bf16.mxu0 %v2416
      %3160 = vmatmul.mubr.bf16.gmra.mrb[0].mxu0 %v2415
      %v3161 = vpop.f32.mrb[0].mxu0
      %v3162 = vadd.f32 %v2573, %v3161
      %v3163 = vpop.f32.mrb[0].mxu0
      %v3164 = vpop.f32.mrb[0].mxu0
      %v3165 = vadd.f32 %v2573, %v3164
      %v3166 = vpop.f32.mrb[0].mxu0
      %3167 = vdwg.mxu0
      %3168 = vmatprep.subr.bf16.mxu0 0
      %3169 = vmatpush1.bf16.msra.mxu0 %v2879
      %3170 = vmatprep.subr.bf16.mxu0 0
      %3171 = vmatpush1.bf16.msra.mxu0 %v2880
      %3172 = vmatprep.subr.bf16.mxu0 0
      %3173 = vmatpush1.bf16.msra.mxu0 %v2881
      %3174 = vmatprep.subr.bf16.mxu0 0
      %3175 = vmatpush1.bf16.msra.mxu0 %v2882
      %3176 = vmatprep.subr.bf16.mxu0 0
      %3177 = vmatpush1.bf16.msra.mxu0 %v2883
      %3178 = vmatprep.subr.bf16.mxu0 0
      %3179 = vmatpush1.bf16.msra.mxu0 %v2884
      %3180 = vmatprep.subr.bf16.mxu0 0
      %3181 = vmatpush1.bf16.msra.mxu0 %v2885
      %3182 = vmatprep.subr.bf16.mxu0 0
      %3183 = vmatpush1.bf16.msra.mxu0 %v2886
      %3184 = vmatprep.subr.bf16.mxu0 0
      %3185 = vmatpush1.bf16.msra.mxu0 %v2887
      %3186 = vmatprep.subr.bf16.mxu0 0
      %3187 = vmatpush1.bf16.msra.mxu0 %v2888
      %3188 = vmatprep.subr.bf16.mxu0 0
      %3189 = vmatpush1.bf16.msra.mxu0 %v2889
      %3190 = vmatprep.subr.bf16.mxu0 0
      %3191 = vmatpush1.bf16.msra.mxu0 %v2890
      %3192 = vmatprep.subr.bf16.mxu0 0
      %3193 = vmatpush1.bf16.msra.mxu0 %v2891
      %3194 = vmatprep.subr.bf16.mxu0 0
      %3195 = vmatpush1.bf16.msra.mxu0 %v2892
      %3196 = vmatprep.subr.bf16.mxu0 0
      %3197 = vmatpush1.bf16.msra.mxu0 %v2893
      %3198 = vmatprep.subr.bf16.mxu0 0
      %3199 = vmatpush1.bf16.msra.mxu0 %v2894
      %3200 = vmatprep.mubr.bf16.mxu0 %v2283
      %3201 = vmatmul.mubr.bf16.gmra.mrb[0].mxu0 %v2282
      %v3202 = vpop.f32.mrb[0].mxu0
      %v3203 = vadd.f32 %v3042, %v3202
      %v3204 = vpop.f32.mrb[0].mxu0
      %v3205 = vpop.f32.mrb[0].mxu0
      %v3206 = vadd.f32 %v3045, %v3205
      %v3207 = vpop.f32.mrb[0].mxu0
      %3208 = vmatprep.mubr.bf16.mxu0 %v2292
      %3209 = vmatmul.mubr.bf16.gmra.mrb[0].mxu0 %v2291
      %v3210 = vpop.f32.mrb[0].mxu0
      %v3211 = vadd.f32 %v3050, %v3210
      %v3212 = vpop.f32.mrb[0].mxu0
      %v3213 = vpop.f32.mrb[0].mxu0
      %v3214 = vadd.f32 %v3053, %v3213
      %v3215 = vpop.f32.mrb[0].mxu0
      %3216 = vmatprep.mubr.bf16.mxu0 %v2301
      %3217 = vmatmul.mubr.bf16.gmra.mrb[0].mxu0 %v2300
      %v3218 = vpop.f32.mrb[0].mxu0
      %v3219 = vadd.f32 %v3058, %v3218
      %v3220 = vpop.f32.mrb[0].mxu0
      %v3221 = vpop.f32.mrb[0].mxu0
      %v3222 = vadd.f32 %v3061, %v3221
      %v3223 = vpop.f32.mrb[0].mxu0
      %3224 = vmatprep.mubr.bf16.mxu0 %v2310
      %3225 = vmatmul.mubr.bf16.gmra.mrb[0].mxu0 %v2309
      %v3226 = vpop.f32.mrb[0].mxu0
      %v3227 = vadd.f32 %v3066, %v3226
      %v3228 = vpop.f32.mrb[0].mxu0
      %v3229 = vpop.f32.mrb[0].mxu0
      %v3230 = vadd.f32 %v3069, %v3229
      %v3231 = vpop.f32.mrb[0].mxu0
      %3232 = vmatprep.mubr.bf16.mxu0 %v2319
      %3233 = vmatmul.mubr.bf16.gmra.mrb[0].mxu0 %v2318
      %v3234 = vpop.f32.mrb[0].mxu0
      %v3235 = vadd.f32 %v3074, %v3234
      %v3236 = vpop.f32.mrb[0].mxu0
      %v3237 = vpop.f32.mrb[0].mxu0
      %v3238 = vadd.f32 %v3077, %v3237
      %v3239 = vpop.f32.mrb[0].mxu0
      %3240 = vmatprep.mubr.bf16.mxu0 %v2328
      %3241 = vmatmul.mubr.bf16.gmra.mrb[0].mxu0 %v2327
      %v3242 = vpop.f32.mrb[0].mxu0
      %v3243 = vadd.f32 %v3082, %v3242
      %v3244 = vpop.f32.mrb[0].mxu0
      %v3245 = vpop.f32.mrb[0].mxu0
      %v3246 = vadd.f32 %v3085, %v3245
      %v3247 = vpop.f32.mrb[0].mxu0
      %3248 = vmatprep.mubr.bf16.mxu0 %v2337
      %3249 = vmatmul.mubr.bf16.gmra.mrb[0].mxu0 %v2336
      %v3250 = vpop.f32.mrb[0].mxu0
      %v3251 = vadd.f32 %v3090, %v3250
      %v3252 = vpop.f32.mrb[0].mxu0
      %v3253 = vpop.f32.mrb[0].mxu0
      %v3254 = vadd.f32 %v3093, %v3253
      %v3255 = vpop.f32.mrb[0].mxu0
      %3256 = vmatprep.mubr.bf16.mxu0 %v2346
      %3257 = vmatmul.mubr.bf16.gmra.mrb[0].mxu0 %v2345
      %v3258 = vpop.f32.mrb[0].mxu0
      %v3259 = vadd.f32 %v3098, %v3258
      %v3260 = vpop.f32.mrb[0].mxu0
      %v3261 = vpop.f32.mrb[0].mxu0
      %v3262 = vadd.f32 %v3101, %v3261
      %v3263 = vpop.f32.mrb[0].mxu0
      %3264 = vmatprep.mubr.bf16.mxu0 %v2355
      %3265 = vmatmul.mubr.bf16.gmra.mrb[0].mxu0 %v2354
      %v3266 = vpop.f32.mrb[0].mxu0
      %v3267 = vadd.f32 %v3106, %v3266
      %v3268 = vpop.f32.mrb[0].mxu0
      %v3269 = vpop.f32.mrb[0].mxu0
      %v3270 = vadd.f32 %v3109, %v3269
      %v3271 = vpop.f32.mrb[0].mxu0
      %3272 = vmatprep.mubr.bf16.mxu0 %v2364
      %3273 = vmatmul.mubr.bf16.gmra.mrb[0].mxu0 %v2363
      %v3274 = vpop.f32.mrb[0].mxu0
      %v3275 = vadd.f32 %v3114, %v3274
      %v3276 = vpop.f32.mrb[0].mxu0
      %v3277 = vpop.f32.mrb[0].mxu0
      %v3278 = vadd.f32 %v3117, %v3277
      %v3279 = vpop.f32.mrb[0].mxu0
      %3280 = vmatprep.mubr.bf16.mxu0 %v2373
      %3281 = vmatmul.mubr.bf16.gmra.mrb[0].mxu0 %v2372
      %v3282 = vpop.f32.mrb[0].mxu0
      %v3283 = vadd.f32 %v3122, %v3282
      %v3284 = vpop.f32.mrb[0].mxu0
      %v3285 = vpop.f32.mrb[0].mxu0
      %v3286 = vadd.f32 %v3125, %v3285
      %v3287 = vpop.f32.mrb[0].mxu0
      %3288 = vmatprep.mubr.bf16.mxu0 %v2382
      %3289 = vmatmul.mubr.bf16.gmra.mrb[0].mxu0 %v2381
      %v3290 = vpop.f32.mrb[0].mxu0
      %v3291 = vadd.f32 %v3130, %v3290
      %v3292 = vpop.f32.mrb[0].mxu0
      %v3293 = vpop.f32.mrb[0].mxu0
      %v3294 = vadd.f32 %v3133, %v3293
      %v3295 = vpop.f32.mrb[0].mxu0
      %3296 = vmatprep.mubr.bf16.mxu0 %v2391
      %3297 = vmatmul.mubr.bf16.gmra.mrb[0].mxu0 %v2390
      %v3298 = vpop.f32.mrb[0].mxu0
      %v3299 = vadd.f32 %v3138, %v3298
      %v3300 = vpop.f32.mrb[0].mxu0
      %v3301 = vpop.f32.mrb[0].mxu0
      %v3302 = vadd.f32 %v3141, %v3301
      %v3303 = vpop.f32.mrb[0].mxu0
      %3304 = vmatprep.mubr.bf16.mxu0 %v2400
      %3305 = vmatmul.mubr.bf16.gmra.mrb[0].mxu0 %v2399
      %v3306 = vpop.f32.mrb[0].mxu0
      %v3307 = vadd.f32 %v3146, %v3306
      %v3308 = vpop.f32.mrb[0].mxu0
      %v3309 = vpop.f32.mrb[0].mxu0
      %v3310 = vadd.f32 %v3149, %v3309
      %v3311 = vpop.f32.mrb[0].mxu0
      %3312 = vmatprep.mubr.bf16.mxu0 %v2409
      %3313 = vmatmul.mubr.bf16.gmra.mrb[0].mxu0 %v2408
      %v3314 = vpop.f32.mrb[0].mxu0
      %v3315 = vadd.f32 %v3154, %v3314
      %v3316 = vpop.f32.mrb[0].mxu0
      %v3317 = vpop.f32.mrb[0].mxu0
      %v3318 = vadd.f32 %v3157, %v3317
      %v3319 = vpop.f32.mrb[0].mxu0
      %3320 = vmatprep.mubr.bf16.mxu0 %v2418
      %3321 = vmatmul.mubr.bf16.gmra.mrb[0].mxu0 %v2417
      %v3322 = vpop.f32.mrb[0].mxu0
      %v3323 = vadd.f32 %v3162, %v3322
      %v3324 = vpop.f32.mrb[0].mxu0
      %v3325 = vpop.f32.mrb[0].mxu0
      %v3326 = vadd.f32 %v3165, %v3325
      %v3327 = vpop.f32.mrb[0].mxu0
      %3328 = vdwg.mxu0
      %3329 = vmatprep.subr.bf16.mxu0 0
      %3330 = vmatpush1.bf16.msra.mxu0 %v2895
      %3331 = vmatprep.subr.bf16.mxu0 0
      %3332 = vmatpush1.bf16.msra.mxu0 %v2896
      %3333 = vmatprep.subr.bf16.mxu0 0
      %3334 = vmatpush1.bf16.msra.mxu0 %v2897
      %3335 = vmatprep.subr.bf16.mxu0 0
      %3336 = vmatpush1.bf16.msra.mxu0 %v2898
      %3337 = vmatprep.subr.bf16.mxu0 0
      %3338 = vmatpush1.bf16.msra.mxu0 %v2899
      %3339 = vmatprep.subr.bf16.mxu0 0
      %3340 = vmatpush1.bf16.msra.mxu0 %v2900
      %3341 = vmatprep.subr.bf16.mxu0 0
      %3342 = vmatpush1.bf16.msra.mxu0 %v2901
      %3343 = vmatprep.subr.bf16.mxu0 0
      %3344 = vmatpush1.bf16.msra.mxu0 %v2902
      %3345 = vmatprep.subr.bf16.mxu0 0
      %3346 = vmatpush1.bf16.msra.mxu0 %v2903
      %3347 = vmatprep.subr.bf16.mxu0 0
      %3348 = vmatpush1.bf16.msra.mxu0 %v2904
      %3349 = vmatprep.subr.bf16.mxu0 0
      %3350 = vmatpush1.bf16.msra.mxu0 %v2905
      %3351 = vmatprep.subr.bf16.mxu0 0
      %3352 = vmatpush1.bf16.msra.mxu0 %v2906
      %3353 = vmatprep.subr.bf16.mxu0 0
      %3354 = vmatpush1.bf16.msra.mxu0 %v2907
      %3355 = vmatprep.subr.bf16.mxu0 0
      %3356 = vmatpush1.bf16.msra.mxu0 %v2908
      %3357 = vmatprep.subr.bf16.mxu0 0
      %3358 = vmatpush1.bf16.msra.mxu0 %v2909
      %3359 = vmatprep.subr.bf16.mxu0 0
      %3360 = vmatpush1.bf16.msra.mxu0 %v2910
      %3361 = vmatprep.mubr.bf16.mxu0 %v2285
      %3362 = vmatmul.mubr.bf16.gmra.mrb[0].mxu0 %v2284
      %v3363 = vpop.f32.mrb[0].mxu0
      %v3364 = vadd.f32 %v3203, %v3363
      %v3365 = vpop.f32.mrb[0].mxu0
      %v3366 = vpop.f32.mrb[0].mxu0
      %v3367 = vadd.f32 %v3206, %v3366
      %v3368 = vpop.f32.mrb[0].mxu0
      %3369 = vmatprep.mubr.bf16.mxu0 %v2294
      %3370 = vmatmul.mubr.bf16.gmra.mrb[0].mxu0 %v2293
      %v3371 = vpop.f32.mrb[0].mxu0
      %v3372 = vadd.f32 %v3211, %v3371
      %v3373 = vpop.f32.mrb[0].mxu0
      %v3374 = vpop.f32.mrb[0].mxu0
      %v3375 = vadd.f32 %v3214, %v3374
      %v3376 = vpop.f32.mrb[0].mxu0
      %3377 = vmatprep.mubr.bf16.mxu0 %v2303
      %3378 = vmatmul.mubr.bf16.gmra.mrb[0].mxu0 %v2302
      %v3379 = vpop.f32.mrb[0].mxu0
      %v3380 = vadd.f32 %v3219, %v3379
      %v3381 = vpop.f32.mrb[0].mxu0
      %v3382 = vpop.f32.mrb[0].mxu0
      %v3383 = vadd.f32 %v3222, %v3382
      %v3384 = vpop.f32.mrb[0].mxu0
      %3385 = vmatprep.mubr.bf16.mxu0 %v2312
      %3386 = vmatmul.mubr.bf16.gmra.mrb[0].mxu0 %v2311
      %v3387 = vpop.f32.mrb[0].mxu0
      %v3388 = vadd.f32 %v3227, %v3387
      %v3389 = vpop.f32.mrb[0].mxu0
      %v3390 = vpop.f32.mrb[0].mxu0
      %v3391 = vadd.f32 %v3230, %v3390
      %v3392 = vpop.f32.mrb[0].mxu0
      %3393 = vmatprep.mubr.bf16.mxu0 %v2321
      %3394 = vmatmul.mubr.bf16.gmra.mrb[0].mxu0 %v2320
      %v3395 = vpop.f32.mrb[0].mxu0
      %v3396 = vadd.f32 %v3235, %v3395
      %v3397 = vpop.f32.mrb[0].mxu0
      %v3398 = vpop.f32.mrb[0].mxu0
      %v3399 = vadd.f32 %v3238, %v3398
      %v3400 = vpop.f32.mrb[0].mxu0
      %3401 = vmatprep.mubr.bf16.mxu0 %v2330
      %3402 = vmatmul.mubr.bf16.gmra.mrb[0].mxu0 %v2329
      %v3403 = vpop.f32.mrb[0].mxu0
      %v3404 = vadd.f32 %v3243, %v3403
      %v3405 = vpop.f32.mrb[0].mxu0
      %v3406 = vpop.f32.mrb[0].mxu0
      %v3407 = vadd.f32 %v3246, %v3406
      %v3408 = vpop.f32.mrb[0].mxu0
      %3409 = vmatprep.mubr.bf16.mxu0 %v2339
      %3410 = vmatmul.mubr.bf16.gmra.mrb[0].mxu0 %v2338
      %v3411 = vpop.f32.mrb[0].mxu0
      %v3412 = vadd.f32 %v3251, %v3411
      %v3413 = vpop.f32.mrb[0].mxu0
      %v3414 = vpop.f32.mrb[0].mxu0
      %v3415 = vadd.f32 %v3254, %v3414
      %v3416 = vpop.f32.mrb[0].mxu0
      %3417 = vmatprep.mubr.bf16.mxu0 %v2348
      %3418 = vmatmul.mubr.bf16.gmra.mrb[0].mxu0 %v2347
      %v3419 = vpop.f32.mrb[0].mxu0
      %v3420 = vadd.f32 %v3259, %v3419
      %v3421 = vpop.f32.mrb[0].mxu0
      %v3422 = vpop.f32.mrb[0].mxu0
      %v3423 = vadd.f32 %v3262, %v3422
      %v3424 = vpop.f32.mrb[0].mxu0
      %3425 = vmatprep.mubr.bf16.mxu0 %v2357
      %3426 = vmatmul.mubr.bf16.gmra.mrb[0].mxu0 %v2356
      %v3427 = vpop.f32.mrb[0].mxu0
      %v3428 = vadd.f32 %v3267, %v3427
      %v3429 = vpop.f32.mrb[0].mxu0
      %v3430 = vpop.f32.mrb[0].mxu0
      %v3431 = vadd.f32 %v3270, %v3430
      %v3432 = vpop.f32.mrb[0].mxu0
      %3433 = vmatprep.mubr.bf16.mxu0 %v2366
      %3434 = vmatmul.mubr.bf16.gmra.mrb[0].mxu0 %v2365
      %v3435 = vpop.f32.mrb[0].mxu0
      %v3436 = vadd.f32 %v3275, %v3435
      %v3437 = vpop.f32.mrb[0].mxu0
      %v3438 = vpop.f32.mrb[0].mxu0
      %v3439 = vadd.f32 %v3278, %v3438
      %v3440 = vpop.f32.mrb[0].mxu0
      %3441 = vmatprep.mubr.bf16.mxu0 %v2375
      %3442 = vmatmul.mubr.bf16.gmra.mrb[0].mxu0 %v2374
      %v3443 = vpop.f32.mrb[0].mxu0
      %v3444 = vadd.f32 %v3283, %v3443
      %v3445 = vpop.f32.mrb[0].mxu0
      %v3446 = vpop.f32.mrb[0].mxu0
      %v3447 = vadd.f32 %v3286, %v3446
      %v3448 = vpop.f32.mrb[0].mxu0
      %3449 = vmatprep.mubr.bf16.mxu0 %v2384
      %3450 = vmatmul.mubr.bf16.gmra.mrb[0].mxu0 %v2383
      %v3451 = vpop.f32.mrb[0].mxu0
      %v3452 = vadd.f32 %v3291, %v3451
      %v3453 = vpop.f32.mrb[0].mxu0
      %v3454 = vpop.f32.mrb[0].mxu0
      %v3455 = vadd.f32 %v3294, %v3454
      %v3456 = vpop.f32.mrb[0].mxu0
      %3457 = vmatprep.mubr.bf16.mxu0 %v2393
      %3458 = vmatmul.mubr.bf16.gmra.mrb[0].mxu0 %v2392
      %v3459 = vpop.f32.mrb[0].mxu0
      %v3460 = vadd.f32 %v3299, %v3459
      %v3461 = vpop.f32.mrb[0].mxu0
      %v3462 = vpop.f32.mrb[0].mxu0
      %v3463 = vadd.f32 %v3302, %v3462
      %v3464 = vpop.f32.mrb[0].mxu0
      %3465 = vmatprep.mubr.bf16.mxu0 %v2402
      %3466 = vmatmul.mubr.bf16.gmra.mrb[0].mxu0 %v2401
      %v3467 = vpop.f32.mrb[0].mxu0
      %v3468 = vadd.f32 %v3307, %v3467
      %v3469 = vpop.f32.mrb[0].mxu0
      %v3470 = vpop.f32.mrb[0].mxu0
      %v3471 = vadd.f32 %v3310, %v3470
      %v3472 = vpop.f32.mrb[0].mxu0
      %3473 = vmatprep.mubr.bf16.mxu0 %v2411
      %3474 = vmatmul.mubr.bf16.gmra.mrb[0].mxu0 %v2410
      %v3475 = vpop.f32.mrb[0].mxu0
      %v3476 = vadd.f32 %v3315, %v3475
      %v3477 = vpop.f32.mrb[0].mxu0
      %v3478 = vpop.f32.mrb[0].mxu0
      %v3479 = vadd.f32 %v3318, %v3478
      %v3480 = vpop.f32.mrb[0].mxu0
      %3481 = vmatprep.mubr.bf16.mxu0 %v2420
      %3482 = vmatmul.mubr.bf16.gmra.mrb[0].mxu0 %v2419
      %v3483 = vpop.f32.mrb[0].mxu0
      %v3484 = vadd.f32 %v3323, %v3483
      %v3485 = vpop.f32.mrb[0].mxu0
      %v3486 = vpop.f32.mrb[0].mxu0
      %v3487 = vadd.f32 %v3326, %v3486
      %v3488 = vpop.f32.mrb[0].mxu0
      %3489 = vdwg.mxu0
      %3490 = vmatprep.subr.bf16.mxu0 0
      %3491 = vmatpush1.bf16.msra.mxu0 %v2911
      %3492 = vmatprep.subr.bf16.mxu0 0
      %3493 = vmatpush1.bf16.msra.mxu0 %v2912
      %3494 = vmatprep.subr.bf16.mxu0 0
      %3495 = vmatpush1.bf16.msra.mxu0 %v2913
      %3496 = vmatprep.subr.bf16.mxu0 0
      %3497 = vmatpush1.bf16.msra.mxu0 %v2914
      %3498 = vmatprep.subr.bf16.mxu0 0
      %3499 = vmatpush1.bf16.msra.mxu0 %v2915
      %3500 = vmatprep.subr.bf16.mxu0 0
      %3501 = vmatpush1.bf16.msra.mxu0 %v2916
      %3502 = vmatprep.subr.bf16.mxu0 0
      %3503 = vmatpush1.bf16.msra.mxu0 %v2917
      %3504 = vmatprep.subr.bf16.mxu0 0
      %3505 = vmatpush1.bf16.msra.mxu0 %v2918
      %3506 = vmatprep.subr.bf16.mxu0 0
      %3507 = vmatpush1.bf16.msra.mxu0 %v2919
      %3508 = vmatprep.subr.bf16.mxu0 0
      %3509 = vmatpush1.bf16.msra.mxu0 %v2920
      %3510 = vmatprep.subr.bf16.mxu0 0
      %3511 = vmatpush1.bf16.msra.mxu0 %v2921
      %3512 = vmatprep.subr.bf16.mxu0 0
      %3513 = vmatpush1.bf16.msra.mxu0 %v2922
      %3514 = vmatprep.subr.bf16.mxu0 0
      %3515 = vmatpush1.bf16.msra.mxu0 %v2923
      %3516 = vmatprep.subr.bf16.mxu0 0
      %3517 = vmatpush1.bf16.msra.mxu0 %v2924
      %3518 = vmatprep.subr.bf16.mxu0 0
      %3519 = vmatpush1.bf16.msra.mxu0 %v2925
      %3520 = vmatprep.subr.bf16.mxu0 0
      %3521 = vmatpush1.bf16.msra.mxu0 %v2926
      %3522 = vmatprep.mubr.bf16.mxu0 %v2287
      %3523 = vmatmul.mubr.bf16.gmra.mrb[0].mxu0 %v2286
      %v3524 = vpop.f32.mrb[0].mxu0
      %v3525 = vadd.f32 %v3364, %v3524
      %v3526 = vpop.f32.mrb[0].mxu0
      %v3527 = vpop.f32.mrb[0].mxu0
      %v3528 = vadd.f32 %v3367, %v3527
      %v3529 = vpop.f32.mrb[0].mxu0
      %3530 = vmatprep.mubr.bf16.mxu0 %v2296
      %3531 = vmatmul.mubr.bf16.gmra.mrb[0].mxu0 %v2295
      %v3532 = vpop.f32.mrb[0].mxu0
      %v3533 = vadd.f32 %v3372, %v3532
      %v3534 = vpop.f32.mrb[0].mxu0
      %v3535 = vpop.f32.mrb[0].mxu0
      %v3536 = vadd.f32 %v3375, %v3535
      %v3537 = vpop.f32.mrb[0].mxu0
      %3538 = vmatprep.mubr.bf16.mxu0 %v2305
      %3539 = vmatmul.mubr.bf16.gmra.mrb[0].mxu0 %v2304
      %v3540 = vpop.f32.mrb[0].mxu0
      %v3541 = vadd.f32 %v3380, %v3540
      %v3542 = vpop.f32.mrb[0].mxu0
      %v3543 = vpop.f32.mrb[0].mxu0
      %v3544 = vadd.f32 %v3383, %v3543
      %v3545 = vpop.f32.mrb[0].mxu0
      %3546 = vmatprep.mubr.bf16.mxu0 %v2314
      %3547 = vmatmul.mubr.bf16.gmra.mrb[0].mxu0 %v2313
      %v3548 = vpop.f32.mrb[0].mxu0
      %v3549 = vadd.f32 %v3388, %v3548
      %v3550 = vpop.f32.mrb[0].mxu0
      %v3551 = vpop.f32.mrb[0].mxu0
      %v3552 = vadd.f32 %v3391, %v3551
      %v3553 = vpop.f32.mrb[0].mxu0
      %3554 = vmatprep.mubr.bf16.mxu0 %v2323
      %3555 = vmatmul.mubr.bf16.gmra.mrb[0].mxu0 %v2322
      %v3556 = vpop.f32.mrb[0].mxu0
      %v3557 = vadd.f32 %v3396, %v3556
      %v3558 = vpop.f32.mrb[0].mxu0
      %v3559 = vpop.f32.mrb[0].mxu0
      %v3560 = vadd.f32 %v3399, %v3559
      %v3561 = vpop.f32.mrb[0].mxu0
      %3562 = vmatprep.mubr.bf16.mxu0 %v2332
      %3563 = vmatmul.mubr.bf16.gmra.mrb[0].mxu0 %v2331
      %v3564 = vpop.f32.mrb[0].mxu0
      %v3565 = vadd.f32 %v3404, %v3564
      %v3566 = vpop.f32.mrb[0].mxu0
      %v3567 = vpop.f32.mrb[0].mxu0
      %v3568 = vadd.f32 %v3407, %v3567
      %v3569 = vpop.f32.mrb[0].mxu0
      %3570 = vmatprep.mubr.bf16.mxu0 %v2341
      %3571 = vmatmul.mubr.bf16.gmra.mrb[0].mxu0 %v2340
      %v3572 = vpop.f32.mrb[0].mxu0
      %v3573 = vadd.f32 %v3412, %v3572
      %v3574 = vpop.f32.mrb[0].mxu0
      %v3575 = vpop.f32.mrb[0].mxu0
      %v3576 = vadd.f32 %v3415, %v3575
      %v3577 = vpop.f32.mrb[0].mxu0
      %3578 = vmatprep.mubr.bf16.mxu0 %v2350
      %3579 = vmatmul.mubr.bf16.gmra.mrb[0].mxu0 %v2349
      %v3580 = vpop.f32.mrb[0].mxu0
      %v3581 = vadd.f32 %v3420, %v3580
      %v3582 = vpop.f32.mrb[0].mxu0
      %v3583 = vpop.f32.mrb[0].mxu0
      %v3584 = vadd.f32 %v3423, %v3583
      %v3585 = vpop.f32.mrb[0].mxu0
      %3586 = vmatprep.mubr.bf16.mxu0 %v2359
      %3587 = vmatmul.mubr.bf16.gmra.mrb[0].mxu0 %v2358
      %v3588 = vpop.f32.mrb[0].mxu0
      %v3589 = vadd.f32 %v3428, %v3588
      %v3590 = vpop.f32.mrb[0].mxu0
      %v3591 = vpop.f32.mrb[0].mxu0
      %v3592 = vadd.f32 %v3431, %v3591
      %v3593 = vpop.f32.mrb[0].mxu0
      %3594 = vmatprep.mubr.bf16.mxu0 %v2368
      %3595 = vmatmul.mubr.bf16.gmra.mrb[0].mxu0 %v2367
      %v3596 = vpop.f32.mrb[0].mxu0
      %v3597 = vadd.f32 %v3436, %v3596
      %v3598 = vpop.f32.mrb[0].mxu0
      %v3599 = vpop.f32.mrb[0].mxu0
      %v3600 = vadd.f32 %v3439, %v3599
      %v3601 = vpop.f32.mrb[0].mxu0
      %3602 = vmatprep.mubr.bf16.mxu0 %v2377
      %3603 = vmatmul.mubr.bf16.gmra.mrb[0].mxu0 %v2376
      %v3604 = vpop.f32.mrb[0].mxu0
      %v3605 = vadd.f32 %v3444, %v3604
      %v3606 = vpop.f32.mrb[0].mxu0
      %v3607 = vpop.f32.mrb[0].mxu0
      %v3608 = vadd.f32 %v3447, %v3607
      %v3609 = vpop.f32.mrb[0].mxu0
      %3610 = vmatprep.mubr.bf16.mxu0 %v2386
      %3611 = vmatmul.mubr.bf16.gmra.mrb[0].mxu0 %v2385
      %v3612 = vpop.f32.mrb[0].mxu0
      %v3613 = vadd.f32 %v3452, %v3612
      %v3614 = vpop.f32.mrb[0].mxu0
      %v3615 = vpop.f32.mrb[0].mxu0
      %v3616 = vadd.f32 %v3455, %v3615
      %v3617 = vpop.f32.mrb[0].mxu0
      %3618 = vmatprep.mubr.bf16.mxu0 %v2395
      %3619 = vmatmul.mubr.bf16.gmra.mrb[0].mxu0 %v2394
      %v3620 = vpop.f32.mrb[0].mxu0
      %v3621 = vadd.f32 %v3460, %v3620
      %v3622 = vpop.f32.mrb[0].mxu0
      %v3623 = vpop.f32.mrb[0].mxu0
      %v3624 = vadd.f32 %v3463, %v3623
      %v3625 = vpop.f32.mrb[0].mxu0
      %3626 = vmatprep.mubr.bf16.mxu0 %v2404
      %3627 = vmatmul.mubr.bf16.gmra.mrb[0].mxu0 %v2403
      %v3628 = vpop.f32.mrb[0].mxu0
      %v3629 = vadd.f32 %v3468, %v3628
      %v3630 = vpop.f32.mrb[0].mxu0
      %v3631 = vpop.f32.mrb[0].mxu0
      %v3632 = vadd.f32 %v3471, %v3631
      %v3633 = vpop.f32.mrb[0].mxu0
      %3634 = vmatprep.mubr.bf16.mxu0 %v2413
      %3635 = vmatmul.mubr.bf16.gmra.mrb[0].mxu0 %v2412
      %v3636 = vpop.f32.mrb[0].mxu0
      %v3637 = vadd.f32 %v3476, %v3636
      %v3638 = vpop.f32.mrb[0].mxu0
      %v3639 = vpop.f32.mrb[0].mxu0
      %v3640 = vadd.f32 %v3479, %v3639
      %v3641 = vpop.f32.mrb[0].mxu0
      %3642 = vmatprep.mubr.bf16.mxu0 %v2422
      %3643 = vmatmul.mubr.bf16.gmra.mrb[0].mxu0 %v2421
      %v3644 = vpop.f32.mrb[0].mxu0
      %v3645 = vadd.f32 %v3484, %v3644
      %v3646 = vpop.f32.mrb[0].mxu0
      %v3647 = vpop.f32.mrb[0].mxu0
      %v3648 = vadd.f32 %v3487, %v3647
      %v3649 = vpop.f32.mrb[0].mxu0
      %3650 = vdwg.mxu0
      %3651 = vmatprep.subr.bf16.mxu0 0
      %3652 = vmatpush1.bf16.msra.mxu0 %v2927
      %3653 = vmatprep.subr.bf16.mxu0 0
      %3654 = vmatpush1.bf16.msra.mxu0 %v2928
      %3655 = vmatprep.subr.bf16.mxu0 0
      %3656 = vmatpush1.bf16.msra.mxu0 %v2929
      %3657 = vmatprep.subr.bf16.mxu0 0
      %3658 = vmatpush1.bf16.msra.mxu0 %v2930
      %3659 = vmatprep.subr.bf16.mxu0 0
      %3660 = vmatpush1.bf16.msra.mxu0 %v2931
      %3661 = vmatprep.subr.bf16.mxu0 0
      %3662 = vmatpush1.bf16.msra.mxu0 %v2932
      %3663 = vmatprep.subr.bf16.mxu0 0
      %3664 = vmatpush1.bf16.msra.mxu0 %v2933
      %3665 = vmatprep.subr.bf16.mxu0 0
      %3666 = vmatpush1.bf16.msra.mxu0 %v2934
      %3667 = vmatprep.subr.bf16.mxu0 0
      %3668 = vmatpush1.bf16.msra.mxu0 0
      %3669 = vmatprep.subr.bf16.mxu0 0
      %3670 = vmatpush1.bf16.msra.mxu0 0
      %3671 = vmatprep.subr.bf16.mxu0 0
      %3672 = vmatpush1.bf16.msra.mxu0 0
      %3673 = vmatprep.subr.bf16.mxu0 0
      %3674 = vmatpush1.bf16.msra.mxu0 0
      %3675 = vmatprep.subr.bf16.mxu0 0
      %3676 = vmatpush1.bf16.msra.mxu0 0
      %3677 = vmatprep.subr.bf16.mxu0 0
      %3678 = vmatpush1.bf16.msra.mxu0 0
      %3679 = vmatprep.subr.bf16.mxu0 0
      %3680 = vmatpush1.bf16.msra.mxu0 0
      %3681 = vmatprep.subr.bf16.mxu0 0
      %3682 = vmatpush1.bf16.msra.mxu0 0
      %3683 = vmatprep.mubr.bf16.mxu0 0
      %3684 = vmatmul.mubr.bf16.gmra.mrb[0].mxu0 %v2288
      %v3685 = vpop.f32.mrb[0].mxu0
      %v3686 = vadd.f32 %v3525, %v3685
      %v3687 = vpop.f32.mrb[0].mxu0
      %v3688 = vpop.f32.mrb[0].mxu0
      %v3689 = vadd.f32 %v3528, %v3688
      %v3690 = vpop.f32.mrb[0].mxu0
      %3691 = vmatprep.mubr.bf16.mxu0 0
      %3692 = vmatmul.mubr.bf16.gmra.mrb[0].mxu0 %v2297
      %v3693 = vpop.f32.mrb[0].mxu0
      %v3694 = vadd.f32 %v3533, %v3693
      %v3695 = vpop.f32.mrb[0].mxu0
      %v3696 = vpop.f32.mrb[0].mxu0
      %v3697 = vadd.f32 %v3536, %v3696
      %v3698 = vpop.f32.mrb[0].mxu0
      %3699 = vmatprep.mubr.bf16.mxu0 0
      %3700 = vmatmul.mubr.bf16.gmra.mrb[0].mxu0 %v2306
      %v3701 = vpop.f32.mrb[0].mxu0
      %v3702 = vadd.f32 %v3541, %v3701
      %v3703 = vpop.f32.mrb[0].mxu0
      %v3704 = vpop.f32.mrb[0].mxu0
      %v3705 = vadd.f32 %v3544, %v3704
      %v3706 = vpop.f32.mrb[0].mxu0
      %3707 = vmatprep.mubr.bf16.mxu0 0
      %3708 = vmatmul.mubr.bf16.gmra.mrb[0].mxu0 %v2315
      %v3709 = vpop.f32.mrb[0].mxu0
      %v3710 = vadd.f32 %v3549, %v3709
      %v3711 = vpop.f32.mrb[0].mxu0
      %v3712 = vpop.f32.mrb[0].mxu0
      %v3713 = vadd.f32 %v3552, %v3712
      %v3714 = vpop.f32.mrb[0].mxu0
      %3715 = vmatprep.mubr.bf16.mxu0 0
      %3716 = vmatmul.mubr.bf16.gmra.mrb[0].mxu0 %v2324
      %v3717 = vpop.f32.mrb[0].mxu0
      %v3718 = vadd.f32 %v3557, %v3717
      %v3719 = vpop.f32.mrb[0].mxu0
      %v3720 = vpop.f32.mrb[0].mxu0
      %v3721 = vadd.f32 %v3560, %v3720
      %v3722 = vpop.f32.mrb[0].mxu0
      %3723 = vmatprep.mubr.bf16.mxu0 0
      %3724 = vmatmul.mubr.bf16.gmra.mrb[0].mxu0 %v2333
      %v3725 = vpop.f32.mrb[0].mxu0
      %v3726 = vadd.f32 %v3565, %v3725
      %v3727 = vpop.f32.mrb[0].mxu0
      %v3728 = vpop.f32.mrb[0].mxu0
      %v3729 = vadd.f32 %v3568, %v3728
      %v3730 = vpop.f32.mrb[0].mxu0
      %3731 = vmatprep.mubr.bf16.mxu0 0
      %3732 = vmatmul.mubr.bf16.gmra.mrb[0].mxu0 %v2342
      %v3733 = vpop.f32.mrb[0].mxu0
      %v3734 = vadd.f32 %v3573, %v3733
      %v3735 = vpop.f32.mrb[0].mxu0
      %v3736 = vpop.f32.mrb[0].mxu0
      %v3737 = vadd.f32 %v3576, %v3736
      %v3738 = vpop.f32.mrb[0].mxu0
      %3739 = vmatprep.mubr.bf16.mxu0 0
      %3740 = vmatmul.mubr.bf16.gmra.mrb[0].mxu0 %v2351
      %v3741 = vpop.f32.mrb[0].mxu0
      %v3742 = vadd.f32 %v3581, %v3741
      %v3743 = vpop.f32.mrb[0].mxu0
      %v3744 = vpop.f32.mrb[0].mxu0
      %v3745 = vadd.f32 %v3584, %v3744
      %v3746 = vpop.f32.mrb[0].mxu0
      %3747 = vmatprep.mubr.bf16.mxu0 0
      %3748 = vmatmul.mubr.bf16.gmra.mrb[0].mxu0 %v2360
      %v3749 = vpop.f32.mrb[0].mxu0
      %v3750 = vadd.f32 %v3589, %v3749
      %v3751 = vpop.f32.mrb[0].mxu0
      %v3752 = vpop.f32.mrb[0].mxu0
      %v3753 = vadd.f32 %v3592, %v3752
      %v3754 = vpop.f32.mrb[0].mxu0
      %3755 = vmatprep.mubr.bf16.mxu0 0
      %3756 = vmatmul.mubr.bf16.gmra.mrb[0].mxu0 %v2369
      %v3757 = vpop.f32.mrb[0].mxu0
      %v3758 = vadd.f32 %v3597, %v3757
      %v3759 = vpop.f32.mrb[0].mxu0
      %v3760 = vpop.f32.mrb[0].mxu0
      %v3761 = vadd.f32 %v3600, %v3760
      %v3762 = vpop.f32.mrb[0].mxu0
      %3763 = vmatprep.mubr.bf16.mxu0 0
      %3764 = vmatmul.mubr.bf16.gmra.mrb[0].mxu0 %v2378
      %v3765 = vpop.f32.mrb[0].mxu0
      %v3766 = vadd.f32 %v3605, %v3765
      %v3767 = vpop.f32.mrb[0].mxu0
      %v3768 = vpop.f32.mrb[0].mxu0
      %v3769 = vadd.f32 %v3608, %v3768
      %v3770 = vpop.f32.mrb[0].mxu0
      %3771 = vmatprep.mubr.bf16.mxu0 0
      %3772 = vmatmul.mubr.bf16.gmra.mrb[0].mxu0 %v2387
      %v3773 = vpop.f32.mrb[0].mxu0
      %v3774 = vadd.f32 %v3613, %v3773
      %v3775 = vpop.f32.mrb[0].mxu0
      %v3776 = vpop.f32.mrb[0].mxu0
      %v3777 = vadd.f32 %v3616, %v3776
      %v3778 = vpop.f32.mrb[0].mxu0
      %3779 = vmatprep.mubr.bf16.mxu0 0
      %3780 = vmatmul.mubr.bf16.gmra.mrb[0].mxu0 %v2396
      %v3781 = vpop.f32.mrb[0].mxu0
      %v3782 = vadd.f32 %v3621, %v3781
      %v3783 = vpop.f32.mrb[0].mxu0
      %v3784 = vpop.f32.mrb[0].mxu0
      %v3785 = vadd.f32 %v3624, %v3784
      %v3786 = vpop.f32.mrb[0].mxu0
      %3787 = vmatprep.mubr.bf16.mxu0 0
      %3788 = vmatmul.mubr.bf16.gmra.mrb[0].mxu0 %v2405
      %v3789 = vpop.f32.mrb[0].mxu0
      %v3790 = vadd.f32 %v3629, %v3789
      %v3791 = vpop.f32.mrb[0].mxu0
      %v3792 = vpop.f32.mrb[0].mxu0
      %v3793 = vadd.f32 %v3632, %v3792
      %v3794 = vpop.f32.mrb[0].mxu0
      %3795 = vmatprep.mubr.bf16.mxu0 0
      %3796 = vmatmul.mubr.bf16.gmra.mrb[0].mxu0 %v2414
      %v3797 = vpop.f32.mrb[0].mxu0
      %v3798 = vadd.f32 %v3637, %v3797
      %v3799 = vpop.f32.mrb[0].mxu0
      %v3800 = vpop.f32.mrb[0].mxu0
      %v3801 = vadd.f32 %v3640, %v3800
      %v3802 = vpop.f32.mrb[0].mxu0
      %3803 = vmatprep.mubr.bf16.mxu0 0
      %3804 = vmatmul.mubr.bf16.gmra.mrb[0].mxu0 %v2423
      %v3805 = vpop.f32.mrb[0].mxu0
      %v3806 = vadd.f32 %v3645, %v3805
      %v3807 = vpop.f32.mrb[0].mxu0
      %v3808 = vpop.f32.mrb[0].mxu0
      %v3809 = vadd.f32 %v3648, %v3808
      %v3810 = vpop.f32.mrb[0].mxu0
      %3811 = vdwg.mxu0
      %v3812 = vpack.c.bf16 %v3689, %v3686
      %v3813 = vpack.c.bf16 %v3697, %v3694
      %v3814 = vpack.c.bf16 %v3705, %v3702
      %v3815 = vpack.c.bf16 %v3713, %v3710
      %v3816 = vpack.c.bf16 %v3721, %v3718
      %v3817 = vpack.c.bf16 %v3729, %v3726
      %v3818 = vpack.c.bf16 %v3737, %v3734
      %v3819 = vpack.c.bf16 %v3745, %v3742
      %v3820 = vpack.c.bf16 %v3753, %v3750
      %v3821 = vpack.c.bf16 %v3761, %v3758
      %v3822 = vpack.c.bf16 %v3769, %v3766
      %v3823 = vpack.c.bf16 %v3777, %v3774
      %v3824 = vpack.c.bf16 %v3785, %v3782
      %v3825 = vpack.c.bf16 %v3793, %v3790
      %v3826 = vpack.c.bf16 %v3801, %v3798
      %v3827 = vpack.c.bf16 %v3809, %v3806
      %v3844 = vunpack.c.l.b16 %v3812
      %v3845 = vunpack.c.h.b16 %v3812
      %v3846 = vunpack.c.l.b16 %v3813
      %v3847 = vunpack.c.h.b16 %v3813
      %v3848 = vunpack.c.l.b16 %v3814
      %v3849 = vunpack.c.h.b16 %v3814
      %v3850 = vunpack.c.l.b16 %v3815
      %v3851 = vunpack.c.h.b16 %v3815
      %v3852 = vunpack.c.l.b16 %v3816
      %v3853 = vunpack.c.h.b16 %v3816
      %v3854 = vunpack.c.l.b16 %v3817
      %v3855 = vunpack.c.h.b16 %v3817
      %v3856 = vunpack.c.l.b16 %v3818
      %v3857 = vunpack.c.h.b16 %v3818
      %v3858 = vunpack.c.l.b16 %v3819
      %v3859 = vunpack.c.h.b16 %v3819
      %v3860 = vunpack.c.l.b16 %v3820
      %v3861 = vunpack.c.h.b16 %v3820
      %v3862 = vunpack.c.l.b16 %v3821
      %v3863 = vunpack.c.h.b16 %v3821
      %v3864 = vunpack.c.l.b16 %v3822
      %v3865 = vunpack.c.h.b16 %v3822
      %v3866 = vunpack.c.l.b16 %v3823
      %v3867 = vunpack.c.h.b16 %v3823
      %v3868 = vunpack.c.l.b16 %v3824
      %v3869 = vunpack.c.h.b16 %v3824
      %v3870 = vunpack.c.l.b16 %v3825
      %v3871 = vunpack.c.h.b16 %v3825
      %v3872 = vunpack.c.l.b16 %v3826
      %v3873 = vunpack.c.h.b16 %v3826
      %v3874 = vunpack.c.l.b16 %v3827
      %v3875 = vunpack.c.h.b16 %v3827
      %v3876 = vpack.c.b16 %v3844, %v3844
      %v3877 = vpack.c.b16 %v3845, %v3845
      %v3878 = vpack.c.b16 %v3846, %v3846
      %v3879 = vpack.c.b16 %v3847, %v3847
      %v3880 = vpack.c.b16 %v3848, %v3848
      %v3881 = vpack.c.b16 %v3849, %v3849
      %v3882 = vpack.c.b16 %v3850, %v3850
      %v3883 = vpack.c.b16 %v3851, %v3851
      %v3884 = vpack.c.b16 %v3852, %v3852
      %v3885 = vpack.c.b16 %v3853, %v3853
      %v3886 = vpack.c.b16 %v3854, %v3854
      %v3887 = vpack.c.b16 %v3855, %v3855
      %v3888 = vpack.c.b16 %v3856, %v3856
      %v3889 = vpack.c.b16 %v3857, %v3857
      %v3890 = vpack.c.b16 %v3858, %v3858
      %v3891 = vpack.c.b16 %v3859, %v3859
      %v3892 = vpack.c.b16 %v3860, %v3860
      %v3893 = vpack.c.b16 %v3861, %v3861
      %v3894 = vpack.c.b16 %v3862, %v3862
      %v3895 = vpack.c.b16 %v3863, %v3863
      %v3896 = vpack.c.b16 %v3864, %v3864
      %v3897 = vpack.c.b16 %v3865, %v3865
      %v3898 = vpack.c.b16 %v3866, %v3866
      %v3899 = vpack.c.b16 %v3867, %v3867
      %v3900 = vpack.c.b16 %v3868, %v3868
      %v3901 = vpack.c.b16 %v3869, %v3869
      %v3902 = vpack.c.b16 %v3870, %v3870
      %v3903 = vpack.c.b16 %v3871, %v3871
      %v3904 = vpack.c.b16 %v3872, %v3872
      %v3905 = vpack.c.b16 %v3873, %v3873
      %v3906 = vpack.c.b16 %v3874, %v3874
      %v3907 = vpack.c.b16 %v3875, %v3875
      %3940 = vst [vmem:[%s316] sm:$0xf] %v3876
      %3941 = vst [vmem:[%s316 + $0x4] sm:$0xf] %v3877
      %3942 = vst [vmem:[%s316 + $0x8] sm:$0xf] %v3878
      %3943 = vst [vmem:[%s316 + $0xc] sm:$0xf] %v3879
      %3944 = vst [vmem:[%s316 + $0x10] sm:$0xf] %v3880
      %3945 = vst [vmem:[%s316 + $0x14] sm:$0xf] %v3881
      %3946 = vst [vmem:[%s316 + $0x18] sm:$0xf] %v3882
      %3947 = vst [vmem:[%s316 + $0x1c] sm:$0xf] %v3883
      %3948 = vst [vmem:[%s316 + $0x20] sm:$0xf] %v3884
      %3949 = vst [vmem:[%s316 + $0x24] sm:$0xf] %v3885
      %3950 = vst [vmem:[%s316 + $0x28] sm:$0xf] %v3886
      %3951 = vst [vmem:[%s316 + $0x2c] sm:$0xf] %v3887
      %3952 = vst [vmem:[%s316 + $0x30] sm:$0xf] %v3888
      %3953 = vst [vmem:[%s316 + $0x34] sm:$0xf] %v3889
      %3954 = vst [vmem:[%s316 + $0x38] sm:$0xf] %v3890
      %3955 = vst [vmem:[%s316 + $0x3c] sm:$0xf] %v3891
      %3956 = vst [vmem:[%s316 + $0x40] sm:$0xf] %v3892
      %3957 = vst [vmem:[%s316 + $0x44] sm:$0xf] %v3893
      %3958 = vst [vmem:[%s316 + $0x48] sm:$0xf] %v3894
      %3959 = vst [vmem:[%s316 + $0x4c] sm:$0xf] %v3895
      %3960 = vst [vmem:[%s316 + $0x50] sm:$0xf] %v3896
      %3961 = vst [vmem:[%s316 + $0x54] sm:$0xf] %v3897
      %3962 = vst [vmem:[%s316 + $0x58] sm:$0xf] %v3898
      %3963 = vst [vmem:[%s316 + $0x5c] sm:$0xf] %v3899
      %3964 = vst [vmem:[%s316 + $0x60] sm:$0xf] %v3900
      %3965 = vst [vmem:[%s316 + $0x64] sm:$0xf] %v3901
      %3966 = vst [vmem:[%s316 + $0x68] sm:$0xf] %v3902
      %3967 = vst [vmem:[%s316 + $0x6c] sm:$0xf] %v3903
      %3968 = vst [vmem:[%s316 + $0x70] sm:$0xf] %v3904
      %3969 = vst [vmem:[%s316 + $0x74] sm:$0xf] %v3905
      %3970 = vst [vmem:[%s316 + $0x78] sm:$0xf] %v3906
      %3971 = vst [vmem:[%s316 + $0x7c] sm:$0xf] %v3907
      %v3972 = vadd.f32 %v3686, %v3689
      %v3973 = vadd.f32 %v3972, %v3694
      %v3974 = vadd.f32 %v3973, %v3697
      %v3975 = vadd.f32 %v3974, %v3702
      %v3976 = vadd.f32 %v3975, %v3705
      %v3977 = vadd.f32 %v3976, %v3710
      %v3978 = vadd.f32 %v3977, %v3713
      %v3979 = vadd.f32 %v3978, %v3718
      %v3980 = vadd.f32 %v3979, %v3721
      %v3981 = vadd.f32 %v3980, %v3726
      %v3982 = vadd.f32 %v3981, %v3729
      %v3983 = vadd.f32 %v3982, %v3734
      %v3984 = vadd.f32 %v3983, %v3737
      %v3985 = vadd.f32 %v3984, %v3742
      %v3986 = vadd.f32 %v3985, %v3745
      %v3987 = vadd.f32 %v3986, %v3750
      %v3988 = vadd.f32 %v3987, %v3753
      %v3989 = vadd.f32 %v3988, %v3758
      %v3990 = vadd.f32 %v3989, %v3761
      %v3991 = vadd.f32 %v3990, %v3766
      %v3992 = vadd.f32 %v3991, %v3769
      %v3993 = vadd.f32 %v3992, %v3774
      %v3994 = vadd.f32 %v3993, %v3777
      %v3995 = vadd.f32 %v3994, %v3782
      %v3996 = vadd.f32 %v3995, %v3785
      %v3997 = vadd.f32 %v3996, %v3790
      %v3998 = vadd.f32 %v3997, %v3793
      %v3999 = vadd.f32 %v3998, %v3798
      %v4000 = vadd.f32 %v3999, %v3801
      %v4001 = vadd.f32 %v4000, %v3806
      %v4002 = vadd.f32 %v4001, %v3809
      %v4003 = vrot.slane %v4002, 4
      %v4004 = vadd.f32 %v4002, %v4003
      %v4005 = vrot.slane %v4004, 2
      %v4006 = vadd.f32 %v4004, %v4005
      %v4007 = vrot.slane %v4006, 1
      %v4008 = vadd.f32 %v4006, %v4007
      %4009 = vst [vmem:[%s319] sm:$0x1] %v4008
      %v4010 = vmul.f32 %v3686, %v3686
      %v4011 = vmul.f32 %v3689, %v3689
      %v4012 = vmul.f32 %v3694, %v3694
      %v4013 = vmul.f32 %v3697, %v3697
      %v4014 = vmul.f32 %v3702, %v3702
      %v4015 = vmul.f32 %v3705, %v3705
      %v4016 = vmul.f32 %v3710, %v3710
      %v4017 = vmul.f32 %v3713, %v3713
      %v4018 = vmul.f32 %v3718, %v3718
      %v4019 = vmul.f32 %v3721, %v3721
      %v4020 = vmul.f32 %v3726, %v3726
      %v4021 = vmul.f32 %v3729, %v3729
      %v4022 = vmul.f32 %v3734, %v3734
      %v4023 = vmul.f32 %v3737, %v3737
      %v4024 = vmul.f32 %v3742, %v3742
      %v4025 = vmul.f32 %v3745, %v3745
      %v4026 = vmul.f32 %v3750, %v3750
      %v4027 = vmul.f32 %v3753, %v3753
      %v4028 = vmul.f32 %v3758, %v3758
      %v4029 = vmul.f32 %v3761, %v3761
      %v4030 = vmul.f32 %v3766, %v3766
      %v4031 = vmul.f32 %v3769, %v3769
      %v4032 = vmul.f32 %v3774, %v3774
      %v4033 = vmul.f32 %v3777, %v3777
      %v4034 = vmul.f32 %v3782, %v3782
      %v4035 = vmul.f32 %v3785, %v3785
      %v4036 = vmul.f32 %v3790, %v3790
      %v4037 = vmul.f32 %v3793, %v3793
      %v4038 = vmul.f32 %v3798, %v3798
      %v4039 = vmul.f32 %v3801, %v3801
      %v4040 = vmul.f32 %v3806, %v3806
      %v4041 = vmul.f32 %v3809, %v3809
      %v4042 = vadd.f32 %v4010, %v4011
      %v4043 = vadd.f32 %v4042, %v4012
      %v4044 = vadd.f32 %v4043, %v4013
      %v4045 = vadd.f32 %v4044, %v4014
      %v4046 = vadd.f32 %v4045, %v4015
      %v4047 = vadd.f32 %v4046, %v4016
      %v4048 = vadd.f32 %v4047, %v4017
      %v4049 = vadd.f32 %v4048, %v4018
      %v4050 = vadd.f32 %v4049, %v4019
      %v4051 = vadd.f32 %v4050, %v4020
      %v4052 = vadd.f32 %v4051, %v4021
      %v4053 = vadd.f32 %v4052, %v4022
      %v4054 = vadd.f32 %v4053, %v4023
      %v4055 = vadd.f32 %v4054, %v4024
      %v4056 = vadd.f32 %v4055, %v4025
      %v4057 = vadd.f32 %v4056, %v4026
      %v4058 = vadd.f32 %v4057, %v4027
      %v4059 = vadd.f32 %v4058, %v4028
      %v4060 = vadd.f32 %v4059, %v4029
      %v4061 = vadd.f32 %v4060, %v4030
      %v4062 = vadd.f32 %v4061, %v4031
      %v4063 = vadd.f32 %v4062, %v4032
      %v4064 = vadd.f32 %v4063, %v4033
      %v4065 = vadd.f32 %v4064, %v4034
      %v4066 = vadd.f32 %v4065, %v4035
      %v4067 = vadd.f32 %v4066, %v4036
      %v4068 = vadd.f32 %v4067, %v4037
      %v4069 = vadd.f32 %v4068, %v4038
      %v4070 = vadd.f32 %v4069, %v4039
      %v4071 = vadd.f32 %v4070, %v4040
      %v4072 = vadd.f32 %v4071, %v4041
      %v4073 = vrot.slane %v4072, 4
      %v4074 = vadd.f32 %v4072, %v4073
      %v4075 = vrot.slane %v4074, 2
      %v4076 = vadd.f32 %v4074, %v4075
      %v4077 = vrot.slane %v4076, 1
      %v4078 = vadd.f32 %v4076, %v4077
      %4079 = vst [vmem:[%s322] sm:$0x1] %v4078
      %p4080 = scmp.lt.s32.totalorder %s20, 1
      %s4081 = scalar_select %p4080, %s20, 1
      %s4082 = smul.addr %s4081, 32
      %s4083 = smul.addr %s4082, 4
      %s4084 = scalar_lea.vmem %s6, %s4083
      %p4085 = scmp.lt.s32.totalorder %s20, 1
      %s4086 = scalar_select %p4085, %s20, 1
      %s4087 = scalar_lea.vmem %s7, %s4086
      %p4088 = scmp.lt.s32.totalorder %s20, 1
      %s4089 = scalar_select %p4088, %s20, 1
      %s4090 = scalar_lea.vmem %s8, %s4089
      // Predicated region
      $region45: #{conv_block_forward.2} parent=43 // pred_check
        %p4091 = pneg %p169
      $region46: #{conv_block_forward.2} parent=43 // pred_check_branch
        %4093 = sbr.rel (%p4091) target = $region48
      $region47: #{conv_block_forward.2} parent=43 // pred_region
        _
      $region48: #{conv_block_forward.2} parent=43 // pred_fallthru
        _
      // Predicated region
      $region49: #{conv_block_forward.2} parent=43 // pred_check
        %p4094 = pneg %p195
      $region50: #{conv_block_forward.2} parent=43 // pred_check_branch
        %4096 = sbr.rel (%p4094) target = $region52
      $region51: #{conv_block_forward.2} parent=43 // pred_region
        _
      $region52: #{conv_block_forward.2} parent=43 // pred_fallthru
        _
      // Predicated region
      $region53: #{conv_block_forward.2} parent=43 // pred_check
        %p4097 = pneg %p221
      $region54: #{conv_block_forward.2} parent=43 // pred_check_branch
        %4099 = sbr.rel (%p4097) target = $region56
      $region55: #{conv_block_forward.2} parent=43 // pred_region
        _
      $region56: #{conv_block_forward.2} parent=43 // pred_fallthru
        _
    $region44: #{conv_block_forward.2} parent=5 // pred_fallthru
      _
    %p4100 = scmp.le.s32.totalorder 2, %s15
    // Predicated region
    $region57: #{conv_block_forward.2} parent=5 // pred_check
      %p4101 = pneg %p4100
    $region58: #{conv_block_forward.2} parent=5 // pred_check_branch
      %4103 = sbr.rel (%p4101) target = $region60
    $region59: #{conv_block_forward.2} parent=5 // pred_region
      %s4104 = ssub.s32 %s15, 2
      // Predicated region
      $region61: #{conv_block_forward.2} parent=59 // pred_check
        %p4105 = pneg %p175
      $region62: #{conv_block_forward.2} parent=59 // pred_check_branch
        %4107 = sbr.rel (%p4105) target = $region64
      $region63: #{conv_block_forward.2} parent=59 // pred_region
        %p4108 = scmp.lt.s32.totalorder %s21, 1
        %s4109 = scalar_select %p4108, %s21, 1
        %s4110 = smul.addr %s4109, 32
        %s4111 = smul.addr %s4110, 4
        %s4112 = scalar_lea.vmem %s6, %s4111
      $region64: #{conv_block_forward.2} parent=59 // pred_fallthru
        _
      // Predicated region
      $region65: #{conv_block_forward.2} parent=59 // pred_check
        %p4113 = pneg %p201
      $region66: #{conv_block_forward.2} parent=59 // pred_check_branch
        %4115 = sbr.rel (%p4113) target = $region68
      $region67: #{conv_block_forward.2} parent=59 // pred_region
        %p4116 = scmp.lt.s32.totalorder %s21, 1
        %s4117 = scalar_select %p4116, %s21, 1
        %s4118 = scalar_lea.vmem %s7, %s4117
      $region68: #{conv_block_forward.2} parent=59 // pred_fallthru
        _
      // Predicated region
      $region69: #{conv_block_forward.2} parent=59 // pred_check
        %p4119 = pneg %p227
      $region70: #{conv_block_forward.2} parent=59 // pred_check_branch
        %4121 = sbr.rel (%p4119) target = $region72
      $region71: #{conv_block_forward.2} parent=59 // pred_region
        %p4122 = scmp.lt.s32.totalorder %s21, 1
        %s4123 = scalar_select %p4122, %s21, 1
        %s4124 = scalar_lea.vmem %s8, %s4123
      $region72: #{conv_block_forward.2} parent=59 // pred_fallthru
        _
    $region60: #{conv_block_forward.2} parent=5 // pred_fallthru
      _
  $region6: #{conv_block_forward.2} parent=0 // loop_footer
    %s19 = sadd.s32 1, %s15
  $region7: #{conv_block_forward.2} parent=0 // loop_footer_branch
    %14 = sbr.rel target = $region3
  $region8: #{conv_block_forward.2} parent=0 // loop_exit
    _

// kernel: conv_block_forward.3
$region0: #{conv_block_forward.3}
  #allocation0 [shape = 'u32[]', space=smem, size = 0x4, offset = 0x4, fixed_abs, tag = 'smem constant byte address 0x4 - core index']
  #allocation1 [shape = 'u32[144,128]{1,0:T(1,128)}', space=vmem, size = 0x12000, scoped, tag = 'internal scratch']
  #allocation2 [shape = 'bf16[256,1152]{1,0:T(16,128)(2,1)}', space=vmem, size = 0x90000, scoped, tag = 'scratch operand']
  %s0 = inlined_call_operand.vmem [shape: bf16[2,16,16,128], index: 0, kind: input, shape index: {}]
  %s1 = inlined_call_operand.vmem [shape: f32[256,9], index: 1, kind: input, shape index: {}]
  %s2 = inlined_call_operand.vmem [shape: bf16[1152,128], index: 2, kind: input, shape index: {}]
  %s3 = inlined_call_operand.vmem [shape: f32[1,128], index: 3, kind: input, shape index: {}]
  %s4 = inlined_call_operand.vmem [shape: f32[1,128], index: 4, kind: input, shape index: {}]
  %s5 = inlined_call_operand.vmem [shape: f32[1,128], index: 5, kind: input, shape index: {}]
  %s6 = inlined_call_operand.vmem [shape: f32[2,16,16,128], index: 6, kind: output, shape index: {0}]
  %s7 = inlined_call_operand.vmem [shape: f32[2,1,128], index: 7, kind: output, shape index: {1}]
  %s8 = inlined_call_operand.vmem [shape: f32[2,1,128], index: 8, kind: output, shape index: {2}]
  %9 = xla_tuple %s6, %s7, %s8
  %s10 = sld [smem:[#allocation0]]
  $region73: #{conv_block_forward.3} parent=0
    _
  %s12 = ssub.s32 1, %s10
  %s13 = scalar_select 0, %s12, %s10
  loop: start=0, step=1, limit=4
  $region2: #{conv_block_forward.3} parent=0 // loop_pre_header
    _
  $region3: #{conv_block_forward.3} parent=0 // loop_header
    %s15 = sphi 0, %s19
    %p16 = scmp.ge.s32.totalorder %s15, 4
    %s25 = sphi 0, %s27
    %s28 = sphi 0, %s25
    %s29 = sphi 0, %s28
    %s45 = sphi 0, %s29
    %s49 = sphi 0, %s49
    %s51 = sphi 0, %s49
    %s52 = sphi 0, %s51
    %s66 = sphi 0, %s52
    %s70 = sphi 0, %s70
    %s72 = sphi 0, %s70
    %s73 = sphi 0, %s72
    %s87 = sphi 0, %s73
    %s91 = sphi 0, %s91
    %s93 = sphi 0, %s91
    %s94 = sphi 0, %s93
    %s108 = sphi 0, %s94
    %s112 = sphi 0, %s112
    %s114 = sphi 0, %s112
    %s115 = sphi 0, %s114
    %s129 = sphi 0, %s115
    %s133 = sphi 0, %s133
    %s135 = sphi 0, %s133
    %s136 = sphi 0, %s135
    %s150 = sphi 0, %s136
    %s156 = sphi 0, %s158
    %s159 = sphi 0, %s156
    %s160 = sphi 0, %s159
    %s176 = sphi 0, %s160
    %s182 = sphi 0, %s184
    %s185 = sphi 0, %s182
    %s186 = sphi 0, %s185
    %s202 = sphi 0, %s186
    %s208 = sphi 0, %s210
    %s211 = sphi 0, %s208
    %s212 = sphi 0, %s211
    %s228 = sphi 0, %s212
  $region4: #{conv_block_forward.3} parent=0 // loop_header_branch
    %18 = sbr.rel (%p16) target = $region8
  $region5: #{conv_block_forward.3} parent=0 // loop_body
    %s20 = ssub.s32 %s15, 1
    %s21 = ssub.s32 %s15, 2
    %s22 = sadd.s32 %s15, 1
    %s23 = ssub.s32 %s15, %s22
    %p24 = scmp.eq.s32.totalorder %s23, 0
    %s26 = sadd.s32 %s25, 1
    %s27 = scalar_select %p24, %s25, %s26
    %p30 = pneg %p24
    %p31 = scmp.eq.s32.totalorder %s15, 1
    %p32 = por %p30, %p31
    %p33 = scmp.ne.s32.totalorder %s25, %s28
    %p34 = scmp.eq.s32.totalorder %s15, 0
    %p35 = por %p33, %p34
    %p36 = scmp.ne.s32.totalorder %s25, %s28
    %p37 = scmp.eq.s32.totalorder %s20, 1
    %p38 = por %p36, %p37
    %p39 = scmp.ne.s32.totalorder %s28, %s29
    %p40 = scmp.eq.s32.totalorder %s20, 0
    %p41 = por %p39, %p40
    %p42 = scmp.ne.s32.totalorder %s28, %s29
    %p43 = scmp.eq.s32.totalorder %s21, 1
    %p44 = por %p42, %p43
    %p46 = scmp.ne.s32.totalorder %s29, %s45
    %p47 = scmp.eq.s32.totalorder %s21, 0
    %p48 = por %p46, %p47
    %s50 = sadd.s32 %s49, 1
    %p53 = scmp.eq.s32.totalorder %s15, 1
    %p54 = scmp.ne.s32.totalorder %s49, %s51
    %p55 = scmp.eq.s32.totalorder %s15, 0
    %p56 = por %p54, %p55
    %p57 = scmp.ne.s32.totalorder %s49, %s51
    %p58 = scmp.eq.s32.totalorder %s20, 1
    %p59 = por %p57, %p58
    %p60 = scmp.ne.s32.totalorder %s51, %s52
    %p61 = scmp.eq.s32.totalorder %s20, 0
    %p62 = por %p60, %p61
    %p63 = scmp.ne.s32.totalorder %s51, %s52
    %p64 = scmp.eq.s32.totalorder %s21, 1
    %p65 = por %p63, %p64
    %p67 = scmp.ne.s32.totalorder %s52, %s66
    %p68 = scmp.eq.s32.totalorder %s21, 0
    %p69 = por %p67, %p68
    %s71 = sadd.s32 %s70, 1
    %p74 = scmp.eq.s32.totalorder %s15, 1
    %p75 = scmp.ne.s32.totalorder %s70, %s72
    %p76 = scmp.eq.s32.totalorder %s15, 0
    %p77 = por %p75, %p76
    %p78 = scmp.ne.s32.totalorder %s70, %s72
    %p79 = scmp.eq.s32.totalorder %s20, 1
    %p80 = por %p78, %p79
    %p81 = scmp.ne.s32.totalorder %s72, %s73
    %p82 = scmp.eq.s32.totalorder %s20, 0
    %p83 = por %p81, %p82
    %p84 = scmp.ne.s32.totalorder %s72, %s73
    %p85 = scmp.eq.s32.totalorder %s21, 1
    %p86 = por %p84, %p85
    %p88 = scmp.ne.s32.totalorder %s73, %s87
    %p89 = scmp.eq.s32.totalorder %s21, 0
    %p90 = por %p88, %p89
    %s92 = sadd.s32 %s91, 1
    %p95 = scmp.eq.s32.totalorder %s15, 1
    %p96 = scmp.ne.s32.totalorder %s91, %s93
    %p97 = scmp.eq.s32.totalorder %s15, 0
    %p98 = por %p96, %p97
    %p99 = scmp.ne.s32.totalorder %s91, %s93
    %p100 = scmp.eq.s32.totalorder %s20, 1
    %p101 = por %p99, %p100
    %p102 = scmp.ne.s32.totalorder %s93, %s94
    %p103 = scmp.eq.s32.totalorder %s20, 0
    %p104 = por %p102, %p103
    %p105 = scmp.ne.s32.totalorder %s93, %s94
    %p106 = scmp.eq.s32.totalorder %s21, 1
    %p107 = por %p105, %p106
    %p109 = scmp.ne.s32.totalorder %s94, %s108
    %p110 = scmp.eq.s32.totalorder %s21, 0
    %p111 = por %p109, %p110
    %s113 = sadd.s32 %s112, 1
    %p116 = scmp.eq.s32.totalorder %s15, 1
    %p117 = scmp.ne.s32.totalorder %s112, %s114
    %p118 = scmp.eq.s32.totalorder %s15, 0
    %p119 = por %p117, %p118
    %p120 = scmp.ne.s32.totalorder %s112, %s114
    %p121 = scmp.eq.s32.totalorder %s20, 1
    %p122 = por %p120, %p121
    %p123 = scmp.ne.s32.totalorder %s114, %s115
    %p124 = scmp.eq.s32.totalorder %s20, 0
    %p125 = por %p123, %p124
    %p126 = scmp.ne.s32.totalorder %s114, %s115
    %p127 = scmp.eq.s32.totalorder %s21, 1
    %p128 = por %p126, %p127
    %p130 = scmp.ne.s32.totalorder %s115, %s129
    %p131 = scmp.eq.s32.totalorder %s21, 0
    %p132 = por %p130, %p131
    %s134 = sadd.s32 %s133, 1
    %p137 = scmp.eq.s32.totalorder %s15, 1
    %p138 = scmp.ne.s32.totalorder %s133, %s135
    %p139 = scmp.eq.s32.totalorder %s15, 0
    %p140 = por %p138, %p139
    %p141 = scmp.ne.s32.totalorder %s133, %s135
    %p142 = scmp.eq.s32.totalorder %s20, 1
    %p143 = por %p141, %p142
    %p144 = scmp.ne.s32.totalorder %s135, %s136
    %p145 = scmp.eq.s32.totalorder %s20, 0
    %p146 = por %p144, %p145
    %p147 = scmp.ne.s32.totalorder %s135, %s136
    %p148 = scmp.eq.s32.totalorder %s21, 1
    %p149 = por %p147, %p148
    %p151 = scmp.ne.s32.totalorder %s136, %s150
    %p152 = scmp.eq.s32.totalorder %s21, 0
    %p153 = por %p151, %p152
    %s154 = ssub.s32 %s15, %s22
    %p155 = scmp.eq.s32.totalorder %s154, 0
    %s157 = sadd.s32 %s156, 1
    %s158 = scalar_select %p155, %s156, %s157
    %p161 = pneg %p155
    %p162 = scmp.eq.s32.totalorder %s15, 1
    %p163 = por %p161, %p162
    %p164 = scmp.ne.s32.totalorder %s156, %s159
    %p165 = scmp.eq.s32.totalorder %s15, 0
    %p166 = por %p164, %p165
    %p167 = scmp.ne.s32.totalorder %s156, %s159
    %p168 = scmp.eq.s32.totalorder %s20, 1
    %p169 = por %p167, %p168
    %p170 = scmp.ne.s32.totalorder %s159, %s160
    %p171 = scmp.eq.s32.totalorder %s20, 0
    %p172 = por %p170, %p171
    %p173 = scmp.ne.s32.totalorder %s159, %s160
    %p174 = scmp.eq.s32.totalorder %s21, 1
    %p175 = por %p173, %p174
    %p177 = scmp.ne.s32.totalorder %s160, %s176
    %p178 = scmp.eq.s32.totalorder %s21, 0
    %p179 = por %p177, %p178
    %s180 = ssub.s32 %s15, %s22
    %p181 = scmp.eq.s32.totalorder %s180, 0
    %s183 = sadd.s32 %s182, 1
    %s184 = scalar_select %p181, %s182, %s183
    %p187 = pneg %p181
    %p188 = scmp.eq.s32.totalorder %s15, 1
    %p189 = por %p187, %p188
    %p190 = scmp.ne.s32.totalorder %s182, %s185
    %p191 = scmp.eq.s32.totalorder %s15, 0
    %p192 = por %p190, %p191
    %p193 = scmp.ne.s32.totalorder %s182, %s185
    %p194 = scmp.eq.s32.totalorder %s20, 1
    %p195 = por %p193, %p194
    %p196 = scmp.ne.s32.totalorder %s185, %s186
    %p197 = scmp.eq.s32.totalorder %s20, 0
    %p198 = por %p196, %p197
    %p199 = scmp.ne.s32.totalorder %s185, %s186
    %p200 = scmp.eq.s32.totalorder %s21, 1
    %p201 = por %p199, %p200
    %p203 = scmp.ne.s32.totalorder %s186, %s202
    %p204 = scmp.eq.s32.totalorder %s21, 0
    %p205 = por %p203, %p204
    %s206 = ssub.s32 %s15, %s22
    %p207 = scmp.eq.s32.totalorder %s206, 0
    %s209 = sadd.s32 %s208, 1
    %s210 = scalar_select %p207, %s208, %s209
    %p213 = pneg %p207
    %p214 = scmp.eq.s32.totalorder %s15, 1
    %p215 = por %p213, %p214
    %p216 = scmp.ne.s32.totalorder %s208, %s211
    %p217 = scmp.eq.s32.totalorder %s15, 0
    %p218 = por %p216, %p217
    %p219 = scmp.ne.s32.totalorder %s208, %s211
    %p220 = scmp.eq.s32.totalorder %s20, 1
    %p221 = por %p219, %p220
    %p222 = scmp.ne.s32.totalorder %s211, %s212
    %p223 = scmp.eq.s32.totalorder %s20, 0
    %p224 = por %p222, %p223
    %p225 = scmp.ne.s32.totalorder %s211, %s212
    %p226 = scmp.eq.s32.totalorder %s21, 1
    %p227 = por %p225, %p226
    %p229 = scmp.ne.s32.totalorder %s212, %s228
    %p230 = scmp.eq.s32.totalorder %s21, 0
    %p231 = por %p229, %p230
    %p232 = scmp.le.s32.totalorder 1, %s15
    %p233 = scmp.lt.s32.totalorder %s15, 3
    %p234 = pnand %p232, %p233
    %p235 = pneg %p234
    // Predicated region
    $region9: #{conv_block_forward.3} parent=5 // pred_check
      _
    $region10: #{conv_block_forward.3} parent=5 // pred_check_branch
      %237 = sbr.rel (%p234) target = $region12
    $region11: #{conv_block_forward.3} parent=5 // pred_region
      %s238 = ssub.s32 %s15, 1
      // Predicated region
      $region13: #{conv_block_forward.3} parent=11 // pred_check
        %p239 = pneg %p62
      $region14: #{conv_block_forward.3} parent=11 // pred_check_branch
        %241 = sbr.rel (%p239) target = $region16
      $region15: #{conv_block_forward.3} parent=11 // pred_region
        _
      $region16: #{conv_block_forward.3} parent=11 // pred_fallthru
        _
      // Predicated region
      $region17: #{conv_block_forward.3} parent=11 // pred_check
        %p242 = pneg %p83
      $region18: #{conv_block_forward.3} parent=11 // pred_check_branch
        %244 = sbr.rel (%p242) target = $region20
      $region19: #{conv_block_forward.3} parent=11 // pred_region
        _
      $region20: #{conv_block_forward.3} parent=11 // pred_fallthru
        _
      // Predicated region
      $region21: #{conv_block_forward.3} parent=11 // pred_check
        %p245 = pneg %p104
      $region22: #{conv_block_forward.3} parent=11 // pred_check_branch
        %247 = sbr.rel (%p245) target = $region24
      $region23: #{conv_block_forward.3} parent=11 // pred_region
        _
      $region24: #{conv_block_forward.3} parent=11 // pred_fallthru
        _
      // Predicated region
      $region25: #{conv_block_forward.3} parent=11 // pred_check
        %p248 = pneg %p125
      $region26: #{conv_block_forward.3} parent=11 // pred_check_branch
        %250 = sbr.rel (%p248) target = $region28
      $region27: #{conv_block_forward.3} parent=11 // pred_region
        _
      $region28: #{conv_block_forward.3} parent=11 // pred_fallthru
        _
      // Predicated region
      $region29: #{conv_block_forward.3} parent=11 // pred_check
        %p251 = pneg %p146
      $region30: #{conv_block_forward.3} parent=11 // pred_check_branch
        %253 = sbr.rel (%p251) target = $region32
      $region31: #{conv_block_forward.3} parent=11 // pred_region
        _
      $region32: #{conv_block_forward.3} parent=11 // pred_fallthru
        _
    $region12: #{conv_block_forward.3} parent=5 // pred_fallthru
      _
    %p254 = scmp.lt.s32.totalorder %s15, 2
    // Predicated region
    $region33: #{conv_block_forward.3} parent=5 // pred_check
      %p255 = pneg %p254
    $region34: #{conv_block_forward.3} parent=5 // pred_check_branch
      %257 = sbr.rel (%p255) target = $region36
    $region35: #{conv_block_forward.3} parent=5 // pred_region
      // Predicated region
      $region37: #{conv_block_forward.3} parent=35 // pred_check
        %p258 = pneg %p35
      $region38: #{conv_block_forward.3} parent=35 // pred_check_branch
        %260 = sbr.rel (%p258) target = $region40
      $region39: #{conv_block_forward.3} parent=35 // pred_region
        %p261 = scmp.lt.s32.totalorder %s15, 1
        %s262 = scalar_select %p261, %s15, 1
        %s263 = smul.addr %s262, 32
        %s264 = smul.addr %s263, 4
        %s265 = scalar_lea.vmem %s0, %s264
      $region40: #{conv_block_forward.3} parent=35 // pred_fallthru
        _
    $region36: #{conv_block_forward.3} parent=5 // pred_fallthru
      _
    %p266 = scmp.le.s32.totalorder 1, %s15
    %p267 = scmp.lt.s32.totalorder %s15, 3
    %p268 = pnand %p266, %p267
    %p269 = pneg %p268
    // Predicated region
    $region41: #{conv_block_forward.3} parent=5 // pred_check
      _
    $region42: #{conv_block_forward.3} parent=5 // pred_check_branch
      %271 = sbr.rel (%p268) target = $region44
    $region43: #{conv_block_forward.3} parent=5 // pred_region
      %s272 = ssub.s32 %s15, 1
      %p273 = scmp.lt.s32.totalorder %s20, 1
      %s274 = scalar_select %p273, %s20, 1
      %s275 = smul.addr %s274, 32
      %s276 = smul.addr %s275, 4
      %s277 = scalar_lea.vmem %s0, %s276
      %p278 = pneg %p41
      %p279 = pneg %p38
      %p280 = pneg %p62
      %p281 = pneg %p59
      %p282 = pneg %p83
      %p283 = pneg %p80
      %p284 = pneg %p104
      %p285 = pneg %p101
      %p286 = pneg %p125
      %p287 = pneg %p122
      %p288 = pneg %p146
      %p289 = pneg %p143
      %p290 = pneg %p172
      %p291 = pneg %p169
      %p292 = scmp.lt.s32.totalorder %s20, 1
      %s293 = scalar_select %p292, %s20, 1
      %s294 = smul.addr %s293, 32
      %s295 = smul.addr %s294, 8
      %s296 = scalar_lea.vmem %s6, %s295
      %p297 = pneg %p198
      %p298 = pneg %p195
      %p299 = scmp.lt.s32.totalorder %s20, 1
      %s300 = scalar_select %p299, %s20, 1
      %s301 = scalar_lea.vmem %s7, %s300
      %p302 = pneg %p224
      %p303 = pneg %p221
      %p304 = scmp.lt.s32.totalorder %s20, 1
      %s305 = scalar_select %p304, %s20, 1
      %s306 = scalar_lea.vmem %s8, %s305
      %p307 = scmp.lt.s32.totalorder %s20, 1
      %s308 = scalar_select %p307, %s20, 1
      %s309 = smul.addr %s308, 32
      %s310 = smul.addr %s309, 4
      %s311 = scalar_lea.vmem %s0, %s310
      %p312 = scmp.lt.s32.totalorder %s20, 1
      %s313 = scalar_select %p312, %s20, 1
      %s314 = smul.addr %s313, 32
      %s315 = smul.addr %s314, 8
      %s316 = scalar_lea.vmem %s6, %s315
      %p317 = scmp.lt.s32.totalorder %s20, 1
      %s318 = scalar_select %p317, %s20, 1
      %s319 = scalar_lea.vmem %s7, %s318
      %p320 = scmp.lt.s32.totalorder %s20, 1
      %s321 = scalar_select %p320, %s20, 1
      %s322 = scalar_lea.vmem %s8, %s321
      %v324 = vld [vmem:[%s311] sm:$0xf]
      %v325 = vld [vmem:[%s311 + $0x4] sm:$0xf]
      %v326 = vld [vmem:[%s311 + $0x8] sm:$0xf]
      %v327 = vld [vmem:[%s311 + $0xc] sm:$0xf]
      %v328 = vld [vmem:[%s311 + $0x10] sm:$0xf]
      %v329 = vld [vmem:[%s311 + $0x14] sm:$0xf]
      %v330 = vld [vmem:[%s311 + $0x18] sm:$0xf]
      %v331 = vld [vmem:[%s311 + $0x1c] sm:$0xf]
      %v332 = vld [vmem:[%s311 + $0x20] sm:$0xf]
      %v333 = vld [vmem:[%s311 + $0x24] sm:$0xf]
      %v334 = vld [vmem:[%s311 + $0x28] sm:$0xf]
      %v335 = vld [vmem:[%s311 + $0x2c] sm:$0xf]
      %v336 = vld [vmem:[%s311 + $0x30] sm:$0xf]
      %v337 = vld [vmem:[%s311 + $0x34] sm:$0xf]
      %v338 = vld [vmem:[%s311 + $0x38] sm:$0xf]
      %v339 = vld [vmem:[%s311 + $0x3c] sm:$0xf]
      %v340 = vld [vmem:[%s311 + $0x40] sm:$0xf]
      %v341 = vld [vmem:[%s311 + $0x44] sm:$0xf]
      %v342 = vld [vmem:[%s311 + $0x48] sm:$0xf]
      %v343 = vld [vmem:[%s311 + $0x4c] sm:$0xf]
      %v344 = vld [vmem:[%s311 + $0x50] sm:$0xf]
      %v345 = vld [vmem:[%s311 + $0x54] sm:$0xf]
      %v346 = vld [vmem:[%s311 + $0x58] sm:$0xf]
      %v347 = vld [vmem:[%s311 + $0x5c] sm:$0xf]
      %v348 = vld [vmem:[%s311 + $0x60] sm:$0xf]
      %v349 = vld [vmem:[%s311 + $0x64] sm:$0xf]
      %v350 = vld [vmem:[%s311 + $0x68] sm:$0xf]
      %v351 = vld [vmem:[%s311 + $0x6c] sm:$0xf]
      %v352 = vld [vmem:[%s311 + $0x70] sm:$0xf]
      %v353 = vld [vmem:[%s311 + $0x74] sm:$0xf]
      %v354 = vld [vmem:[%s311 + $0x78] sm:$0xf]
      %v355 = vld [vmem:[%s311 + $0x7c] sm:$0xf]
      %v356 = vunpack.c.l.bf16 %v324
      %v357 = vunpack.c.l.bf16 %v325
      %v358 = vunpack.c.l.bf16 %v326
      %v359 = vunpack.c.l.bf16 %v327
      %v360 = vunpack.c.l.bf16 %v328
      %v361 = vunpack.c.l.bf16 %v329
      %v362 = vunpack.c.l.bf16 %v330
      %v363 = vunpack.c.l.bf16 %v331
      %v364 = vunpack.c.l.bf16 %v332
      %v365 = vunpack.c.l.bf16 %v333
      %v366 = vunpack.c.l.bf16 %v334
      %v367 = vunpack.c.l.bf16 %v335
      %v368 = vunpack.c.l.bf16 %v336
      %v369 = vunpack.c.l.bf16 %v337
      %v370 = vunpack.c.l.bf16 %v338
      %v371 = vunpack.c.l.bf16 %v339
      %v372 = vunpack.c.l.bf16 %v340
      %v373 = vunpack.c.l.bf16 %v341
      %v374 = vunpack.c.l.bf16 %v342
      %v375 = vunpack.c.l.bf16 %v343
      %v376 = vunpack.c.l.bf16 %v344
      %v377 = vunpack.c.l.bf16 %v345
      %v378 = vunpack.c.l.bf16 %v346
      %v379 = vunpack.c.l.bf16 %v347
      %v380 = vunpack.c.l.bf16 %v348
      %v381 = vunpack.c.l.bf16 %v349
      %v382 = vunpack.c.l.bf16 %v350
      %v383 = vunpack.c.l.bf16 %v351
      %v384 = vunpack.c.l.bf16 %v352
      %v385 = vunpack.c.l.bf16 %v353
      %v386 = vunpack.c.l.bf16 %v354
      %v387 = vunpack.c.l.bf16 %v355
      %v388 = vld [vmem:[%s4] sm:$0x1]
      %v390 = vlaneseq
      %v391 = vshrl.u32 %v390, 7
      %v392 = vsub.s32 0, %v391
      %v393 = vrot.slane %v388, %v392
      %v395 = vmul.f32 %v356, %v393
      %v396 = vmul.f32 %v357, %v393
      %v397 = vmul.f32 %v358, %v393
      %v398 = vmul.f32 %v359, %v393
      %v399 = vmul.f32 %v360, %v393
      %v400 = vmul.f32 %v361, %v393
      %v401 = vmul.f32 %v362, %v393
      %v402 = vmul.f32 %v363, %v393
      %v403 = vmul.f32 %v364, %v393
      %v404 = vmul.f32 %v365, %v393
      %v405 = vmul.f32 %v366, %v393
      %v406 = vmul.f32 %v367, %v393
      %v407 = vmul.f32 %v368, %v393
      %v408 = vmul.f32 %v369, %v393
      %v409 = vmul.f32 %v370, %v393
      %v410 = vmul.f32 %v371, %v393
      %v411 = vmul.f32 %v372, %v393
      %v412 = vmul.f32 %v373, %v393
      %v413 = vmul.f32 %v374, %v393
      %v414 = vmul.f32 %v375, %v393
      %v415 = vmul.f32 %v376, %v393
      %v416 = vmul.f32 %v377, %v393
      %v417 = vmul.f32 %v378, %v393
      %v418 = vmul.f32 %v379, %v393
      %v419 = vmul.f32 %v380, %v393
      %v420 = vmul.f32 %v381, %v393
      %v421 = vmul.f32 %v382, %v393
      %v422 = vmul.f32 %v383, %v393
      %v423 = vmul.f32 %v384, %v393
      %v424 = vmul.f32 %v385, %v393
      %v425 = vmul.f32 %v386, %v393
      %v426 = vmul.f32 %v387, %v393
      %v427 = vld [vmem:[%s5] sm:$0x1]
      %v429 = vlaneseq
      %v430 = vshrl.u32 %v429, 7
      %v431 = vsub.s32 0, %v430
      %v432 = vrot.slane %v427, %v431
      %v434 = vadd.f32 %v395, %v432
      %v435 = vadd.f32 %v396, %v432
      %v436 = vadd.f32 %v397, %v432
      %v437 = vadd.f32 %v398, %v432
      %v438 = vadd.f32 %v399, %v432
      %v439 = vadd.f32 %v400, %v432
      %v440 = vadd.f32 %v401, %v432
      %v441 = vadd.f32 %v402, %v432
      %v442 = vadd.f32 %v403, %v432
      %v443 = vadd.f32 %v404, %v432
      %v444 = vadd.f32 %v405, %v432
      %v445 = vadd.f32 %v406, %v432
      %v446 = vadd.f32 %v407, %v432
      %v447 = vadd.f32 %v408, %v432
      %v448 = vadd.f32 %v409, %v432
      %v449 = vadd.f32 %v410, %v432
      %v450 = vadd.f32 %v411, %v432
      %v451 = vadd.f32 %v412, %v432
      %v452 = vadd.f32 %v413, %v432
      %v453 = vadd.f32 %v414, %v432
      %v454 = vadd.f32 %v415, %v432
      %v455 = vadd.f32 %v416, %v432
      %v456 = vadd.f32 %v417, %v432
      %v457 = vadd.f32 %v418, %v432
      %v458 = vadd.f32 %v419, %v432
      %v459 = vadd.f32 %v420, %v432
      %v460 = vadd.f32 %v421, %v432
      %v461 = vadd.f32 %v422, %v432
      %v462 = vadd.f32 %v423, %v432
      %v463 = vadd.f32 %v424, %v432
      %v464 = vadd.f32 %v425, %v432
      %v465 = vadd.f32 %v426, %v432
      %v466 = vmax.f32 %v434, 0.0
      %v467 = vmax.f32 %v435, 0.0
      %v468 = vmax.f32 %v436, 0.0
      %v469 = vmax.f32 %v437, 0.0
      %v470 = vmax.f32 %v438, 0.0
      %v471 = vmax.f32 %v439, 0.0
      %v472 = vmax.f32 %v440, 0.0
      %v473 = vmax.f32 %v441, 0.0
      %v474 = vmax.f32 %v442, 0.0
      %v475 = vmax.f32 %v443, 0.0
      %v476 = vmax.f32 %v444, 0.0
      %v477 = vmax.f32 %v445, 0.0
      %v478 = vmax.f32 %v446, 0.0
      %v479 = vmax.f32 %v447, 0.0
      %v480 = vmax.f32 %v448, 0.0
      %v481 = vmax.f32 %v449, 0.0
      %v482 = vmax.f32 %v450, 0.0
      %v483 = vmax.f32 %v451, 0.0
      %v484 = vmax.f32 %v452, 0.0
      %v485 = vmax.f32 %v453, 0.0
      %v486 = vmax.f32 %v454, 0.0
      %v487 = vmax.f32 %v455, 0.0
      %v488 = vmax.f32 %v456, 0.0
      %v489 = vmax.f32 %v457, 0.0
      %v490 = vmax.f32 %v458, 0.0
      %v491 = vmax.f32 %v459, 0.0
      %v492 = vmax.f32 %v460, 0.0
      %v493 = vmax.f32 %v461, 0.0
      %v494 = vmax.f32 %v462, 0.0
      %v495 = vmax.f32 %v463, 0.0
      %v496 = vmax.f32 %v464, 0.0
      %v497 = vmax.f32 %v465, 0.0
      %v498 = vld [vmem:[%s1] sm:$0xff]
      %v499 = vld [vmem:[%s1 + $0x8] sm:$0xff]
      %v500 = vld [vmem:[%s1 + $0x10] sm:$0xff]
      %v501 = vld [vmem:[%s1 + $0x18] sm:$0xff]
      %v502 = vld [vmem:[%s1 + $0x20] sm:$0xff]
      %v503 = vld [vmem:[%s1 + $0x28] sm:$0xff]
      %v504 = vld [vmem:[%s1 + $0x30] sm:$0xff]
      %v505 = vld [vmem:[%s1 + $0x38] sm:$0xff]
      %v506 = vld [vmem:[%s1 + $0x40] sm:$0xff]
      %v507 = vld [vmem:[%s1 + $0x48] sm:$0xff]
      %v508 = vld [vmem:[%s1 + $0x50] sm:$0xff]
      %v509 = vld [vmem:[%s1 + $0x58] sm:$0xff]
      %v510 = vld [vmem:[%s1 + $0x60] sm:$0xff]
      %v511 = vld [vmem:[%s1 + $0x68] sm:$0xff]
      %v512 = vld [vmem:[%s1 + $0x70] sm:$0xff]
      %v513 = vld [vmem:[%s1 + $0x78] sm:$0xff]
      %v514 = vld [vmem:[%s1 + $0x80] sm:$0xff]
      %v515 = vld [vmem:[%s1 + $0x88] sm:$0xff]
      %v516 = vld [vmem:[%s1 + $0x90] sm:$0xff]
      %v517 = vld [vmem:[%s1 + $0x98] sm:$0xff]
      %v518 = vld [vmem:[%s1 + $0xa0] sm:$0xff]
      %v519 = vld [vmem:[%s1 + $0xa8] sm:$0xff]
      %v520 = vld [vmem:[%s1 + $0xb0] sm:$0xff]
      %v521 = vld [vmem:[%s1 + $0xb8] sm:$0xff]
      %v522 = vld [vmem:[%s1 + $0xc0] sm:$0xff]
      %v523 = vld [vmem:[%s1 + $0xc8] sm:$0xff]
      %v524 = vld [vmem:[%s1 + $0xd0] sm:$0xff]
      %v525 = vld [vmem:[%s1 + $0xd8] sm:$0xff]
      %v526 = vld [vmem:[%s1 + $0xe0] sm:$0xff]
      %v527 = vld [vmem:[%s1 + $0xe8] sm:$0xff]
      %v528 = vld [vmem:[%s1 + $0xf0] sm:$0xff]
      %v529 = vld [vmem:[%s1 + $0xf8] sm:$0xff]
      %v530 = vrot.slane %v466, 7
      %v531 = vrot.slane %v467, 7
      %v532 = vrot.slane %v468, 7
      %v533 = vrot.slane %v469, 7
      %v534 = vrot.slane %v470, 7
      %v535 = vrot.slane %v471, 7
      %v536 = vrot.slane %v472, 7
      %v537 = vrot.slane %v473, 7
      %v538 = vrot.slane %v474, 7
      %v539 = vrot.slane %v475, 7
      %v540 = vrot.slane %v476, 7
      %v541 = vrot.slane %v477, 7
      %v542 = vrot.slane %v478, 7
      %v543 = vrot.slane %v479, 7
      %v544 = vrot.slane %v480, 7
      %v545 = vrot.slane %v481, 7
      %v546 = vrot.slane %v482, 7
      %v547 = vrot.slane %v483, 7
      %v548 = vrot.slane %v484, 7
      %v549 = vrot.slane %v485, 7
      %v550 = vrot.slane %v486, 7
      %v551 = vrot.slane %v487, 7
      %v552 = vrot.slane %v488, 7
      %v553 = vrot.slane %v489, 7
      %v554 = vrot.slane %v490, 7
      %v555 = vrot.slane %v491, 7
      %v556 = vrot.slane %v492, 7
      %v557 = vrot.slane %v493, 7
      %v558 = vrot.slane %v494, 7
      %v559 = vrot.slane %v495, 7
      %v560 = vrot.slane %v496, 7
      %v561 = vrot.slane %v497, 7
      %v562 = vlaneseq
      %v563 = vshrl.u32 %v562, 7
      %vm564 = vcmp.lt.s32.totalorder %v563, 1
      %v565 = vsel %vm564, %v560, %v561
      %v566 = vsel %vm564, %v559, %v560
      %v567 = vsel %vm564, %v558, %v559
      %v568 = vsel %vm564, %v557, %v558
      %v569 = vsel %vm564, %v556, %v557
      %v570 = vsel %vm564, %v555, %v556
      %v571 = vsel %vm564, %v554, %v555
      %v572 = vsel %vm564, %v553, %v554
      %v573 = vsel %vm564, %v552, %v553
      %v574 = vsel %vm564, %v551, %v552
      %v575 = vsel %vm564, %v550, %v551
      %v576 = vsel %vm564, %v549, %v550
      %v577 = vsel %vm564, %v548, %v549
      %v578 = vsel %vm564, %v547, %v548
      %v579 = vsel %vm564, %v546, %v547
      %v580 = vsel %vm564, %v545, %v546
      %v581 = vsel %vm564, %v544, %v545
      %v582 = vsel %vm564, %v543, %v544
      %v583 = vsel %vm564, %v542, %v543
      %v584 = vsel %vm564, %v541, %v542
      %v585 = vsel %vm564, %v540, %v541
      %v586 = vsel %vm564, %v539, %v540
      %v587 = vsel %vm564, %v538, %v539
      %v588 = vsel %vm564, %v537, %v538
      %v589 = vsel %vm564, %v536, %v537
      %v590 = vsel %vm564, %v535, %v536
      %v591 = vsel %vm564, %v534, %v535
      %v592 = vsel %vm564, %v533, %v534
      %v593 = vsel %vm564, %v532, %v533
      %v594 = vsel %vm564, %v531, %v532
      %v595 = vsel %vm564, %v530, %v531
      %v596 = vsel %vm564, %v561, %v530
      %598 = vset.pattern.permute.xlu0 0
      %599 = vperm.xlu0 %598, %v498
      %v600 = vpop.permute.xlu0 %599
      %603 = vset.pattern.permute.xlu0 0
      %604 = vperm.xlu0 %603, %v499
      %v605 = vpop.permute.xlu0 %604
      %608 = vset.pattern.permute.xlu0 0
      %609 = vperm.xlu0 %608, %v500
      %v610 = vpop.permute.xlu0 %609
      %613 = vset.pattern.permute.xlu0 0
      %614 = vperm.xlu0 %613, %v501
      %v615 = vpop.permute.xlu0 %614
      %618 = vset.pattern.permute.xlu0 0
      %619 = vperm.xlu0 %618, %v502
      %v620 = vpop.permute.xlu0 %619
      %623 = vset.pattern.permute.xlu0 0
      %624 = vperm.xlu0 %623, %v503
      %v625 = vpop.permute.xlu0 %624
      %628 = vset.pattern.permute.xlu0 0
      %629 = vperm.xlu0 %628, %v504
      %v630 = vpop.permute.xlu0 %629
      %633 = vset.pattern.permute.xlu0 0
      %634 = vperm.xlu0 %633, %v505
      %v635 = vpop.permute.xlu0 %634
      %638 = vset.pattern.permute.xlu0 0
      %639 = vperm.xlu0 %638, %v506
      %v640 = vpop.permute.xlu0 %639
      %643 = vset.pattern.permute.xlu0 0
      %644 = vperm.xlu0 %643, %v507
      %v645 = vpop.permute.xlu0 %644
      %648 = vset.pattern.permute.xlu0 0
      %649 = vperm.xlu0 %648, %v508
      %v650 = vpop.permute.xlu0 %649
      %653 = vset.pattern.permute.xlu0 0
      %654 = vperm.xlu0 %653, %v509
      %v655 = vpop.permute.xlu0 %654
      %658 = vset.pattern.permute.xlu0 0
      %659 = vperm.xlu0 %658, %v510
      %v660 = vpop.permute.xlu0 %659
      %663 = vset.pattern.permute.xlu0 0
      %664 = vperm.xlu0 %663, %v511
      %v665 = vpop.permute.xlu0 %664
      %668 = vset.pattern.permute.xlu0 0
      %669 = vperm.xlu0 %668, %v512
      %v670 = vpop.permute.xlu0 %669
      %673 = vset.pattern.permute.xlu0 0
      %674 = vperm.xlu0 %673, %v513
      %v675 = vpop.permute.xlu0 %674
      %678 = vset.pattern.permute.xlu0 0
      %679 = vperm.xlu0 %678, %v514
      %v680 = vpop.permute.xlu0 %679
      %683 = vset.pattern.permute.xlu0 0
      %684 = vperm.xlu0 %683, %v515
      %v685 = vpop.permute.xlu0 %684
      %688 = vset.pattern.permute.xlu0 0
      %689 = vperm.xlu0 %688, %v516
      %v690 = vpop.permute.xlu0 %689
      %693 = vset.pattern.permute.xlu0 0
      %694 = vperm.xlu0 %693, %v517
      %v695 = vpop.permute.xlu0 %694
      %698 = vset.pattern.permute.xlu0 0
      %699 = vperm.xlu0 %698, %v518
      %v700 = vpop.permute.xlu0 %699
      %703 = vset.pattern.permute.xlu0 0
      %704 = vperm.xlu0 %703, %v519
      %v705 = vpop.permute.xlu0 %704
      %708 = vset.pattern.permute.xlu0 0
      %709 = vperm.xlu0 %708, %v520
      %v710 = vpop.permute.xlu0 %709
      %713 = vset.pattern.permute.xlu0 0
      %714 = vperm.xlu0 %713, %v521
      %v715 = vpop.permute.xlu0 %714
      %718 = vset.pattern.permute.xlu0 0
      %719 = vperm.xlu0 %718, %v522
      %v720 = vpop.permute.xlu0 %719
      %723 = vset.pattern.permute.xlu0 0
      %724 = vperm.xlu0 %723, %v523
      %v725 = vpop.permute.xlu0 %724
      %728 = vset.pattern.permute.xlu0 0
      %729 = vperm.xlu0 %728, %v524
      %v730 = vpop.permute.xlu0 %729
      %733 = vset.pattern.permute.xlu0 0
      %734 = vperm.xlu0 %733, %v525
      %v735 = vpop.permute.xlu0 %734
      %738 = vset.pattern.permute.xlu0 0
      %739 = vperm.xlu0 %738, %v526
      %v740 = vpop.permute.xlu0 %739
      %743 = vset.pattern.permute.xlu0 0
      %744 = vperm.xlu0 %743, %v527
      %v745 = vpop.permute.xlu0 %744
      %748 = vset.pattern.permute.xlu0 0
      %749 = vperm.xlu0 %748, %v528
      %v750 = vpop.permute.xlu0 %749
      %753 = vset.pattern.permute.xlu0 0
      %754 = vperm.xlu0 %753, %v529
      %v755 = vpop.permute.xlu0 %754
      %v757 = vmul.f32 %v566, %v600
      %v758 = vmul.f32 %v565, %v605
      %v759 = vmul.f32 %v596, %v610
      %v760 = vmul.f32 %v595, %v615
      %v761 = vmul.f32 %v594, %v620
      %v762 = vmul.f32 %v593, %v625
      %v763 = vmul.f32 %v592, %v630
      %v764 = vmul.f32 %v591, %v635
      %v765 = vmul.f32 %v590, %v640
      %v766 = vmul.f32 %v589, %v645
      %v767 = vmul.f32 %v588, %v650
      %v768 = vmul.f32 %v587, %v655
      %v769 = vmul.f32 %v586, %v660
      %v770 = vmul.f32 %v585, %v665
      %v771 = vmul.f32 %v584, %v670
      %v772 = vmul.f32 %v583, %v675
      %v773 = vmul.f32 %v582, %v680
      %v774 = vmul.f32 %v581, %v685
      %v775 = vmul.f32 %v580, %v690
      %v776 = vmul.f32 %v579, %v695
      %v777 = vmul.f32 %v578, %v700
      %v778 = vmul.f32 %v577, %v705
      %v779 = vmul.f32 %v576, %v710
      %v780 = vmul.f32 %v575, %v715
      %v781 = vmul.f32 %v574, %v720
      %v782 = vmul.f32 %v573, %v725
      %v783 = vmul.f32 %v572, %v730
      %v784 = vmul.f32 %v571, %v735
      %v785 = vmul.f32 %v570, %v740
      %v786 = vmul.f32 %v569, %v745
      %v787 = vmul.f32 %v568, %v750
      %v788 = vmul.f32 %v567, %v755
      %v789 = vpack.c.bf16 %v758, %v757
      %v790 = vpack.c.bf16 %v760, %v759
      %v791 = vpack.c.bf16 %v762, %v761
      %v792 = vpack.c.bf16 %v764, %v763
      %v793 = vpack.c.bf16 %v766, %v765
      %v794 = vpack.c.bf16 %v768, %v767
      %v795 = vpack.c.bf16 %v770, %v769
      %v796 = vpack.c.bf16 %v772, %v771
      %v797 = vpack.c.bf16 %v774, %v773
      %v798 = vpack.c.bf16 %v776, %v775
      %v799 = vpack.c.bf16 %v778, %v777
      %v800 = vpack.c.bf16 %v780, %v779
      %v801 = vpack.c.bf16 %v782, %v781
      %v802 = vpack.c.bf16 %v784, %v783
      %v803 = vpack.c.bf16 %v786, %v785
      %v804 = vpack.c.bf16 %v788, %v787
      %805 = vst [vmem:[#allocation2] sm:$0xff] %v789
      %806 = vst [vmem:[#allocation2 + $0x48] sm:$0xff] %v790
      %807 = vst [vmem:[#allocation2 + $0x90] sm:$0xff] %v791
      %808 = vst [vmem:[#allocation2 + $0xd8] sm:$0xff] %v792
      %809 = vst [vmem:[#allocation2 + $0x120] sm:$0xff] %v793
      %810 = vst [vmem:[#allocation2 + $0x168] sm:$0xff] %v794
      %811 = vst [vmem:[#allocation2 + $0x1b0] sm:$0xff] %v795
      %812 = vst [vmem:[#allocation2 + $0x1f8] sm:$0xff] %v796
      %813 = vst [vmem:[#allocation2 + $0x240] sm:$0xff] %v797
      %814 = vst [vmem:[#allocation2 + $0x288] sm:$0xff] %v798
      %815 = vst [vmem:[#allocation2 + $0x2d0] sm:$0xff] %v799
      %816 = vst [vmem:[#allocation2 + $0x318] sm:$0xff] %v800
      %817 = vst [vmem:[#allocation2 + $0x360] sm:$0xff] %v801
      %818 = vst [vmem:[#allocation2 + $0x3a8] sm:$0xff] %v802
      %819 = vst [vmem:[#allocation2 + $0x3f0] sm:$0xff] %v803
      %820 = vst [vmem:[#allocation2 + $0x438] sm:$0xff] %v804
      %821 = vset.pattern.permute.xlu0 1
      %822 = vperm.xlu0 %821, %v498
      %v823 = vpop.permute.xlu0 %822
      %825 = vset.pattern.permute.xlu0 1
      %826 = vperm.xlu0 %825, %v499
      %v827 = vpop.permute.xlu0 %826
      %829 = vset.pattern.permute.xlu0 1
      %830 = vperm.xlu0 %829, %v500
      %v831 = vpop.permute.xlu0 %830
      %833 = vset.pattern.permute.xlu0 1
      %834 = vperm.xlu0 %833, %v501
      %v835 = vpop.permute.xlu0 %834
      %837 = vset.pattern.permute.xlu0 1
      %838 = vperm.xlu0 %837, %v502
      %v839 = vpop.permute.xlu0 %838
      %841 = vset.pattern.permute.xlu0 1
      %842 = vperm.xlu0 %841, %v503
      %v843 = vpop.permute.xlu0 %842
      %845 = vset.pattern.permute.xlu0 1
      %846 = vperm.xlu0 %845, %v504
      %v847 = vpop.permute.xlu0 %846
      %849 = vset.pattern.permute.xlu0 1
      %850 = vperm.xlu0 %849, %v505
      %v851 = vpop.permute.xlu0 %850
      %853 = vset.pattern.permute.xlu0 1
      %854 = vperm.xlu0 %853, %v506
      %v855 = vpop.permute.xlu0 %854
      %857 = vset.pattern.permute.xlu0 1
      %858 = vperm.xlu0 %857, %v507
      %v859 = vpop.permute.xlu0 %858
      %861 = vset.pattern.permute.xlu0 1
      %862 = vperm.xlu0 %861, %v508
      %v863 = vpop.permute.xlu0 %862
      %865 = vset.pattern.permute.xlu0 1
      %866 = vperm.xlu0 %865, %v509
      %v867 = vpop.permute.xlu0 %866
      %869 = vset.pattern.permute.xlu0 1
      %870 = vperm.xlu0 %869, %v510
      %v871 = vpop.permute.xlu0 %870
      %873 = vset.pattern.permute.xlu0 1
      %874 = vperm.xlu0 %873, %v511
      %v875 = vpop.permute.xlu0 %874
      %877 = vset.pattern.permute.xlu0 1
      %878 = vperm.xlu0 %877, %v512
      %v879 = vpop.permute.xlu0 %878
      %881 = vset.pattern.permute.xlu0 1
      %882 = vperm.xlu0 %881, %v513
      %v883 = vpop.permute.xlu0 %882
      %885 = vset.pattern.permute.xlu0 1
      %886 = vperm.xlu0 %885, %v514
      %v887 = vpop.permute.xlu0 %886
      %889 = vset.pattern.permute.xlu0 1
      %890 = vperm.xlu0 %889, %v515
      %v891 = vpop.permute.xlu0 %890
      %893 = vset.pattern.permute.xlu0 1
      %894 = vperm.xlu0 %893, %v516
      %v895 = vpop.permute.xlu0 %894
      %897 = vset.pattern.permute.xlu0 1
      %898 = vperm.xlu0 %897, %v517
      %v899 = vpop.permute.xlu0 %898
      %901 = vset.pattern.permute.xlu0 1
      %902 = vperm.xlu0 %901, %v518
      %v903 = vpop.permute.xlu0 %902
      %905 = vset.pattern.permute.xlu0 1
      %906 = vperm.xlu0 %905, %v519
      %v907 = vpop.permute.xlu0 %906
      %909 = vset.pattern.permute.xlu0 1
      %910 = vperm.xlu0 %909, %v520
      %v911 = vpop.permute.xlu0 %910
      %913 = vset.pattern.permute.xlu0 1
      %914 = vperm.xlu0 %913, %v521
      %v915 = vpop.permute.xlu0 %914
      %917 = vset.pattern.permute.xlu0 1
      %918 = vperm.xlu0 %917, %v522
      %v919 = vpop.permute.xlu0 %918
      %921 = vset.pattern.permute.xlu0 1
      %922 = vperm.xlu0 %921, %v523
      %v923 = vpop.permute.xlu0 %922
      %925 = vset.pattern.permute.xlu0 1
      %926 = vperm.xlu0 %925, %v524
      %v927 = vpop.permute.xlu0 %926
      %929 = vset.pattern.permute.xlu0 1
      %930 = vperm.xlu0 %929, %v525
      %v931 = vpop.permute.xlu0 %930
      %933 = vset.pattern.permute.xlu0 1
      %934 = vperm.xlu0 %933, %v526
      %v935 = vpop.permute.xlu0 %934
      %937 = vset.pattern.permute.xlu0 1
      %938 = vperm.xlu0 %937, %v527
      %v939 = vpop.permute.xlu0 %938
      %941 = vset.pattern.permute.xlu0 1
      %942 = vperm.xlu0 %941, %v528
      %v943 = vpop.permute.xlu0 %942
      %945 = vset.pattern.permute.xlu0 1
      %946 = vperm.xlu0 %945, %v529
      %v947 = vpop.permute.xlu0 %946
      %v949 = vmul.f32 %v496, %v823
      %v950 = vmul.f32 %v497, %v827
      %v951 = vmul.f32 %v466, %v831
      %v952 = vmul.f32 %v467, %v835
      %v953 = vmul.f32 %v468, %v839
      %v954 = vmul.f32 %v469, %v843
      %v955 = vmul.f32 %v470, %v847
      %v956 = vmul.f32 %v471, %v851
      %v957 = vmul.f32 %v472, %v855
      %v958 = vmul.f32 %v473, %v859
      %v959 = vmul.f32 %v474, %v863
      %v960 = vmul.f32 %v475, %v867
      %v961 = vmul.f32 %v476, %v871
      %v962 = vmul.f32 %v477, %v875
      %v963 = vmul.f32 %v478, %v879
      %v964 = vmul.f32 %v479, %v883
      %v965 = vmul.f32 %v480, %v887
      %v966 = vmul.f32 %v481, %v891
      %v967 = vmul.f32 %v482, %v895
      %v968 = vmul.f32 %v483, %v899
      %v969 = vmul.f32 %v484, %v903
      %v970 = vmul.f32 %v485, %v907
      %v971 = vmul.f32 %v486, %v911
      %v972 = vmul.f32 %v487, %v915
      %v973 = vmul.f32 %v488, %v919
      %v974 = vmul.f32 %v489, %v923
      %v975 = vmul.f32 %v490, %v927
      %v976 = vmul.f32 %v491, %v931
      %v977 = vmul.f32 %v492, %v935
      %v978 = vmul.f32 %v493, %v939
      %v979 = vmul.f32 %v494, %v943
      %v980 = vmul.f32 %v495, %v947
      %v981 = vpack.c.bf16 %v950, %v949
      %v982 = vpack.c.bf16 %v952, %v951
      %v983 = vpack.c.bf16 %v954, %v953
      %v984 = vpack.c.bf16 %v956, %v955
      %v985 = vpack.c.bf16 %v958, %v957
      %v986 = vpack.c.bf16 %v960, %v959
      %v987 = vpack.c.bf16 %v962, %v961
      %v988 = vpack.c.bf16 %v964, %v963
      %v989 = vpack.c.bf16 %v966, %v965
      %v990 = vpack.c.bf16 %v968, %v967
      %v991 = vpack.c.bf16 %v970, %v969
      %v992 = vpack.c.bf16 %v972, %v971
      %v993 = vpack.c.bf16 %v974, %v973
      %v994 = vpack.c.bf16 %v976, %v975
      %v995 = vpack.c.bf16 %v978, %v977
      %v996 = vpack.c.bf16 %v980, %v979
      %997 = vst [vmem:[#allocation2 + $0x8] sm:$0xff] %v981
      %998 = vst [vmem:[#allocation2 + $0x50] sm:$0xff] %v982
      %999 = vst [vmem:[#allocation2 + $0x98] sm:$0xff] %v983
      %1000 = vst [vmem:[#allocation2 + $0xe0] sm:$0xff] %v984
      %1001 = vst [vmem:[#allocation2 + $0x128] sm:$0xff] %v985
      %1002 = vst [vmem:[#allocation2 + $0x170] sm:$0xff] %v986
      %1003 = vst [vmem:[#allocation2 + $0x1b8] sm:$0xff] %v987
      %1004 = vst [vmem:[#allocation2 + $0x200] sm:$0xff] %v988
      %1005 = vst [vmem:[#allocation2 + $0x248] sm:$0xff] %v989
      %1006 = vst [vmem:[#allocation2 + $0x290] sm:$0xff] %v990
      %1007 = vst [vmem:[#allocation2 + $0x2d8] sm:$0xff] %v991
      %1008 = vst [vmem:[#allocation2 + $0x320] sm:$0xff] %v992
      %1009 = vst [vmem:[#allocation2 + $0x368] sm:$0xff] %v993
      %1010 = vst [vmem:[#allocation2 + $0x3b0] sm:$0xff] %v994
      %1011 = vst [vmem:[#allocation2 + $0x3f8] sm:$0xff] %v995
      %1012 = vst [vmem:[#allocation2 + $0x440] sm:$0xff] %v996
      %v1013 = vrot.slane %v466, 1
      %v1014 = vrot.slane %v467, 1
      %v1015 = vrot.slane %v468, 1
      %v1016 = vrot.slane %v469, 1
      %v1017 = vrot.slane %v470, 1
      %v1018 = vrot.slane %v471, 1
      %v1019 = vrot.slane %v472, 1
      %v1020 = vrot.slane %v473, 1
      %v1021 = vrot.slane %v474, 1
      %v1022 = vrot.slane %v475, 1
      %v1023 = vrot.slane %v476, 1
      %v1024 = vrot.slane %v477, 1
      %v1025 = vrot.slane %v478, 1
      %v1026 = vrot.slane %v479, 1
      %v1027 = vrot.slane %v480, 1
      %v1028 = vrot.slane %v481, 1
      %v1029 = vrot.slane %v482, 1
      %v1030 = vrot.slane %v483, 1
      %v1031 = vrot.slane %v484, 1
      %v1032 = vrot.slane %v485, 1
      %v1033 = vrot.slane %v486, 1
      %v1034 = vrot.slane %v487, 1
      %v1035 = vrot.slane %v488, 1
      %v1036 = vrot.slane %v489, 1
      %v1037 = vrot.slane %v490, 1
      %v1038 = vrot.slane %v491, 1
      %v1039 = vrot.slane %v492, 1
      %v1040 = vrot.slane %v493, 1
      %v1041 = vrot.slane %v494, 1
      %v1042 = vrot.slane %v495, 1
      %v1043 = vrot.slane %v496, 1
      %v1044 = vrot.slane %v497, 1
      %vm1045 = vcmp.lt.s32.totalorder %v563, 7
      %v1046 = vsel %vm1045, %v1043, %v1044
      %v1047 = vsel %vm1045, %v1042, %v1043
      %v1048 = vsel %vm1045, %v1041, %v1042
      %v1049 = vsel %vm1045, %v1040, %v1041
      %v1050 = vsel %vm1045, %v1039, %v1040
      %v1051 = vsel %vm1045, %v1038, %v1039
      %v1052 = vsel %vm1045, %v1037, %v1038
      %v1053 = vsel %vm1045, %v1036, %v1037
      %v1054 = vsel %vm1045, %v1035, %v1036
      %v1055 = vsel %vm1045, %v1034, %v1035
      %v1056 = vsel %vm1045, %v1033, %v1034
      %v1057 = vsel %vm1045, %v1032, %v1033
      %v1058 = vsel %vm1045, %v1031, %v1032
      %v1059 = vsel %vm1045, %v1030, %v1031
      %v1060 = vsel %vm1045, %v1029, %v1030
      %v1061 = vsel %vm1045, %v1028, %v1029
      %v1062 = vsel %vm1045, %v1027, %v1028
      %v1063 = vsel %vm1045, %v1026, %v1027
      %v1064 = vsel %vm1045, %v1025, %v1026
      %v1065 = vsel %vm1045, %v1024, %v1025
      %v1066 = vsel %vm1045, %v1023, %v1024
      %v1067 = vsel %vm1045, %v1022, %v1023
      %v1068 = vsel %vm1045, %v1021, %v1022
      %v1069 = vsel %vm1045, %v1020, %v1021
      %v1070 = vsel %vm1045, %v1019, %v1020
      %v1071 = vsel %vm1045, %v1018, %v1019
      %v1072 = vsel %vm1045, %v1017, %v1018
      %v1073 = vsel %vm1045, %v1016, %v1017
      %v1074 = vsel %vm1045, %v1015, %v1016
      %v1075 = vsel %vm1045, %v1014, %v1015
      %v1076 = vsel %vm1045, %v1013, %v1014
      %v1077 = vsel %vm1045, %v1044, %v1013
      %1078 = vset.pattern.permute.xlu0 2
      %1079 = vperm.xlu0 %1078, %v498
      %v1080 = vpop.permute.xlu0 %1079
      %1082 = vset.pattern.permute.xlu0 2
      %1083 = vperm.xlu0 %1082, %v499
      %v1084 = vpop.permute.xlu0 %1083
      %1086 = vset.pattern.permute.xlu0 2
      %1087 = vperm.xlu0 %1086, %v500
      %v1088 = vpop.permute.xlu0 %1087
      %1090 = vset.pattern.permute.xlu0 2
      %1091 = vperm.xlu0 %1090, %v501
      %v1092 = vpop.permute.xlu0 %1091
      %1094 = vset.pattern.permute.xlu0 2
      %1095 = vperm.xlu0 %1094, %v502
      %v1096 = vpop.permute.xlu0 %1095
      %1098 = vset.pattern.permute.xlu0 2
      %1099 = vperm.xlu0 %1098, %v503
      %v1100 = vpop.permute.xlu0 %1099
      %1102 = vset.pattern.permute.xlu0 2
      %1103 = vperm.xlu0 %1102, %v504
      %v1104 = vpop.permute.xlu0 %1103
      %1106 = vset.pattern.permute.xlu0 2
      %1107 = vperm.xlu0 %1106, %v505
      %v1108 = vpop.permute.xlu0 %1107
      %1110 = vset.pattern.permute.xlu0 2
      %1111 = vperm.xlu0 %1110, %v506
      %v1112 = vpop.permute.xlu0 %1111
      %1114 = vset.pattern.permute.xlu0 2
      %1115 = vperm.xlu0 %1114, %v507
      %v1116 = vpop.permute.xlu0 %1115
      %1118 = vset.pattern.permute.xlu0 2
      %1119 = vperm.xlu0 %1118, %v508
      %v1120 = vpop.permute.xlu0 %1119
      %1122 = vset.pattern.permute.xlu0 2
      %1123 = vperm.xlu0 %1122, %v509
      %v1124 = vpop.permute.xlu0 %1123
      %1126 = vset.pattern.permute.xlu0 2
      %1127 = vperm.xlu0 %1126, %v510
      %v1128 = vpop.permute.xlu0 %1127
      %1130 = vset.pattern.permute.xlu0 2
      %1131 = vperm.xlu0 %1130, %v511
      %v1132 = vpop.permute.xlu0 %1131
      %1134 = vset.pattern.permute.xlu0 2
      %1135 = vperm.xlu0 %1134, %v512
      %v1136 = vpop.permute.xlu0 %1135
      %1138 = vset.pattern.permute.xlu0 2
      %1139 = vperm.xlu0 %1138, %v513
      %v1140 = vpop.permute.xlu0 %1139
      %1142 = vset.pattern.permute.xlu0 2
      %1143 = vperm.xlu0 %1142, %v514
      %v1144 = vpop.permute.xlu0 %1143
      %1146 = vset.pattern.permute.xlu0 2
      %1147 = vperm.xlu0 %1146, %v515
      %v1148 = vpop.permute.xlu0 %1147
      %1150 = vset.pattern.permute.xlu0 2
      %1151 = vperm.xlu0 %1150, %v516
      %v1152 = vpop.permute.xlu0 %1151
      %1154 = vset.pattern.permute.xlu0 2
      %1155 = vperm.xlu0 %1154, %v517
      %v1156 = vpop.permute.xlu0 %1155
      %1158 = vset.pattern.permute.xlu0 2
      %1159 = vperm.xlu0 %1158, %v518
      %v1160 = vpop.permute.xlu0 %1159
      %1162 = vset.pattern.permute.xlu0 2
      %1163 = vperm.xlu0 %1162, %v519
      %v1164 = vpop.permute.xlu0 %1163
      %1166 = vset.pattern.permute.xlu0 2
      %1167 = vperm.xlu0 %1166, %v520
      %v1168 = vpop.permute.xlu0 %1167
      %1170 = vset.pattern.permute.xlu0 2
      %1171 = vperm.xlu0 %1170, %v521
      %v1172 = vpop.permute.xlu0 %1171
      %1174 = vset.pattern.permute.xlu0 2
      %1175 = vperm.xlu0 %1174, %v522
      %v1176 = vpop.permute.xlu0 %1175
      %1178 = vset.pattern.permute.xlu0 2
      %1179 = vperm.xlu0 %1178, %v523
      %v1180 = vpop.permute.xlu0 %1179
      %1182 = vset.pattern.permute.xlu0 2
      %1183 = vperm.xlu0 %1182, %v524
      %v1184 = vpop.permute.xlu0 %1183
      %1186 = vset.pattern.permute.xlu0 2
      %1187 = vperm.xlu0 %1186, %v525
      %v1188 = vpop.permute.xlu0 %1187
      %1190 = vset.pattern.permute.xlu0 2
      %1191 = vperm.xlu0 %1190, %v526
      %v1192 = vpop.permute.xlu0 %1191
      %1194 = vset.pattern.permute.xlu0 2
      %1195 = vperm.xlu0 %1194, %v527
      %v1196 = vpop.permute.xlu0 %1195
      %1198 = vset.pattern.permute.xlu0 2
      %1199 = vperm.xlu0 %1198, %v528
      %v1200 = vpop.permute.xlu0 %1199
      %1202 = vset.pattern.permute.xlu0 2
      %1203 = vperm.xlu0 %1202, %v529
      %v1204 = vpop.permute.xlu0 %1203
      %v1206 = vmul.f32 %v1046, %v1080
      %v1207 = vmul.f32 %v1077, %v1084
      %v1208 = vmul.f32 %v1076, %v1088
      %v1209 = vmul.f32 %v1075, %v1092
      %v1210 = vmul.f32 %v1074, %v1096
      %v1211 = vmul.f32 %v1073, %v1100
      %v1212 = vmul.f32 %v1072, %v1104
      %v1213 = vmul.f32 %v1071, %v1108
      %v1214 = vmul.f32 %v1070, %v1112
      %v1215 = vmul.f32 %v1069, %v1116
      %v1216 = vmul.f32 %v1068, %v1120
      %v1217 = vmul.f32 %v1067, %v1124
      %v1218 = vmul.f32 %v1066, %v1128
      %v1219 = vmul.f32 %v1065, %v1132
      %v1220 = vmul.f32 %v1064, %v1136
      %v1221 = vmul.f32 %v1063, %v1140
      %v1222 = vmul.f32 %v1062, %v1144
      %v1223 = vmul.f32 %v1061, %v1148
      %v1224 = vmul.f32 %v1060, %v1152
      %v1225 = vmul.f32 %v1059, %v1156
      %v1226 = vmul.f32 %v1058, %v1160
      %v1227 = vmul.f32 %v1057, %v1164
      %v1228 = vmul.f32 %v1056, %v1168
      %v1229 = vmul.f32 %v1055, %v1172
      %v1230 = vmul.f32 %v1054, %v1176
      %v1231 = vmul.f32 %v1053, %v1180
      %v1232 = vmul.f32 %v1052, %v1184
      %v1233 = vmul.f32 %v1051, %v1188
      %v1234 = vmul.f32 %v1050, %v1192
      %v1235 = vmul.f32 %v1049, %v1196
      %v1236 = vmul.f32 %v1048, %v1200
      %v1237 = vmul.f32 %v1047, %v1204
      %v1238 = vpack.c.bf16 %v1207, %v1206
      %v1239 = vpack.c.bf16 %v1209, %v1208
      %v1240 = vpack.c.bf16 %v1211, %v1210
      %v1241 = vpack.c.bf16 %v1213, %v1212
      %v1242 = vpack.c.bf16 %v1215, %v1214
      %v1243 = vpack.c.bf16 %v1217, %v1216
      %v1244 = vpack.c.bf16 %v1219, %v1218
      %v1245 = vpack.c.bf16 %v1221, %v1220
      %v1246 = vpack.c.bf16 %v1223, %v1222
      %v1247 = vpack.c.bf16 %v1225, %v1224
      %v1248 = vpack.c.bf16 %v1227, %v1226
      %v1249 = vpack.c.bf16 %v1229, %v1228
      %v1250 = vpack.c.bf16 %v1231, %v1230
      %v1251 = vpack.c.bf16 %v1233, %v1232
      %v1252 = vpack.c.bf16 %v1235, %v1234
      %v1253 = vpack.c.bf16 %v1237, %v1236
      %1254 = vst [vmem:[#allocation2 + $0x10] sm:$0xff] %v1238
      %1255 = vst [vmem:[#allocation2 + $0x58] sm:$0xff] %v1239
      %1256 = vst [vmem:[#allocation2 + $0xa0] sm:$0xff] %v1240
      %1257 = vst [vmem:[#allocation2 + $0xe8] sm:$0xff] %v1241
      %1258 = vst [vmem:[#allocation2 + $0x130] sm:$0xff] %v1242
      %1259 = vst [vmem:[#allocation2 + $0x178] sm:$0xff] %v1243
      %1260 = vst [vmem:[#allocation2 + $0x1c0] sm:$0xff] %v1244
      %1261 = vst [vmem:[#allocation2 + $0x208] sm:$0xff] %v1245
      %1262 = vst [vmem:[#allocation2 + $0x250] sm:$0xff] %v1246
      %1263 = vst [vmem:[#allocation2 + $0x298] sm:$0xff] %v1247
      %1264 = vst [vmem:[#allocation2 + $0x2e0] sm:$0xff] %v1248
      %1265 = vst [vmem:[#allocation2 + $0x328] sm:$0xff] %v1249
      %1266 = vst [vmem:[#allocation2 + $0x370] sm:$0xff] %v1250
      %1267 = vst [vmem:[#allocation2 + $0x3b8] sm:$0xff] %v1251
      %1268 = vst [vmem:[#allocation2 + $0x400] sm:$0xff] %v1252
      %1269 = vst [vmem:[#allocation2 + $0x448] sm:$0xff] %v1253
      %1270 = vset.pattern.permute.xlu0 3
      %1271 = vperm.xlu0 %1270, %v498
      %v1272 = vpop.permute.xlu0 %1271
      %1274 = vset.pattern.permute.xlu0 3
      %1275 = vperm.xlu0 %1274, %v499
      %v1276 = vpop.permute.xlu0 %1275
      %1278 = vset.pattern.permute.xlu0 3
      %1279 = vperm.xlu0 %1278, %v500
      %v1280 = vpop.permute.xlu0 %1279
      %1282 = vset.pattern.permute.xlu0 3
      %1283 = vperm.xlu0 %1282, %v501
      %v1284 = vpop.permute.xlu0 %1283
      %1286 = vset.pattern.permute.xlu0 3
      %1287 = vperm.xlu0 %1286, %v502
      %v1288 = vpop.permute.xlu0 %1287
      %1290 = vset.pattern.permute.xlu0 3
      %1291 = vperm.xlu0 %1290, %v503
      %v1292 = vpop.permute.xlu0 %1291
      %1294 = vset.pattern.permute.xlu0 3
      %1295 = vperm.xlu0 %1294, %v504
      %v1296 = vpop.permute.xlu0 %1295
      %1298 = vset.pattern.permute.xlu0 3
      %1299 = vperm.xlu0 %1298, %v505
      %v1300 = vpop.permute.xlu0 %1299
      %1302 = vset.pattern.permute.xlu0 3
      %1303 = vperm.xlu0 %1302, %v506
      %v1304 = vpop.permute.xlu0 %1303
      %1306 = vset.pattern.permute.xlu0 3
      %1307 = vperm.xlu0 %1306, %v507
      %v1308 = vpop.permute.xlu0 %1307
      %1310 = vset.pattern.permute.xlu0 3
      %1311 = vperm.xlu0 %1310, %v508
      %v1312 = vpop.permute.xlu0 %1311
      %1314 = vset.pattern.permute.xlu0 3
      %1315 = vperm.xlu0 %1314, %v509
      %v1316 = vpop.permute.xlu0 %1315
      %1318 = vset.pattern.permute.xlu0 3
      %1319 = vperm.xlu0 %1318, %v510
      %v1320 = vpop.permute.xlu0 %1319
      %1322 = vset.pattern.permute.xlu0 3
      %1323 = vperm.xlu0 %1322, %v511
      %v1324 = vpop.permute.xlu0 %1323
      %1326 = vset.pattern.permute.xlu0 3
      %1327 = vperm.xlu0 %1326, %v512
      %v1328 = vpop.permute.xlu0 %1327
      %1330 = vset.pattern.permute.xlu0 3
      %1331 = vperm.xlu0 %1330, %v513
      %v1332 = vpop.permute.xlu0 %1331
      %1334 = vset.pattern.permute.xlu0 3
      %1335 = vperm.xlu0 %1334, %v514
      %v1336 = vpop.permute.xlu0 %1335
      %1338 = vset.pattern.permute.xlu0 3
      %1339 = vperm.xlu0 %1338, %v515
      %v1340 = vpop.permute.xlu0 %1339
      %1342 = vset.pattern.permute.xlu0 3
      %1343 = vperm.xlu0 %1342, %v516
      %v1344 = vpop.permute.xlu0 %1343
      %1346 = vset.pattern.permute.xlu0 3
      %1347 = vperm.xlu0 %1346, %v517
      %v1348 = vpop.permute.xlu0 %1347
      %1350 = vset.pattern.permute.xlu0 3
      %1351 = vperm.xlu0 %1350, %v518
      %v1352 = vpop.permute.xlu0 %1351
      %1354 = vset.pattern.permute.xlu0 3
      %1355 = vperm.xlu0 %1354, %v519
      %v1356 = vpop.permute.xlu0 %1355
      %1358 = vset.pattern.permute.xlu0 3
      %1359 = vperm.xlu0 %1358, %v520
      %v1360 = vpop.permute.xlu0 %1359
      %1362 = vset.pattern.permute.xlu0 3
      %1363 = vperm.xlu0 %1362, %v521
      %v1364 = vpop.permute.xlu0 %1363
      %1366 = vset.pattern.permute.xlu0 3
      %1367 = vperm.xlu0 %1366, %v522
      %v1368 = vpop.permute.xlu0 %1367
      %1370 = vset.pattern.permute.xlu0 3
      %1371 = vperm.xlu0 %1370, %v523
      %v1372 = vpop.permute.xlu0 %1371
      %1374 = vset.pattern.permute.xlu0 3
      %1375 = vperm.xlu0 %1374, %v524
      %v1376 = vpop.permute.xlu0 %1375
      %1378 = vset.pattern.permute.xlu0 3
      %1379 = vperm.xlu0 %1378, %v525
      %v1380 = vpop.permute.xlu0 %1379
      %1382 = vset.pattern.permute.xlu0 3
      %1383 = vperm.xlu0 %1382, %v526
      %v1384 = vpop.permute.xlu0 %1383
      %1386 = vset.pattern.permute.xlu0 3
      %1387 = vperm.xlu0 %1386, %v527
      %v1388 = vpop.permute.xlu0 %1387
      %1390 = vset.pattern.permute.xlu0 3
      %1391 = vperm.xlu0 %1390, %v528
      %v1392 = vpop.permute.xlu0 %1391
      %1394 = vset.pattern.permute.xlu0 3
      %1395 = vperm.xlu0 %1394, %v529
      %v1396 = vpop.permute.xlu0 %1395
      %v1398 = vmul.f32 %v596, %v1272
      %v1399 = vmul.f32 %v595, %v1276
      %v1400 = vmul.f32 %v594, %v1280
      %v1401 = vmul.f32 %v593, %v1284
      %v1402 = vmul.f32 %v592, %v1288
      %v1403 = vmul.f32 %v591, %v1292
      %v1404 = vmul.f32 %v590, %v1296
      %v1405 = vmul.f32 %v589, %v1300
      %v1406 = vmul.f32 %v588, %v1304
      %v1407 = vmul.f32 %v587, %v1308
      %v1408 = vmul.f32 %v586, %v1312
      %v1409 = vmul.f32 %v585, %v1316
      %v1410 = vmul.f32 %v584, %v1320
      %v1411 = vmul.f32 %v583, %v1324
      %v1412 = vmul.f32 %v582, %v1328
      %v1413 = vmul.f32 %v581, %v1332
      %v1414 = vmul.f32 %v580, %v1336
      %v1415 = vmul.f32 %v579, %v1340
      %v1416 = vmul.f32 %v578, %v1344
      %v1417 = vmul.f32 %v577, %v1348
      %v1418 = vmul.f32 %v576, %v1352
      %v1419 = vmul.f32 %v575, %v1356
      %v1420 = vmul.f32 %v574, %v1360
      %v1421 = vmul.f32 %v573, %v1364
      %v1422 = vmul.f32 %v572, %v1368
      %v1423 = vmul.f32 %v571, %v1372
      %v1424 = vmul.f32 %v570, %v1376
      %v1425 = vmul.f32 %v569, %v1380
      %v1426 = vmul.f32 %v568, %v1384
      %v1427 = vmul.f32 %v567, %v1388
      %v1428 = vmul.f32 %v566, %v1392
      %v1429 = vmul.f32 %v565, %v1396
      %v1430 = vpack.c.bf16 %v1399, %v1398
      %v1431 = vpack.c.bf16 %v1401, %v1400
      %v1432 = vpack.c.bf16 %v1403, %v1402
      %v1433 = vpack.c.bf16 %v1405, %v1404
      %v1434 = vpack.c.bf16 %v1407, %v1406
      %v1435 = vpack.c.bf16 %v1409, %v1408
      %v1436 = vpack.c.bf16 %v1411, %v1410
      %v1437 = vpack.c.bf16 %v1413, %v1412
      %v1438 = vpack.c.bf16 %v1415, %v1414
      %v1439 = vpack.c.bf16 %v1417, %v1416
      %v1440 = vpack.c.bf16 %v1419, %v1418
      %v1441 = vpack.c.bf16 %v1421, %v1420
      %v1442 = vpack.c.bf16 %v1423, %v1422
      %v1443 = vpack.c.bf16 %v1425, %v1424
      %v1444 = vpack.c.bf16 %v1427, %v1426
      %v1445 = vpack.c.bf16 %v1429, %v1428
      %1446 = vst [vmem:[#allocation2 + $0x18] sm:$0xff] %v1430
      %1447 = vst [vmem:[#allocation2 + $0x60] sm:$0xff] %v1431
      %1448 = vst [vmem:[#allocation2 + $0xa8] sm:$0xff] %v1432
      %1449 = vst [vmem:[#allocation2 + $0xf0] sm:$0xff] %v1433
      %1450 = vst [vmem:[#allocation2 + $0x138] sm:$0xff] %v1434
      %1451 = vst [vmem:[#allocation2 + $0x180] sm:$0xff] %v1435
      %1452 = vst [vmem:[#allocation2 + $0x1c8] sm:$0xff] %v1436
      %1453 = vst [vmem:[#allocation2 + $0x210] sm:$0xff] %v1437
      %1454 = vst [vmem:[#allocation2 + $0x258] sm:$0xff] %v1438
      %1455 = vst [vmem:[#allocation2 + $0x2a0] sm:$0xff] %v1439
      %1456 = vst [vmem:[#allocation2 + $0x2e8] sm:$0xff] %v1440
      %1457 = vst [vmem:[#allocation2 + $0x330] sm:$0xff] %v1441
      %1458 = vst [vmem:[#allocation2 + $0x378] sm:$0xff] %v1442
      %1459 = vst [vmem:[#allocation2 + $0x3c0] sm:$0xff] %v1443
      %1460 = vst [vmem:[#allocation2 + $0x408] sm:$0xff] %v1444
      %1461 = vst [vmem:[#allocation2 + $0x450] sm:$0xff] %v1445
      %1462 = vset.pattern.permute.xlu0 4
      %1463 = vperm.xlu0 %1462, %v498
      %v1464 = vpop.permute.xlu0 %1463
      %1466 = vset.pattern.permute.xlu0 4
      %1467 = vperm.xlu0 %1466, %v499
      %v1468 = vpop.permute.xlu0 %1467
      %1470 = vset.pattern.permute.xlu0 4
      %1471 = vperm.xlu0 %1470, %v500
      %v1472 = vpop.permute.xlu0 %1471
      %1474 = vset.pattern.permute.xlu0 4
      %1475 = vperm.xlu0 %1474, %v501
      %v1476 = vpop.permute.xlu0 %1475
      %1478 = vset.pattern.permute.xlu0 4
      %1479 = vperm.xlu0 %1478, %v502
      %v1480 = vpop.permute.xlu0 %1479
      %1482 = vset.pattern.permute.xlu0 4
      %1483 = vperm.xlu0 %1482, %v503
      %v1484 = vpop.permute.xlu0 %1483
      %1486 = vset.pattern.permute.xlu0 4
      %1487 = vperm.xlu0 %1486, %v504
      %v1488 = vpop.permute.xlu0 %1487
      %1490 = vset.pattern.permute.xlu0 4
      %1491 = vperm.xlu0 %1490, %v505
      %v1492 = vpop.permute.xlu0 %1491
      %1494 = vset.pattern.permute.xlu0 4
      %1495 = vperm.xlu0 %1494, %v506
      %v1496 = vpop.permute.xlu0 %1495
      %1498 = vset.pattern.permute.xlu0 4
      %1499 = vperm.xlu0 %1498, %v507
      %v1500 = vpop.permute.xlu0 %1499
      %1502 = vset.pattern.permute.xlu0 4
      %1503 = vperm.xlu0 %1502, %v508
      %v1504 = vpop.permute.xlu0 %1503
      %1506 = vset.pattern.permute.xlu0 4
      %1507 = vperm.xlu0 %1506, %v509
      %v1508 = vpop.permute.xlu0 %1507
      %1510 = vset.pattern.permute.xlu0 4
      %1511 = vperm.xlu0 %1510, %v510
      %v1512 = vpop.permute.xlu0 %1511
      %1514 = vset.pattern.permute.xlu0 4
      %1515 = vperm.xlu0 %1514, %v511
      %v1516 = vpop.permute.xlu0 %1515
      %1518 = vset.pattern.permute.xlu0 4
      %1519 = vperm.xlu0 %1518, %v512
      %v1520 = vpop.permute.xlu0 %1519
      %1522 = vset.pattern.permute.xlu0 4
      %1523 = vperm.xlu0 %1522, %v513
      %v1524 = vpop.permute.xlu0 %1523
      %1526 = vset.pattern.permute.xlu0 4
      %1527 = vperm.xlu0 %1526, %v514
      %v1528 = vpop.permute.xlu0 %1527
      %1530 = vset.pattern.permute.xlu0 4
      %1531 = vperm.xlu0 %1530, %v515
      %v1532 = vpop.permute.xlu0 %1531
      %1534 = vset.pattern.permute.xlu0 4
      %1535 = vperm.xlu0 %1534, %v516
      %v1536 = vpop.permute.xlu0 %1535
      %1538 = vset.pattern.permute.xlu0 4
      %1539 = vperm.xlu0 %1538, %v517
      %v1540 = vpop.permute.xlu0 %1539
      %1542 = vset.pattern.permute.xlu0 4
      %1543 = vperm.xlu0 %1542, %v518
      %v1544 = vpop.permute.xlu0 %1543
      %1546 = vset.pattern.permute.xlu0 4
      %1547 = vperm.xlu0 %1546, %v519
      %v1548 = vpop.permute.xlu0 %1547
      %1550 = vset.pattern.permute.xlu0 4
      %1551 = vperm.xlu0 %1550, %v520
      %v1552 = vpop.permute.xlu0 %1551
      %1554 = vset.pattern.permute.xlu0 4
      %1555 = vperm.xlu0 %1554, %v521
      %v1556 = vpop.permute.xlu0 %1555
      %1558 = vset.pattern.permute.xlu0 4
      %1559 = vperm.xlu0 %1558, %v522
      %v1560 = vpop.permute.xlu0 %1559
      %1562 = vset.pattern.permute.xlu0 4
      %1563 = vperm.xlu0 %1562, %v523
      %v1564 = vpop.permute.xlu0 %1563
      %1566 = vset.pattern.permute.xlu0 4
      %1567 = vperm.xlu0 %1566, %v524
      %v1568 = vpop.permute.xlu0 %1567
      %1570 = vset.pattern.permute.xlu0 4
      %1571 = vperm.xlu0 %1570, %v525
      %v1572 = vpop.permute.xlu0 %1571
      %1574 = vset.pattern.permute.xlu0 4
      %1575 = vperm.xlu0 %1574, %v526
      %v1576 = vpop.permute.xlu0 %1575
      %1578 = vset.pattern.permute.xlu0 4
      %1579 = vperm.xlu0 %1578, %v527
      %v1580 = vpop.permute.xlu0 %1579
      %1582 = vset.pattern.permute.xlu0 4
      %1583 = vperm.xlu0 %1582, %v528
      %v1584 = vpop.permute.xlu0 %1583
      %1586 = vset.pattern.permute.xlu0 4
      %1587 = vperm.xlu0 %1586, %v529
      %v1588 = vpop.permute.xlu0 %1587
      %v1590 = vmul.f32 %v466, %v1464
      %v1591 = vmul.f32 %v467, %v1468
      %v1592 = vmul.f32 %v468, %v1472
      %v1593 = vmul.f32 %v469, %v1476
      %v1594 = vmul.f32 %v470, %v1480
      %v1595 = vmul.f32 %v471, %v1484
      %v1596 = vmul.f32 %v472, %v1488
      %v1597 = vmul.f32 %v473, %v1492
      %v1598 = vmul.f32 %v474, %v1496
      %v1599 = vmul.f32 %v475, %v1500
      %v1600 = vmul.f32 %v476, %v1504
      %v1601 = vmul.f32 %v477, %v1508
      %v1602 = vmul.f32 %v478, %v1512
      %v1603 = vmul.f32 %v479, %v1516
      %v1604 = vmul.f32 %v480, %v1520
      %v1605 = vmul.f32 %v481, %v1524
      %v1606 = vmul.f32 %v482, %v1528
      %v1607 = vmul.f32 %v483, %v1532
      %v1608 = vmul.f32 %v484, %v1536
      %v1609 = vmul.f32 %v485, %v1540
      %v1610 = vmul.f32 %v486, %v1544
      %v1611 = vmul.f32 %v487, %v1548
      %v1612 = vmul.f32 %v488, %v1552
      %v1613 = vmul.f32 %v489, %v1556
      %v1614 = vmul.f32 %v490, %v1560
      %v1615 = vmul.f32 %v491, %v1564
      %v1616 = vmul.f32 %v492, %v1568
      %v1617 = vmul.f32 %v493, %v1572
      %v1618 = vmul.f32 %v494, %v1576
      %v1619 = vmul.f32 %v495, %v1580
      %v1620 = vmul.f32 %v496, %v1584
      %v1621 = vmul.f32 %v497, %v1588
      %v1622 = vpack.c.bf16 %v1591, %v1590
      %v1623 = vpack.c.bf16 %v1593, %v1592
      %v1624 = vpack.c.bf16 %v1595, %v1594
      %v1625 = vpack.c.bf16 %v1597, %v1596
      %v1626 = vpack.c.bf16 %v1599, %v1598
      %v1627 = vpack.c.bf16 %v1601, %v1600
      %v1628 = vpack.c.bf16 %v1603, %v1602
      %v1629 = vpack.c.bf16 %v1605, %v1604
      %v1630 = vpack.c.bf16 %v1607, %v1606
      %v1631 = vpack.c.bf16 %v1609, %v1608
      %v1632 = vpack.c.bf16 %v1611, %v1610
      %v1633 = vpack.c.bf16 %v1613, %v1612
      %v1634 = vpack.c.bf16 %v1615, %v1614
      %v1635 = vpack.c.bf16 %v1617, %v1616
      %v1636 = vpack.c.bf16 %v1619, %v1618
      %v1637 = vpack.c.bf16 %v1621, %v1620
      %1638 = vst [vmem:[#allocation2 + $0x20] sm:$0xff] %v1622
      %1639 = vst [vmem:[#allocation2 + $0x68] sm:$0xff] %v1623
      %1640 = vst [vmem:[#allocation2 + $0xb0] sm:$0xff] %v1624
      %1641 = vst [vmem:[#allocation2 + $0xf8] sm:$0xff] %v1625
      %1642 = vst [vmem:[#allocation2 + $0x140] sm:$0xff] %v1626
      %1643 = vst [vmem:[#allocation2 + $0x188] sm:$0xff] %v1627
      %1644 = vst [vmem:[#allocation2 + $0x1d0] sm:$0xff] %v1628
      %1645 = vst [vmem:[#allocation2 + $0x218] sm:$0xff] %v1629
      %1646 = vst [vmem:[#allocation2 + $0x260] sm:$0xff] %v1630
      %1647 = vst [vmem:[#allocation2 + $0x2a8] sm:$0xff] %v1631
      %1648 = vst [vmem:[#allocation2 + $0x2f0] sm:$0xff] %v1632
      %1649 = vst [vmem:[#allocation2 + $0x338] sm:$0xff] %v1633
      %1650 = vst [vmem:[#allocation2 + $0x380] sm:$0xff] %v1634
      %1651 = vst [vmem:[#allocation2 + $0x3c8] sm:$0xff] %v1635
      %1652 = vst [vmem:[#allocation2 + $0x410] sm:$0xff] %v1636
      %1653 = vst [vmem:[#allocation2 + $0x458] sm:$0xff] %v1637
      %1654 = vset.pattern.permute.xlu0 5
      %1655 = vperm.xlu0 %1654, %v498
      %v1656 = vpop.permute.xlu0 %1655
      %1658 = vset.pattern.permute.xlu0 5
      %1659 = vperm.xlu0 %1658, %v499
      %v1660 = vpop.permute.xlu0 %1659
      %1662 = vset.pattern.permute.xlu0 5
      %1663 = vperm.xlu0 %1662, %v500
      %v1664 = vpop.permute.xlu0 %1663
      %1666 = vset.pattern.permute.xlu0 5
      %1667 = vperm.xlu0 %1666, %v501
      %v1668 = vpop.permute.xlu0 %1667
      %1670 = vset.pattern.permute.xlu0 5
      %1671 = vperm.xlu0 %1670, %v502
      %v1672 = vpop.permute.xlu0 %1671
      %1674 = vset.pattern.permute.xlu0 5
      %1675 = vperm.xlu0 %1674, %v503
      %v1676 = vpop.permute.xlu0 %1675
      %1678 = vset.pattern.permute.xlu0 5
      %1679 = vperm.xlu0 %1678, %v504
      %v1680 = vpop.permute.xlu0 %1679
      %1682 = vset.pattern.permute.xlu0 5
      %1683 = vperm.xlu0 %1682, %v505
      %v1684 = vpop.permute.xlu0 %1683
      %1686 = vset.pattern.permute.xlu0 5
      %1687 = vperm.xlu0 %1686, %v506
      %v1688 = vpop.permute.xlu0 %1687
      %1690 = vset.pattern.permute.xlu0 5
      %1691 = vperm.xlu0 %1690, %v507
      %v1692 = vpop.permute.xlu0 %1691
      %1694 = vset.pattern.permute.xlu0 5
      %1695 = vperm.xlu0 %1694, %v508
      %v1696 = vpop.permute.xlu0 %1695
      %1698 = vset.pattern.permute.xlu0 5
      %1699 = vperm.xlu0 %1698, %v509
      %v1700 = vpop.permute.xlu0 %1699
      %1702 = vset.pattern.permute.xlu0 5
      %1703 = vperm.xlu0 %1702, %v510
      %v1704 = vpop.permute.xlu0 %1703
      %1706 = vset.pattern.permute.xlu0 5
      %1707 = vperm.xlu0 %1706, %v511
      %v1708 = vpop.permute.xlu0 %1707
      %1710 = vset.pattern.permute.xlu0 5
      %1711 = vperm.xlu0 %1710, %v512
      %v1712 = vpop.permute.xlu0 %1711
      %1714 = vset.pattern.permute.xlu0 5
      %1715 = vperm.xlu0 %1714, %v513
      %v1716 = vpop.permute.xlu0 %1715
      %1718 = vset.pattern.permute.xlu0 5
      %1719 = vperm.xlu0 %1718, %v514
      %v1720 = vpop.permute.xlu0 %1719
      %1722 = vset.pattern.permute.xlu0 5
      %1723 = vperm.xlu0 %1722, %v515
      %v1724 = vpop.permute.xlu0 %1723
      %1726 = vset.pattern.permute.xlu0 5
      %1727 = vperm.xlu0 %1726, %v516
      %v1728 = vpop.permute.xlu0 %1727
      %1730 = vset.pattern.permute.xlu0 5
      %1731 = vperm.xlu0 %1730, %v517
      %v1732 = vpop.permute.xlu0 %1731
      %1734 = vset.pattern.permute.xlu0 5
      %1735 = vperm.xlu0 %1734, %v518
      %v1736 = vpop.permute.xlu0 %1735
      %1738 = vset.pattern.permute.xlu0 5
      %1739 = vperm.xlu0 %1738, %v519
      %v1740 = vpop.permute.xlu0 %1739
      %1742 = vset.pattern.permute.xlu0 5
      %1743 = vperm.xlu0 %1742, %v520
      %v1744 = vpop.permute.xlu0 %1743
      %1746 = vset.pattern.permute.xlu0 5
      %1747 = vperm.xlu0 %1746, %v521
      %v1748 = vpop.permute.xlu0 %1747
      %1750 = vset.pattern.permute.xlu0 5
      %1751 = vperm.xlu0 %1750, %v522
      %v1752 = vpop.permute.xlu0 %1751
      %1754 = vset.pattern.permute.xlu0 5
      %1755 = vperm.xlu0 %1754, %v523
      %v1756 = vpop.permute.xlu0 %1755
      %1758 = vset.pattern.permute.xlu0 5
      %1759 = vperm.xlu0 %1758, %v524
      %v1760 = vpop.permute.xlu0 %1759
      %1762 = vset.pattern.permute.xlu0 5
      %1763 = vperm.xlu0 %1762, %v525
      %v1764 = vpop.permute.xlu0 %1763
      %1766 = vset.pattern.permute.xlu0 5
      %1767 = vperm.xlu0 %1766, %v526
      %v1768 = vpop.permute.xlu0 %1767
      %1770 = vset.pattern.permute.xlu0 5
      %1771 = vperm.xlu0 %1770, %v527
      %v1772 = vpop.permute.xlu0 %1771
      %1774 = vset.pattern.permute.xlu0 5
      %1775 = vperm.xlu0 %1774, %v528
      %v1776 = vpop.permute.xlu0 %1775
      %1778 = vset.pattern.permute.xlu0 5
      %1779 = vperm.xlu0 %1778, %v529
      %v1780 = vpop.permute.xlu0 %1779
      %v1782 = vmul.f32 %v1076, %v1656
      %v1783 = vmul.f32 %v1075, %v1660
      %v1784 = vmul.f32 %v1074, %v1664
      %v1785 = vmul.f32 %v1073, %v1668
      %v1786 = vmul.f32 %v1072, %v1672
      %v1787 = vmul.f32 %v1071, %v1676
      %v1788 = vmul.f32 %v1070, %v1680
      %v1789 = vmul.f32 %v1069, %v1684
      %v1790 = vmul.f32 %v1068, %v1688
      %v1791 = vmul.f32 %v1067, %v1692
      %v1792 = vmul.f32 %v1066, %v1696
      %v1793 = vmul.f32 %v1065, %v1700
      %v1794 = vmul.f32 %v1064, %v1704
      %v1795 = vmul.f32 %v1063, %v1708
      %v1796 = vmul.f32 %v1062, %v1712
      %v1797 = vmul.f32 %v1061, %v1716
      %v1798 = vmul.f32 %v1060, %v1720
      %v1799 = vmul.f32 %v1059, %v1724
      %v1800 = vmul.f32 %v1058, %v1728
      %v1801 = vmul.f32 %v1057, %v1732
      %v1802 = vmul.f32 %v1056, %v1736
      %v1803 = vmul.f32 %v1055, %v1740
      %v1804 = vmul.f32 %v1054, %v1744
      %v1805 = vmul.f32 %v1053, %v1748
      %v1806 = vmul.f32 %v1052, %v1752
      %v1807 = vmul.f32 %v1051, %v1756
      %v1808 = vmul.f32 %v1050, %v1760
      %v1809 = vmul.f32 %v1049, %v1764
      %v1810 = vmul.f32 %v1048, %v1768
      %v1811 = vmul.f32 %v1047, %v1772
      %v1812 = vmul.f32 %v1046, %v1776
      %v1813 = vmul.f32 %v1077, %v1780
      %v1814 = vpack.c.bf16 %v1783, %v1782
      %v1815 = vpack.c.bf16 %v1785, %v1784
      %v1816 = vpack.c.bf16 %v1787, %v1786
      %v1817 = vpack.c.bf16 %v1789, %v1788
      %v1818 = vpack.c.bf16 %v1791, %v1790
      %v1819 = vpack.c.bf16 %v1793, %v1792
      %v1820 = vpack.c.bf16 %v1795, %v1794
      %v1821 = vpack.c.bf16 %v1797, %v1796
      %v1822 = vpack.c.bf16 %v1799, %v1798
      %v1823 = vpack.c.bf16 %v1801, %v1800
      %v1824 = vpack.c.bf16 %v1803, %v1802
      %v1825 = vpack.c.bf16 %v1805, %v1804
      %v1826 = vpack.c.bf16 %v1807, %v1806
      %v1827 = vpack.c.bf16 %v1809, %v1808
      %v1828 = vpack.c.bf16 %v1811, %v1810
      %v1829 = vpack.c.bf16 %v1813, %v1812
      %1830 = vst [vmem:[#allocation2 + $0x28] sm:$0xff] %v1814
      %1831 = vst [vmem:[#allocation2 + $0x70] sm:$0xff] %v1815
      %1832 = vst [vmem:[#allocation2 + $0xb8] sm:$0xff] %v1816
      %1833 = vst [vmem:[#allocation2 + $0x100] sm:$0xff] %v1817
      %1834 = vst [vmem:[#allocation2 + $0x148] sm:$0xff] %v1818
      %1835 = vst [vmem:[#allocation2 + $0x190] sm:$0xff] %v1819
      %1836 = vst [vmem:[#allocation2 + $0x1d8] sm:$0xff] %v1820
      %1837 = vst [vmem:[#allocation2 + $0x220] sm:$0xff] %v1821
      %1838 = vst [vmem:[#allocation2 + $0x268] sm:$0xff] %v1822
      %1839 = vst [vmem:[#allocation2 + $0x2b0] sm:$0xff] %v1823
      %1840 = vst [vmem:[#allocation2 + $0x2f8] sm:$0xff] %v1824
      %1841 = vst [vmem:[#allocation2 + $0x340] sm:$0xff] %v1825
      %1842 = vst [vmem:[#allocation2 + $0x388] sm:$0xff] %v1826
      %1843 = vst [vmem:[#allocation2 + $0x3d0] sm:$0xff] %v1827
      %1844 = vst [vmem:[#allocation2 + $0x418] sm:$0xff] %v1828
      %1845 = vst [vmem:[#allocation2 + $0x460] sm:$0xff] %v1829
      %1846 = vset.pattern.permute.xlu0 6
      %1847 = vperm.xlu0 %1846, %v498
      %v1848 = vpop.permute.xlu0 %1847
      %1850 = vset.pattern.permute.xlu0 6
      %1851 = vperm.xlu0 %1850, %v499
      %v1852 = vpop.permute.xlu0 %1851
      %1854 = vset.pattern.permute.xlu0 6
      %1855 = vperm.xlu0 %1854, %v500
      %v1856 = vpop.permute.xlu0 %1855
      %1858 = vset.pattern.permute.xlu0 6
      %1859 = vperm.xlu0 %1858, %v501
      %v1860 = vpop.permute.xlu0 %1859
      %1862 = vset.pattern.permute.xlu0 6
      %1863 = vperm.xlu0 %1862, %v502
      %v1864 = vpop.permute.xlu0 %1863
      %1866 = vset.pattern.permute.xlu0 6
      %1867 = vperm.xlu0 %1866, %v503
      %v1868 = vpop.permute.xlu0 %1867
      %1870 = vset.pattern.permute.xlu0 6
      %1871 = vperm.xlu0 %1870, %v504
      %v1872 = vpop.permute.xlu0 %1871
      %1874 = vset.pattern.permute.xlu0 6
      %1875 = vperm.xlu0 %1874, %v505
      %v1876 = vpop.permute.xlu0 %1875
      %1878 = vset.pattern.permute.xlu0 6
      %1879 = vperm.xlu0 %1878, %v506
      %v1880 = vpop.permute.xlu0 %1879
      %1882 = vset.pattern.permute.xlu0 6
      %1883 = vperm.xlu0 %1882, %v507
      %v1884 = vpop.permute.xlu0 %1883
      %1886 = vset.pattern.permute.xlu0 6
      %1887 = vperm.xlu0 %1886, %v508
      %v1888 = vpop.permute.xlu0 %1887
      %1890 = vset.pattern.permute.xlu0 6
      %1891 = vperm.xlu0 %1890, %v509
      %v1892 = vpop.permute.xlu0 %1891
      %1894 = vset.pattern.permute.xlu0 6
      %1895 = vperm.xlu0 %1894, %v510
      %v1896 = vpop.permute.xlu0 %1895
      %1898 = vset.pattern.permute.xlu0 6
      %1899 = vperm.xlu0 %1898, %v511
      %v1900 = vpop.permute.xlu0 %1899
      %1902 = vset.pattern.permute.xlu0 6
      %1903 = vperm.xlu0 %1902, %v512
      %v1904 = vpop.permute.xlu0 %1903
      %1906 = vset.pattern.permute.xlu0 6
      %1907 = vperm.xlu0 %1906, %v513
      %v1908 = vpop.permute.xlu0 %1907
      %1910 = vset.pattern.permute.xlu0 6
      %1911 = vperm.xlu0 %1910, %v514
      %v1912 = vpop.permute.xlu0 %1911
      %1914 = vset.pattern.permute.xlu0 6
      %1915 = vperm.xlu0 %1914, %v515
      %v1916 = vpop.permute.xlu0 %1915
      %1918 = vset.pattern.permute.xlu0 6
      %1919 = vperm.xlu0 %1918, %v516
      %v1920 = vpop.permute.xlu0 %1919
      %1922 = vset.pattern.permute.xlu0 6
      %1923 = vperm.xlu0 %1922, %v517
      %v1924 = vpop.permute.xlu0 %1923
      %1926 = vset.pattern.permute.xlu0 6
      %1927 = vperm.xlu0 %1926, %v518
      %v1928 = vpop.permute.xlu0 %1927
      %1930 = vset.pattern.permute.xlu0 6
      %1931 = vperm.xlu0 %1930, %v519
      %v1932 = vpop.permute.xlu0 %1931
      %1934 = vset.pattern.permute.xlu0 6
      %1935 = vperm.xlu0 %1934, %v520
      %v1936 = vpop.permute.xlu0 %1935
      %1938 = vset.pattern.permute.xlu0 6
      %1939 = vperm.xlu0 %1938, %v521
      %v1940 = vpop.permute.xlu0 %1939
      %1942 = vset.pattern.permute.xlu0 6
      %1943 = vperm.xlu0 %1942, %v522
      %v1944 = vpop.permute.xlu0 %1943
      %1946 = vset.pattern.permute.xlu0 6
      %1947 = vperm.xlu0 %1946, %v523
      %v1948 = vpop.permute.xlu0 %1947
      %1950 = vset.pattern.permute.xlu0 6
      %1951 = vperm.xlu0 %1950, %v524
      %v1952 = vpop.permute.xlu0 %1951
      %1954 = vset.pattern.permute.xlu0 6
      %1955 = vperm.xlu0 %1954, %v525
      %v1956 = vpop.permute.xlu0 %1955
      %1958 = vset.pattern.permute.xlu0 6
      %1959 = vperm.xlu0 %1958, %v526
      %v1960 = vpop.permute.xlu0 %1959
      %1962 = vset.pattern.permute.xlu0 6
      %1963 = vperm.xlu0 %1962, %v527
      %v1964 = vpop.permute.xlu0 %1963
      %1966 = vset.pattern.permute.xlu0 6
      %1967 = vperm.xlu0 %1966, %v528
      %v1968 = vpop.permute.xlu0 %1967
      %1970 = vset.pattern.permute.xlu0 6
      %1971 = vperm.xlu0 %1970, %v529
      %v1972 = vpop.permute.xlu0 %1971
      %v1974 = vmul.f32 %v594, %v1848
      %v1975 = vmul.f32 %v593, %v1852
      %v1976 = vmul.f32 %v592, %v1856
      %v1977 = vmul.f32 %v591, %v1860
      %v1978 = vmul.f32 %v590, %v1864
      %v1979 = vmul.f32 %v589, %v1868
      %v1980 = vmul.f32 %v588, %v1872
      %v1981 = vmul.f32 %v587, %v1876
      %v1982 = vmul.f32 %v586, %v1880
      %v1983 = vmul.f32 %v585, %v1884
      %v1984 = vmul.f32 %v584, %v1888
      %v1985 = vmul.f32 %v583, %v1892
      %v1986 = vmul.f32 %v582, %v1896
      %v1987 = vmul.f32 %v581, %v1900
      %v1988 = vmul.f32 %v580, %v1904
      %v1989 = vmul.f32 %v579, %v1908
      %v1990 = vmul.f32 %v578, %v1912
      %v1991 = vmul.f32 %v577, %v1916
      %v1992 = vmul.f32 %v576, %v1920
      %v1993 = vmul.f32 %v575, %v1924
      %v1994 = vmul.f32 %v574, %v1928
      %v1995 = vmul.f32 %v573, %v1932
      %v1996 = vmul.f32 %v572, %v1936
      %v1997 = vmul.f32 %v571, %v1940
      %v1998 = vmul.f32 %v570, %v1944
      %v1999 = vmul.f32 %v569, %v1948
      %v2000 = vmul.f32 %v568, %v1952
      %v2001 = vmul.f32 %v567, %v1956
      %v2002 = vmul.f32 %v566, %v1960
      %v2003 = vmul.f32 %v565, %v1964
      %v2004 = vmul.f32 %v596, %v1968
      %v2005 = vmul.f32 %v595, %v1972
      %v2006 = vpack.c.bf16 %v1975, %v1974
      %v2007 = vpack.c.bf16 %v1977, %v1976
      %v2008 = vpack.c.bf16 %v1979, %v1978
      %v2009 = vpack.c.bf16 %v1981, %v1980
      %v2010 = vpack.c.bf16 %v1983, %v1982
      %v2011 = vpack.c.bf16 %v1985, %v1984
      %v2012 = vpack.c.bf16 %v1987, %v1986
      %v2013 = vpack.c.bf16 %v1989, %v1988
      %v2014 = vpack.c.bf16 %v1991, %v1990
      %v2015 = vpack.c.bf16 %v1993, %v1992
      %v2016 = vpack.c.bf16 %v1995, %v1994
      %v2017 = vpack.c.bf16 %v1997, %v1996
      %v2018 = vpack.c.bf16 %v1999, %v1998
      %v2019 = vpack.c.bf16 %v2001, %v2000
      %v2020 = vpack.c.bf16 %v2003, %v2002
      %v2021 = vpack.c.bf16 %v2005, %v2004
      %2022 = vst [vmem:[#allocation2 + $0x30] sm:$0xff] %v2006
      %2023 = vst [vmem:[#allocation2 + $0x78] sm:$0xff] %v2007
      %2024 = vst [vmem:[#allocation2 + $0xc0] sm:$0xff] %v2008
      %2025 = vst [vmem:[#allocation2 + $0x108] sm:$0xff] %v2009
      %2026 = vst [vmem:[#allocation2 + $0x150] sm:$0xff] %v2010
      %2027 = vst [vmem:[#allocation2 + $0x198] sm:$0xff] %v2011
      %2028 = vst [vmem:[#allocation2 + $0x1e0] sm:$0xff] %v2012
      %2029 = vst [vmem:[#allocation2 + $0x228] sm:$0xff] %v2013
      %2030 = vst [vmem:[#allocation2 + $0x270] sm:$0xff] %v2014
      %2031 = vst [vmem:[#allocation2 + $0x2b8] sm:$0xff] %v2015
      %2032 = vst [vmem:[#allocation2 + $0x300] sm:$0xff] %v2016
      %2033 = vst [vmem:[#allocation2 + $0x348] sm:$0xff] %v2017
      %2034 = vst [vmem:[#allocation2 + $0x390] sm:$0xff] %v2018
      %2035 = vst [vmem:[#allocation2 + $0x3d8] sm:$0xff] %v2019
      %2036 = vst [vmem:[#allocation2 + $0x420] sm:$0xff] %v2020
      %2037 = vst [vmem:[#allocation2 + $0x468] sm:$0xff] %v2021
      %2038 = vset.pattern.permute.xlu0 7
      %2039 = vperm.xlu0 %2038, %v498
      %v2040 = vpop.permute.xlu0 %2039
      %2042 = vset.pattern.permute.xlu0 7
      %2043 = vperm.xlu0 %2042, %v499
      %v2044 = vpop.permute.xlu0 %2043
      %2046 = vset.pattern.permute.xlu0 7
      %2047 = vperm.xlu0 %2046, %v500
      %v2048 = vpop.permute.xlu0 %2047
      %2050 = vset.pattern.permute.xlu0 7
      %2051 = vperm.xlu0 %2050, %v501
      %v2052 = vpop.permute.xlu0 %2051
      %2054 = vset.pattern.permute.xlu0 7
      %2055 = vperm.xlu0 %2054, %v502
      %v2056 = vpop.permute.xlu0 %2055
      %2058 = vset.pattern.permute.xlu0 7
      %2059 = vperm.xlu0 %2058, %v503
      %v2060 = vpop.permute.xlu0 %2059
      %2062 = vset.pattern.permute.xlu0 7
      %2063 = vperm.xlu0 %2062, %v504
      %v2064 = vpop.permute.xlu0 %2063
      %2066 = vset.pattern.permute.xlu0 7
      %2067 = vperm.xlu0 %2066, %v505
      %v2068 = vpop.permute.xlu0 %2067
      %2070 = vset.pattern.permute.xlu0 7
      %2071 = vperm.xlu0 %2070, %v506
      %v2072 = vpop.permute.xlu0 %2071
      %2074 = vset.pattern.permute.xlu0 7
      %2075 = vperm.xlu0 %2074, %v507
      %v2076 = vpop.permute.xlu0 %2075
      %2078 = vset.pattern.permute.xlu0 7
      %2079 = vperm.xlu0 %2078, %v508
      %v2080 = vpop.permute.xlu0 %2079
      %2082 = vset.pattern.permute.xlu0 7
      %2083 = vperm.xlu0 %2082, %v509
      %v2084 = vpop.permute.xlu0 %2083
      %2086 = vset.pattern.permute.xlu0 7
      %2087 = vperm.xlu0 %2086, %v510
      %v2088 = vpop.permute.xlu0 %2087
      %2090 = vset.pattern.permute.xlu0 7
      %2091 = vperm.xlu0 %2090, %v511
      %v2092 = vpop.permute.xlu0 %2091
      %2094 = vset.pattern.permute.xlu0 7
      %2095 = vperm.xlu0 %2094, %v512
      %v2096 = vpop.permute.xlu0 %2095
      %2098 = vset.pattern.permute.xlu0 7
      %2099 = vperm.xlu0 %2098, %v513
      %v2100 = vpop.permute.xlu0 %2099
      %2102 = vset.pattern.permute.xlu0 7
      %2103 = vperm.xlu0 %2102, %v514
      %v2104 = vpop.permute.xlu0 %2103
      %2106 = vset.pattern.permute.xlu0 7
      %2107 = vperm.xlu0 %2106, %v515
      %v2108 = vpop.permute.xlu0 %2107
      %2110 = vset.pattern.permute.xlu0 7
      %2111 = vperm.xlu0 %2110, %v516
      %v2112 = vpop.permute.xlu0 %2111
      %2114 = vset.pattern.permute.xlu0 7
      %2115 = vperm.xlu0 %2114, %v517
      %v2116 = vpop.permute.xlu0 %2115
      %2118 = vset.pattern.permute.xlu0 7
      %2119 = vperm.xlu0 %2118, %v518
      %v2120 = vpop.permute.xlu0 %2119
      %2122 = vset.pattern.permute.xlu0 7
      %2123 = vperm.xlu0 %2122, %v519
      %v2124 = vpop.permute.xlu0 %2123
      %2126 = vset.pattern.permute.xlu0 7
      %2127 = vperm.xlu0 %2126, %v520
      %v2128 = vpop.permute.xlu0 %2127
      %2130 = vset.pattern.permute.xlu0 7
      %2131 = vperm.xlu0 %2130, %v521
      %v2132 = vpop.permute.xlu0 %2131
      %2134 = vset.pattern.permute.xlu0 7
      %2135 = vperm.xlu0 %2134, %v522
      %v2136 = vpop.permute.xlu0 %2135
      %2138 = vset.pattern.permute.xlu0 7
      %2139 = vperm.xlu0 %2138, %v523
      %v2140 = vpop.permute.xlu0 %2139
      %2142 = vset.pattern.permute.xlu0 7
      %2143 = vperm.xlu0 %2142, %v524
      %v2144 = vpop.permute.xlu0 %2143
      %2146 = vset.pattern.permute.xlu0 7
      %2147 = vperm.xlu0 %2146, %v525
      %v2148 = vpop.permute.xlu0 %2147
      %2150 = vset.pattern.permute.xlu0 7
      %2151 = vperm.xlu0 %2150, %v526
      %v2152 = vpop.permute.xlu0 %2151
      %2154 = vset.pattern.permute.xlu0 7
      %2155 = vperm.xlu0 %2154, %v527
      %v2156 = vpop.permute.xlu0 %2155
      %2158 = vset.pattern.permute.xlu0 7
      %2159 = vperm.xlu0 %2158, %v528
      %v2160 = vpop.permute.xlu0 %2159
      %2162 = vset.pattern.permute.xlu0 7
      %2163 = vperm.xlu0 %2162, %v529
      %v2164 = vpop.permute.xlu0 %2163
      %v2166 = vmul.f32 %v468, %v2040
      %v2167 = vmul.f32 %v469, %v2044
      %v2168 = vmul.f32 %v470, %v2048
      %v2169 = vmul.f32 %v471, %v2052
      %v2170 = vmul.f32 %v472, %v2056
      %v2171 = vmul.f32 %v473, %v2060
      %v2172 = vmul.f32 %v474, %v2064
      %v2173 = vmul.f32 %v475, %v2068
      %v2174 = vmul.f32 %v476, %v2072
      %v2175 = vmul.f32 %v477, %v2076
      %v2176 = vmul.f32 %v478, %v2080
      %v2177 = vmul.f32 %v479, %v2084
      %v2178 = vmul.f32 %v480, %v2088
      %v2179 = vmul.f32 %v481, %v2092
      %v2180 = vmul.f32 %v482, %v2096
      %v2181 = vmul.f32 %v483, %v2100
      %v2182 = vmul.f32 %v484, %v2104
      %v2183 = vmul.f32 %v485, %v2108
      %v2184 = vmul.f32 %v486, %v2112
      %v2185 = vmul.f32 %v487, %v2116
      %v2186 = vmul.f32 %v488, %v2120
      %v2187 = vmul.f32 %v489, %v2124
      %v2188 = vmul.f32 %v490, %v2128
      %v2189 = vmul.f32 %v491, %v2132
      %v2190 = vmul.f32 %v492, %v2136
      %v2191 = vmul.f32 %v493, %v2140
      %v2192 = vmul.f32 %v494, %v2144
      %v2193 = vmul.f32 %v495, %v2148
      %v2194 = vmul.f32 %v496, %v2152
      %v2195 = vmul.f32 %v497, %v2156
      %v2196 = vmul.f32 %v466, %v2160
      %v2197 = vmul.f32 %v467, %v2164
      %v2198 = vpack.c.bf16 %v2167, %v2166
      %v2199 = vpack.c.bf16 %v2169, %v2168
      %v2200 = vpack.c.bf16 %v2171, %v2170
      %v2201 = vpack.c.bf16 %v2173, %v2172
      %v2202 = vpack.c.bf16 %v2175, %v2174
      %v2203 = vpack.c.bf16 %v2177, %v2176
      %v2204 = vpack.c.bf16 %v2179, %v2178
      %v2205 = vpack.c.bf16 %v2181, %v2180
      %v2206 = vpack.c.bf16 %v2183, %v2182
      %v2207 = vpack.c.bf16 %v2185, %v2184
      %v2208 = vpack.c.bf16 %v2187, %v2186
      %v2209 = vpack.c.bf16 %v2189, %v2188
      %v2210 = vpack.c.bf16 %v2191, %v2190
      %v2211 = vpack.c.bf16 %v2193, %v2192
      %v2212 = vpack.c.bf16 %v2195, %v2194
      %v2213 = vpack.c.bf16 %v2197, %v2196
      %2214 = vst [vmem:[#allocation2 + $0x38] sm:$0xff] %v2198
      %2215 = vst [vmem:[#allocation2 + $0x80] sm:$0xff] %v2199
      %2216 = vst [vmem:[#allocation2 + $0xc8] sm:$0xff] %v2200
      %2217 = vst [vmem:[#allocation2 + $0x110] sm:$0xff] %v2201
      %2218 = vst [vmem:[#allocation2 + $0x158] sm:$0xff] %v2202
      %2219 = vst [vmem:[#allocation2 + $0x1a0] sm:$0xff] %v2203
      %2220 = vst [vmem:[#allocation2 + $0x1e8] sm:$0xff] %v2204
      %2221 = vst [vmem:[#allocation2 + $0x230] sm:$0xff] %v2205
      %2222 = vst [vmem:[#allocation2 + $0x278] sm:$0xff] %v2206
      %2223 = vst [vmem:[#allocation2 + $0x2c0] sm:$0xff] %v2207
      %2224 = vst [vmem:[#allocation2 + $0x308] sm:$0xff] %v2208
      %2225 = vst [vmem:[#allocation2 + $0x350] sm:$0xff] %v2209
      %2226 = vst [vmem:[#allocation2 + $0x398] sm:$0xff] %v2210
      %2227 = vst [vmem:[#allocation2 + $0x3e0] sm:$0xff] %v2211
      %2228 = vst [vmem:[#allocation2 + $0x428] sm:$0xff] %v2212
      %2229 = vst [vmem:[#allocation2 + $0x470] sm:$0xff] %v2213
      %2230 = vset.pattern.permute.xlu0 8
      %2231 = vperm.xlu0 %2230, %v498
      %v2232 = vpop.permute.xlu0 %2231
      %2234 = vset.pattern.permute.xlu0 8
      %2235 = vperm.xlu0 %2234, %v499
      %v2236 = vpop.permute.xlu0 %2235
      %2238 = vset.pattern.permute.xlu0 8
      %2239 = vperm.xlu0 %2238, %v500
      %v2240 = vpop.permute.xlu0 %2239
      %2242 = vset.pattern.permute.xlu0 8
      %2243 = vperm.xlu0 %2242, %v501
      %v2244 = vpop.permute.xlu0 %2243
      %2246 = vset.pattern.permute.xlu0 8
      %2247 = vperm.xlu0 %2246, %v502
      %v2248 = vpop.permute.xlu0 %2247
      %2250 = vset.pattern.permute.xlu0 8
      %2251 = vperm.xlu0 %2250, %v503
      %v2252 = vpop.permute.xlu0 %2251
      %2254 = vset.pattern.permute.xlu0 8
      %2255 = vperm.xlu0 %2254, %v504
      %v2256 = vpop.permute.xlu0 %2255
      %2258 = vset.pattern.permute.xlu0 8
      %2259 = vperm.xlu0 %2258, %v505
      %v2260 = vpop.permute.xlu0 %2259
      %2262 = vset.pattern.permute.xlu0 8
      %2263 = vperm.xlu0 %2262, %v506
      %v2264 = vpop.permute.xlu0 %2263
      %2266 = vset.pattern.permute.xlu0 8
      %2267 = vperm.xlu0 %2266, %v507
      %v2268 = vpop.permute.xlu0 %2267
      %2270 = vset.pattern.permute.xlu0 8
      %2271 = vperm.xlu0 %2270, %v508
      %v2272 = vpop.permute.xlu0 %2271
      %2274 = vset.pattern.permute.xlu0 8
      %2275 = vperm.xlu0 %2274, %v509
      %v2276 = vpop.permute.xlu0 %2275
      %2278 = vset.pattern.permute.xlu0 8
      %2279 = vperm.xlu0 %2278, %v510
      %v2280 = vpop.permute.xlu0 %2279
      %2282 = vset.pattern.permute.xlu0 8
      %2283 = vperm.xlu0 %2282, %v511
      %v2284 = vpop.permute.xlu0 %2283
      %2286 = vset.pattern.permute.xlu0 8
      %2287 = vperm.xlu0 %2286, %v512
      %v2288 = vpop.permute.xlu0 %2287
      %2290 = vset.pattern.permute.xlu0 8
      %2291 = vperm.xlu0 %2290, %v513
      %v2292 = vpop.permute.xlu0 %2291
      %2294 = vset.pattern.permute.xlu0 8
      %2295 = vperm.xlu0 %2294, %v514
      %v2296 = vpop.permute.xlu0 %2295
      %2298 = vset.pattern.permute.xlu0 8
      %2299 = vperm.xlu0 %2298, %v515
      %v2300 = vpop.permute.xlu0 %2299
      %2302 = vset.pattern.permute.xlu0 8
      %2303 = vperm.xlu0 %2302, %v516
      %v2304 = vpop.permute.xlu0 %2303
      %2306 = vset.pattern.permute.xlu0 8
      %2307 = vperm.xlu0 %2306, %v517
      %v2308 = vpop.permute.xlu0 %2307
      %2310 = vset.pattern.permute.xlu0 8
      %2311 = vperm.xlu0 %2310, %v518
      %v2312 = vpop.permute.xlu0 %2311
      %2314 = vset.pattern.permute.xlu0 8
      %2315 = vperm.xlu0 %2314, %v519
      %v2316 = vpop.permute.xlu0 %2315
      %2318 = vset.pattern.permute.xlu0 8
      %2319 = vperm.xlu0 %2318, %v520
      %v2320 = vpop.permute.xlu0 %2319
      %2322 = vset.pattern.permute.xlu0 8
      %2323 = vperm.xlu0 %2322, %v521
      %v2324 = vpop.permute.xlu0 %2323
      %2326 = vset.pattern.permute.xlu0 8
      %2327 = vperm.xlu0 %2326, %v522
      %v2328 = vpop.permute.xlu0 %2327
      %2330 = vset.pattern.permute.xlu0 8
      %2331 = vperm.xlu0 %2330, %v523
      %v2332 = vpop.permute.xlu0 %2331
      %2334 = vset.pattern.permute.xlu0 8
      %2335 = vperm.xlu0 %2334, %v524
      %v2336 = vpop.permute.xlu0 %2335
      %2338 = vset.pattern.permute.xlu0 8
      %2339 = vperm.xlu0 %2338, %v525
      %v2340 = vpop.permute.xlu0 %2339
      %2342 = vset.pattern.permute.xlu0 8
      %2343 = vperm.xlu0 %2342, %v526
      %v2344 = vpop.permute.xlu0 %2343
      %2346 = vset.pattern.permute.xlu0 8
      %2347 = vperm.xlu0 %2346, %v527
      %v2348 = vpop.permute.xlu0 %2347
      %2350 = vset.pattern.permute.xlu0 8
      %2351 = vperm.xlu0 %2350, %v528
      %v2352 = vpop.permute.xlu0 %2351
      %2354 = vset.pattern.permute.xlu0 8
      %2355 = vperm.xlu0 %2354, %v529
      %v2356 = vpop.permute.xlu0 %2355
      %v2358 = vmul.f32 %v1074, %v2232
      %v2359 = vmul.f32 %v1073, %v2236
      %v2360 = vmul.f32 %v1072, %v2240
      %v2361 = vmul.f32 %v1071, %v2244
      %v2362 = vmul.f32 %v1070, %v2248
      %v2363 = vmul.f32 %v1069, %v2252
      %v2364 = vmul.f32 %v1068, %v2256
      %v2365 = vmul.f32 %v1067, %v2260
      %v2366 = vmul.f32 %v1066, %v2264
      %v2367 = vmul.f32 %v1065, %v2268
      %v2368 = vmul.f32 %v1064, %v2272
      %v2369 = vmul.f32 %v1063, %v2276
      %v2370 = vmul.f32 %v1062, %v2280
      %v2371 = vmul.f32 %v1061, %v2284
      %v2372 = vmul.f32 %v1060, %v2288
      %v2373 = vmul.f32 %v1059, %v2292
      %v2374 = vmul.f32 %v1058, %v2296
      %v2375 = vmul.f32 %v1057, %v2300
      %v2376 = vmul.f32 %v1056, %v2304
      %v2377 = vmul.f32 %v1055, %v2308
      %v2378 = vmul.f32 %v1054, %v2312
      %v2379 = vmul.f32 %v1053, %v2316
      %v2380 = vmul.f32 %v1052, %v2320
      %v2381 = vmul.f32 %v1051, %v2324
      %v2382 = vmul.f32 %v1050, %v2328
      %v2383 = vmul.f32 %v1049, %v2332
      %v2384 = vmul.f32 %v1048, %v2336
      %v2385 = vmul.f32 %v1047, %v2340
      %v2386 = vmul.f32 %v1046, %v2344
      %v2387 = vmul.f32 %v1077, %v2348
      %v2388 = vmul.f32 %v1076, %v2352
      %v2389 = vmul.f32 %v1075, %v2356
      %v2390 = vpack.c.bf16 %v2359, %v2358
      %v2391 = vpack.c.bf16 %v2361, %v2360
      %v2392 = vpack.c.bf16 %v2363, %v2362
      %v2393 = vpack.c.bf16 %v2365, %v2364
      %v2394 = vpack.c.bf16 %v2367, %v2366
      %v2395 = vpack.c.bf16 %v2369, %v2368
      %v2396 = vpack.c.bf16 %v2371, %v2370
      %v2397 = vpack.c.bf16 %v2373, %v2372
      %v2398 = vpack.c.bf16 %v2375, %v2374
      %v2399 = vpack.c.bf16 %v2377, %v2376
      %v2400 = vpack.c.bf16 %v2379, %v2378
      %v2401 = vpack.c.bf16 %v2381, %v2380
      %v2402 = vpack.c.bf16 %v2383, %v2382
      %v2403 = vpack.c.bf16 %v2385, %v2384
      %v2404 = vpack.c.bf16 %v2387, %v2386
      %v2405 = vpack.c.bf16 %v2389, %v2388
      %2406 = vst [vmem:[#allocation2 + $0x40] sm:$0xff] %v2390
      %2407 = vst [vmem:[#allocation2 + $0x88] sm:$0xff] %v2391
      %2408 = vst [vmem:[#allocation2 + $0xd0] sm:$0xff] %v2392
      %2409 = vst [vmem:[#allocation2 + $0x118] sm:$0xff] %v2393
      %2410 = vst [vmem:[#allocation2 + $0x160] sm:$0xff] %v2394
      %2411 = vst [vmem:[#allocation2 + $0x1a8] sm:$0xff] %v2395
      %2412 = vst [vmem:[#allocation2 + $0x1f0] sm:$0xff] %v2396
      %2413 = vst [vmem:[#allocation2 + $0x238] sm:$0xff] %v2397
      %2414 = vst [vmem:[#allocation2 + $0x280] sm:$0xff] %v2398
      %2415 = vst [vmem:[#allocation2 + $0x2c8] sm:$0xff] %v2399
      %2416 = vst [vmem:[#allocation2 + $0x310] sm:$0xff] %v2400
      %2417 = vst [vmem:[#allocation2 + $0x358] sm:$0xff] %v2401
      %2418 = vst [vmem:[#allocation2 + $0x3a0] sm:$0xff] %v2402
      %2419 = vst [vmem:[#allocation2 + $0x3e8] sm:$0xff] %v2403
      %2420 = vst [vmem:[#allocation2 + $0x430] sm:$0xff] %v2404
      %2421 = vst [vmem:[#allocation2 + $0x478] sm:$0xff] %v2405
      %v2422 = vld [vmem:[#allocation2] sm:$0xff]
      %v2423 = vld [vmem:[#allocation2 + $0x8] sm:$0xff]
      %v2424 = vld [vmem:[#allocation2 + $0x10] sm:$0xff]
      %v2425 = vld [vmem:[#allocation2 + $0x18] sm:$0xff]
      %v2426 = vld [vmem:[#allocation2 + $0x20] sm:$0xff]
      %v2427 = vld [vmem:[#allocation2 + $0x28] sm:$0xff]
      %v2428 = vld [vmem:[#allocation2 + $0x30] sm:$0xff]
      %v2429 = vld [vmem:[#allocation2 + $0x38] sm:$0xff]
      %v2430 = vld [vmem:[#allocation2 + $0x40] sm:$0xff]
      %v2431 = vld [vmem:[#allocation2 + $0x48] sm:$0xff]
      %v2432 = vld [vmem:[#allocation2 + $0x50] sm:$0xff]
      %v2433 = vld [vmem:[#allocation2 + $0x58] sm:$0xff]
      %v2434 = vld [vmem:[#allocation2 + $0x60] sm:$0xff]
      %v2435 = vld [vmem:[#allocation2 + $0x68] sm:$0xff]
      %v2436 = vld [vmem:[#allocation2 + $0x70] sm:$0xff]
      %v2437 = vld [vmem:[#allocation2 + $0x78] sm:$0xff]
      %v2438 = vld [vmem:[#allocation2 + $0x80] sm:$0xff]
      %v2439 = vld [vmem:[#allocation2 + $0x88] sm:$0xff]
      %v2440 = vld [vmem:[#allocation2 + $0x90] sm:$0xff]
      %v2441 = vld [vmem:[#allocation2 + $0x98] sm:$0xff]
      %v2442 = vld [vmem:[#allocation2 + $0xa0] sm:$0xff]
      %v2443 = vld [vmem:[#allocation2 + $0xa8] sm:$0xff]
      %v2444 = vld [vmem:[#allocation2 + $0xb0] sm:$0xff]
      %v2445 = vld [vmem:[#allocation2 + $0xb8] sm:$0xff]
      %v2446 = vld [vmem:[#allocation2 + $0xc0] sm:$0xff]
      %v2447 = vld [vmem:[#allocation2 + $0xc8] sm:$0xff]
      %v2448 = vld [vmem:[#allocation2 + $0xd0] sm:$0xff]
      %v2449 = vld [vmem:[#allocation2 + $0xd8] sm:$0xff]
      %v2450 = vld [vmem:[#allocation2 + $0xe0] sm:$0xff]
      %v2451 = vld [vmem:[#allocation2 + $0xe8] sm:$0xff]
      %v2452 = vld [vmem:[#allocation2 + $0xf0] sm:$0xff]
      %v2453 = vld [vmem:[#allocation2 + $0xf8] sm:$0xff]
      %v2454 = vld [vmem:[#allocation2 + $0x100] sm:$0xff]
      %v2455 = vld [vmem:[#allocation2 + $0x108] sm:$0xff]
      %v2456 = vld [vmem:[#allocation2 + $0x110] sm:$0xff]
      %v2457 = vld [vmem:[#allocation2 + $0x118] sm:$0xff]
      %v2458 = vld [vmem:[#allocation2 + $0x120] sm:$0xff]
      %v2459 = vld [vmem:[#allocation2 + $0x128] sm:$0xff]
      %v2460 = vld [vmem:[#allocation2 + $0x130] sm:$0xff]
      %v2461 = vld [vmem:[#allocation2 + $0x138] sm:$0xff]
      %v2462 = vld [vmem:[#allocation2 + $0x140] sm:$0xff]
      %v2463 = vld [vmem:[#allocation2 + $0x148] sm:$0xff]
      %v2464 = vld [vmem:[#allocation2 + $0x150] sm:$0xff]
      %v2465 = vld [vmem:[#allocation2 + $0x158] sm:$0xff]
      %v2466 = vld [vmem:[#allocation2 + $0x160] sm:$0xff]
      %v2467 = vld [vmem:[#allocation2 + $0x168] sm:$0xff]
      %v2468 = vld [vmem:[#allocation2 + $0x170] sm:$0xff]
      %v2469 = vld [vmem:[#allocation2 + $0x178] sm:$0xff]
      %v2470 = vld [vmem:[#allocation2 + $0x180] sm:$0xff]
      %v2471 = vld [vmem:[#allocation2 + $0x188] sm:$0xff]
      %v2472 = vld [vmem:[#allocation2 + $0x190] sm:$0xff]
      %v2473 = vld [vmem:[#allocation2 + $0x198] sm:$0xff]
      %v2474 = vld [vmem:[#allocation2 + $0x1a0] sm:$0xff]
      %v2475 = vld [vmem:[#allocation2 + $0x1a8] sm:$0xff]
      %v2476 = vld [vmem:[#allocation2 + $0x1b0] sm:$0xff]
      %v2477 = vld [vmem:[#allocation2 + $0x1b8] sm:$0xff]
      %v2478 = vld [vmem:[#allocation2 + $0x1c0] sm:$0xff]
      %v2479 = vld [vmem:[#allocation2 + $0x1c8] sm:$0xff]
      %v2480 = vld [vmem:[#allocation2 + $0x1d0] sm:$0xff]
      %v2481 = vld [vmem:[#allocation2 + $0x1d8] sm:$0xff]
      %v2482 = vld [vmem:[#allocation2 + $0x1e0] sm:$0xff]
      %v2483 = vld [vmem:[#allocation2 + $0x1e8] sm:$0xff]
      %v2484 = vld [vmem:[#allocation2 + $0x1f0] sm:$0xff]
      %v2485 = vld [vmem:[#allocation2 + $0x1f8] sm:$0xff]
      %v2486 = vld [vmem:[#allocation2 + $0x200] sm:$0xff]
      %v2487 = vld [vmem:[#allocation2 + $0x208] sm:$0xff]
      %v2488 = vld [vmem:[#allocation2 + $0x210] sm:$0xff]
      %v2489 = vld [vmem:[#allocation2 + $0x218] sm:$0xff]
      %v2490 = vld [vmem:[#allocation2 + $0x220] sm:$0xff]
      %v2491 = vld [vmem:[#allocation2 + $0x228] sm:$0xff]
      %v2492 = vld [vmem:[#allocation2 + $0x230] sm:$0xff]
      %v2493 = vld [vmem:[#allocation2 + $0x238] sm:$0xff]
      %v2494 = vld [vmem:[#allocation2 + $0x240] sm:$0xff]
      %v2495 = vld [vmem:[#allocation2 + $0x248] sm:$0xff]
      %v2496 = vld [vmem:[#allocation2 + $0x250] sm:$0xff]
      %v2497 = vld [vmem:[#allocation2 + $0x258] sm:$0xff]
      %v2498 = vld [vmem:[#allocation2 + $0x260] sm:$0xff]
      %v2499 = vld [vmem:[#allocation2 + $0x268] sm:$0xff]
      %v2500 = vld [vmem:[#allocation2 + $0x270] sm:$0xff]
      %v2501 = vld [vmem:[#allocation2 + $0x278] sm:$0xff]
      %v2502 = vld [vmem:[#allocation2 + $0x280] sm:$0xff]
      %v2503 = vld [vmem:[#allocation2 + $0x288] sm:$0xff]
      %v2504 = vld [vmem:[#allocation2 + $0x290] sm:$0xff]
      %v2505 = vld [vmem:[#allocation2 + $0x298] sm:$0xff]
      %v2506 = vld [vmem:[#allocation2 + $0x2a0] sm:$0xff]
      %v2507 = vld [vmem:[#allocation2 + $0x2a8] sm:$0xff]
      %v2508 = vld [vmem:[#allocation2 + $0x2b0] sm:$0xff]
      %v2509 = vld [vmem:[#allocation2 + $0x2b8] sm:$0xff]
      %v2510 = vld [vmem:[#allocation2 + $0x2c0] sm:$0xff]
      %v2511 = vld [vmem:[#allocation2 + $0x2c8] sm:$0xff]
      %v2512 = vld [vmem:[#allocation2 + $0x2d0] sm:$0xff]
      %v2513 = vld [vmem:[#allocation2 + $0x2d8] sm:$0xff]
      %v2514 = vld [vmem:[#allocation2 + $0x2e0] sm:$0xff]
      %v2515 = vld [vmem:[#allocation2 + $0x2e8] sm:$0xff]
      %v2516 = vld [vmem:[#allocation2 + $0x2f0] sm:$0xff]
      %v2517 = vld [vmem:[#allocation2 + $0x2f8] sm:$0xff]
      %v2518 = vld [vmem:[#allocation2 + $0x300] sm:$0xff]
      %v2519 = vld [vmem:[#allocation2 + $0x308] sm:$0xff]
      %v2520 = vld [vmem:[#allocation2 + $0x310] sm:$0xff]
      %v2521 = vld [vmem:[#allocation2 + $0x318] sm:$0xff]
      %v2522 = vld [vmem:[#allocation2 + $0x320] sm:$0xff]
      %v2523 = vld [vmem:[#allocation2 + $0x328] sm:$0xff]
      %v2524 = vld [vmem:[#allocation2 + $0x330] sm:$0xff]
      %v2525 = vld [vmem:[#allocation2 + $0x338] sm:$0xff]
      %v2526 = vld [vmem:[#allocation2 + $0x340] sm:$0xff]
      %v2527 = vld [vmem:[#allocation2 + $0x348] sm:$0xff]
      %v2528 = vld [vmem:[#allocation2 + $0x350] sm:$0xff]
      %v2529 = vld [vmem:[#allocation2 + $0x358] sm:$0xff]
      %v2530 = vld [vmem:[#allocation2 + $0x360] sm:$0xff]
      %v2531 = vld [vmem:[#allocation2 + $0x368] sm:$0xff]
      %v2532 = vld [vmem:[#allocation2 + $0x370] sm:$0xff]
      %v2533 = vld [vmem:[#allocation2 + $0x378] sm:$0xff]
      %v2534 = vld [vmem:[#allocation2 + $0x380] sm:$0xff]
      %v2535 = vld [vmem:[#allocation2 + $0x388] sm:$0xff]
      %v2536 = vld [vmem:[#allocation2 + $0x390] sm:$0xff]
      %v2537 = vld [vmem:[#allocation2 + $0x398] sm:$0xff]
      %v2538 = vld [vmem:[#allocation2 + $0x3a0] sm:$0xff]
      %v2539 = vld [vmem:[#allocation2 + $0x3a8] sm:$0xff]
      %v2540 = vld [vmem:[#allocation2 + $0x3b0] sm:$0xff]
      %v2541 = vld [vmem:[#allocation2 + $0x3b8] sm:$0xff]
      %v2542 = vld [vmem:[#allocation2 + $0x3c0] sm:$0xff]
      %v2543 = vld [vmem:[#allocation2 + $0x3c8] sm:$0xff]
      %v2544 = vld [vmem:[#allocation2 + $0x3d0] sm:$0xff]
      %v2545 = vld [vmem:[#allocation2 + $0x3d8] sm:$0xff]
      %v2546 = vld [vmem:[#allocation2 + $0x3e0] sm:$0xff]
      %v2547 = vld [vmem:[#allocation2 + $0x3e8] sm:$0xff]
      %v2548 = vld [vmem:[#allocation2 + $0x3f0] sm:$0xff]
      %v2549 = vld [vmem:[#allocation2 + $0x3f8] sm:$0xff]
      %v2550 = vld [vmem:[#allocation2 + $0x400] sm:$0xff]
      %v2551 = vld [vmem:[#allocation2 + $0x408] sm:$0xff]
      %v2552 = vld [vmem:[#allocation2 + $0x410] sm:$0xff]
      %v2553 = vld [vmem:[#allocation2 + $0x418] sm:$0xff]
      %v2554 = vld [vmem:[#allocation2 + $0x420] sm:$0xff]
      %v2555 = vld [vmem:[#allocation2 + $0x428] sm:$0xff]
      %v2556 = vld [vmem:[#allocation2 + $0x430] sm:$0xff]
      %v2557 = vld [vmem:[#allocation2 + $0x438] sm:$0xff]
      %v2558 = vld [vmem:[#allocation2 + $0x440] sm:$0xff]
      %v2559 = vld [vmem:[#allocation2 + $0x448] sm:$0xff]
      %v2560 = vld [vmem:[#allocation2 + $0x450] sm:$0xff]
      %v2561 = vld [vmem:[#allocation2 + $0x458] sm:$0xff]
      %v2562 = vld [vmem:[#allocation2 + $0x460] sm:$0xff]
      %v2563 = vld [vmem:[#allocation2 + $0x468] sm:$0xff]
      %v2564 = vld [vmem:[#allocation2 + $0x470] sm:$0xff]
      %v2565 = vld [vmem:[#allocation2 + $0x478] sm:$0xff]
      %v2566 = vld [vmem:[%s2] sm:$0xf]
      %v2567 = vld [vmem:[%s2 + $0x4] sm:$0xf]
      %v2568 = vld [vmem:[%s2 + $0x8] sm:$0xf]
      %v2569 = vld [vmem:[%s2 + $0xc] sm:$0xf]
      %v2570 = vld [vmem:[%s2 + $0x10] sm:$0xf]
      %v2571 = vld [vmem:[%s2 + $0x14] sm:$0xf]
      %v2572 = vld [vmem:[%s2 + $0x18] sm:$0xf]
      %v2573 = vld [vmem:[%s2 + $0x1c] sm:$0xf]
      %v2574 = vld [vmem:[%s2 + $0x20] sm:$0xf]
      %v2575 = vld [vmem:[%s2 + $0x24] sm:$0xf]
      %v2576 = vld [vmem:[%s2 + $0x28] sm:$0xf]
      %v2577 = vld [vmem:[%s2 + $0x2c] sm:$0xf]
      %v2578 = vld [vmem:[%s2 + $0x30] sm:$0xf]
      %v2579 = vld [vmem:[%s2 + $0x34] sm:$0xf]
      %v2580 = vld [vmem:[%s2 + $0x38] sm:$0xf]
      %v2581 = vld [vmem:[%s2 + $0x3c] sm:$0xf]
      %v2582 = vld [vmem:[%s2 + $0x40] sm:$0xf]
      %v2583 = vld [vmem:[%s2 + $0x44] sm:$0xf]
      %v2584 = vld [vmem:[%s2 + $0x48] sm:$0xf]
      %v2585 = vld [vmem:[%s2 + $0x4c] sm:$0xf]
      %v2586 = vld [vmem:[%s2 + $0x50] sm:$0xf]
      %v2587 = vld [vmem:[%s2 + $0x54] sm:$0xf]
      %v2588 = vld [vmem:[%s2 + $0x58] sm:$0xf]
      %v2589 = vld [vmem:[%s2 + $0x5c] sm:$0xf]
      %v2590 = vld [vmem:[%s2 + $0x60] sm:$0xf]
      %v2591 = vld [vmem:[%s2 + $0x64] sm:$0xf]
      %v2592 = vld [vmem:[%s2 + $0x68] sm:$0xf]
      %v2593 = vld [vmem:[%s2 + $0x6c] sm:$0xf]
      %v2594 = vld [vmem:[%s2 + $0x70] sm:$0xf]
      %v2595 = vld [vmem:[%s2 + $0x74] sm:$0xf]
      %v2596 = vld [vmem:[%s2 + $0x78] sm:$0xf]
      %v2597 = vld [vmem:[%s2 + $0x7c] sm:$0xf]
      %v2598 = vld [vmem:[%s2 + $0x80] sm:$0xf]
      %v2599 = vld [vmem:[%s2 + $0x84] sm:$0xf]
      %v2600 = vld [vmem:[%s2 + $0x88] sm:$0xf]
      %v2601 = vld [vmem:[%s2 + $0x8c] sm:$0xf]
      %v2602 = vld [vmem:[%s2 + $0x90] sm:$0xf]
      %v2603 = vld [vmem:[%s2 + $0x94] sm:$0xf]
      %v2604 = vld [vmem:[%s2 + $0x98] sm:$0xf]
      %v2605 = vld [vmem:[%s2 + $0x9c] sm:$0xf]
      %v2606 = vld [vmem:[%s2 + $0xa0] sm:$0xf]
      %v2607 = vld [vmem:[%s2 + $0xa4] sm:$0xf]
      %v2608 = vld [vmem:[%s2 + $0xa8] sm:$0xf]
      %v2609 = vld [vmem:[%s2 + $0xac] sm:$0xf]
      %v2610 = vld [vmem:[%s2 + $0xb0] sm:$0xf]
      %v2611 = vld [vmem:[%s2 + $0xb4] sm:$0xf]
      %v2612 = vld [vmem:[%s2 + $0xb8] sm:$0xf]
      %v2613 = vld [vmem:[%s2 + $0xbc] sm:$0xf]
      %v2614 = vld [vmem:[%s2 + $0xc0] sm:$0xf]
      %v2615 = vld [vmem:[%s2 + $0xc4] sm:$0xf]
      %v2616 = vld [vmem:[%s2 + $0xc8] sm:$0xf]
      %v2617 = vld [vmem:[%s2 + $0xcc] sm:$0xf]
      %v2618 = vld [vmem:[%s2 + $0xd0] sm:$0xf]
      %v2619 = vld [vmem:[%s2 + $0xd4] sm:$0xf]
      %v2620 = vld [vmem:[%s2 + $0xd8] sm:$0xf]
      %v2621 = vld [vmem:[%s2 + $0xdc] sm:$0xf]
      %v2622 = vld [vmem:[%s2 + $0xe0] sm:$0xf]
      %v2623 = vld [vmem:[%s2 + $0xe4] sm:$0xf]
      %v2624 = vld [vmem:[%s2 + $0xe8] sm:$0xf]
      %v2625 = vld [vmem:[%s2 + $0xec] sm:$0xf]
      %v2626 = vld [vmem:[%s2 + $0xf0] sm:$0xf]
      %v2627 = vld [vmem:[%s2 + $0xf4] sm:$0xf]
      %v2628 = vld [vmem:[%s2 + $0xf8] sm:$0xf]
      %v2629 = vld [vmem:[%s2 + $0xfc] sm:$0xf]
      %v2630 = vld [vmem:[%s2 + $0x100] sm:$0xf]
      %v2631 = vld [vmem:[%s2 + $0x104] sm:$0xf]
      %v2632 = vld [vmem:[%s2 + $0x108] sm:$0xf]
      %v2633 = vld [vmem:[%s2 + $0x10c] sm:$0xf]
      %v2634 = vld [vmem:[%s2 + $0x110] sm:$0xf]
      %v2635 = vld [vmem:[%s2 + $0x114] sm:$0xf]
      %v2636 = vld [vmem:[%s2 + $0x118] sm:$0xf]
      %v2637 = vld [vmem:[%s2 + $0x11c] sm:$0xf]
      %v2638 = vld [vmem:[%s2 + $0x120] sm:$0xf]
      %v2639 = vld [vmem:[%s2 + $0x124] sm:$0xf]
      %v2640 = vld [vmem:[%s2 + $0x128] sm:$0xf]
      %v2641 = vld [vmem:[%s2 + $0x12c] sm:$0xf]
      %v2642 = vld [vmem:[%s2 + $0x130] sm:$0xf]
      %v2643 = vld [vmem:[%s2 + $0x134] sm:$0xf]
      %v2644 = vld [vmem:[%s2 + $0x138] sm:$0xf]
      %v2645 = vld [vmem:[%s2 + $0x13c] sm:$0xf]
      %v2646 = vld [vmem:[%s2 + $0x140] sm:$0xf]
      %v2647 = vld [vmem:[%s2 + $0x144] sm:$0xf]
      %v2648 = vld [vmem:[%s2 + $0x148] sm:$0xf]
      %v2649 = vld [vmem:[%s2 + $0x14c] sm:$0xf]
      %v2650 = vld [vmem:[%s2 + $0x150] sm:$0xf]
      %v2651 = vld [vmem:[%s2 + $0x154] sm:$0xf]
      %v2652 = vld [vmem:[%s2 + $0x158] sm:$0xf]
      %v2653 = vld [vmem:[%s2 + $0x15c] sm:$0xf]
      %v2654 = vld [vmem:[%s2 + $0x160] sm:$0xf]
      %v2655 = vld [vmem:[%s2 + $0x164] sm:$0xf]
      %v2656 = vld [vmem:[%s2 + $0x168] sm:$0xf]
      %v2657 = vld [vmem:[%s2 + $0x16c] sm:$0xf]
      %v2658 = vld [vmem:[%s2 + $0x170] sm:$0xf]
      %v2659 = vld [vmem:[%s2 + $0x174] sm:$0xf]
      %v2660 = vld [vmem:[%s2 + $0x178] sm:$0xf]
      %v2661 = vld [vmem:[%s2 + $0x17c] sm:$0xf]
      %v2662 = vld [vmem:[%s2 + $0x180] sm:$0xf]
      %v2663 = vld [vmem:[%s2 + $0x184] sm:$0xf]
      %v2664 = vld [vmem:[%s2 + $0x188] sm:$0xf]
      %v2665 = vld [vmem:[%s2 + $0x18c] sm:$0xf]
      %v2666 = vld [vmem:[%s2 + $0x190] sm:$0xf]
      %v2667 = vld [vmem:[%s2 + $0x194] sm:$0xf]
      %v2668 = vld [vmem:[%s2 + $0x198] sm:$0xf]
      %v2669 = vld [vmem:[%s2 + $0x19c] sm:$0xf]
      %v2670 = vld [vmem:[%s2 + $0x1a0] sm:$0xf]
      %v2671 = vld [vmem:[%s2 + $0x1a4] sm:$0xf]
      %v2672 = vld [vmem:[%s2 + $0x1a8] sm:$0xf]
      %v2673 = vld [vmem:[%s2 + $0x1ac] sm:$0xf]
      %v2674 = vld [vmem:[%s2 + $0x1b0] sm:$0xf]
      %v2675 = vld [vmem:[%s2 + $0x1b4] sm:$0xf]
      %v2676 = vld [vmem:[%s2 + $0x1b8] sm:$0xf]
      %v2677 = vld [vmem:[%s2 + $0x1bc] sm:$0xf]
      %v2678 = vld [vmem:[%s2 + $0x1c0] sm:$0xf]
      %v2679 = vld [vmem:[%s2 + $0x1c4] sm:$0xf]
      %v2680 = vld [vmem:[%s2 + $0x1c8] sm:$0xf]
      %v2681 = vld [vmem:[%s2 + $0x1cc] sm:$0xf]
      %v2682 = vld [vmem:[%s2 + $0x1d0] sm:$0xf]
      %v2683 = vld [vmem:[%s2 + $0x1d4] sm:$0xf]
      %v2684 = vld [vmem:[%s2 + $0x1d8] sm:$0xf]
      %v2685 = vld [vmem:[%s2 + $0x1dc] sm:$0xf]
      %v2686 = vld [vmem:[%s2 + $0x1e0] sm:$0xf]
      %v2687 = vld [vmem:[%s2 + $0x1e4] sm:$0xf]
      %v2688 = vld [vmem:[%s2 + $0x1e8] sm:$0xf]
      %v2689 = vld [vmem:[%s2 + $0x1ec] sm:$0xf]
      %v2690 = vld [vmem:[%s2 + $0x1f0] sm:$0xf]
      %v2691 = vld [vmem:[%s2 + $0x1f4] sm:$0xf]
      %v2692 = vld [vmem:[%s2 + $0x1f8] sm:$0xf]
      %v2693 = vld [vmem:[%s2 + $0x1fc] sm:$0xf]
      %v2694 = vld [vmem:[%s2 + $0x200] sm:$0xf]
      %v2695 = vld [vmem:[%s2 + $0x204] sm:$0xf]
      %v2696 = vld [vmem:[%s2 + $0x208] sm:$0xf]
      %v2697 = vld [vmem:[%s2 + $0x20c] sm:$0xf]
      %v2698 = vld [vmem:[%s2 + $0x210] sm:$0xf]
      %v2699 = vld [vmem:[%s2 + $0x214] sm:$0xf]
      %v2700 = vld [vmem:[%s2 + $0x218] sm:$0xf]
      %v2701 = vld [vmem:[%s2 + $0x21c] sm:$0xf]
      %v2702 = vld [vmem:[%s2 + $0x220] sm:$0xf]
      %v2703 = vld [vmem:[%s2 + $0x224] sm:$0xf]
      %v2704 = vld [vmem:[%s2 + $0x228] sm:$0xf]
      %v2705 = vld [vmem:[%s2 + $0x22c] sm:$0xf]
      %v2706 = vld [vmem:[%s2 + $0x230] sm:$0xf]
      %v2707 = vld [vmem:[%s2 + $0x234] sm:$0xf]
      %v2708 = vld [vmem:[%s2 + $0x238] sm:$0xf]
      %v2709 = vld [vmem:[%s2 + $0x23c] sm:$0xf]
      %v2710 = vld [vmem:[%s3] sm:$0x1]
      %v2712 = vlaneseq
      %v2713 = vshrl.u32 %v2712, 7
      %v2714 = vsub.s32 0, %v2713
      %v2715 = vrot.slane %v2710, %v2714
      %v2861 = vunpack.c.l.b16 %v2566
      %v2862 = vunpack.c.l.b16 %v2567
      %v2863 = vunpack.c.l.b16 %v2568
      %v2864 = vunpack.c.l.b16 %v2569
      %v2865 = vunpack.c.l.b16 %v2570
      %v2866 = vunpack.c.l.b16 %v2571
      %v2867 = vunpack.c.l.b16 %v2572
      %v2868 = vunpack.c.l.b16 %v2573
      %v2869 = vunpack.c.l.b16 %v2574
      %v2870 = vunpack.c.l.b16 %v2575
      %v2871 = vunpack.c.l.b16 %v2576
      %v2872 = vunpack.c.l.b16 %v2577
      %v2873 = vunpack.c.l.b16 %v2578
      %v2874 = vunpack.c.l.b16 %v2579
      %v2875 = vunpack.c.l.b16 %v2580
      %v2876 = vunpack.c.l.b16 %v2581
      %v2877 = vunpack.c.l.b16 %v2582
      %v2878 = vunpack.c.l.b16 %v2583
      %v2879 = vunpack.c.l.b16 %v2584
      %v2880 = vunpack.c.l.b16 %v2585
      %v2881 = vunpack.c.l.b16 %v2586
      %v2882 = vunpack.c.l.b16 %v2587
      %v2883 = vunpack.c.l.b16 %v2588
      %v2884 = vunpack.c.l.b16 %v2589
      %v2885 = vunpack.c.l.b16 %v2590
      %v2886 = vunpack.c.l.b16 %v2591
      %v2887 = vunpack.c.l.b16 %v2592
      %v2888 = vunpack.c.l.b16 %v2593
      %v2889 = vunpack.c.l.b16 %v2594
      %v2890 = vunpack.c.l.b16 %v2595
      %v2891 = vunpack.c.l.b16 %v2596
      %v2892 = vunpack.c.l.b16 %v2597
      %v2893 = vunpack.c.l.b16 %v2598
      %v2894 = vunpack.c.l.b16 %v2599
      %v2895 = vunpack.c.l.b16 %v2600
      %v2896 = vunpack.c.l.b16 %v2601
      %v2897 = vunpack.c.l.b16 %v2602
      %v2898 = vunpack.c.l.b16 %v2603
      %v2899 = vunpack.c.l.b16 %v2604
      %v2900 = vunpack.c.l.b16 %v2605
      %v2901 = vunpack.c.l.b16 %v2606
      %v2902 = vunpack.c.l.b16 %v2607
      %v2903 = vunpack.c.l.b16 %v2608
      %v2904 = vunpack.c.l.b16 %v2609
      %v2905 = vunpack.c.l.b16 %v2610
      %v2906 = vunpack.c.l.b16 %v2611
      %v2907 = vunpack.c.l.b16 %v2612
      %v2908 = vunpack.c.l.b16 %v2613
      %v2909 = vunpack.c.l.b16 %v2614
      %v2910 = vunpack.c.l.b16 %v2615
      %v2911 = vunpack.c.l.b16 %v2616
      %v2912 = vunpack.c.l.b16 %v2617
      %v2913 = vunpack.c.l.b16 %v2618
      %v2914 = vunpack.c.l.b16 %v2619
      %v2915 = vunpack.c.l.b16 %v2620
      %v2916 = vunpack.c.l.b16 %v2621
      %v2917 = vunpack.c.l.b16 %v2622
      %v2918 = vunpack.c.l.b16 %v2623
      %v2919 = vunpack.c.l.b16 %v2624
      %v2920 = vunpack.c.l.b16 %v2625
      %v2921 = vunpack.c.l.b16 %v2626
      %v2922 = vunpack.c.l.b16 %v2627
      %v2923 = vunpack.c.l.b16 %v2628
      %v2924 = vunpack.c.l.b16 %v2629
      %v2925 = vunpack.c.l.b16 %v2630
      %v2926 = vunpack.c.l.b16 %v2631
      %v2927 = vunpack.c.l.b16 %v2632
      %v2928 = vunpack.c.l.b16 %v2633
      %v2929 = vunpack.c.l.b16 %v2634
      %v2930 = vunpack.c.l.b16 %v2635
      %v2931 = vunpack.c.l.b16 %v2636
      %v2932 = vunpack.c.l.b16 %v2637
      %v2933 = vunpack.c.l.b16 %v2638
      %v2934 = vunpack.c.l.b16 %v2639
      %v2935 = vunpack.c.l.b16 %v2640
      %v2936 = vunpack.c.l.b16 %v2641
      %v2937 = vunpack.c.l.b16 %v2642
      %v2938 = vunpack.c.l.b16 %v2643
      %v2939 = vunpack.c.l.b16 %v2644
      %v2940 = vunpack.c.l.b16 %v2645
      %v2941 = vunpack.c.l.b16 %v2646
      %v2942 = vunpack.c.l.b16 %v2647
      %v2943 = vunpack.c.l.b16 %v2648
      %v2944 = vunpack.c.l.b16 %v2649
      %v2945 = vunpack.c.l.b16 %v2650
      %v2946 = vunpack.c.l.b16 %v2651
      %v2947 = vunpack.c.l.b16 %v2652
      %v2948 = vunpack.c.l.b16 %v2653
      %v2949 = vunpack.c.l.b16 %v2654
      %v2950 = vunpack.c.l.b16 %v2655
      %v2951 = vunpack.c.l.b16 %v2656
      %v2952 = vunpack.c.l.b16 %v2657
      %v2953 = vunpack.c.l.b16 %v2658
      %v2954 = vunpack.c.l.b16 %v2659
      %v2955 = vunpack.c.l.b16 %v2660
      %v2956 = vunpack.c.l.b16 %v2661
      %v2957 = vunpack.c.l.b16 %v2662
      %v2958 = vunpack.c.l.b16 %v2663
      %v2959 = vunpack.c.l.b16 %v2664
      %v2960 = vunpack.c.l.b16 %v2665
      %v2961 = vunpack.c.l.b16 %v2666
      %v2962 = vunpack.c.l.b16 %v2667
      %v2963 = vunpack.c.l.b16 %v2668
      %v2964 = vunpack.c.l.b16 %v2669
      %v2965 = vunpack.c.l.b16 %v2670
      %v2966 = vunpack.c.l.b16 %v2671
      %v2967 = vunpack.c.l.b16 %v2672
      %v2968 = vunpack.c.l.b16 %v2673
      %v2969 = vunpack.c.l.b16 %v2674
      %v2970 = vunpack.c.l.b16 %v2675
      %v2971 = vunpack.c.l.b16 %v2676
      %v2972 = vunpack.c.l.b16 %v2677
      %v2973 = vunpack.c.l.b16 %v2678
      %v2974 = vunpack.c.l.b16 %v2679
      %v2975 = vunpack.c.l.b16 %v2680
      %v2976 = vunpack.c.l.b16 %v2681
      %v2977 = vunpack.c.l.b16 %v2682
      %v2978 = vunpack.c.l.b16 %v2683
      %v2979 = vunpack.c.l.b16 %v2684
      %v2980 = vunpack.c.l.b16 %v2685
      %v2981 = vunpack.c.l.b16 %v2686
      %v2982 = vunpack.c.l.b16 %v2687
      %v2983 = vunpack.c.l.b16 %v2688
      %v2984 = vunpack.c.l.b16 %v2689
      %v2985 = vunpack.c.l.b16 %v2690
      %v2986 = vunpack.c.l.b16 %v2691
      %v2987 = vunpack.c.l.b16 %v2692
      %v2988 = vunpack.c.l.b16 %v2693
      %v2989 = vunpack.c.l.b16 %v2694
      %v2990 = vunpack.c.l.b16 %v2695
      %v2991 = vunpack.c.l.b16 %v2696
      %v2992 = vunpack.c.l.b16 %v2697
      %v2993 = vunpack.c.l.b16 %v2698
      %v2994 = vunpack.c.l.b16 %v2699
      %v2995 = vunpack.c.l.b16 %v2700
      %v2996 = vunpack.c.l.b16 %v2701
      %v2997 = vunpack.c.l.b16 %v2702
      %v2998 = vunpack.c.l.b16 %v2703
      %v2999 = vunpack.c.l.b16 %v2704
      %v3000 = vunpack.c.l.b16 %v2705
      %v3001 = vunpack.c.l.b16 %v2706
      %v3002 = vunpack.c.l.b16 %v2707
      %v3003 = vunpack.c.l.b16 %v2708
      %v3004 = vunpack.c.l.b16 %v2709
      %v3005 = vpack.c.b16 %v2862, %v2861
      %v3006 = vpack.c.b16 %v2864, %v2863
      %v3007 = vpack.c.b16 %v2866, %v2865
      %v3008 = vpack.c.b16 %v2868, %v2867
      %v3009 = vpack.c.b16 %v2870, %v2869
      %v3010 = vpack.c.b16 %v2872, %v2871
      %v3011 = vpack.c.b16 %v2874, %v2873
      %v3012 = vpack.c.b16 %v2876, %v2875
      %v3013 = vpack.c.b16 %v2878, %v2877
      %v3014 = vpack.c.b16 %v2880, %v2879
      %v3015 = vpack.c.b16 %v2882, %v2881
      %v3016 = vpack.c.b16 %v2884, %v2883
      %v3017 = vpack.c.b16 %v2886, %v2885
      %v3018 = vpack.c.b16 %v2888, %v2887
      %v3019 = vpack.c.b16 %v2890, %v2889
      %v3020 = vpack.c.b16 %v2892, %v2891
      %v3021 = vpack.c.b16 %v2894, %v2893
      %v3022 = vpack.c.b16 %v2896, %v2895
      %v3023 = vpack.c.b16 %v2898, %v2897
      %v3024 = vpack.c.b16 %v2900, %v2899
      %v3025 = vpack.c.b16 %v2902, %v2901
      %v3026 = vpack.c.b16 %v2904, %v2903
      %v3027 = vpack.c.b16 %v2906, %v2905
      %v3028 = vpack.c.b16 %v2908, %v2907
      %v3029 = vpack.c.b16 %v2910, %v2909
      %v3030 = vpack.c.b16 %v2912, %v2911
      %v3031 = vpack.c.b16 %v2914, %v2913
      %v3032 = vpack.c.b16 %v2916, %v2915
      %v3033 = vpack.c.b16 %v2918, %v2917
      %v3034 = vpack.c.b16 %v2920, %v2919
      %v3035 = vpack.c.b16 %v2922, %v2921
      %v3036 = vpack.c.b16 %v2924, %v2923
      %v3037 = vpack.c.b16 %v2926, %v2925
      %v3038 = vpack.c.b16 %v2928, %v2927
      %v3039 = vpack.c.b16 %v2930, %v2929
      %v3040 = vpack.c.b16 %v2932, %v2931
      %v3041 = vpack.c.b16 %v2934, %v2933
      %v3042 = vpack.c.b16 %v2936, %v2935
      %v3043 = vpack.c.b16 %v2938, %v2937
      %v3044 = vpack.c.b16 %v2940, %v2939
      %v3045 = vpack.c.b16 %v2942, %v2941
      %v3046 = vpack.c.b16 %v2944, %v2943
      %v3047 = vpack.c.b16 %v2946, %v2945
      %v3048 = vpack.c.b16 %v2948, %v2947
      %v3049 = vpack.c.b16 %v2950, %v2949
      %v3050 = vpack.c.b16 %v2952, %v2951
      %v3051 = vpack.c.b16 %v2954, %v2953
      %v3052 = vpack.c.b16 %v2956, %v2955
      %v3053 = vpack.c.b16 %v2958, %v2957
      %v3054 = vpack.c.b16 %v2960, %v2959
      %v3055 = vpack.c.b16 %v2962, %v2961
      %v3056 = vpack.c.b16 %v2964, %v2963
      %v3057 = vpack.c.b16 %v2966, %v2965
      %v3058 = vpack.c.b16 %v2968, %v2967
      %v3059 = vpack.c.b16 %v2970, %v2969
      %v3060 = vpack.c.b16 %v2972, %v2971
      %v3061 = vpack.c.b16 %v2974, %v2973
      %v3062 = vpack.c.b16 %v2976, %v2975
      %v3063 = vpack.c.b16 %v2978, %v2977
      %v3064 = vpack.c.b16 %v2980, %v2979
      %v3065 = vpack.c.b16 %v2982, %v2981
      %v3066 = vpack.c.b16 %v2984, %v2983
      %v3067 = vpack.c.b16 %v2986, %v2985
      %v3068 = vpack.c.b16 %v2988, %v2987
      %v3069 = vpack.c.b16 %v2990, %v2989
      %v3070 = vpack.c.b16 %v2992, %v2991
      %v3071 = vpack.c.b16 %v2994, %v2993
      %v3072 = vpack.c.b16 %v2996, %v2995
      %v3073 = vpack.c.b16 %v2998, %v2997
      %v3074 = vpack.c.b16 %v3000, %v2999
      %v3075 = vpack.c.b16 %v3002, %v3001
      %v3076 = vpack.c.b16 %v3004, %v3003
      %3149 = vmatprep.subr.bf16.mxu0 0
      %3150 = vmatpush1.bf16.msra.mxu0 %v3005
      %3151 = vmatprep.subr.bf16.mxu0 0
      %3152 = vmatpush1.bf16.msra.mxu0 %v3006
      %3153 = vmatprep.subr.bf16.mxu0 0
      %3154 = vmatpush1.bf16.msra.mxu0 %v3007
      %3155 = vmatprep.subr.bf16.mxu0 0
      %3156 = vmatpush1.bf16.msra.mxu0 %v3008
      %3157 = vmatprep.subr.bf16.mxu0 0
      %3158 = vmatpush1.bf16.msra.mxu0 %v3009
      %3159 = vmatprep.subr.bf16.mxu0 0
      %3160 = vmatpush1.bf16.msra.mxu0 %v3010
      %3161 = vmatprep.subr.bf16.mxu0 0
      %3162 = vmatpush1.bf16.msra.mxu0 %v3011
      %3163 = vmatprep.subr.bf16.mxu0 0
      %3164 = vmatpush1.bf16.msra.mxu0 %v3012
      %3165 = vmatprep.subr.bf16.mxu0 0
      %3166 = vmatpush1.bf16.msra.mxu0 %v3013
      %3167 = vmatprep.subr.bf16.mxu0 0
      %3168 = vmatpush1.bf16.msra.mxu0 %v3014
      %3169 = vmatprep.subr.bf16.mxu0 0
      %3170 = vmatpush1.bf16.msra.mxu0 %v3015
      %3171 = vmatprep.subr.bf16.mxu0 0
      %3172 = vmatpush1.bf16.msra.mxu0 %v3016
      %3173 = vmatprep.subr.bf16.mxu0 0
      %3174 = vmatpush1.bf16.msra.mxu0 %v3017
      %3175 = vmatprep.subr.bf16.mxu0 0
      %3176 = vmatpush1.bf16.msra.mxu0 %v3018
      %3177 = vmatprep.subr.bf16.mxu0 0
      %3178 = vmatpush1.bf16.msra.mxu0 %v3019
      %3179 = vmatprep.subr.bf16.mxu0 0
      %3180 = vmatpush1.bf16.msra.mxu0 %v3020
      %3181 = vmatprep.mubr.bf16.mxu0 %v2423
      %3182 = vmatmul.mubr.bf16.gmra.mrb[0].mxu0 %v2422
      %v3183 = vpop.f32.mrb[0].mxu0
      %v3184 = vadd.f32 %v2715, %v3183
      %v3185 = vpop.f32.mrb[0].mxu0
      %v3186 = vpop.f32.mrb[0].mxu0
      %v3187 = vadd.f32 %v2715, %v3186
      %v3188 = vpop.f32.mrb[0].mxu0
      %3189 = vmatprep.mubr.bf16.mxu0 %v2432
      %3190 = vmatmul.mubr.bf16.gmra.mrb[0].mxu0 %v2431
      %v3191 = vpop.f32.mrb[0].mxu0
      %v3192 = vadd.f32 %v2715, %v3191
      %v3193 = vpop.f32.mrb[0].mxu0
      %v3194 = vpop.f32.mrb[0].mxu0
      %v3195 = vadd.f32 %v2715, %v3194
      %v3196 = vpop.f32.mrb[0].mxu0
      %3197 = vmatprep.mubr.bf16.mxu0 %v2441
      %3198 = vmatmul.mubr.bf16.gmra.mrb[0].mxu0 %v2440
      %v3199 = vpop.f32.mrb[0].mxu0
      %v3200 = vadd.f32 %v2715, %v3199
      %v3201 = vpop.f32.mrb[0].mxu0
      %v3202 = vpop.f32.mrb[0].mxu0
      %v3203 = vadd.f32 %v2715, %v3202
      %v3204 = vpop.f32.mrb[0].mxu0
      %3205 = vmatprep.mubr.bf16.mxu0 %v2450
      %3206 = vmatmul.mubr.bf16.gmra.mrb[0].mxu0 %v2449
      %v3207 = vpop.f32.mrb[0].mxu0
      %v3208 = vadd.f32 %v2715, %v3207
      %v3209 = vpop.f32.mrb[0].mxu0
      %v3210 = vpop.f32.mrb[0].mxu0
      %v3211 = vadd.f32 %v2715, %v3210
      %v3212 = vpop.f32.mrb[0].mxu0
      %3213 = vmatprep.mubr.bf16.mxu0 %v2459
      %3214 = vmatmul.mubr.bf16.gmra.mrb[0].mxu0 %v2458
      %v3215 = vpop.f32.mrb[0].mxu0
      %v3216 = vadd.f32 %v2715, %v3215
      %v3217 = vpop.f32.mrb[0].mxu0
      %v3218 = vpop.f32.mrb[0].mxu0
      %v3219 = vadd.f32 %v2715, %v3218
      %v3220 = vpop.f32.mrb[0].mxu0
      %3221 = vmatprep.mubr.bf16.mxu0 %v2468
      %3222 = vmatmul.mubr.bf16.gmra.mrb[0].mxu0 %v2467
      %v3223 = vpop.f32.mrb[0].mxu0
      %v3224 = vadd.f32 %v2715, %v3223
      %v3225 = vpop.f32.mrb[0].mxu0
      %v3226 = vpop.f32.mrb[0].mxu0
      %v3227 = vadd.f32 %v2715, %v3226
      %v3228 = vpop.f32.mrb[0].mxu0
      %3229 = vmatprep.mubr.bf16.mxu0 %v2477
      %3230 = vmatmul.mubr.bf16.gmra.mrb[0].mxu0 %v2476
      %v3231 = vpop.f32.mrb[0].mxu0
      %v3232 = vadd.f32 %v2715, %v3231
      %v3233 = vpop.f32.mrb[0].mxu0
      %v3234 = vpop.f32.mrb[0].mxu0
      %v3235 = vadd.f32 %v2715, %v3234
      %v3236 = vpop.f32.mrb[0].mxu0
      %3237 = vmatprep.mubr.bf16.mxu0 %v2486
      %3238 = vmatmul.mubr.bf16.gmra.mrb[0].mxu0 %v2485
      %v3239 = vpop.f32.mrb[0].mxu0
      %v3240 = vadd.f32 %v2715, %v3239
      %v3241 = vpop.f32.mrb[0].mxu0
      %v3242 = vpop.f32.mrb[0].mxu0
      %v3243 = vadd.f32 %v2715, %v3242
      %v3244 = vpop.f32.mrb[0].mxu0
      %3245 = vmatprep.mubr.bf16.mxu0 %v2495
      %3246 = vmatmul.mubr.bf16.gmra.mrb[0].mxu0 %v2494
      %v3247 = vpop.f32.mrb[0].mxu0
      %v3248 = vadd.f32 %v2715, %v3247
      %v3249 = vpop.f32.mrb[0].mxu0
      %v3250 = vpop.f32.mrb[0].mxu0
      %v3251 = vadd.f32 %v2715, %v3250
      %v3252 = vpop.f32.mrb[0].mxu0
      %3253 = vmatprep.mubr.bf16.mxu0 %v2504
      %3254 = vmatmul.mubr.bf16.gmra.mrb[0].mxu0 %v2503
      %v3255 = vpop.f32.mrb[0].mxu0
      %v3256 = vadd.f32 %v2715, %v3255
      %v3257 = vpop.f32.mrb[0].mxu0
      %v3258 = vpop.f32.mrb[0].mxu0
      %v3259 = vadd.f32 %v2715, %v3258
      %v3260 = vpop.f32.mrb[0].mxu0
      %3261 = vmatprep.mubr.bf16.mxu0 %v2513
      %3262 = vmatmul.mubr.bf16.gmra.mrb[0].mxu0 %v2512
      %v3263 = vpop.f32.mrb[0].mxu0
      %v3264 = vadd.f32 %v2715, %v3263
      %v3265 = vpop.f32.mrb[0].mxu0
      %v3266 = vpop.f32.mrb[0].mxu0
      %v3267 = vadd.f32 %v2715, %v3266
      %v3268 = vpop.f32.mrb[0].mxu0
      %3269 = vmatprep.mubr.bf16.mxu0 %v2522
      %3270 = vmatmul.mubr.bf16.gmra.mrb[0].mxu0 %v2521
      %v3271 = vpop.f32.mrb[0].mxu0
      %v3272 = vadd.f32 %v2715, %v3271
      %v3273 = vpop.f32.mrb[0].mxu0
      %v3274 = vpop.f32.mrb[0].mxu0
      %v3275 = vadd.f32 %v2715, %v3274
      %v3276 = vpop.f32.mrb[0].mxu0
      %3277 = vmatprep.mubr.bf16.mxu0 %v2531
      %3278 = vmatmul.mubr.bf16.gmra.mrb[0].mxu0 %v2530
      %v3279 = vpop.f32.mrb[0].mxu0
      %v3280 = vadd.f32 %v2715, %v3279
      %v3281 = vpop.f32.mrb[0].mxu0
      %v3282 = vpop.f32.mrb[0].mxu0
      %v3283 = vadd.f32 %v2715, %v3282
      %v3284 = vpop.f32.mrb[0].mxu0
      %3285 = vmatprep.mubr.bf16.mxu0 %v2540
      %3286 = vmatmul.mubr.bf16.gmra.mrb[0].mxu0 %v2539
      %v3287 = vpop.f32.mrb[0].mxu0
      %v3288 = vadd.f32 %v2715, %v3287
      %v3289 = vpop.f32.mrb[0].mxu0
      %v3290 = vpop.f32.mrb[0].mxu0
      %v3291 = vadd.f32 %v2715, %v3290
      %v3292 = vpop.f32.mrb[0].mxu0
      %3293 = vmatprep.mubr.bf16.mxu0 %v2549
      %3294 = vmatmul.mubr.bf16.gmra.mrb[0].mxu0 %v2548
      %v3295 = vpop.f32.mrb[0].mxu0
      %v3296 = vadd.f32 %v2715, %v3295
      %v3297 = vpop.f32.mrb[0].mxu0
      %v3298 = vpop.f32.mrb[0].mxu0
      %v3299 = vadd.f32 %v2715, %v3298
      %v3300 = vpop.f32.mrb[0].mxu0
      %3301 = vmatprep.mubr.bf16.mxu0 %v2558
      %3302 = vmatmul.mubr.bf16.gmra.mrb[0].mxu0 %v2557
      %v3303 = vpop.f32.mrb[0].mxu0
      %v3304 = vadd.f32 %v2715, %v3303
      %v3305 = vpop.f32.mrb[0].mxu0
      %v3306 = vpop.f32.mrb[0].mxu0
      %v3307 = vadd.f32 %v2715, %v3306
      %v3308 = vpop.f32.mrb[0].mxu0
      %3309 = vdwg.mxu0
      %3310 = vmatprep.subr.bf16.mxu0 0
      %3311 = vmatpush1.bf16.msra.mxu0 %v3021
      %3312 = vmatprep.subr.bf16.mxu0 0
      %3313 = vmatpush1.bf16.msra.mxu0 %v3022
      %3314 = vmatprep.subr.bf16.mxu0 0
      %3315 = vmatpush1.bf16.msra.mxu0 %v3023
      %3316 = vmatprep.subr.bf16.mxu0 0
      %3317 = vmatpush1.bf16.msra.mxu0 %v3024
      %3318 = vmatprep.subr.bf16.mxu0 0
      %3319 = vmatpush1.bf16.msra.mxu0 %v3025
      %3320 = vmatprep.subr.bf16.mxu0 0
      %3321 = vmatpush1.bf16.msra.mxu0 %v3026
      %3322 = vmatprep.subr.bf16.mxu0 0
      %3323 = vmatpush1.bf16.msra.mxu0 %v3027
      %3324 = vmatprep.subr.bf16.mxu0 0
      %3325 = vmatpush1.bf16.msra.mxu0 %v3028
      %3326 = vmatprep.subr.bf16.mxu0 0
      %3327 = vmatpush1.bf16.msra.mxu0 %v3029
      %3328 = vmatprep.subr.bf16.mxu0 0
      %3329 = vmatpush1.bf16.msra.mxu0 %v3030
      %3330 = vmatprep.subr.bf16.mxu0 0
      %3331 = vmatpush1.bf16.msra.mxu0 %v3031
      %3332 = vmatprep.subr.bf16.mxu0 0
      %3333 = vmatpush1.bf16.msra.mxu0 %v3032
      %3334 = vmatprep.subr.bf16.mxu0 0
      %3335 = vmatpush1.bf16.msra.mxu0 %v3033
      %3336 = vmatprep.subr.bf16.mxu0 0
      %3337 = vmatpush1.bf16.msra.mxu0 %v3034
      %3338 = vmatprep.subr.bf16.mxu0 0
      %3339 = vmatpush1.bf16.msra.mxu0 %v3035
      %3340 = vmatprep.subr.bf16.mxu0 0
      %3341 = vmatpush1.bf16.msra.mxu0 %v3036
      %3342 = vmatprep.mubr.bf16.mxu0 %v2425
      %3343 = vmatmul.mubr.bf16.gmra.mrb[0].mxu0 %v2424
      %v3344 = vpop.f32.mrb[0].mxu0
      %v3345 = vadd.f32 %v3184, %v3344
      %v3346 = vpop.f32.mrb[0].mxu0
      %v3347 = vpop.f32.mrb[0].mxu0
      %v3348 = vadd.f32 %v3187, %v3347
      %v3349 = vpop.f32.mrb[0].mxu0
      %3350 = vmatprep.mubr.bf16.mxu0 %v2434
      %3351 = vmatmul.mubr.bf16.gmra.mrb[0].mxu0 %v2433
      %v3352 = vpop.f32.mrb[0].mxu0
      %v3353 = vadd.f32 %v3192, %v3352
      %v3354 = vpop.f32.mrb[0].mxu0
      %v3355 = vpop.f32.mrb[0].mxu0
      %v3356 = vadd.f32 %v3195, %v3355
      %v3357 = vpop.f32.mrb[0].mxu0
      %3358 = vmatprep.mubr.bf16.mxu0 %v2443
      %3359 = vmatmul.mubr.bf16.gmra.mrb[0].mxu0 %v2442
      %v3360 = vpop.f32.mrb[0].mxu0
      %v3361 = vadd.f32 %v3200, %v3360
      %v3362 = vpop.f32.mrb[0].mxu0
      %v3363 = vpop.f32.mrb[0].mxu0
      %v3364 = vadd.f32 %v3203, %v3363
      %v3365 = vpop.f32.mrb[0].mxu0
      %3366 = vmatprep.mubr.bf16.mxu0 %v2452
      %3367 = vmatmul.mubr.bf16.gmra.mrb[0].mxu0 %v2451
      %v3368 = vpop.f32.mrb[0].mxu0
      %v3369 = vadd.f32 %v3208, %v3368
      %v3370 = vpop.f32.mrb[0].mxu0
      %v3371 = vpop.f32.mrb[0].mxu0
      %v3372 = vadd.f32 %v3211, %v3371
      %v3373 = vpop.f32.mrb[0].mxu0
      %3374 = vmatprep.mubr.bf16.mxu0 %v2461
      %3375 = vmatmul.mubr.bf16.gmra.mrb[0].mxu0 %v2460
      %v3376 = vpop.f32.mrb[0].mxu0
      %v3377 = vadd.f32 %v3216, %v3376
      %v3378 = vpop.f32.mrb[0].mxu0
      %v3379 = vpop.f32.mrb[0].mxu0
      %v3380 = vadd.f32 %v3219, %v3379
      %v3381 = vpop.f32.mrb[0].mxu0
      %3382 = vmatprep.mubr.bf16.mxu0 %v2470
      %3383 = vmatmul.mubr.bf16.gmra.mrb[0].mxu0 %v2469
      %v3384 = vpop.f32.mrb[0].mxu0
      %v3385 = vadd.f32 %v3224, %v3384
      %v3386 = vpop.f32.mrb[0].mxu0
      %v3387 = vpop.f32.mrb[0].mxu0
      %v3388 = vadd.f32 %v3227, %v3387
      %v3389 = vpop.f32.mrb[0].mxu0
      %3390 = vmatprep.mubr.bf16.mxu0 %v2479
      %3391 = vmatmul.mubr.bf16.gmra.mrb[0].mxu0 %v2478
      %v3392 = vpop.f32.mrb[0].mxu0
      %v3393 = vadd.f32 %v3232, %v3392
      %v3394 = vpop.f32.mrb[0].mxu0
      %v3395 = vpop.f32.mrb[0].mxu0
      %v3396 = vadd.f32 %v3235, %v3395
      %v3397 = vpop.f32.mrb[0].mxu0
      %3398 = vmatprep.mubr.bf16.mxu0 %v2488
      %3399 = vmatmul.mubr.bf16.gmra.mrb[0].mxu0 %v2487
      %v3400 = vpop.f32.mrb[0].mxu0
      %v3401 = vadd.f32 %v3240, %v3400
      %v3402 = vpop.f32.mrb[0].mxu0
      %v3403 = vpop.f32.mrb[0].mxu0
      %v3404 = vadd.f32 %v3243, %v3403
      %v3405 = vpop.f32.mrb[0].mxu0
      %3406 = vmatprep.mubr.bf16.mxu0 %v2497
      %3407 = vmatmul.mubr.bf16.gmra.mrb[0].mxu0 %v2496
      %v3408 = vpop.f32.mrb[0].mxu0
      %v3409 = vadd.f32 %v3248, %v3408
      %v3410 = vpop.f32.mrb[0].mxu0
      %v3411 = vpop.f32.mrb[0].mxu0
      %v3412 = vadd.f32 %v3251, %v3411
      %v3413 = vpop.f32.mrb[0].mxu0
      %3414 = vmatprep.mubr.bf16.mxu0 %v2506
      %3415 = vmatmul.mubr.bf16.gmra.mrb[0].mxu0 %v2505
      %v3416 = vpop.f32.mrb[0].mxu0
      %v3417 = vadd.f32 %v3256, %v3416
      %v3418 = vpop.f32.mrb[0].mxu0
      %v3419 = vpop.f32.mrb[0].mxu0
      %v3420 = vadd.f32 %v3259, %v3419
      %v3421 = vpop.f32.mrb[0].mxu0
      %3422 = vmatprep.mubr.bf16.mxu0 %v2515
      %3423 = vmatmul.mubr.bf16.gmra.mrb[0].mxu0 %v2514
      %v3424 = vpop.f32.mrb[0].mxu0
      %v3425 = vadd.f32 %v3264, %v3424
      %v3426 = vpop.f32.mrb[0].mxu0
      %v3427 = vpop.f32.mrb[0].mxu0
      %v3428 = vadd.f32 %v3267, %v3427
      %v3429 = vpop.f32.mrb[0].mxu0
      %3430 = vmatprep.mubr.bf16.mxu0 %v2524
      %3431 = vmatmul.mubr.bf16.gmra.mrb[0].mxu0 %v2523
      %v3432 = vpop.f32.mrb[0].mxu0
      %v3433 = vadd.f32 %v3272, %v3432
      %v3434 = vpop.f32.mrb[0].mxu0
      %v3435 = vpop.f32.mrb[0].mxu0
      %v3436 = vadd.f32 %v3275, %v3435
      %v3437 = vpop.f32.mrb[0].mxu0
      %3438 = vmatprep.mubr.bf16.mxu0 %v2533
      %3439 = vmatmul.mubr.bf16.gmra.mrb[0].mxu0 %v2532
      %v3440 = vpop.f32.mrb[0].mxu0
      %v3441 = vadd.f32 %v3280, %v3440
      %v3442 = vpop.f32.mrb[0].mxu0
      %v3443 = vpop.f32.mrb[0].mxu0
      %v3444 = vadd.f32 %v3283, %v3443
      %v3445 = vpop.f32.mrb[0].mxu0
      %3446 = vmatprep.mubr.bf16.mxu0 %v2542
      %3447 = vmatmul.mubr.bf16.gmra.mrb[0].mxu0 %v2541
      %v3448 = vpop.f32.mrb[0].mxu0
      %v3449 = vadd.f32 %v3288, %v3448
      %v3450 = vpop.f32.mrb[0].mxu0
      %v3451 = vpop.f32.mrb[0].mxu0
      %v3452 = vadd.f32 %v3291, %v3451
      %v3453 = vpop.f32.mrb[0].mxu0
      %3454 = vmatprep.mubr.bf16.mxu0 %v2551
      %3455 = vmatmul.mubr.bf16.gmra.mrb[0].mxu0 %v2550
      %v3456 = vpop.f32.mrb[0].mxu0
      %v3457 = vadd.f32 %v3296, %v3456
      %v3458 = vpop.f32.mrb[0].mxu0
      %v3459 = vpop.f32.mrb[0].mxu0
      %v3460 = vadd.f32 %v3299, %v3459
      %v3461 = vpop.f32.mrb[0].mxu0
      %3462 = vmatprep.mubr.bf16.mxu0 %v2560
      %3463 = vmatmul.mubr.bf16.gmra.mrb[0].mxu0 %v2559
      %v3464 = vpop.f32.mrb[0].mxu0
      %v3465 = vadd.f32 %v3304, %v3464
      %v3466 = vpop.f32.mrb[0].mxu0
      %v3467 = vpop.f32.mrb[0].mxu0
      %v3468 = vadd.f32 %v3307, %v3467
      %v3469 = vpop.f32.mrb[0].mxu0
      %3470 = vdwg.mxu0
      %3471 = vmatprep.subr.bf16.mxu0 0
      %3472 = vmatpush1.bf16.msra.mxu0 %v3037
      %3473 = vmatprep.subr.bf16.mxu0 0
      %3474 = vmatpush1.bf16.msra.mxu0 %v3038
      %3475 = vmatprep.subr.bf16.mxu0 0
      %3476 = vmatpush1.bf16.msra.mxu0 %v3039
      %3477 = vmatprep.subr.bf16.mxu0 0
      %3478 = vmatpush1.bf16.msra.mxu0 %v3040
      %3479 = vmatprep.subr.bf16.mxu0 0
      %3480 = vmatpush1.bf16.msra.mxu0 %v3041
      %3481 = vmatprep.subr.bf16.mxu0 0
      %3482 = vmatpush1.bf16.msra.mxu0 %v3042
      %3483 = vmatprep.subr.bf16.mxu0 0
      %3484 = vmatpush1.bf16.msra.mxu0 %v3043
      %3485 = vmatprep.subr.bf16.mxu0 0
      %3486 = vmatpush1.bf16.msra.mxu0 %v3044
      %3487 = vmatprep.subr.bf16.mxu0 0
      %3488 = vmatpush1.bf16.msra.mxu0 %v3045
      %3489 = vmatprep.subr.bf16.mxu0 0
      %3490 = vmatpush1.bf16.msra.mxu0 %v3046
      %3491 = vmatprep.subr.bf16.mxu0 0
      %3492 = vmatpush1.bf16.msra.mxu0 %v3047
      %3493 = vmatprep.subr.bf16.mxu0 0
      %3494 = vmatpush1.bf16.msra.mxu0 %v3048
      %3495 = vmatprep.subr.bf16.mxu0 0
      %3496 = vmatpush1.bf16.msra.mxu0 %v3049
      %3497 = vmatprep.subr.bf16.mxu0 0
      %3498 = vmatpush1.bf16.msra.mxu0 %v3050
      %3499 = vmatprep.subr.bf16.mxu0 0
      %3500 = vmatpush1.bf16.msra.mxu0 %v3051
      %3501 = vmatprep.subr.bf16.mxu0 0
      %3502 = vmatpush1.bf16.msra.mxu0 %v3052
      %3503 = vmatprep.mubr.bf16.mxu0 %v2427
      %3504 = vmatmul.mubr.bf16.gmra.mrb[0].mxu0 %v2426
      %v3505 = vpop.f32.mrb[0].mxu0
      %v3506 = vadd.f32 %v3345, %v3505
      %v3507 = vpop.f32.mrb[0].mxu0
      %v3508 = vpop.f32.mrb[0].mxu0
      %v3509 = vadd.f32 %v3348, %v3508
      %v3510 = vpop.f32.mrb[0].mxu0
      %3511 = vmatprep.mubr.bf16.mxu0 %v2436
      %3512 = vmatmul.mubr.bf16.gmra.mrb[0].mxu0 %v2435
      %v3513 = vpop.f32.mrb[0].mxu0
      %v3514 = vadd.f32 %v3353, %v3513
      %v3515 = vpop.f32.mrb[0].mxu0
      %v3516 = vpop.f32.mrb[0].mxu0
      %v3517 = vadd.f32 %v3356, %v3516
      %v3518 = vpop.f32.mrb[0].mxu0
      %3519 = vmatprep.mubr.bf16.mxu0 %v2445
      %3520 = vmatmul.mubr.bf16.gmra.mrb[0].mxu0 %v2444
      %v3521 = vpop.f32.mrb[0].mxu0
      %v3522 = vadd.f32 %v3361, %v3521
      %v3523 = vpop.f32.mrb[0].mxu0
      %v3524 = vpop.f32.mrb[0].mxu0
      %v3525 = vadd.f32 %v3364, %v3524
      %v3526 = vpop.f32.mrb[0].mxu0
      %3527 = vmatprep.mubr.bf16.mxu0 %v2454
      %3528 = vmatmul.mubr.bf16.gmra.mrb[0].mxu0 %v2453
      %v3529 = vpop.f32.mrb[0].mxu0
      %v3530 = vadd.f32 %v3369, %v3529
      %v3531 = vpop.f32.mrb[0].mxu0
      %v3532 = vpop.f32.mrb[0].mxu0
      %v3533 = vadd.f32 %v3372, %v3532
      %v3534 = vpop.f32.mrb[0].mxu0
      %3535 = vmatprep.mubr.bf16.mxu0 %v2463
      %3536 = vmatmul.mubr.bf16.gmra.mrb[0].mxu0 %v2462
      %v3537 = vpop.f32.mrb[0].mxu0
      %v3538 = vadd.f32 %v3377, %v3537
      %v3539 = vpop.f32.mrb[0].mxu0
      %v3540 = vpop.f32.mrb[0].mxu0
      %v3541 = vadd.f32 %v3380, %v3540
      %v3542 = vpop.f32.mrb[0].mxu0
      %3543 = vmatprep.mubr.bf16.mxu0 %v2472
      %3544 = vmatmul.mubr.bf16.gmra.mrb[0].mxu0 %v2471
      %v3545 = vpop.f32.mrb[0].mxu0
      %v3546 = vadd.f32 %v3385, %v3545
      %v3547 = vpop.f32.mrb[0].mxu0
      %v3548 = vpop.f32.mrb[0].mxu0
      %v3549 = vadd.f32 %v3388, %v3548
      %v3550 = vpop.f32.mrb[0].mxu0
      %3551 = vmatprep.mubr.bf16.mxu0 %v2481
      %3552 = vmatmul.mubr.bf16.gmra.mrb[0].mxu0 %v2480
      %v3553 = vpop.f32.mrb[0].mxu0
      %v3554 = vadd.f32 %v3393, %v3553
      %v3555 = vpop.f32.mrb[0].mxu0
      %v3556 = vpop.f32.mrb[0].mxu0
      %v3557 = vadd.f32 %v3396, %v3556
      %v3558 = vpop.f32.mrb[0].mxu0
      %3559 = vmatprep.mubr.bf16.mxu0 %v2490
      %3560 = vmatmul.mubr.bf16.gmra.mrb[0].mxu0 %v2489
      %v3561 = vpop.f32.mrb[0].mxu0
      %v3562 = vadd.f32 %v3401, %v3561
      %v3563 = vpop.f32.mrb[0].mxu0
      %v3564 = vpop.f32.mrb[0].mxu0
      %v3565 = vadd.f32 %v3404, %v3564
      %v3566 = vpop.f32.mrb[0].mxu0
      %3567 = vmatprep.mubr.bf16.mxu0 %v2499
      %3568 = vmatmul.mubr.bf16.gmra.mrb[0].mxu0 %v2498
      %v3569 = vpop.f32.mrb[0].mxu0
      %v3570 = vadd.f32 %v3409, %v3569
      %v3571 = vpop.f32.mrb[0].mxu0
      %v3572 = vpop.f32.mrb[0].mxu0
      %v3573 = vadd.f32 %v3412, %v3572
      %v3574 = vpop.f32.mrb[0].mxu0
      %3575 = vmatprep.mubr.bf16.mxu0 %v2508
      %3576 = vmatmul.mubr.bf16.gmra.mrb[0].mxu0 %v2507
      %v3577 = vpop.f32.mrb[0].mxu0
      %v3578 = vadd.f32 %v3417, %v3577
      %v3579 = vpop.f32.mrb[0].mxu0
      %v3580 = vpop.f32.mrb[0].mxu0
      %v3581 = vadd.f32 %v3420, %v3580
      %v3582 = vpop.f32.mrb[0].mxu0
      %3583 = vmatprep.mubr.bf16.mxu0 %v2517
      %3584 = vmatmul.mubr.bf16.gmra.mrb[0].mxu0 %v2516
      %v3585 = vpop.f32.mrb[0].mxu0
      %v3586 = vadd.f32 %v3425, %v3585
      %v3587 = vpop.f32.mrb[0].mxu0
      %v3588 = vpop.f32.mrb[0].mxu0
      %v3589 = vadd.f32 %v3428, %v3588
      %v3590 = vpop.f32.mrb[0].mxu0
      %3591 = vmatprep.mubr.bf16.mxu0 %v2526
      %3592 = vmatmul.mubr.bf16.gmra.mrb[0].mxu0 %v2525
      %v3593 = vpop.f32.mrb[0].mxu0
      %v3594 = vadd.f32 %v3433, %v3593
      %v3595 = vpop.f32.mrb[0].mxu0
      %v3596 = vpop.f32.mrb[0].mxu0
      %v3597 = vadd.f32 %v3436, %v3596
      %v3598 = vpop.f32.mrb[0].mxu0
      %3599 = vmatprep.mubr.bf16.mxu0 %v2535
      %3600 = vmatmul.mubr.bf16.gmra.mrb[0].mxu0 %v2534
      %v3601 = vpop.f32.mrb[0].mxu0
      %v3602 = vadd.f32 %v3441, %v3601
      %v3603 = vpop.f32.mrb[0].mxu0
      %v3604 = vpop.f32.mrb[0].mxu0
      %v3605 = vadd.f32 %v3444, %v3604
      %v3606 = vpop.f32.mrb[0].mxu0
      %3607 = vmatprep.mubr.bf16.mxu0 %v2544
      %3608 = vmatmul.mubr.bf16.gmra.mrb[0].mxu0 %v2543
      %v3609 = vpop.f32.mrb[0].mxu0
      %v3610 = vadd.f32 %v3449, %v3609
      %v3611 = vpop.f32.mrb[0].mxu0
      %v3612 = vpop.f32.mrb[0].mxu0
      %v3613 = vadd.f32 %v3452, %v3612
      %v3614 = vpop.f32.mrb[0].mxu0
      %3615 = vmatprep.mubr.bf16.mxu0 %v2553
      %3616 = vmatmul.mubr.bf16.gmra.mrb[0].mxu0 %v2552
      %v3617 = vpop.f32.mrb[0].mxu0
      %v3618 = vadd.f32 %v3457, %v3617
      %v3619 = vpop.f32.mrb[0].mxu0
      %v3620 = vpop.f32.mrb[0].mxu0
      %v3621 = vadd.f32 %v3460, %v3620
      %v3622 = vpop.f32.mrb[0].mxu0
      %3623 = vmatprep.mubr.bf16.mxu0 %v2562
      %3624 = vmatmul.mubr.bf16.gmra.mrb[0].mxu0 %v2561
      %v3625 = vpop.f32.mrb[0].mxu0
      %v3626 = vadd.f32 %v3465, %v3625
      %v3627 = vpop.f32.mrb[0].mxu0
      %v3628 = vpop.f32.mrb[0].mxu0
      %v3629 = vadd.f32 %v3468, %v3628
      %v3630 = vpop.f32.mrb[0].mxu0
      %3631 = vdwg.mxu0
      %3632 = vmatprep.subr.bf16.mxu0 0
      %3633 = vmatpush1.bf16.msra.mxu0 %v3053
      %3634 = vmatprep.subr.bf16.mxu0 0
      %3635 = vmatpush1.bf16.msra.mxu0 %v3054
      %3636 = vmatprep.subr.bf16.mxu0 0
      %3637 = vmatpush1.bf16.msra.mxu0 %v3055
      %3638 = vmatprep.subr.bf16.mxu0 0
      %3639 = vmatpush1.bf16.msra.mxu0 %v3056
      %3640 = vmatprep.subr.bf16.mxu0 0
      %3641 = vmatpush1.bf16.msra.mxu0 %v3057
      %3642 = vmatprep.subr.bf16.mxu0 0
      %3643 = vmatpush1.bf16.msra.mxu0 %v3058
      %3644 = vmatprep.subr.bf16.mxu0 0
      %3645 = vmatpush1.bf16.msra.mxu0 %v3059
      %3646 = vmatprep.subr.bf16.mxu0 0
      %3647 = vmatpush1.bf16.msra.mxu0 %v3060
      %3648 = vmatprep.subr.bf16.mxu0 0
      %3649 = vmatpush1.bf16.msra.mxu0 %v3061
      %3650 = vmatprep.subr.bf16.mxu0 0
      %3651 = vmatpush1.bf16.msra.mxu0 %v3062
      %3652 = vmatprep.subr.bf16.mxu0 0
      %3653 = vmatpush1.bf16.msra.mxu0 %v3063
      %3654 = vmatprep.subr.bf16.mxu0 0
      %3655 = vmatpush1.bf16.msra.mxu0 %v3064
      %3656 = vmatprep.subr.bf16.mxu0 0
      %3657 = vmatpush1.bf16.msra.mxu0 %v3065
      %3658 = vmatprep.subr.bf16.mxu0 0
      %3659 = vmatpush1.bf16.msra.mxu0 %v3066
      %3660 = vmatprep.subr.bf16.mxu0 0
      %3661 = vmatpush1.bf16.msra.mxu0 %v3067
      %3662 = vmatprep.subr.bf16.mxu0 0
      %3663 = vmatpush1.bf16.msra.mxu0 %v3068
      %3664 = vmatprep.mubr.bf16.mxu0 %v2429
      %3665 = vmatmul.mubr.bf16.gmra.mrb[0].mxu0 %v2428
      %v3666 = vpop.f32.mrb[0].mxu0
      %v3667 = vadd.f32 %v3506, %v3666
      %v3668 = vpop.f32.mrb[0].mxu0
      %v3669 = vpop.f32.mrb[0].mxu0
      %v3670 = vadd.f32 %v3509, %v3669
      %v3671 = vpop.f32.mrb[0].mxu0
      %3672 = vmatprep.mubr.bf16.mxu0 %v2438
      %3673 = vmatmul.mubr.bf16.gmra.mrb[0].mxu0 %v2437
      %v3674 = vpop.f32.mrb[0].mxu0
      %v3675 = vadd.f32 %v3514, %v3674
      %v3676 = vpop.f32.mrb[0].mxu0
      %v3677 = vpop.f32.mrb[0].mxu0
      %v3678 = vadd.f32 %v3517, %v3677
      %v3679 = vpop.f32.mrb[0].mxu0
      %3680 = vmatprep.mubr.bf16.mxu0 %v2447
      %3681 = vmatmul.mubr.bf16.gmra.mrb[0].mxu0 %v2446
      %v3682 = vpop.f32.mrb[0].mxu0
      %v3683 = vadd.f32 %v3522, %v3682
      %v3684 = vpop.f32.mrb[0].mxu0
      %v3685 = vpop.f32.mrb[0].mxu0
      %v3686 = vadd.f32 %v3525, %v3685
      %v3687 = vpop.f32.mrb[0].mxu0
      %3688 = vmatprep.mubr.bf16.mxu0 %v2456
      %3689 = vmatmul.mubr.bf16.gmra.mrb[0].mxu0 %v2455
      %v3690 = vpop.f32.mrb[0].mxu0
      %v3691 = vadd.f32 %v3530, %v3690
      %v3692 = vpop.f32.mrb[0].mxu0
      %v3693 = vpop.f32.mrb[0].mxu0
      %v3694 = vadd.f32 %v3533, %v3693
      %v3695 = vpop.f32.mrb[0].mxu0
      %3696 = vmatprep.mubr.bf16.mxu0 %v2465
      %3697 = vmatmul.mubr.bf16.gmra.mrb[0].mxu0 %v2464
      %v3698 = vpop.f32.mrb[0].mxu0
      %v3699 = vadd.f32 %v3538, %v3698
      %v3700 = vpop.f32.mrb[0].mxu0
      %v3701 = vpop.f32.mrb[0].mxu0
      %v3702 = vadd.f32 %v3541, %v3701
      %v3703 = vpop.f32.mrb[0].mxu0
      %3704 = vmatprep.mubr.bf16.mxu0 %v2474
      %3705 = vmatmul.mubr.bf16.gmra.mrb[0].mxu0 %v2473
      %v3706 = vpop.f32.mrb[0].mxu0
      %v3707 = vadd.f32 %v3546, %v3706
      %v3708 = vpop.f32.mrb[0].mxu0
      %v3709 = vpop.f32.mrb[0].mxu0
      %v3710 = vadd.f32 %v3549, %v3709
      %v3711 = vpop.f32.mrb[0].mxu0
      %3712 = vmatprep.mubr.bf16.mxu0 %v2483
      %3713 = vmatmul.mubr.bf16.gmra.mrb[0].mxu0 %v2482
      %v3714 = vpop.f32.mrb[0].mxu0
      %v3715 = vadd.f32 %v3554, %v3714
      %v3716 = vpop.f32.mrb[0].mxu0
      %v3717 = vpop.f32.mrb[0].mxu0
      %v3718 = vadd.f32 %v3557, %v3717
      %v3719 = vpop.f32.mrb[0].mxu0
      %3720 = vmatprep.mubr.bf16.mxu0 %v2492
      %3721 = vmatmul.mubr.bf16.gmra.mrb[0].mxu0 %v2491
      %v3722 = vpop.f32.mrb[0].mxu0
      %v3723 = vadd.f32 %v3562, %v3722
      %v3724 = vpop.f32.mrb[0].mxu0
      %v3725 = vpop.f32.mrb[0].mxu0
      %v3726 = vadd.f32 %v3565, %v3725
      %v3727 = vpop.f32.mrb[0].mxu0
      %3728 = vmatprep.mubr.bf16.mxu0 %v2501
      %3729 = vmatmul.mubr.bf16.gmra.mrb[0].mxu0 %v2500
      %v3730 = vpop.f32.mrb[0].mxu0
      %v3731 = vadd.f32 %v3570, %v3730
      %v3732 = vpop.f32.mrb[0].mxu0
      %v3733 = vpop.f32.mrb[0].mxu0
      %v3734 = vadd.f32 %v3573, %v3733
      %v3735 = vpop.f32.mrb[0].mxu0
      %3736 = vmatprep.mubr.bf16.mxu0 %v2510
      %3737 = vmatmul.mubr.bf16.gmra.mrb[0].mxu0 %v2509
      %v3738 = vpop.f32.mrb[0].mxu0
      %v3739 = vadd.f32 %v3578, %v3738
      %v3740 = vpop.f32.mrb[0].mxu0
      %v3741 = vpop.f32.mrb[0].mxu0
      %v3742 = vadd.f32 %v3581, %v3741
      %v3743 = vpop.f32.mrb[0].mxu0
      %3744 = vmatprep.mubr.bf16.mxu0 %v2519
      %3745 = vmatmul.mubr.bf16.gmra.mrb[0].mxu0 %v2518
      %v3746 = vpop.f32.mrb[0].mxu0
      %v3747 = vadd.f32 %v3586, %v3746
      %v3748 = vpop.f32.mrb[0].mxu0
      %v3749 = vpop.f32.mrb[0].mxu0
      %v3750 = vadd.f32 %v3589, %v3749
      %v3751 = vpop.f32.mrb[0].mxu0
      %3752 = vmatprep.mubr.bf16.mxu0 %v2528
      %3753 = vmatmul.mubr.bf16.gmra.mrb[0].mxu0 %v2527
      %v3754 = vpop.f32.mrb[0].mxu0
      %v3755 = vadd.f32 %v3594, %v3754
      %v3756 = vpop.f32.mrb[0].mxu0
      %v3757 = vpop.f32.mrb[0].mxu0
      %v3758 = vadd.f32 %v3597, %v3757
      %v3759 = vpop.f32.mrb[0].mxu0
      %3760 = vmatprep.mubr.bf16.mxu0 %v2537
      %3761 = vmatmul.mubr.bf16.gmra.mrb[0].mxu0 %v2536
      %v3762 = vpop.f32.mrb[0].mxu0
      %v3763 = vadd.f32 %v3602, %v3762
      %v3764 = vpop.f32.mrb[0].mxu0
      %v3765 = vpop.f32.mrb[0].mxu0
      %v3766 = vadd.f32 %v3605, %v3765
      %v3767 = vpop.f32.mrb[0].mxu0
      %3768 = vmatprep.mubr.bf16.mxu0 %v2546
      %3769 = vmatmul.mubr.bf16.gmra.mrb[0].mxu0 %v2545
      %v3770 = vpop.f32.mrb[0].mxu0
      %v3771 = vadd.f32 %v3610, %v3770
      %v3772 = vpop.f32.mrb[0].mxu0
      %v3773 = vpop.f32.mrb[0].mxu0
      %v3774 = vadd.f32 %v3613, %v3773
      %v3775 = vpop.f32.mrb[0].mxu0
      %3776 = vmatprep.mubr.bf16.mxu0 %v2555
      %3777 = vmatmul.mubr.bf16.gmra.mrb[0].mxu0 %v2554
      %v3778 = vpop.f32.mrb[0].mxu0
      %v3779 = vadd.f32 %v3618, %v3778
      %v3780 = vpop.f32.mrb[0].mxu0
      %v3781 = vpop.f32.mrb[0].mxu0
      %v3782 = vadd.f32 %v3621, %v3781
      %v3783 = vpop.f32.mrb[0].mxu0
      %3784 = vmatprep.mubr.bf16.mxu0 %v2564
      %3785 = vmatmul.mubr.bf16.gmra.mrb[0].mxu0 %v2563
      %v3786 = vpop.f32.mrb[0].mxu0
      %v3787 = vadd.f32 %v3626, %v3786
      %v3788 = vpop.f32.mrb[0].mxu0
      %v3789 = vpop.f32.mrb[0].mxu0
      %v3790 = vadd.f32 %v3629, %v3789
      %v3791 = vpop.f32.mrb[0].mxu0
      %3792 = vdwg.mxu0
      %3793 = vmatprep.subr.bf16.mxu0 0
      %3794 = vmatpush1.bf16.msra.mxu0 %v3069
      %3795 = vmatprep.subr.bf16.mxu0 0
      %3796 = vmatpush1.bf16.msra.mxu0 %v3070
      %3797 = vmatprep.subr.bf16.mxu0 0
      %3798 = vmatpush1.bf16.msra.mxu0 %v3071
      %3799 = vmatprep.subr.bf16.mxu0 0
      %3800 = vmatpush1.bf16.msra.mxu0 %v3072
      %3801 = vmatprep.subr.bf16.mxu0 0
      %3802 = vmatpush1.bf16.msra.mxu0 %v3073
      %3803 = vmatprep.subr.bf16.mxu0 0
      %3804 = vmatpush1.bf16.msra.mxu0 %v3074
      %3805 = vmatprep.subr.bf16.mxu0 0
      %3806 = vmatpush1.bf16.msra.mxu0 %v3075
      %3807 = vmatprep.subr.bf16.mxu0 0
      %3808 = vmatpush1.bf16.msra.mxu0 %v3076
      %3809 = vmatprep.subr.bf16.mxu0 0
      %3810 = vmatpush1.bf16.msra.mxu0 0
      %3811 = vmatprep.subr.bf16.mxu0 0
      %3812 = vmatpush1.bf16.msra.mxu0 0
      %3813 = vmatprep.subr.bf16.mxu0 0
      %3814 = vmatpush1.bf16.msra.mxu0 0
      %3815 = vmatprep.subr.bf16.mxu0 0
      %3816 = vmatpush1.bf16.msra.mxu0 0
      %3817 = vmatprep.subr.bf16.mxu0 0
      %3818 = vmatpush1.bf16.msra.mxu0 0
      %3819 = vmatprep.subr.bf16.mxu0 0
      %3820 = vmatpush1.bf16.msra.mxu0 0
      %3821 = vmatprep.subr.bf16.mxu0 0
      %3822 = vmatpush1.bf16.msra.mxu0 0
      %3823 = vmatprep.subr.bf16.mxu0 0
      %3824 = vmatpush1.bf16.msra.mxu0 0
      %3825 = vmatprep.mubr.bf16.mxu0 0
      %3826 = vmatmul.mubr.bf16.gmra.mrb[0].mxu0 %v2430
      %v3827 = vpop.f32.mrb[0].mxu0
      %v3828 = vadd.f32 %v3667, %v3827
      %v3829 = vpop.f32.mrb[0].mxu0
      %v3830 = vpop.f32.mrb[0].mxu0
      %v3831 = vadd.f32 %v3670, %v3830
      %v3832 = vpop.f32.mrb[0].mxu0
      %3833 = vmatprep.mubr.bf16.mxu0 0
      %3834 = vmatmul.mubr.bf16.gmra.mrb[0].mxu0 %v2439
      %v3835 = vpop.f32.mrb[0].mxu0
      %v3836 = vadd.f32 %v3675, %v3835
      %v3837 = vpop.f32.mrb[0].mxu0
      %v3838 = vpop.f32.mrb[0].mxu0
      %v3839 = vadd.f32 %v3678, %v3838
      %v3840 = vpop.f32.mrb[0].mxu0
      %3841 = vmatprep.mubr.bf16.mxu0 0
      %3842 = vmatmul.mubr.bf16.gmra.mrb[0].mxu0 %v2448
      %v3843 = vpop.f32.mrb[0].mxu0
      %v3844 = vadd.f32 %v3683, %v3843
      %v3845 = vpop.f32.mrb[0].mxu0
      %v3846 = vpop.f32.mrb[0].mxu0
      %v3847 = vadd.f32 %v3686, %v3846
      %v3848 = vpop.f32.mrb[0].mxu0
      %3849 = vmatprep.mubr.bf16.mxu0 0
      %3850 = vmatmul.mubr.bf16.gmra.mrb[0].mxu0 %v2457
      %v3851 = vpop.f32.mrb[0].mxu0
      %v3852 = vadd.f32 %v3691, %v3851
      %v3853 = vpop.f32.mrb[0].mxu0
      %v3854 = vpop.f32.mrb[0].mxu0
      %v3855 = vadd.f32 %v3694, %v3854
      %v3856 = vpop.f32.mrb[0].mxu0
      %3857 = vmatprep.mubr.bf16.mxu0 0
      %3858 = vmatmul.mubr.bf16.gmra.mrb[0].mxu0 %v2466
      %v3859 = vpop.f32.mrb[0].mxu0
      %v3860 = vadd.f32 %v3699, %v3859
      %v3861 = vpop.f32.mrb[0].mxu0
      %v3862 = vpop.f32.mrb[0].mxu0
      %v3863 = vadd.f32 %v3702, %v3862
      %v3864 = vpop.f32.mrb[0].mxu0
      %3865 = vmatprep.mubr.bf16.mxu0 0
      %3866 = vmatmul.mubr.bf16.gmra.mrb[0].mxu0 %v2475
      %v3867 = vpop.f32.mrb[0].mxu0
      %v3868 = vadd.f32 %v3707, %v3867
      %v3869 = vpop.f32.mrb[0].mxu0
      %v3870 = vpop.f32.mrb[0].mxu0
      %v3871 = vadd.f32 %v3710, %v3870
      %v3872 = vpop.f32.mrb[0].mxu0
      %3873 = vmatprep.mubr.bf16.mxu0 0
      %3874 = vmatmul.mubr.bf16.gmra.mrb[0].mxu0 %v2484
      %v3875 = vpop.f32.mrb[0].mxu0
      %v3876 = vadd.f32 %v3715, %v3875
      %v3877 = vpop.f32.mrb[0].mxu0
      %v3878 = vpop.f32.mrb[0].mxu0
      %v3879 = vadd.f32 %v3718, %v3878
      %v3880 = vpop.f32.mrb[0].mxu0
      %3881 = vmatprep.mubr.bf16.mxu0 0
      %3882 = vmatmul.mubr.bf16.gmra.mrb[0].mxu0 %v2493
      %v3883 = vpop.f32.mrb[0].mxu0
      %v3884 = vadd.f32 %v3723, %v3883
      %v3885 = vpop.f32.mrb[0].mxu0
      %v3886 = vpop.f32.mrb[0].mxu0
      %v3887 = vadd.f32 %v3726, %v3886
      %v3888 = vpop.f32.mrb[0].mxu0
      %3889 = vmatprep.mubr.bf16.mxu0 0
      %3890 = vmatmul.mubr.bf16.gmra.mrb[0].mxu0 %v2502
      %v3891 = vpop.f32.mrb[0].mxu0
      %v3892 = vadd.f32 %v3731, %v3891
      %v3893 = vpop.f32.mrb[0].mxu0
      %v3894 = vpop.f32.mrb[0].mxu0
      %v3895 = vadd.f32 %v3734, %v3894
      %v3896 = vpop.f32.mrb[0].mxu0
      %3897 = vmatprep.mubr.bf16.mxu0 0
      %3898 = vmatmul.mubr.bf16.gmra.mrb[0].mxu0 %v2511
      %v3899 = vpop.f32.mrb[0].mxu0
      %v3900 = vadd.f32 %v3739, %v3899
      %v3901 = vpop.f32.mrb[0].mxu0
      %v3902 = vpop.f32.mrb[0].mxu0
      %v3903 = vadd.f32 %v3742, %v3902
      %v3904 = vpop.f32.mrb[0].mxu0
      %3905 = vmatprep.mubr.bf16.mxu0 0
      %3906 = vmatmul.mubr.bf16.gmra.mrb[0].mxu0 %v2520
      %v3907 = vpop.f32.mrb[0].mxu0
      %v3908 = vadd.f32 %v3747, %v3907
      %v3909 = vpop.f32.mrb[0].mxu0
      %v3910 = vpop.f32.mrb[0].mxu0
      %v3911 = vadd.f32 %v3750, %v3910
      %v3912 = vpop.f32.mrb[0].mxu0
      %3913 = vmatprep.mubr.bf16.mxu0 0
      %3914 = vmatmul.mubr.bf16.gmra.mrb[0].mxu0 %v2529
      %v3915 = vpop.f32.mrb[0].mxu0
      %v3916 = vadd.f32 %v3755, %v3915
      %v3917 = vpop.f32.mrb[0].mxu0
      %v3918 = vpop.f32.mrb[0].mxu0
      %v3919 = vadd.f32 %v3758, %v3918
      %v3920 = vpop.f32.mrb[0].mxu0
      %3921 = vmatprep.mubr.bf16.mxu0 0
      %3922 = vmatmul.mubr.bf16.gmra.mrb[0].mxu0 %v2538
      %v3923 = vpop.f32.mrb[0].mxu0
      %v3924 = vadd.f32 %v3763, %v3923
      %v3925 = vpop.f32.mrb[0].mxu0
      %v3926 = vpop.f32.mrb[0].mxu0
      %v3927 = vadd.f32 %v3766, %v3926
      %v3928 = vpop.f32.mrb[0].mxu0
      %3929 = vmatprep.mubr.bf16.mxu0 0
      %3930 = vmatmul.mubr.bf16.gmra.mrb[0].mxu0 %v2547
      %v3931 = vpop.f32.mrb[0].mxu0
      %v3932 = vadd.f32 %v3771, %v3931
      %v3933 = vpop.f32.mrb[0].mxu0
      %v3934 = vpop.f32.mrb[0].mxu0
      %v3935 = vadd.f32 %v3774, %v3934
      %v3936 = vpop.f32.mrb[0].mxu0
      %3937 = vmatprep.mubr.bf16.mxu0 0
      %3938 = vmatmul.mubr.bf16.gmra.mrb[0].mxu0 %v2556
      %v3939 = vpop.f32.mrb[0].mxu0
      %v3940 = vadd.f32 %v3779, %v3939
      %v3941 = vpop.f32.mrb[0].mxu0
      %v3942 = vpop.f32.mrb[0].mxu0
      %v3943 = vadd.f32 %v3782, %v3942
      %v3944 = vpop.f32.mrb[0].mxu0
      %3945 = vmatprep.mubr.bf16.mxu0 0
      %3946 = vmatmul.mubr.bf16.gmra.mrb[0].mxu0 %v2565
      %v3947 = vpop.f32.mrb[0].mxu0
      %v3948 = vadd.f32 %v3787, %v3947
      %v3949 = vpop.f32.mrb[0].mxu0
      %v3950 = vpop.f32.mrb[0].mxu0
      %v3951 = vadd.f32 %v3790, %v3950
      %v3952 = vpop.f32.mrb[0].mxu0
      %3953 = vdwg.mxu0
      %3954 = vst [vmem:[%s316] sm:$0xff] %v3828
      %3955 = vst [vmem:[%s316 + $0x8] sm:$0xff] %v3831
      %3956 = vst [vmem:[%s316 + $0x10] sm:$0xff] %v3836
      %3957 = vst [vmem:[%s316 + $0x18] sm:$0xff] %v3839
      %3958 = vst [vmem:[%s316 + $0x20] sm:$0xff] %v3844
      %3959 = vst [vmem:[%s316 + $0x28] sm:$0xff] %v3847
      %3960 = vst [vmem:[%s316 + $0x30] sm:$0xff] %v3852
      %3961 = vst [vmem:[%s316 + $0x38] sm:$0xff] %v3855
      %3962 = vst [vmem:[%s316 + $0x40] sm:$0xff] %v3860
      %3963 = vst [vmem:[%s316 + $0x48] sm:$0xff] %v3863
      %3964 = vst [vmem:[%s316 + $0x50] sm:$0xff] %v3868
      %3965 = vst [vmem:[%s316 + $0x58] sm:$0xff] %v3871
      %3966 = vst [vmem:[%s316 + $0x60] sm:$0xff] %v3876
      %3967 = vst [vmem:[%s316 + $0x68] sm:$0xff] %v3879
      %3968 = vst [vmem:[%s316 + $0x70] sm:$0xff] %v3884
      %3969 = vst [vmem:[%s316 + $0x78] sm:$0xff] %v3887
      %3970 = vst [vmem:[%s316 + $0x80] sm:$0xff] %v3892
      %3971 = vst [vmem:[%s316 + $0x88] sm:$0xff] %v3895
      %3972 = vst [vmem:[%s316 + $0x90] sm:$0xff] %v3900
      %3973 = vst [vmem:[%s316 + $0x98] sm:$0xff] %v3903
      %3974 = vst [vmem:[%s316 + $0xa0] sm:$0xff] %v3908
      %3975 = vst [vmem:[%s316 + $0xa8] sm:$0xff] %v3911
      %3976 = vst [vmem:[%s316 + $0xb0] sm:$0xff] %v3916
      %3977 = vst [vmem:[%s316 + $0xb8] sm:$0xff] %v3919
      %3978 = vst [vmem:[%s316 + $0xc0] sm:$0xff] %v3924
      %3979 = vst [vmem:[%s316 + $0xc8] sm:$0xff] %v3927
      %3980 = vst [vmem:[%s316 + $0xd0] sm:$0xff] %v3932
      %3981 = vst [vmem:[%s316 + $0xd8] sm:$0xff] %v3935
      %3982 = vst [vmem:[%s316 + $0xe0] sm:$0xff] %v3940
      %3983 = vst [vmem:[%s316 + $0xe8] sm:$0xff] %v3943
      %3984 = vst [vmem:[%s316 + $0xf0] sm:$0xff] %v3948
      %3985 = vst [vmem:[%s316 + $0xf8] sm:$0xff] %v3951
      %v3986 = vadd.f32 %v3828, %v3831
      %v3987 = vadd.f32 %v3986, %v3836
      %v3988 = vadd.f32 %v3987, %v3839
      %v3989 = vadd.f32 %v3988, %v3844
      %v3990 = vadd.f32 %v3989, %v3847
      %v3991 = vadd.f32 %v3990, %v3852
      %v3992 = vadd.f32 %v3991, %v3855
      %v3993 = vadd.f32 %v3992, %v3860
      %v3994 = vadd.f32 %v3993, %v3863
      %v3995 = vadd.f32 %v3994, %v3868
      %v3996 = vadd.f32 %v3995, %v3871
      %v3997 = vadd.f32 %v3996, %v3876
      %v3998 = vadd.f32 %v3997, %v3879
      %v3999 = vadd.f32 %v3998, %v3884
      %v4000 = vadd.f32 %v3999, %v3887
      %v4001 = vadd.f32 %v4000, %v3892
      %v4002 = vadd.f32 %v4001, %v3895
      %v4003 = vadd.f32 %v4002, %v3900
      %v4004 = vadd.f32 %v4003, %v3903
      %v4005 = vadd.f32 %v4004, %v3908
      %v4006 = vadd.f32 %v4005, %v3911
      %v4007 = vadd.f32 %v4006, %v3916
      %v4008 = vadd.f32 %v4007, %v3919
      %v4009 = vadd.f32 %v4008, %v3924
      %v4010 = vadd.f32 %v4009, %v3927
      %v4011 = vadd.f32 %v4010, %v3932
      %v4012 = vadd.f32 %v4011, %v3935
      %v4013 = vadd.f32 %v4012, %v3940
      %v4014 = vadd.f32 %v4013, %v3943
      %v4015 = vadd.f32 %v4014, %v3948
      %v4016 = vadd.f32 %v4015, %v3951
      %v4017 = vrot.slane %v4016, 4
      %v4018 = vadd.f32 %v4016, %v4017
      %v4019 = vrot.slane %v4018, 2
      %v4020 = vadd.f32 %v4018, %v4019
      %v4021 = vrot.slane %v4020, 1
      %v4022 = vadd.f32 %v4020, %v4021
      %4023 = vst [vmem:[%s319] sm:$0x1] %v4022
      %v4024 = vmul.f32 %v3828, %v3828
      %v4025 = vmul.f32 %v3831, %v3831
      %v4026 = vmul.f32 %v3836, %v3836
      %v4027 = vmul.f32 %v3839, %v3839
      %v4028 = vmul.f32 %v3844, %v3844
      %v4029 = vmul.f32 %v3847, %v3847
      %v4030 = vmul.f32 %v3852, %v3852
      %v4031 = vmul.f32 %v3855, %v3855
      %v4032 = vmul.f32 %v3860, %v3860
      %v4033 = vmul.f32 %v3863, %v3863
      %v4034 = vmul.f32 %v3868, %v3868
      %v4035 = vmul.f32 %v3871, %v3871
      %v4036 = vmul.f32 %v3876, %v3876
      %v4037 = vmul.f32 %v3879, %v3879
      %v4038 = vmul.f32 %v3884, %v3884
      %v4039 = vmul.f32 %v3887, %v3887
      %v4040 = vmul.f32 %v3892, %v3892
      %v4041 = vmul.f32 %v3895, %v3895
      %v4042 = vmul.f32 %v3900, %v3900
      %v4043 = vmul.f32 %v3903, %v3903
      %v4044 = vmul.f32 %v3908, %v3908
      %v4045 = vmul.f32 %v3911, %v3911
      %v4046 = vmul.f32 %v3916, %v3916
      %v4047 = vmul.f32 %v3919, %v3919
      %v4048 = vmul.f32 %v3924, %v3924
      %v4049 = vmul.f32 %v3927, %v3927
      %v4050 = vmul.f32 %v3932, %v3932
      %v4051 = vmul.f32 %v3935, %v3935
      %v4052 = vmul.f32 %v3940, %v3940
      %v4053 = vmul.f32 %v3943, %v3943
      %v4054 = vmul.f32 %v3948, %v3948
      %v4055 = vmul.f32 %v3951, %v3951
      %v4056 = vadd.f32 %v4024, %v4025
      %v4057 = vadd.f32 %v4056, %v4026
      %v4058 = vadd.f32 %v4057, %v4027
      %v4059 = vadd.f32 %v4058, %v4028
      %v4060 = vadd.f32 %v4059, %v4029
      %v4061 = vadd.f32 %v4060, %v4030
      %v4062 = vadd.f32 %v4061, %v4031
      %v4063 = vadd.f32 %v4062, %v4032
      %v4064 = vadd.f32 %v4063, %v4033
      %v4065 = vadd.f32 %v4064, %v4034
      %v4066 = vadd.f32 %v4065, %v4035
      %v4067 = vadd.f32 %v4066, %v4036
      %v4068 = vadd.f32 %v4067, %v4037
      %v4069 = vadd.f32 %v4068, %v4038
      %v4070 = vadd.f32 %v4069, %v4039
      %v4071 = vadd.f32 %v4070, %v4040
      %v4072 = vadd.f32 %v4071, %v4041
      %v4073 = vadd.f32 %v4072, %v4042
      %v4074 = vadd.f32 %v4073, %v4043
      %v4075 = vadd.f32 %v4074, %v4044
      %v4076 = vadd.f32 %v4075, %v4045
      %v4077 = vadd.f32 %v4076, %v4046
      %v4078 = vadd.f32 %v4077, %v4047
      %v4079 = vadd.f32 %v4078, %v4048
      %v4080 = vadd.f32 %v4079, %v4049
      %v4081 = vadd.f32 %v4080, %v4050
      %v4082 = vadd.f32 %v4081, %v4051
      %v4083 = vadd.f32 %v4082, %v4052
      %v4084 = vadd.f32 %v4083, %v4053
      %v4085 = vadd.f32 %v4084, %v4054
      %v4086 = vadd.f32 %v4085, %v4055
      %v4087 = vrot.slane %v4086, 4
      %v4088 = vadd.f32 %v4086, %v4087
      %v4089 = vrot.slane %v4088, 2
      %v4090 = vadd.f32 %v4088, %v4089
      %v4091 = vrot.slane %v4090, 1
      %v4092 = vadd.f32 %v4090, %v4091
      %4093 = vst [vmem:[%s322] sm:$0x1] %v4092
      %p4094 = scmp.lt.s32.totalorder %s20, 1
      %s4095 = scalar_select %p4094, %s20, 1
      %s4096 = smul.addr %s4095, 32
      %s4097 = smul.addr %s4096, 8
      %s4098 = scalar_lea.vmem %s6, %s4097
      %p4099 = scmp.lt.s32.totalorder %s20, 1
      %s4100 = scalar_select %p4099, %s20, 1
      %s4101 = scalar_lea.vmem %s7, %s4100
      %p4102 = scmp.lt.s32.totalorder %s20, 1
      %s4103 = scalar_select %p4102, %s20, 1
      %s4104 = scalar_lea.vmem %s8, %s4103
      // Predicated region
      $region45: #{conv_block_forward.3} parent=43 // pred_check
        %p4105 = pneg %p169
      $region46: #{conv_block_forward.3} parent=43 // pred_check_branch
        %4107 = sbr.rel (%p4105) target = $region48
      $region47: #{conv_block_forward.3} parent=43 // pred_region
        _
      $region48: #{conv_block_forward.3} parent=43 // pred_fallthru
        _
      // Predicated region
      $region49: #{conv_block_forward.3} parent=43 // pred_check
        %p4108 = pneg %p195
      $region50: #{conv_block_forward.3} parent=43 // pred_check_branch
        %4110 = sbr.rel (%p4108) target = $region52
      $region51: #{conv_block_forward.3} parent=43 // pred_region
        _
      $region52: #{conv_block_forward.3} parent=43 // pred_fallthru
        _
      // Predicated region
      $region53: #{conv_block_forward.3} parent=43 // pred_check
        %p4111 = pneg %p221
      $region54: #{conv_block_forward.3} parent=43 // pred_check_branch
        %4113 = sbr.rel (%p4111) target = $region56
      $region55: #{conv_block_forward.3} parent=43 // pred_region
        _
      $region56: #{conv_block_forward.3} parent=43 // pred_fallthru
        _
    $region44: #{conv_block_forward.3} parent=5 // pred_fallthru
      _
    %p4114 = scmp.le.s32.totalorder 2, %s15
    // Predicated region
    $region57: #{conv_block_forward.3} parent=5 // pred_check
      %p4115 = pneg %p4114
    $region58: #{conv_block_forward.3} parent=5 // pred_check_branch
      %4117 = sbr.rel (%p4115) target = $region60
    $region59: #{conv_block_forward.3} parent=5 // pred_region
      %s4118 = ssub.s32 %s15, 2
      // Predicated region
      $region61: #{conv_block_forward.3} parent=59 // pred_check
        %p4119 = pneg %p175
      $region62: #{conv_block_forward.3} parent=59 // pred_check_branch
        %4121 = sbr.rel (%p4119) target = $region64
      $region63: #{conv_block_forward.3} parent=59 // pred_region
        %p4122 = scmp.lt.s32.totalorder %s21, 1
        %s4123 = scalar_select %p4122, %s21, 1
        %s4124 = smul.addr %s4123, 32
        %s4125 = smul.addr %s4124, 8
        %s4126 = scalar_lea.vmem %s6, %s4125
      $region64: #{conv_block_forward.3} parent=59 // pred_fallthru
        _
      // Predicated region
      $region65: #{conv_block_forward.3} parent=59 // pred_check
        %p4127 = pneg %p201
      $region66: #{conv_block_forward.3} parent=59 // pred_check_branch
        %4129 = sbr.rel (%p4127) target = $region68
      $region67: #{conv_block_forward.3} parent=59 // pred_region
        %p4130 = scmp.lt.s32.totalorder %s21, 1
        %s4131 = scalar_select %p4130, %s21, 1
        %s4132 = scalar_lea.vmem %s7, %s4131
      $region68: #{conv_block_forward.3} parent=59 // pred_fallthru
        _
      // Predicated region
      $region69: #{conv_block_forward.3} parent=59 // pred_check
        %p4133 = pneg %p227
      $region70: #{conv_block_forward.3} parent=59 // pred_check_branch
        %4135 = sbr.rel (%p4133) target = $region72
      $region71: #{conv_block_forward.3} parent=59 // pred_region
        %p4136 = scmp.lt.s32.totalorder %s21, 1
        %s4137 = scalar_select %p4136, %s21, 1
        %s4138 = scalar_lea.vmem %s8, %s4137
      $region72: #{conv_block_forward.3} parent=59 // pred_fallthru
        _
    $region60: #{conv_block_forward.3} parent=5 // pred_fallthru
      _
  $region6: #{conv_block_forward.3} parent=0 // loop_footer
    %s19 = sadd.s32 1, %s15
  $region7: #{conv_block_forward.3} parent=0 // loop_footer_branch
    %14 = sbr.rel target = $region3
  $region8: #{conv_block_forward.3} parent=0 // loop_exit
    _

</llo_original>
